<compile_context>
chip_gen: v6e
topology: v6e:2x2x1
jax: 0.10.0
libtpu: 0.0.40
codegen_flags: <defaults>
</compile_context>

<pallas_src>
import numpy as np
import jax
import jax.numpy as jnp
from jax.experimental import pallas as pl
from jax.experimental.pallas import tpu as pltpu

DIM = 32                      # dim
NUM_HEADS = 4                 # num_heads
HEAD_DIM = DIM // NUM_HEADS
MLP_HIDDEN = int(DIM * 4.0)   # mlp_ratio = 4.0
MLP_OUT = int(DIM * 1.0)      # mlp_out_ratio = 1.0
SCALE = HEAD_DIM ** -0.5      # qk_scale=None -> head_dim ** -0.5
LN_EPS = 1e-5                 # torch.nn.LayerNorm default
NEG_INF = -1e30

_W_LANES = 4 * DIM + MLP_HIDDEN   # 256 lanes:  [Wqkv(96) | Wproj(32) | W1(128)]
_W_ROWS = DIM + MLP_HIDDEN        # 160 rows :  rows 0:32 above, rows 32:160 = W2 (lanes 0:32)


# ---------------- in-kernel math helpers (traced inside the Pallas kernel) ----------

def _layernorm(x, gamma, beta):
    mu = jnp.mean(x, axis=-1, keepdims=True)
    var = jnp.mean(jnp.square(x - mu), axis=-1, keepdims=True)
    return (x - mu) * jax.lax.rsqrt(var + LN_EPS) * gamma + beta


def _gelu_tanh(x):
    # tanh-approximate GELU (|err vs exact erf-GELU| tiny at the ~0.1-scale activations
    # seen here); a single EUP tanh instead of a long erf polynomial on the VPU.
    c = 0.7978845608028654  # sqrt(2/pi)
    return 0.5 * x * (1.0 + jnp.tanh(c * (x + 0.044715 * x * x * x)))


def _branch(x, w_ref, v_ref, bias):
    """One (attention residual + MLP residual) branch on a flat (RT, C) token slab.

    w_ref : (160, 256) packed weight slab   [rows 0:32 -> Wqkv|Wproj|W1 ; rows 32:160 -> W2]
    v_ref : (8, 128)   packed vector slab   [g1, b1, bqkv, bproj, g2, b2, c1, c2] (lane 0..)
    bias  : (RT, RT)   additive attention bias (0 inside group, -1e30 outside)
    """
    vec = v_ref[...]
    g1, b1 = vec[0:1, 0:DIM], vec[1:2, 0:DIM]
    bqkv, bproj = vec[2:3, 0:3 * DIM], vec[3:4, 0:DIM]
    g2, b2 = vec[4:5, 0:DIM], vec[5:6, 0:DIM]
    c1, c2 = vec[6:7, 0:MLP_HIDDEN], vec[7:8, 0:MLP_OUT]

    w_top = w_ref[0:DIM, :]                                  # (32, 256)
    wqkv = w_top[:, 0:3 * DIM]                               # (32, 96)
    wproj = w_top[:, 3 * DIM:4 * DIM]                        # (32, 32)
    w1 = w_top[:, 4 * DIM:4 * DIM + MLP_HIDDEN]              # (32, 128)
    w2 = w_ref[DIM:DIM + MLP_HIDDEN, 0:MLP_OUT]              # (128, 32)

    # ---- attention residual: x + Proj(masked-MHSA(LN(x))) ----
    xn = _layernorm(x, g1, b1)
    qkv = jnp.dot(xn, wqkv, preferred_element_type=jnp.float32) + bqkv   # (RT, 96)
    heads = []
    for h in range(NUM_HEADS):                              # static unroll (4 heads)
        lo, hi = h * HEAD_DIM, (h + 1) * HEAD_DIM
        q_h = qkv[:, 0 * DIM + lo:0 * DIM + hi]
        k_h = qkv[:, 1 * DIM + lo:1 * DIM + hi]
        v_h = qkv[:, 2 * DIM + lo:2 * DIM + hi]
        s = jnp.einsum('qd,kd->qk', q_h, k_h,
                       preferred_element_type=jnp.float32) * SCALE + bias   # (RT, RT)
        m = jnp.max(s, axis=-1, keepdims=True)
        e = jnp.exp(s - m)                                   # masked entries underflow to 0
        p = e * pl.reciprocal(jnp.sum(e, axis=-1, keepdims=True), approx=True)
        heads.append(jnp.dot(p, v_h, preferred_element_type=jnp.float32))  # (RT, hd)
    o = jnp.concatenate(heads, axis=-1)                      # (RT, 32)
    x = x + jnp.dot(o, wproj, preferred_element_type=jnp.float32) + bproj

    # ---- MLP residual: x + fc2(GELU(fc1(LN(x)))) ----
    xn = _layernorm(x, g2, b2)
    hdn = jnp.dot(xn, w1, preferred_element_type=jnp.float32) + c1
    hdn = _gelu_tanh(hdn)
    x = x + jnp.dot(hdn, w2, preferred_element_type=jnp.float32) + c2
    return x


# ---------------- fused Block kernel -------------------------------------------------

def _block_kernel(x_ref, bias_s_ref, bias_t_ref,
                  ws_s_ref, vs_s_ref, ws_t_ref, vs_t_ref, o_ref):
    x = x_ref[...].astype(jnp.float32)                       # (RT, C) token slab (BT clips)
    x = _branch(x, ws_s_ref, vs_s_ref, bias_s_ref[...])      # spatial attn + MLP
    x = _branch(x, ws_t_ref, vs_t_ref, bias_t_ref[...])      # temporal attn + MLP
    o_ref[...] = x.astype(o_ref.dtype)


# ---------------- host-side packing helpers ------------------------------------------

def _pick_bt(batch, tokens_per_clip):
    """Clips per grid step: ~256 rows per step, but keep >= 2 grid steps (v7x 2 TCs)."""
    bt = min(batch, max(1, 256 // tokens_per_clip))
    if batch >= 2:
        bt = max(1, min(bt, batch // 2))
    while batch % bt:
        bt -= 1
    return bt


def _attn_bias_masks(bt, seqlen, njoints):
    """Additive (RT, RT) biases: 0 inside the softmax group, NEG_INF outside."""
    r = seqlen * njoints
    rt = bt * r
    idx = np.arange(rt)
    clip = idx // r
    frame = (idx % r) // njoints
    joint = idx % njoints
    same_clip = clip[:, None] == clip[None, :]
    bias_s = np.where(same_clip & (frame[:, None] == frame[None, :]), 0.0, NEG_INF)
    bias_t = np.where(same_clip & (joint[:, None] == joint[None, :]), 0.0, NEG_INF)
    return jnp.asarray(bias_s, jnp.float32), jnp.asarray(bias_t, jnp.float32)


def _pack_branch_params(P, b):
    """Pack one s/t branch into a (160, 256) weight slab and an (8, 128) vector slab."""
    wqkv, bqkv, wp, bp = P[f'attn_{b}']
    w1, c1, w2, c2 = P[f'mlp_{b}']
    g1, be1 = P[f'norm1_{b}']
    g2, be2 = P[f'norm2_{b}']

    top = jnp.concatenate([wqkv, wp, w1], axis=1)                        # (32, 256)
    bot = jnp.pad(w2, ((0, 0), (0, _W_LANES - MLP_OUT)))                 # (128, 256)
    wslab = jnp.concatenate([top, bot], axis=0).astype(jnp.float32)      # (160, 256)

    def _row(v):
        v = jnp.asarray(v, jnp.float32).reshape(1, -1)
        return jnp.pad(v, ((0, 0), (0, 128 - v.shape[1])))
    vslab = jnp.concatenate(
        [_row(g1), _row(be1), _row(bqkv), _row(bp),
         _row(g2), _row(be2), _row(c1), _row(c2)], axis=0)               # (8, 128)
    return wslab, vslab


# ---------------- wrapper -------------------------------------------------------------

def block_forward(x, P, seqlen, bt=None):
    """Block.forward with st_mode='stage_st', eval mode, fused into one pallas_call."""
    B, N, C = x.shape
    assert C == DIM and B % seqlen == 0
    batch = B // seqlen                    # number of clips
    R = seqlen * N                         # tokens per clip
    if bt is None:
        bt = _pick_bt(batch, R)
    assert batch % bt == 0
    steps = batch // bt
    RT = bt * R                            # tokens per grid step
    assert RT % 8 == 0, "token-slab rows must be sublane-aligned"

    xr = x.reshape(steps * RT, C)          # pure contiguous view: clip-major, frame-major

    bias_s, bias_t = _attn_bias_masks(bt, seqlen, N)
    ws_s, vs_s = _pack_branch_params(P, 's')
    ws_t, vs_t = _pack_branch_params(P, 't')

    rep2 = lambda g: (0, 0)
    out = pl.pallas_call(
        _block_kernel,
        out_shape=jax.ShapeDtypeStruct((steps * RT, C), x.dtype),
        grid_spec=pltpu.PrefetchScalarGridSpec(
            num_scalar_prefetch=0,
            grid=(steps,),
            in_specs=[
                pl.BlockSpec((RT, C), lambda g: (g, 0)),          # token slab per step
                pl.BlockSpec((RT, RT), rep2),                     # spatial attn bias (replicated)
                pl.BlockSpec((RT, RT), rep2),                     # temporal attn bias (replicated)
                pl.BlockSpec((_W_ROWS, _W_LANES), rep2),          # spatial weight slab
                pl.BlockSpec((8, 128), rep2),                     # spatial vector slab
                pl.BlockSpec((_W_ROWS, _W_LANES), rep2),          # temporal weight slab
                pl.BlockSpec((8, 128), rep2),                     # temporal vector slab
            ],
            out_specs=pl.BlockSpec((RT, C), lambda g: (g, 0)),
        ),
        compiler_params=pltpu.CompilerParams(
            dimension_semantics=("parallel",),
            vmem_limit_bytes=32 * 1024 * 1024,
        ),
    )(xr, bias_s, bias_t, ws_s, vs_s, ws_t, vs_t)
    return out.reshape(B, N, C)


# ---------------- deterministic parameter init & pure-JAX reference -----------------

def init_params(key):
    keys = iter(jax.random.split(key, 32))

    def linear(fin, fout):
        w = jax.random.normal(next(keys), (fin, fout), jnp.float32) * 0.02
        b = jax.random.normal(next(keys), (1, fout), jnp.float32) * 0.02
        return w, b

    def norm():
        return (jnp.ones((1, DIM), jnp.float32), jnp.zeros((1, DIM), jnp.float32))

    def attn():
        wqkv, bqkv = linear(DIM, 3 * DIM)      # qkv_bias=True
        wp, bp = linear(DIM, DIM)
        return (wqkv, bqkv, wp, bp)

    def mlp():
        w1, b1 = linear(DIM, MLP_HIDDEN)
        w2, b2 = linear(MLP_HIDDEN, MLP_OUT)
        return (w1, b1, w2, b2)

    return {
        'norm1_s': norm(), 'norm2_s': norm(), 'norm1_t': norm(), 'norm2_t': norm(),
        'attn_s': attn(), 'attn_t': attn(),
        'mlp_s': mlp(), 'mlp_t': mlp(),
    }


def _reference_block(x, P, seqlen):
    """Plain-JAX mirror of the PyTorch Block for numerical validation."""
    def layernorm(x, g, b):
        mu = x.mean(-1, keepdims=True)
        var = ((x - mu) ** 2).mean(-1, keepdims=True)
        return (x - mu) / jnp.sqrt(var + LN_EPS) * g + b

    def attention(x, p, mode):
        wqkv, bqkv, wp, bp = p
        B, N, C = x.shape
        qkv = (x @ wqkv + bqkv).reshape(B, N, 3, NUM_HEADS, HEAD_DIM).transpose(2, 0, 3, 1, 4)
        q, k, v = qkv[0], qkv[1], qkv[2]                      # (B, H, N, hd)
        if mode == 'spatial':
            a = jax.nn.softmax(jnp.einsum('bhqd,bhkd->bhqk', q, k) * SCALE, -1)
            o = jnp.einsum('bhqk,bhkd->bhqd', a, v).transpose(0, 2, 1, 3).reshape(B, N, C)
        else:  # temporal
            qt = q.reshape(-1, seqlen, NUM_HEADS, N, HEAD_DIM).transpose(0, 2, 3, 1, 4)
            kt = k.reshape(-1, seqlen, NUM_HEADS, N, HEAD_DIM).transpose(0, 2, 3, 1, 4)
            vt = v.reshape(-1, seqlen, NUM_HEADS, N, HEAD_DIM).transpose(0, 2, 3, 1, 4)
            a = jax.nn.softmax(jnp.einsum('bhntd,bhnsd->bhnts', qt, kt) * SCALE, -1)
            o = jnp.einsum('bhnts,bhnsd->bhntd', a, vt).transpose(0, 3, 2, 1, 4).reshape(B, N, C)
        return o @ wp + bp

    def mlp(x, p):
        w1, b1, w2, b2 = p
        return jax.nn.gelu(x @ w1 + b1, approximate=False) @ w2 + b2

    x = x + attention(layernorm(x, *P['norm1_s']), P['attn_s'], 'spatial')
    x = x + mlp(layernorm(x, *P['norm2_s']), P['mlp_s'])
    x = x + attention(layernorm(x, *P['norm1_t']), P['attn_t'], 'temporal')
    x = x + mlp(layernorm(x, *P['norm2_t']), P['mlp_t'])
    return x


if __name__ == "__main__":
    key = jax.random.PRNGKey(0)
    kx, kp = jax.random.split(key)

    batch, seqlen, joints = 8, 4, 8            # B = batch*seqlen = 32, N = 8, C = 32
    x = jax.random.normal(kx, (batch * seqlen, joints, DIM), jnp.float32)
    params = init_params(kp)

    fwd = jax.jit(lambda xx: block_forward(xx, params, seqlen))
    out = jax.block_until_ready(fwd(x))

    ref = _reference_block(x, params, seqlen)
    assert out.shape == x.shape
    max_err = float(jnp.max(jnp.abs(out - ref)))
    assert max_err < 5e-3, f"max abs err too large: {max_err}"
    print("KERNEL_OK")
</pallas_src>

<mosaic_0001>
module attributes {stable_mosaic.version = 11 : i64} {
  func.func @_block_kernel(%arg0: i32, %arg1: memref<128x32xf32, #tpu.memory_space<vmem>>, %arg2: memref<128x128xf32, #tpu.memory_space<vmem>>, %arg3: memref<128x128xf32, #tpu.memory_space<vmem>>, %arg4: memref<160x256xf32, #tpu.memory_space<vmem>>, %arg5: memref<8x128xf32, #tpu.memory_space<vmem>>, %arg6: memref<160x256xf32, #tpu.memory_space<vmem>>, %arg7: memref<8x128xf32, #tpu.memory_space<vmem>>, %arg8: memref<128x32xf32, #tpu.memory_space<vmem>>) attributes {dimension_semantics = [#tpu.dimension_semantics<parallel>], iteration_bounds = array<i64: 2>, scalar_prefetch = 0 : i64, scratch_operands = 0 : i64, tpu.core_type = #tpu.core_type<tc>, window_params = [{transform_indices = @transform_0, window_bounds = array<i64: 128, 32>}, {pipeline_mode = #tpu.pipeline_mode<synchronous>, transform_indices = @transform_1, window_bounds = array<i64: 128, 128>}, {pipeline_mode = #tpu.pipeline_mode<synchronous>, transform_indices = @transform_2, window_bounds = array<i64: 128, 128>}, {pipeline_mode = #tpu.pipeline_mode<synchronous>, transform_indices = @transform_3, window_bounds = array<i64: 160, 256>}, {pipeline_mode = #tpu.pipeline_mode<synchronous>, transform_indices = @transform_4, window_bounds = array<i64: 8, 128>}, {pipeline_mode = #tpu.pipeline_mode<synchronous>, transform_indices = @transform_5, window_bounds = array<i64: 160, 256>}, {pipeline_mode = #tpu.pipeline_mode<synchronous>, transform_indices = @transform_6, window_bounds = array<i64: 8, 128>}, {transform_indices = @transform_7, window_bounds = array<i64: 128, 32>}]} {
    %c0 = arith.constant 0 : index
    %c0_0 = arith.constant 0 : index
    %0 = vector.load %arg1[%c0, %c0_0] : memref<128x32xf32, #tpu.memory_space<vmem>>, vector<128x32xf32>
    %c0_1 = arith.constant 0 : index
    %c0_2 = arith.constant 0 : index
    %1 = vector.load %arg2[%c0_1, %c0_2] : memref<128x128xf32, #tpu.memory_space<vmem>>, vector<128x128xf32>
    %c0_3 = arith.constant 0 : index
    %c0_4 = arith.constant 0 : index
    %2 = vector.load %arg5[%c0_3, %c0_4] : memref<8x128xf32, #tpu.memory_space<vmem>>, vector<8x128xf32>
    %3 = vector.extract_strided_slice %2 {offsets = [0, 0], sizes = [1, 32], strides = [1, 1]} : vector<8x128xf32> to vector<1x32xf32>
    %4 = vector.extract_strided_slice %2 {offsets = [1, 0], sizes = [1, 32], strides = [1, 1]} : vector<8x128xf32> to vector<1x32xf32>
    %5 = vector.extract_strided_slice %2 {offsets = [2, 0], sizes = [1, 96], strides = [1, 1]} : vector<8x128xf32> to vector<1x96xf32>
    %6 = vector.extract_strided_slice %2 {offsets = [3, 0], sizes = [1, 32], strides = [1, 1]} : vector<8x128xf32> to vector<1x32xf32>
    %7 = vector.extract_strided_slice %2 {offsets = [4, 0], sizes = [1, 32], strides = [1, 1]} : vector<8x128xf32> to vector<1x32xf32>
    %8 = vector.extract_strided_slice %2 {offsets = [5, 0], sizes = [1, 32], strides = [1, 1]} : vector<8x128xf32> to vector<1x32xf32>
    %9 = vector.extract_strided_slice %2 {offsets = [6, 0], sizes = [1, 128], strides = [1, 1]} : vector<8x128xf32> to vector<1x128xf32>
    %10 = vector.extract_strided_slice %2 {offsets = [7, 0], sizes = [1, 32], strides = [1, 1]} : vector<8x128xf32> to vector<1x32xf32>
    %c0_5 = arith.constant 0 : index
    %c0_6 = arith.constant 0 : index
    %11 = vector.load %arg4[%c0_5, %c0_6] : memref<160x256xf32, #tpu.memory_space<vmem>>, vector<32x256xf32>
    %12 = vector.extract_strided_slice %11 {offsets = [0, 0], sizes = [32, 96], strides = [1, 1]} : vector<32x256xf32> to vector<32x96xf32>
    %13 = vector.extract_strided_slice %11 {offsets = [0, 96], sizes = [32, 32], strides = [1, 1]} : vector<32x256xf32> to vector<32x32xf32>
    %14 = vector.extract_strided_slice %11 {offsets = [0, 128], sizes = [32, 128], strides = [1, 1]} : vector<32x256xf32> to vector<32x128xf32>
    %c32 = arith.constant 32 : index
    %c0_7 = arith.constant 0 : index
    %15 = vector.load %arg4[%c32, %c0_7] : memref<160x256xf32, #tpu.memory_space<vmem>>, vector<128x32xf32>
    %cst = arith.constant dense<0.000000e+00> : vector<128xf32>
    %16 = vector.multi_reduction <add>, %0, %cst [1] : vector<128x32xf32> to vector<128xf32>
    %17 = vector.shape_cast %16 : vector<128xf32> to vector<128x1xf32>
    %cst_8 = arith.constant 3.200000e+01 : f32
    %18 = vector.broadcast %cst_8 : f32 to vector<128x1xf32>
    %19 = arith.divf %17, %18 : vector<128x1xf32>
    %20 = vector.broadcast %19 : vector<128x1xf32> to vector<128x32xf32>
    %21 = arith.subf %0, %20 : vector<128x32xf32>
    %22 = arith.mulf %21, %21 : vector<128x32xf32>
    %cst_9 = arith.constant dense<0.000000e+00> : vector<128xf32>
    %23 = vector.multi_reduction <add>, %22, %cst_9 [1] : vector<128x32xf32> to vector<128xf32>
    %24 = vector.shape_cast %23 : vector<128xf32> to vector<128x1xf32>
    %cst_10 = arith.constant 3.200000e+01 : f32
    %25 = vector.broadcast %cst_10 : f32 to vector<128x1xf32>
    %26 = arith.divf %24, %25 : vector<128x1xf32>
    %27 = vector.broadcast %19 : vector<128x1xf32> to vector<128x32xf32>
    %28 = arith.subf %0, %27 : vector<128x32xf32>
    %cst_11 = arith.constant 9.99999974E-6 : f32
    %29 = vector.broadcast %cst_11 : f32 to vector<128x1xf32>
    %30 = arith.addf %26, %29 : vector<128x1xf32>
    %31 = math.rsqrt %30 : vector<128x1xf32>
    %32 = vector.broadcast %31 : vector<128x1xf32> to vector<128x32xf32>
    %33 = arith.mulf %28, %32 : vector<128x32xf32>
    %34 = vector.broadcast %3 : vector<1x32xf32> to vector<128x32xf32>
    %35 = arith.mulf %33, %34 : vector<128x32xf32>
    %36 = vector.broadcast %4 : vector<1x32xf32> to vector<128x32xf32>
    %37 = arith.addf %35, %36 : vector<128x32xf32>
    %cst_12 = arith.constant dense<0.000000e+00> : vector<128x96xf32>
    %38 = tpu.matmul %37, %12, %cst_12 {dimension_numbers = #tpu.dot_dimension_numbers<[1], [0], [0], [1], [0, 0, 1, 1], [], []>} : vector<128x32xf32>, vector<32x96xf32>, vector<128x96xf32> -> vector<128x96xf32>
    %39 = vector.broadcast %5 : vector<1x96xf32> to vector<128x96xf32>
    %40 = arith.addf %38, %39 : vector<128x96xf32>
    %41 = vector.extract_strided_slice %40 {offsets = [0, 0], sizes = [128, 8], strides = [1, 1]} : vector<128x96xf32> to vector<128x8xf32>
    %42 = vector.extract_strided_slice %40 {offsets = [0, 32], sizes = [128, 8], strides = [1, 1]} : vector<128x96xf32> to vector<128x8xf32>
    %43 = vector.extract_strided_slice %40 {offsets = [0, 64], sizes = [128, 8], strides = [1, 1]} : vector<128x96xf32> to vector<128x8xf32>
    "tpu.trace_start"() <{level = 10 : i32, message = "qd,kd->qk"}> : () -> ()
    %cst_13 = arith.constant dense<0.000000e+00> : vector<128x128xf32>
    %44 = tpu.matmul %41, %42, %cst_13 {dimension_numbers = #tpu.dot_dimension_numbers<[1], [1], [0], [0], [0, 0, 1, 0], [], []>} : vector<128x8xf32>, vector<128x8xf32>, vector<128x128xf32> -> vector<128x128xf32>
    "tpu.trace_stop"() : () -> ()
    %cst_14 = arith.constant 0.353553385 : f32
    %45 = vector.broadcast %cst_14 : f32 to vector<128x128xf32>
    %46 = arith.mulf %44, %45 : vector<128x128xf32>
    %47 = arith.addf %46, %1 : vector<128x128xf32>
    %cst_15 = arith.constant dense<0xFF800000> : vector<128xf32>
    %48 = vector.multi_reduction <maximumf>, %47, %cst_15 [1] : vector<128x128xf32> to vector<128xf32>
    %49 = vector.shape_cast %48 : vector<128xf32> to vector<128x1xf32>
    %50 = vector.broadcast %49 : vector<128x1xf32> to vector<128x128xf32>
    %51 = arith.subf %47, %50 : vector<128x128xf32>
    %52 = math.exp %51 : vector<128x128xf32>
    %cst_16 = arith.constant dense<0.000000e+00> : vector<128xf32>
    %53 = vector.multi_reduction <add>, %52, %cst_16 [1] : vector<128x128xf32> to vector<128xf32>
    %54 = vector.shape_cast %53 : vector<128xf32> to vector<128x1xf32>
    %55 = tpu.reciprocal %54 {approx = true} : vector<128x1xf32> -> vector<128x1xf32>
    %56 = vector.broadcast %55 : vector<128x1xf32> to vector<128x128xf32>
    %57 = arith.mulf %52, %56 : vector<128x128xf32>
    %cst_17 = arith.constant dense<0.000000e+00> : vector<128x8xf32>
    %58 = tpu.matmul %57, %43, %cst_17 {dimension_numbers = #tpu.dot_dimension_numbers<[1], [0], [0], [1], [0, 0, 1, 1], [], []>} : vector<128x128xf32>, vector<128x8xf32>, vector<128x8xf32> -> vector<128x8xf32>
    %59 = vector.extract_strided_slice %40 {offsets = [0, 8], sizes = [128, 8], strides = [1, 1]} : vector<128x96xf32> to vector<128x8xf32>
    %60 = vector.extract_strided_slice %40 {offsets = [0, 40], sizes = [128, 8], strides = [1, 1]} : vector<128x96xf32> to vector<128x8xf32>
    %61 = vector.extract_strided_slice %40 {offsets = [0, 72], sizes = [128, 8], strides = [1, 1]} : vector<128x96xf32> to vector<128x8xf32>
    "tpu.trace_start"() <{level = 10 : i32, message = "qd,kd->qk"}> : () -> ()
    %cst_18 = arith.constant dense<0.000000e+00> : vector<128x128xf32>
    %62 = tpu.matmul %59, %60, %cst_18 {dimension_numbers = #tpu.dot_dimension_numbers<[1], [1], [0], [0], [0, 0, 1, 0], [], []>} : vector<128x8xf32>, vector<128x8xf32>, vector<128x128xf32> -> vector<128x128xf32>
    "tpu.trace_stop"() : () -> ()
    %cst_19 = arith.constant 0.353553385 : f32
    %63 = vector.broadcast %cst_19 : f32 to vector<128x128xf32>
    %64 = arith.mulf %62, %63 : vector<128x128xf32>
    %65 = arith.addf %64, %1 : vector<128x128xf32>
    %cst_20 = arith.constant dense<0xFF800000> : vector<128xf32>
    %66 = vector.multi_reduction <maximumf>, %65, %cst_20 [1] : vector<128x128xf32> to vector<128xf32>
    %67 = vector.shape_cast %66 : vector<128xf32> to vector<128x1xf32>
    %68 = vector.broadcast %67 : vector<128x1xf32> to vector<128x128xf32>
    %69 = arith.subf %65, %68 : vector<128x128xf32>
    %70 = math.exp %69 : vector<128x128xf32>
    %cst_21 = arith.constant dense<0.000000e+00> : vector<128xf32>
    %71 = vector.multi_reduction <add>, %70, %cst_21 [1] : vector<128x128xf32> to vector<128xf32>
    %72 = vector.shape_cast %71 : vector<128xf32> to vector<128x1xf32>
    %73 = tpu.reciprocal %72 {approx = true} : vector<128x1xf32> -> vector<128x1xf32>
    %74 = vector.broadcast %73 : vector<128x1xf32> to vector<128x128xf32>
    %75 = arith.mulf %70, %74 : vector<128x128xf32>
    %cst_22 = arith.constant dense<0.000000e+00> : vector<128x8xf32>
    %76 = tpu.matmul %75, %61, %cst_22 {dimension_numbers = #tpu.dot_dimension_numbers<[1], [0], [0], [1], [0, 0, 1, 1], [], []>} : vector<128x128xf32>, vector<128x8xf32>, vector<128x8xf32> -> vector<128x8xf32>
    %77 = vector.extract_strided_slice %40 {offsets = [0, 16], sizes = [128, 8], strides = [1, 1]} : vector<128x96xf32> to vector<128x8xf32>
    %78 = vector.extract_strided_slice %40 {offsets = [0, 48], sizes = [128, 8], strides = [1, 1]} : vector<128x96xf32> to vector<128x8xf32>
    %79 = vector.extract_strided_slice %40 {offsets = [0, 80], sizes = [128, 8], strides = [1, 1]} : vector<128x96xf32> to vector<128x8xf32>
    "tpu.trace_start"() <{level = 10 : i32, message = "qd,kd->qk"}> : () -> ()
    %cst_23 = arith.constant dense<0.000000e+00> : vector<128x128xf32>
    %80 = tpu.matmul %77, %78, %cst_23 {dimension_numbers = #tpu.dot_dimension_numbers<[1], [1], [0], [0], [0, 0, 1, 0], [], []>} : vector<128x8xf32>, vector<128x8xf32>, vector<128x128xf32> -> vector<128x128xf32>
    "tpu.trace_stop"() : () -> ()
    %cst_24 = arith.constant 0.353553385 : f32
    %81 = vector.broadcast %cst_24 : f32 to vector<128x128xf32>
    %82 = arith.mulf %80, %81 : vector<128x128xf32>
    %83 = arith.addf %82, %1 : vector<128x128xf32>
    %cst_25 = arith.constant dense<0xFF800000> : vector<128xf32>
    %84 = vector.multi_reduction <maximumf>, %83, %cst_25 [1] : vector<128x128xf32> to vector<128xf32>
    %85 = vector.shape_cast %84 : vector<128xf32> to vector<128x1xf32>
    %86 = vector.broadcast %85 : vector<128x1xf32> to vector<128x128xf32>
    %87 = arith.subf %83, %86 : vector<128x128xf32>
    %88 = math.exp %87 : vector<128x128xf32>
    %cst_26 = arith.constant dense<0.000000e+00> : vector<128xf32>
    %89 = vector.multi_reduction <add>, %88, %cst_26 [1] : vector<128x128xf32> to vector<128xf32>
    %90 = vector.shape_cast %89 : vector<128xf32> to vector<128x1xf32>
    %91 = tpu.reciprocal %90 {approx = true} : vector<128x1xf32> -> vector<128x1xf32>
    %92 = vector.broadcast %91 : vector<128x1xf32> to vector<128x128xf32>
    %93 = arith.mulf %88, %92 : vector<128x128xf32>
    %cst_27 = arith.constant dense<0.000000e+00> : vector<128x8xf32>
    %94 = tpu.matmul %93, %79, %cst_27 {dimension_numbers = #tpu.dot_dimension_numbers<[1], [0], [0], [1], [0, 0, 1, 1], [], []>} : vector<128x128xf32>, vector<128x8xf32>, vector<128x8xf32> -> vector<128x8xf32>
    %95 = vector.extract_strided_slice %40 {offsets = [0, 24], sizes = [128, 8], strides = [1, 1]} : vector<128x96xf32> to vector<128x8xf32>
    %96 = vector.extract_strided_slice %40 {offsets = [0, 56], sizes = [128, 8], strides = [1, 1]} : vector<128x96xf32> to vector<128x8xf32>
    %97 = vector.extract_strided_slice %40 {offsets = [0, 88], sizes = [128, 8], strides = [1, 1]} : vector<128x96xf32> to vector<128x8xf32>
    "tpu.trace_start"() <{level = 10 : i32, message = "qd,kd->qk"}> : () -> ()
    %cst_28 = arith.constant dense<0.000000e+00> : vector<128x128xf32>
    %98 = tpu.matmul %95, %96, %cst_28 {dimension_numbers = #tpu.dot_dimension_numbers<[1], [1], [0], [0], [0, 0, 1, 0], [], []>} : vector<128x8xf32>, vector<128x8xf32>, vector<128x128xf32> -> vector<128x128xf32>
    "tpu.trace_stop"() : () -> ()
    %cst_29 = arith.constant 0.353553385 : f32
    %99 = vector.broadcast %cst_29 : f32 to vector<128x128xf32>
    %100 = arith.mulf %98, %99 : vector<128x128xf32>
    %101 = arith.addf %100, %1 : vector<128x128xf32>
    %cst_30 = arith.constant dense<0xFF800000> : vector<128xf32>
    %102 = vector.multi_reduction <maximumf>, %101, %cst_30 [1] : vector<128x128xf32> to vector<128xf32>
    %103 = vector.shape_cast %102 : vector<128xf32> to vector<128x1xf32>
    %104 = vector.broadcast %103 : vector<128x1xf32> to vector<128x128xf32>
    %105 = arith.subf %101, %104 : vector<128x128xf32>
    %106 = math.exp %105 : vector<128x128xf32>
    %cst_31 = arith.constant dense<0.000000e+00> : vector<128xf32>
    %107 = vector.multi_reduction <add>, %106, %cst_31 [1] : vector<128x128xf32> to vector<128xf32>
    %108 = vector.shape_cast %107 : vector<128xf32> to vector<128x1xf32>
    %109 = tpu.reciprocal %108 {approx = true} : vector<128x1xf32> -> vector<128x1xf32>
    %110 = vector.broadcast %109 : vector<128x1xf32> to vector<128x128xf32>
    %111 = arith.mulf %106, %110 : vector<128x128xf32>
    %cst_32 = arith.constant dense<0.000000e+00> : vector<128x8xf32>
    %112 = tpu.matmul %111, %97, %cst_32 {dimension_numbers = #tpu.dot_dimension_numbers<[1], [0], [0], [1], [0, 0, 1, 1], [], []>} : vector<128x128xf32>, vector<128x8xf32>, vector<128x8xf32> -> vector<128x8xf32>
    %113 = tpu.concatenate %58, %76, %94, %112 in 1 : vector<128x8xf32>, vector<128x8xf32>, vector<128x8xf32>, vector<128x8xf32> -> vector<128x32xf32>
    %cst_33 = arith.constant dense<0.000000e+00> : vector<128x32xf32>
    %114 = tpu.matmul %113, %13, %cst_33 {dimension_numbers = #tpu.dot_dimension_numbers<[1], [0], [0], [1], [0, 0, 1, 1], [], []>} : vector<128x32xf32>, vector<32x32xf32>, vector<128x32xf32> -> vector<128x32xf32>
    %115 = arith.addf %0, %114 : vector<128x32xf32>
    %116 = vector.broadcast %6 : vector<1x32xf32> to vector<128x32xf32>
    %117 = arith.addf %115, %116 : vector<128x32xf32>
    %cst_34 = arith.constant dense<0.000000e+00> : vector<128xf32>
    %118 = vector.multi_reduction <add>, %117, %cst_34 [1] : vector<128x32xf32> to vector<128xf32>
    %119 = vector.shape_cast %118 : vector<128xf32> to vector<128x1xf32>
    %cst_35 = arith.constant 3.200000e+01 : f32
    %120 = vector.broadcast %cst_35 : f32 to vector<128x1xf32>
    %121 = arith.divf %119, %120 : vector<128x1xf32>
    %122 = vector.broadcast %121 : vector<128x1xf32> to vector<128x32xf32>
    %123 = arith.subf %117, %122 : vector<128x32xf32>
    %124 = arith.mulf %123, %123 : vector<128x32xf32>
    %cst_36 = arith.constant dense<0.000000e+00> : vector<128xf32>
    %125 = vector.multi_reduction <add>, %124, %cst_36 [1] : vector<128x32xf32> to vector<128xf32>
    %126 = vector.shape_cast %125 : vector<128xf32> to vector<128x1xf32>
    %cst_37 = arith.constant 3.200000e+01 : f32
    %127 = vector.broadcast %cst_37 : f32 to vector<128x1xf32>
    %128 = arith.divf %126, %127 : vector<128x1xf32>
    %129 = vector.broadcast %121 : vector<128x1xf32> to vector<128x32xf32>
    %130 = arith.subf %117, %129 : vector<128x32xf32>
    %cst_38 = arith.constant 9.99999974E-6 : f32
    %131 = vector.broadcast %cst_38 : f32 to vector<128x1xf32>
    %132 = arith.addf %128, %131 : vector<128x1xf32>
    %133 = math.rsqrt %132 : vector<128x1xf32>
    %134 = vector.broadcast %133 : vector<128x1xf32> to vector<128x32xf32>
    %135 = arith.mulf %130, %134 : vector<128x32xf32>
    %136 = vector.broadcast %7 : vector<1x32xf32> to vector<128x32xf32>
    %137 = arith.mulf %135, %136 : vector<128x32xf32>
    %138 = vector.broadcast %8 : vector<1x32xf32> to vector<128x32xf32>
    %139 = arith.addf %137, %138 : vector<128x32xf32>
    %cst_39 = arith.constant dense<0.000000e+00> : vector<128x128xf32>
    %140 = tpu.matmul %139, %14, %cst_39 {dimension_numbers = #tpu.dot_dimension_numbers<[1], [0], [0], [1], [0, 0, 1, 1], [], []>} : vector<128x32xf32>, vector<32x128xf32>, vector<128x128xf32> -> vector<128x128xf32>
    %141 = vector.broadcast %9 : vector<1x128xf32> to vector<128x128xf32>
    %142 = arith.addf %140, %141 : vector<128x128xf32>
    %cst_40 = arith.constant 5.000000e-01 : f32
    %143 = vector.broadcast %cst_40 : f32 to vector<128x128xf32>
    %144 = arith.mulf %143, %142 : vector<128x128xf32>
    %cst_41 = arith.constant 4.471500e-02 : f32
    %145 = vector.broadcast %cst_41 : f32 to vector<128x128xf32>
    %146 = arith.mulf %145, %142 : vector<128x128xf32>
    %147 = arith.mulf %146, %142 : vector<128x128xf32>
    %148 = arith.mulf %147, %142 : vector<128x128xf32>
    %149 = arith.addf %142, %148 : vector<128x128xf32>
    %cst_42 = arith.constant 0.797884583 : f32
    %150 = vector.broadcast %cst_42 : f32 to vector<128x128xf32>
    %151 = arith.mulf %150, %149 : vector<128x128xf32>
    %152 = math.tanh %151 : vector<128x128xf32>
    %cst_43 = arith.constant 1.000000e+00 : f32
    %153 = vector.broadcast %cst_43 : f32 to vector<128x128xf32>
    %154 = arith.addf %153, %152 : vector<128x128xf32>
    %155 = arith.mulf %144, %154 : vector<128x128xf32>
    %cst_44 = arith.constant dense<0.000000e+00> : vector<128x32xf32>
    %156 = tpu.matmul %155, %15, %cst_44 {dimension_numbers = #tpu.dot_dimension_numbers<[1], [0], [0], [1], [0, 0, 1, 1], [], []>} : vector<128x128xf32>, vector<128x32xf32>, vector<128x32xf32> -> vector<128x32xf32>
    %157 = arith.addf %117, %156 : vector<128x32xf32>
    %158 = vector.broadcast %10 : vector<1x32xf32> to vector<128x32xf32>
    %159 = arith.addf %157, %158 : vector<128x32xf32>
    %c0_45 = arith.constant 0 : index
    %c0_46 = arith.constant 0 : index
    %160 = vector.load %arg3[%c0_45, %c0_46] : memref<128x128xf32, #tpu.memory_space<vmem>>, vector<128x128xf32>
    %c0_47 = arith.constant 0 : index
    %c0_48 = arith.constant 0 : index
    %161 = vector.load %arg7[%c0_47, %c0_48] : memref<8x128xf32, #tpu.memory_space<vmem>>, vector<8x128xf32>
    %162 = vector.extract_strided_slice %161 {offsets = [0, 0], sizes = [1, 32], strides = [1, 1]} : vector<8x128xf32> to vector<1x32xf32>
    %163 = vector.extract_strided_slice %161 {offsets = [1, 0], sizes = [1, 32], strides = [1, 1]} : vector<8x128xf32> to vector<1x32xf32>
    %164 = vector.extract_strided_slice %161 {offsets = [2, 0], sizes = [1, 96], strides = [1, 1]} : vector<8x128xf32> to vector<1x96xf32>
    %165 = vector.extract_strided_slice %161 {offsets = [3, 0], sizes = [1, 32], strides = [1, 1]} : vector<8x128xf32> to vector<1x32xf32>
    %166 = vector.extract_strided_slice %161 {offsets = [4, 0], sizes = [1, 32], strides = [1, 1]} : vector<8x128xf32> to vector<1x32xf32>
    %167 = vector.extract_strided_slice %161 {offsets = [5, 0], sizes = [1, 32], strides = [1, 1]} : vector<8x128xf32> to vector<1x32xf32>
    %168 = vector.extract_strided_slice %161 {offsets = [6, 0], sizes = [1, 128], strides = [1, 1]} : vector<8x128xf32> to vector<1x128xf32>
    %169 = vector.extract_strided_slice %161 {offsets = [7, 0], sizes = [1, 32], strides = [1, 1]} : vector<8x128xf32> to vector<1x32xf32>
    %c0_49 = arith.constant 0 : index
    %c0_50 = arith.constant 0 : index
    %170 = vector.load %arg6[%c0_49, %c0_50] : memref<160x256xf32, #tpu.memory_space<vmem>>, vector<32x256xf32>
    %171 = vector.extract_strided_slice %170 {offsets = [0, 0], sizes = [32, 96], strides = [1, 1]} : vector<32x256xf32> to vector<32x96xf32>
    %172 = vector.extract_strided_slice %170 {offsets = [0, 96], sizes = [32, 32], strides = [1, 1]} : vector<32x256xf32> to vector<32x32xf32>
    %173 = vector.extract_strided_slice %170 {offsets = [0, 128], sizes = [32, 128], strides = [1, 1]} : vector<32x256xf32> to vector<32x128xf32>
    %c32_51 = arith.constant 32 : index
    %c0_52 = arith.constant 0 : index
    %174 = vector.load %arg6[%c32_51, %c0_52] : memref<160x256xf32, #tpu.memory_space<vmem>>, vector<128x32xf32>
    %cst_53 = arith.constant dense<0.000000e+00> : vector<128xf32>
    %175 = vector.multi_reduction <add>, %159, %cst_53 [1] : vector<128x32xf32> to vector<128xf32>
    %176 = vector.shape_cast %175 : vector<128xf32> to vector<128x1xf32>
    %cst_54 = arith.constant 3.200000e+01 : f32
    %177 = vector.broadcast %cst_54 : f32 to vector<128x1xf32>
    %178 = arith.divf %176, %177 : vector<128x1xf32>
    %179 = vector.broadcast %178 : vector<128x1xf32> to vector<128x32xf32>
    %180 = arith.subf %159, %179 : vector<128x32xf32>
    %181 = arith.mulf %180, %180 : vector<128x32xf32>
    %cst_55 = arith.constant dense<0.000000e+00> : vector<128xf32>
    %182 = vector.multi_reduction <add>, %181, %cst_55 [1] : vector<128x32xf32> to vector<128xf32>
    %183 = vector.shape_cast %182 : vector<128xf32> to vector<128x1xf32>
    %cst_56 = arith.constant 3.200000e+01 : f32
    %184 = vector.broadcast %cst_56 : f32 to vector<128x1xf32>
    %185 = arith.divf %183, %184 : vector<128x1xf32>
    %186 = vector.broadcast %178 : vector<128x1xf32> to vector<128x32xf32>
    %187 = arith.subf %159, %186 : vector<128x32xf32>
    %cst_57 = arith.constant 9.99999974E-6 : f32
    %188 = vector.broadcast %cst_57 : f32 to vector<128x1xf32>
    %189 = arith.addf %185, %188 : vector<128x1xf32>
    %190 = math.rsqrt %189 : vector<128x1xf32>
    %191 = vector.broadcast %190 : vector<128x1xf32> to vector<128x32xf32>
    %192 = arith.mulf %187, %191 : vector<128x32xf32>
    %193 = vector.broadcast %162 : vector<1x32xf32> to vector<128x32xf32>
    %194 = arith.mulf %192, %193 : vector<128x32xf32>
    %195 = vector.broadcast %163 : vector<1x32xf32> to vector<128x32xf32>
    %196 = arith.addf %194, %195 : vector<128x32xf32>
    %cst_58 = arith.constant dense<0.000000e+00> : vector<128x96xf32>
    %197 = tpu.matmul %196, %171, %cst_58 {dimension_numbers = #tpu.dot_dimension_numbers<[1], [0], [0], [1], [0, 0, 1, 1], [], []>} : vector<128x32xf32>, vector<32x96xf32>, vector<128x96xf32> -> vector<128x96xf32>
    %198 = vector.broadcast %164 : vector<1x96xf32> to vector<128x96xf32>
    %199 = arith.addf %197, %198 : vector<128x96xf32>
    %200 = vector.extract_strided_slice %199 {offsets = [0, 0], sizes = [128, 8], strides = [1, 1]} : vector<128x96xf32> to vector<128x8xf32>
    %201 = vector.extract_strided_slice %199 {offsets = [0, 32], sizes = [128, 8], strides = [1, 1]} : vector<128x96xf32> to vector<128x8xf32>
    %202 = vector.extract_strided_slice %199 {offsets = [0, 64], sizes = [128, 8], strides = [1, 1]} : vector<128x96xf32> to vector<128x8xf32>
    "tpu.trace_start"() <{level = 10 : i32, message = "qd,kd->qk"}> : () -> ()
    %cst_59 = arith.constant dense<0.000000e+00> : vector<128x128xf32>
    %203 = tpu.matmul %200, %201, %cst_59 {dimension_numbers = #tpu.dot_dimension_numbers<[1], [1], [0], [0], [0, 0, 1, 0], [], []>} : vector<128x8xf32>, vector<128x8xf32>, vector<128x128xf32> -> vector<128x128xf32>
    "tpu.trace_stop"() : () -> ()
    %cst_60 = arith.constant 0.353553385 : f32
    %204 = vector.broadcast %cst_60 : f32 to vector<128x128xf32>
    %205 = arith.mulf %203, %204 : vector<128x128xf32>
    %206 = arith.addf %205, %160 : vector<128x128xf32>
    %cst_61 = arith.constant dense<0xFF800000> : vector<128xf32>
    %207 = vector.multi_reduction <maximumf>, %206, %cst_61 [1] : vector<128x128xf32> to vector<128xf32>
    %208 = vector.shape_cast %207 : vector<128xf32> to vector<128x1xf32>
    %209 = vector.broadcast %208 : vector<128x1xf32> to vector<128x128xf32>
    %210 = arith.subf %206, %209 : vector<128x128xf32>
    %211 = math.exp %210 : vector<128x128xf32>
    %cst_62 = arith.constant dense<0.000000e+00> : vector<128xf32>
    %212 = vector.multi_reduction <add>, %211, %cst_62 [1] : vector<128x128xf32> to vector<128xf32>
    %213 = vector.shape_cast %212 : vector<128xf32> to vector<128x1xf32>
    %214 = tpu.reciprocal %213 {approx = true} : vector<128x1xf32> -> vector<128x1xf32>
    %215 = vector.broadcast %214 : vector<128x1xf32> to vector<128x128xf32>
    %216 = arith.mulf %211, %215 : vector<128x128xf32>
    %cst_63 = arith.constant dense<0.000000e+00> : vector<128x8xf32>
    %217 = tpu.matmul %216, %202, %cst_63 {dimension_numbers = #tpu.dot_dimension_numbers<[1], [0], [0], [1], [0, 0, 1, 1], [], []>} : vector<128x128xf32>, vector<128x8xf32>, vector<128x8xf32> -> vector<128x8xf32>
    %218 = vector.extract_strided_slice %199 {offsets = [0, 8], sizes = [128, 8], strides = [1, 1]} : vector<128x96xf32> to vector<128x8xf32>
    %219 = vector.extract_strided_slice %199 {offsets = [0, 40], sizes = [128, 8], strides = [1, 1]} : vector<128x96xf32> to vector<128x8xf32>
    %220 = vector.extract_strided_slice %199 {offsets = [0, 72], sizes = [128, 8], strides = [1, 1]} : vector<128x96xf32> to vector<128x8xf32>
    "tpu.trace_start"() <{level = 10 : i32, message = "qd,kd->qk"}> : () -> ()
    %cst_64 = arith.constant dense<0.000000e+00> : vector<128x128xf32>
    %221 = tpu.matmul %218, %219, %cst_64 {dimension_numbers = #tpu.dot_dimension_numbers<[1], [1], [0], [0], [0, 0, 1, 0], [], []>} : vector<128x8xf32>, vector<128x8xf32>, vector<128x128xf32> -> vector<128x128xf32>
    "tpu.trace_stop"() : () -> ()
    %cst_65 = arith.constant 0.353553385 : f32
    %222 = vector.broadcast %cst_65 : f32 to vector<128x128xf32>
    %223 = arith.mulf %221, %222 : vector<128x128xf32>
    %224 = arith.addf %223, %160 : vector<128x128xf32>
    %cst_66 = arith.constant dense<0xFF800000> : vector<128xf32>
    %225 = vector.multi_reduction <maximumf>, %224, %cst_66 [1] : vector<128x128xf32> to vector<128xf32>
    %226 = vector.shape_cast %225 : vector<128xf32> to vector<128x1xf32>
    %227 = vector.broadcast %226 : vector<128x1xf32> to vector<128x128xf32>
    %228 = arith.subf %224, %227 : vector<128x128xf32>
    %229 = math.exp %228 : vector<128x128xf32>
    %cst_67 = arith.constant dense<0.000000e+00> : vector<128xf32>
    %230 = vector.multi_reduction <add>, %229, %cst_67 [1] : vector<128x128xf32> to vector<128xf32>
    %231 = vector.shape_cast %230 : vector<128xf32> to vector<128x1xf32>
    %232 = tpu.reciprocal %231 {approx = true} : vector<128x1xf32> -> vector<128x1xf32>
    %233 = vector.broadcast %232 : vector<128x1xf32> to vector<128x128xf32>
    %234 = arith.mulf %229, %233 : vector<128x128xf32>
    %cst_68 = arith.constant dense<0.000000e+00> : vector<128x8xf32>
    %235 = tpu.matmul %234, %220, %cst_68 {dimension_numbers = #tpu.dot_dimension_numbers<[1], [0], [0], [1], [0, 0, 1, 1], [], []>} : vector<128x128xf32>, vector<128x8xf32>, vector<128x8xf32> -> vector<128x8xf32>
    %236 = vector.extract_strided_slice %199 {offsets = [0, 16], sizes = [128, 8], strides = [1, 1]} : vector<128x96xf32> to vector<128x8xf32>
    %237 = vector.extract_strided_slice %199 {offsets = [0, 48], sizes = [128, 8], strides = [1, 1]} : vector<128x96xf32> to vector<128x8xf32>
    %238 = vector.extract_strided_slice %199 {offsets = [0, 80], sizes = [128, 8], strides = [1, 1]} : vector<128x96xf32> to vector<128x8xf32>
    "tpu.trace_start"() <{level = 10 : i32, message = "qd,kd->qk"}> : () -> ()
    %cst_69 = arith.constant dense<0.000000e+00> : vector<128x128xf32>
    %239 = tpu.matmul %236, %237, %cst_69 {dimension_numbers = #tpu.dot_dimension_numbers<[1], [1], [0], [0], [0, 0, 1, 0], [], []>} : vector<128x8xf32>, vector<128x8xf32>, vector<128x128xf32> -> vector<128x128xf32>
    "tpu.trace_stop"() : () -> ()
    %cst_70 = arith.constant 0.353553385 : f32
    %240 = vector.broadcast %cst_70 : f32 to vector<128x128xf32>
    %241 = arith.mulf %239, %240 : vector<128x128xf32>
    %242 = arith.addf %241, %160 : vector<128x128xf32>
    %cst_71 = arith.constant dense<0xFF800000> : vector<128xf32>
    %243 = vector.multi_reduction <maximumf>, %242, %cst_71 [1] : vector<128x128xf32> to vector<128xf32>
    %244 = vector.shape_cast %243 : vector<128xf32> to vector<128x1xf32>
    %245 = vector.broadcast %244 : vector<128x1xf32> to vector<128x128xf32>
    %246 = arith.subf %242, %245 : vector<128x128xf32>
    %247 = math.exp %246 : vector<128x128xf32>
    %cst_72 = arith.constant dense<0.000000e+00> : vector<128xf32>
    %248 = vector.multi_reduction <add>, %247, %cst_72 [1] : vector<128x128xf32> to vector<128xf32>
    %249 = vector.shape_cast %248 : vector<128xf32> to vector<128x1xf32>
    %250 = tpu.reciprocal %249 {approx = true} : vector<128x1xf32> -> vector<128x1xf32>
    %251 = vector.broadcast %250 : vector<128x1xf32> to vector<128x128xf32>
    %252 = arith.mulf %247, %251 : vector<128x128xf32>
    %cst_73 = arith.constant dense<0.000000e+00> : vector<128x8xf32>
    %253 = tpu.matmul %252, %238, %cst_73 {dimension_numbers = #tpu.dot_dimension_numbers<[1], [0], [0], [1], [0, 0, 1, 1], [], []>} : vector<128x128xf32>, vector<128x8xf32>, vector<128x8xf32> -> vector<128x8xf32>
    %254 = vector.extract_strided_slice %199 {offsets = [0, 24], sizes = [128, 8], strides = [1, 1]} : vector<128x96xf32> to vector<128x8xf32>
    %255 = vector.extract_strided_slice %199 {offsets = [0, 56], sizes = [128, 8], strides = [1, 1]} : vector<128x96xf32> to vector<128x8xf32>
    %256 = vector.extract_strided_slice %199 {offsets = [0, 88], sizes = [128, 8], strides = [1, 1]} : vector<128x96xf32> to vector<128x8xf32>
    "tpu.trace_start"() <{level = 10 : i32, message = "qd,kd->qk"}> : () -> ()
    %cst_74 = arith.constant dense<0.000000e+00> : vector<128x128xf32>
    %257 = tpu.matmul %254, %255, %cst_74 {dimension_numbers = #tpu.dot_dimension_numbers<[1], [1], [0], [0], [0, 0, 1, 0], [], []>} : vector<128x8xf32>, vector<128x8xf32>, vector<128x128xf32> -> vector<128x128xf32>
    "tpu.trace_stop"() : () -> ()
    %cst_75 = arith.constant 0.353553385 : f32
    %258 = vector.broadcast %cst_75 : f32 to vector<128x128xf32>
    %259 = arith.mulf %257, %258 : vector<128x128xf32>
    %260 = arith.addf %259, %160 : vector<128x128xf32>
    %cst_76 = arith.constant dense<0xFF800000> : vector<128xf32>
    %261 = vector.multi_reduction <maximumf>, %260, %cst_76 [1] : vector<128x128xf32> to vector<128xf32>
    %262 = vector.shape_cast %261 : vector<128xf32> to vector<128x1xf32>
    %263 = vector.broadcast %262 : vector<128x1xf32> to vector<128x128xf32>
    %264 = arith.subf %260, %263 : vector<128x128xf32>
    %265 = math.exp %264 : vector<128x128xf32>
    %cst_77 = arith.constant dense<0.000000e+00> : vector<128xf32>
    %266 = vector.multi_reduction <add>, %265, %cst_77 [1] : vector<128x128xf32> to vector<128xf32>
    %267 = vector.shape_cast %266 : vector<128xf32> to vector<128x1xf32>
    %268 = tpu.reciprocal %267 {approx = true} : vector<128x1xf32> -> vector<128x1xf32>
    %269 = vector.broadcast %268 : vector<128x1xf32> to vector<128x128xf32>
    %270 = arith.mulf %265, %269 : vector<128x128xf32>
    %cst_78 = arith.constant dense<0.000000e+00> : vector<128x8xf32>
    %271 = tpu.matmul %270, %256, %cst_78 {dimension_numbers = #tpu.dot_dimension_numbers<[1], [0], [0], [1], [0, 0, 1, 1], [], []>} : vector<128x128xf32>, vector<128x8xf32>, vector<128x8xf32> -> vector<128x8xf32>
    %272 = tpu.concatenate %217, %235, %253, %271 in 1 : vector<128x8xf32>, vector<128x8xf32>, vector<128x8xf32>, vector<128x8xf32> -> vector<128x32xf32>
    %cst_79 = arith.constant dense<0.000000e+00> : vector<128x32xf32>
    %273 = tpu.matmul %272, %172, %cst_79 {dimension_numbers = #tpu.dot_dimension_numbers<[1], [0], [0], [1], [0, 0, 1, 1], [], []>} : vector<128x32xf32>, vector<32x32xf32>, vector<128x32xf32> -> vector<128x32xf32>
    %274 = arith.addf %159, %273 : vector<128x32xf32>
    %275 = vector.broadcast %165 : vector<1x32xf32> to vector<128x32xf32>
    %276 = arith.addf %274, %275 : vector<128x32xf32>
    %cst_80 = arith.constant dense<0.000000e+00> : vector<128xf32>
    %277 = vector.multi_reduction <add>, %276, %cst_80 [1] : vector<128x32xf32> to vector<128xf32>
    %278 = vector.shape_cast %277 : vector<128xf32> to vector<128x1xf32>
    %cst_81 = arith.constant 3.200000e+01 : f32
    %279 = vector.broadcast %cst_81 : f32 to vector<128x1xf32>
    %280 = arith.divf %278, %279 : vector<128x1xf32>
    %281 = vector.broadcast %280 : vector<128x1xf32> to vector<128x32xf32>
    %282 = arith.subf %276, %281 : vector<128x32xf32>
    %283 = arith.mulf %282, %282 : vector<128x32xf32>
    %cst_82 = arith.constant dense<0.000000e+00> : vector<128xf32>
    %284 = vector.multi_reduction <add>, %283, %cst_82 [1] : vector<128x32xf32> to vector<128xf32>
    %285 = vector.shape_cast %284 : vector<128xf32> to vector<128x1xf32>
    %cst_83 = arith.constant 3.200000e+01 : f32
    %286 = vector.broadcast %cst_83 : f32 to vector<128x1xf32>
    %287 = arith.divf %285, %286 : vector<128x1xf32>
    %288 = vector.broadcast %280 : vector<128x1xf32> to vector<128x32xf32>
    %289 = arith.subf %276, %288 : vector<128x32xf32>
    %cst_84 = arith.constant 9.99999974E-6 : f32
    %290 = vector.broadcast %cst_84 : f32 to vector<128x1xf32>
    %291 = arith.addf %287, %290 : vector<128x1xf32>
    %292 = math.rsqrt %291 : vector<128x1xf32>
    %293 = vector.broadcast %292 : vector<128x1xf32> to vector<128x32xf32>
    %294 = arith.mulf %289, %293 : vector<128x32xf32>
    %295 = vector.broadcast %166 : vector<1x32xf32> to vector<128x32xf32>
    %296 = arith.mulf %294, %295 : vector<128x32xf32>
    %297 = vector.broadcast %167 : vector<1x32xf32> to vector<128x32xf32>
    %298 = arith.addf %296, %297 : vector<128x32xf32>
    %cst_85 = arith.constant dense<0.000000e+00> : vector<128x128xf32>
    %299 = tpu.matmul %298, %173, %cst_85 {dimension_numbers = #tpu.dot_dimension_numbers<[1], [0], [0], [1], [0, 0, 1, 1], [], []>} : vector<128x32xf32>, vector<32x128xf32>, vector<128x128xf32> -> vector<128x128xf32>
    %300 = vector.broadcast %168 : vector<1x128xf32> to vector<128x128xf32>
    %301 = arith.addf %299, %300 : vector<128x128xf32>
    %cst_86 = arith.constant 5.000000e-01 : f32
    %302 = vector.broadcast %cst_86 : f32 to vector<128x128xf32>
    %303 = arith.mulf %302, %301 : vector<128x128xf32>
    %cst_87 = arith.constant 4.471500e-02 : f32
    %304 = vector.broadcast %cst_87 : f32 to vector<128x128xf32>
    %305 = arith.mulf %304, %301 : vector<128x128xf32>
    %306 = arith.mulf %305, %301 : vector<128x128xf32>
    %307 = arith.mulf %306, %301 : vector<128x128xf32>
    %308 = arith.addf %301, %307 : vector<128x128xf32>
    %cst_88 = arith.constant 0.797884583 : f32
    %309 = vector.broadcast %cst_88 : f32 to vector<128x128xf32>
    %310 = arith.mulf %309, %308 : vector<128x128xf32>
    %311 = math.tanh %310 : vector<128x128xf32>
    %cst_89 = arith.constant 1.000000e+00 : f32
    %312 = vector.broadcast %cst_89 : f32 to vector<128x128xf32>
    %313 = arith.addf %312, %311 : vector<128x128xf32>
    %314 = arith.mulf %303, %313 : vector<128x128xf32>
    %cst_90 = arith.constant dense<0.000000e+00> : vector<128x32xf32>
    %315 = tpu.matmul %314, %174, %cst_90 {dimension_numbers = #tpu.dot_dimension_numbers<[1], [0], [0], [1], [0, 0, 1, 1], [], []>} : vector<128x128xf32>, vector<128x32xf32>, vector<128x32xf32> -> vector<128x32xf32>
    %316 = arith.addf %276, %315 : vector<128x32xf32>
    %317 = vector.broadcast %169 : vector<1x32xf32> to vector<128x32xf32>
    %318 = arith.addf %316, %317 : vector<128x32xf32>
    %c0_91 = arith.constant 0 : index
    %c0_92 = arith.constant 0 : index
    %319 = vector.load %arg8[%c0_91, %c0_92] : memref<128x32xf32, #tpu.memory_space<vmem>>, vector<128x32xf32>
    tpu.vector_store %arg8[%c0_91, %c0_92], %318 {strides = array<i32>} : memref<128x32xf32, #tpu.memory_space<vmem>>, vector<128x32xf32>,
    return
  }
  func.func @transform_0(%arg0: i32) -> (i32, i32) {
    %c0_i32 = arith.constant 0 : i32
    %c0_i32_0 = arith.constant 0 : i32
    return %arg0, %c0_i32 : i32, i32
  }
  func.func @transform_1(%arg0: i32) -> (i32, i32) {
    %c0_i32 = arith.constant 0 : i32
    %c0_i32_0 = arith.constant 0 : i32
    %c0_i32_1 = arith.constant 0 : i32
    return %c0_i32, %c0_i32_0 : i32, i32
  }
  func.func @transform_2(%arg0: i32) -> (i32, i32) {
    %c0_i32 = arith.constant 0 : i32
    %c0_i32_0 = arith.constant 0 : i32
    %c0_i32_1 = arith.constant 0 : i32
    return %c0_i32, %c0_i32_0 : i32, i32
  }
  func.func @transform_3(%arg0: i32) -> (i32, i32) {
    %c0_i32 = arith.constant 0 : i32
    %c0_i32_0 = arith.constant 0 : i32
    %c0_i32_1 = arith.constant 0 : i32
    return %c0_i32, %c0_i32_0 : i32, i32
  }
  func.func @transform_4(%arg0: i32) -> (i32, i32) {
    %c0_i32 = arith.constant 0 : i32
    %c0_i32_0 = arith.constant 0 : i32
    %c0_i32_1 = arith.constant 0 : i32
    return %c0_i32, %c0_i32_0 : i32, i32
  }
  func.func @transform_5(%arg0: i32) -> (i32, i32) {
    %c0_i32 = arith.constant 0 : i32
    %c0_i32_0 = arith.constant 0 : i32
    %c0_i32_1 = arith.constant 0 : i32
    return %c0_i32, %c0_i32_0 : i32, i32
  }
  func.func @transform_6(%arg0: i32) -> (i32, i32) {
    %c0_i32 = arith.constant 0 : i32
    %c0_i32_0 = arith.constant 0 : i32
    %c0_i32_1 = arith.constant 0 : i32
    return %c0_i32, %c0_i32_0 : i32, i32
  }
  func.func @transform_7(%arg0: i32) -> (i32, i32) {
    %c0_i32 = arith.constant 0 : i32
    %c0_i32_0 = arith.constant 0 : i32
    return %arg0, %c0_i32 : i32, i32
  }
}

</mosaic_0001>

<llo_original>
// kernel: _lambda_.1
$region0: #{_lambda_.1}
  #allocation0 [shape = 'u32[]', space=smem, size = 0x4, offset = 0x4, fixed_abs, tag = 'smem constant byte address 0x4 - core index']
  #allocation1 [shape = 'u32[144,128]{1,0:T(1,128)}', space=vmem, size = 0x12000, scoped, tag = 'internal scratch']
  %s0 = inlined_call_operand.hbm [shape: f32[256,32], index: 0, kind: input, shape index: {}]
  %s1 = inlined_call_operand.hbm [shape: f32[128,128], index: 1, kind: input, shape index: {}]
  %s2 = inlined_call_operand.hbm [shape: f32[128,128], index: 2, kind: input, shape index: {}]
  %s3 = inlined_call_operand.hbm [shape: f32[160,256], index: 3, kind: input, shape index: {}]
  %s4 = inlined_call_operand.vmem [shape: f32[8,128], index: 4, kind: input, shape index: {}]
  %s5 = inlined_call_operand.hbm [shape: f32[160,256], index: 5, kind: input, shape index: {}]
  %s6 = inlined_call_operand.vmem [shape: f32[8,128], index: 6, kind: input, shape index: {}]
  %s7 = inlined_call_operand.hbm [shape: f32[256,32], index: 7, kind: output, shape index: {}]
  %s8 = sld [smem:[#allocation0]]
  $region81: #{_lambda_.1} parent=0
    _
  %s10 = ssub.s32 1, %s8
  %s11 = scalar_select 0, %s10, %s8
  $region1: #{_lambda_.1} parent=0
    #allocation2 [shape = 'u8[131072]{0}', space=vmem, size = 0x20000, scoped, tag = 'input window, operand 0']
    #allocation3 [shape = 's32[2]{0}', space=sflag, size = 0x8, scoped, tag = 'scoped memory for _lambda_.1']
    #allocation4 [shape = 's32[2]{0}', space=sflag, size = 0x8, scoped, tag = 'scoped memory for _lambda_.1']
    #allocation5 [shape = 'u8[65536]{0}', space=vmem, size = 0x10000, scoped, tag = 'input window, operand 1, single buffered']
    #allocation6 [shape = 's32[1]{0}', space=sflag, size = 0x4, scoped, tag = 'scoped memory for _lambda_.1']
    #allocation7 [shape = 'u8[65536]{0}', space=vmem, size = 0x10000, scoped, tag = 'input window, operand 2, single buffered']
    #allocation8 [shape = 'u8[163840]{0}', space=vmem, size = 0x28000, scoped, tag = 'input window, operand 3, single buffered']
    #allocation9 [shape = 's32[1]{0}', space=sflag, size = 0x4, scoped, tag = 'scoped memory for _lambda_.1']
    #allocation10 [shape = 'u8[163840]{0}', space=vmem, size = 0x28000, scoped, tag = 'input window, operand 5, single buffered']
    #allocation11 [shape = 'u8[131072]{0}', space=vmem, size = 0x20000, scoped, tag = 'output window, operand 0']
    %12 = vsyncpa [#allocation3], 0
    %s13 = scalar_lea.sflag [#allocation3], 1
    %14 = vsyncpa %s13, 0
    %15 = vsyncpa [#allocation6], 0
    %16 = vsyncpa [#allocation9], 0
    %17 = vsyncpa [#allocation4], 0
    %s18 = scalar_lea.sflag [#allocation4], 1
    %19 = vsyncpa %s18, 0
    loop: start=0, step=1, limit=4
    $region2: #{_lambda_.1} parent=1 // loop_pre_header
      _
    $region3: #{_lambda_.1} parent=1 // loop_header
      %s21 = sphi 0, %s25
      %p22 = scmp.ge.s32.totalorder %s21, 4
      %s31 = sphi 0, %s33
      %s34 = sphi 0, %s31
      %s35 = sphi 0, %s34
      %s51 = sphi 0, %s35
      %s55 = sphi 0, %s55
      %s57 = sphi 0, %s55
      %s58 = sphi 0, %s57
      %s72 = sphi 0, %s58
      %s76 = sphi 0, %s76
      %s78 = sphi 0, %s76
      %s79 = sphi 0, %s78
      %s93 = sphi 0, %s79
      %s97 = sphi 0, %s97
      %s99 = sphi 0, %s97
      %s100 = sphi 0, %s99
      %s114 = sphi 0, %s100
      %s118 = sphi 0, %s118
      %s120 = sphi 0, %s118
      %s121 = sphi 0, %s120
      %s135 = sphi 0, %s121
      %s139 = sphi 0, %s139
      %s141 = sphi 0, %s139
      %s142 = sphi 0, %s141
      %s156 = sphi 0, %s142
      %s160 = sphi 0, %s160
      %s162 = sphi 0, %s160
      %s163 = sphi 0, %s162
      %s177 = sphi 0, %s163
      %s183 = sphi 0, %s185
      %s186 = sphi 0, %s183
      %s187 = sphi 0, %s186
      %s203 = sphi 0, %s187
    $region4: #{_lambda_.1} parent=1 // loop_header_branch
      %24 = sbr.rel (%p22) target = $region8
    $region5: #{_lambda_.1} parent=1 // loop_body
      %s26 = ssub.s32 %s21, 1
      %s27 = ssub.s32 %s21, 2
      %s28 = sadd.s32 %s21, 1
      %s29 = ssub.s32 %s21, %s28
      %p30 = scmp.eq.s32.totalorder %s29, 0
      %s32 = sadd.s32 %s31, 1
      %s33 = scalar_select %p30, %s31, %s32
      %p36 = pneg %p30
      %p37 = scmp.eq.s32.totalorder %s21, 1
      %p38 = por %p36, %p37
      %p39 = scmp.ne.s32.totalorder %s31, %s34
      %p40 = scmp.eq.s32.totalorder %s21, 0
      %p41 = por %p39, %p40
      %p42 = scmp.ne.s32.totalorder %s31, %s34
      %p43 = scmp.eq.s32.totalorder %s26, 1
      %p44 = por %p42, %p43
      %p45 = scmp.ne.s32.totalorder %s34, %s35
      %p46 = scmp.eq.s32.totalorder %s26, 0
      %p47 = por %p45, %p46
      %p48 = scmp.ne.s32.totalorder %s34, %s35
      %p49 = scmp.eq.s32.totalorder %s27, 1
      %p50 = por %p48, %p49
      %p52 = scmp.ne.s32.totalorder %s35, %s51
      %p53 = scmp.eq.s32.totalorder %s27, 0
      %p54 = por %p52, %p53
      %s56 = sadd.s32 %s55, 1
      %p59 = scmp.eq.s32.totalorder %s21, 1
      %p60 = scmp.ne.s32.totalorder %s55, %s57
      %p61 = scmp.eq.s32.totalorder %s21, 0
      %p62 = por %p60, %p61
      %p63 = scmp.ne.s32.totalorder %s55, %s57
      %p64 = scmp.eq.s32.totalorder %s26, 1
      %p65 = por %p63, %p64
      %p66 = scmp.ne.s32.totalorder %s57, %s58
      %p67 = scmp.eq.s32.totalorder %s26, 0
      %p68 = por %p66, %p67
      %p69 = scmp.ne.s32.totalorder %s57, %s58
      %p70 = scmp.eq.s32.totalorder %s27, 1
      %p71 = por %p69, %p70
      %p73 = scmp.ne.s32.totalorder %s58, %s72
      %p74 = scmp.eq.s32.totalorder %s27, 0
      %p75 = por %p73, %p74
      %s77 = sadd.s32 %s76, 1
      %p80 = scmp.eq.s32.totalorder %s21, 1
      %p81 = scmp.ne.s32.totalorder %s76, %s78
      %p82 = scmp.eq.s32.totalorder %s21, 0
      %p83 = por %p81, %p82
      %p84 = scmp.ne.s32.totalorder %s76, %s78
      %p85 = scmp.eq.s32.totalorder %s26, 1
      %p86 = por %p84, %p85
      %p87 = scmp.ne.s32.totalorder %s78, %s79
      %p88 = scmp.eq.s32.totalorder %s26, 0
      %p89 = por %p87, %p88
      %p90 = scmp.ne.s32.totalorder %s78, %s79
      %p91 = scmp.eq.s32.totalorder %s27, 1
      %p92 = por %p90, %p91
      %p94 = scmp.ne.s32.totalorder %s79, %s93
      %p95 = scmp.eq.s32.totalorder %s27, 0
      %p96 = por %p94, %p95
      %s98 = sadd.s32 %s97, 1
      %p101 = scmp.eq.s32.totalorder %s21, 1
      %p102 = scmp.ne.s32.totalorder %s97, %s99
      %p103 = scmp.eq.s32.totalorder %s21, 0
      %p104 = por %p102, %p103
      %p105 = scmp.ne.s32.totalorder %s97, %s99
      %p106 = scmp.eq.s32.totalorder %s26, 1
      %p107 = por %p105, %p106
      %p108 = scmp.ne.s32.totalorder %s99, %s100
      %p109 = scmp.eq.s32.totalorder %s26, 0
      %p110 = por %p108, %p109
      %p111 = scmp.ne.s32.totalorder %s99, %s100
      %p112 = scmp.eq.s32.totalorder %s27, 1
      %p113 = por %p111, %p112
      %p115 = scmp.ne.s32.totalorder %s100, %s114
      %p116 = scmp.eq.s32.totalorder %s27, 0
      %p117 = por %p115, %p116
      %s119 = sadd.s32 %s118, 1
      %p122 = scmp.eq.s32.totalorder %s21, 1
      %p123 = scmp.ne.s32.totalorder %s118, %s120
      %p124 = scmp.eq.s32.totalorder %s21, 0
      %p125 = por %p123, %p124
      %p126 = scmp.ne.s32.totalorder %s118, %s120
      %p127 = scmp.eq.s32.totalorder %s26, 1
      %p128 = por %p126, %p127
      %p129 = scmp.ne.s32.totalorder %s120, %s121
      %p130 = scmp.eq.s32.totalorder %s26, 0
      %p131 = por %p129, %p130
      %p132 = scmp.ne.s32.totalorder %s120, %s121
      %p133 = scmp.eq.s32.totalorder %s27, 1
      %p134 = por %p132, %p133
      %p136 = scmp.ne.s32.totalorder %s121, %s135
      %p137 = scmp.eq.s32.totalorder %s27, 0
      %p138 = por %p136, %p137
      %s140 = sadd.s32 %s139, 1
      %p143 = scmp.eq.s32.totalorder %s21, 1
      %p144 = scmp.ne.s32.totalorder %s139, %s141
      %p145 = scmp.eq.s32.totalorder %s21, 0
      %p146 = por %p144, %p145
      %p147 = scmp.ne.s32.totalorder %s139, %s141
      %p148 = scmp.eq.s32.totalorder %s26, 1
      %p149 = por %p147, %p148
      %p150 = scmp.ne.s32.totalorder %s141, %s142
      %p151 = scmp.eq.s32.totalorder %s26, 0
      %p152 = por %p150, %p151
      %p153 = scmp.ne.s32.totalorder %s141, %s142
      %p154 = scmp.eq.s32.totalorder %s27, 1
      %p155 = por %p153, %p154
      %p157 = scmp.ne.s32.totalorder %s142, %s156
      %p158 = scmp.eq.s32.totalorder %s27, 0
      %p159 = por %p157, %p158
      %s161 = sadd.s32 %s160, 1
      %p164 = scmp.eq.s32.totalorder %s21, 1
      %p165 = scmp.ne.s32.totalorder %s160, %s162
      %p166 = scmp.eq.s32.totalorder %s21, 0
      %p167 = por %p165, %p166
      %p168 = scmp.ne.s32.totalorder %s160, %s162
      %p169 = scmp.eq.s32.totalorder %s26, 1
      %p170 = por %p168, %p169
      %p171 = scmp.ne.s32.totalorder %s162, %s163
      %p172 = scmp.eq.s32.totalorder %s26, 0
      %p173 = por %p171, %p172
      %p174 = scmp.ne.s32.totalorder %s162, %s163
      %p175 = scmp.eq.s32.totalorder %s27, 1
      %p176 = por %p174, %p175
      %p178 = scmp.ne.s32.totalorder %s163, %s177
      %p179 = scmp.eq.s32.totalorder %s27, 0
      %p180 = por %p178, %p179
      %s181 = ssub.s32 %s21, %s28
      %p182 = scmp.eq.s32.totalorder %s181, 0
      %s184 = sadd.s32 %s183, 1
      %s185 = scalar_select %p182, %s183, %s184
      %p188 = pneg %p182
      %p189 = scmp.eq.s32.totalorder %s21, 1
      %p190 = por %p188, %p189
      %p191 = scmp.ne.s32.totalorder %s183, %s186
      %p192 = scmp.eq.s32.totalorder %s21, 0
      %p193 = por %p191, %p192
      %p194 = scmp.ne.s32.totalorder %s183, %s186
      %p195 = scmp.eq.s32.totalorder %s26, 1
      %p196 = por %p194, %p195
      %p197 = scmp.ne.s32.totalorder %s186, %s187
      %p198 = scmp.eq.s32.totalorder %s26, 0
      %p199 = por %p197, %p198
      %p200 = scmp.ne.s32.totalorder %s186, %s187
      %p201 = scmp.eq.s32.totalorder %s27, 1
      %p202 = por %p200, %p201
      %p204 = scmp.ne.s32.totalorder %s187, %s203
      %p205 = scmp.eq.s32.totalorder %s27, 0
      %p206 = por %p204, %p205
      %p207 = scmp.le.s32.totalorder 1, %s21
      %p208 = scmp.lt.s32.totalorder %s21, 3
      %p209 = pnand %p207, %p208
      %p210 = pneg %p209
      // Predicated region
      $region9: #{_lambda_.1} parent=5 // pred_check
        _
      $region10: #{_lambda_.1} parent=5 // pred_check_branch
        %212 = sbr.rel (%p209) target = $region12
      $region11: #{_lambda_.1} parent=5 // pred_region
        %s213 = ssub.s32 %s21, 1
        // Predicated region
        $region13: #{_lambda_.1} parent=11 // pred_check
          %p214 = pneg %p68
        $region14: #{_lambda_.1} parent=11 // pred_check_branch
          %216 = sbr.rel (%p214) target = $region16
        $region15: #{_lambda_.1} parent=11 // pred_region
          %s218 = ssub.s32 2048, 2048
          %219 = vsyncadd [#allocation6], %s218
          %s220 = sshll.u32 [#allocation5], 4
          %s221 = int_to_ptr.vmem [resolvable:$true] %s220
          %226 = dma.hbm_to_vmem [thread:$0]  %s1, 2048, %s221, [#allocation6], 128, 128, 8
        $region16: #{_lambda_.1} parent=11 // pred_fallthru
          _
        // Predicated region
        $region17: #{_lambda_.1} parent=11 // pred_check
          %p227 = pneg %p89
        $region18: #{_lambda_.1} parent=11 // pred_check_branch
          %229 = sbr.rel (%p227) target = $region20
        $region19: #{_lambda_.1} parent=11 // pred_region
          %s231 = ssub.s32 2048, 2048
          %232 = vsyncadd [#allocation6], %s231
          %s233 = sshll.u32 [#allocation7], 4
          %s234 = int_to_ptr.vmem [resolvable:$true] %s233
          %239 = dma.hbm_to_vmem [thread:$0]  %s2, 2048, %s234, [#allocation6], 128, 128, 8
        $region20: #{_lambda_.1} parent=11 // pred_fallthru
          _
        // Predicated region
        $region21: #{_lambda_.1} parent=11 // pred_check
          %p240 = pneg %p110
        $region22: #{_lambda_.1} parent=11 // pred_check_branch
          %242 = sbr.rel (%p240) target = $region24
        $region23: #{_lambda_.1} parent=11 // pred_region
          %s244 = ssub.s32 5120, 5120
          %245 = vsyncadd [#allocation9], %s244
          %s246 = sshll.u32 [#allocation8], 4
          %s247 = int_to_ptr.vmem [resolvable:$true] %s246
          %252 = dma.hbm_to_vmem [thread:$0]  %s3, 5120, %s247, [#allocation9], 256, 256, 16
        $region24: #{_lambda_.1} parent=11 // pred_fallthru
          _
        // Predicated region
        $region25: #{_lambda_.1} parent=11 // pred_check
          %p253 = pneg %p131
        $region26: #{_lambda_.1} parent=11 // pred_check_branch
          %255 = sbr.rel (%p253) target = $region28
        $region27: #{_lambda_.1} parent=11 // pred_region
          _
        $region28: #{_lambda_.1} parent=11 // pred_fallthru
          _
        // Predicated region
        $region29: #{_lambda_.1} parent=11 // pred_check
          %p256 = pneg %p152
        $region30: #{_lambda_.1} parent=11 // pred_check_branch
          %258 = sbr.rel (%p256) target = $region32
        $region31: #{_lambda_.1} parent=11 // pred_region
          %s260 = ssub.s32 5120, 5120
          %261 = vsyncadd [#allocation9], %s260
          %s262 = sshll.u32 [#allocation10], 4
          %s263 = int_to_ptr.vmem [resolvable:$true] %s262
          %268 = dma.hbm_to_vmem [thread:$0]  %s5, 5120, %s263, [#allocation9], 256, 256, 16
        $region32: #{_lambda_.1} parent=11 // pred_fallthru
          _
        // Predicated region
        $region33: #{_lambda_.1} parent=11 // pred_check
          %p269 = pneg %p173
        $region34: #{_lambda_.1} parent=11 // pred_check_branch
          %271 = sbr.rel (%p269) target = $region36
        $region35: #{_lambda_.1} parent=11 // pred_region
          _
        $region36: #{_lambda_.1} parent=11 // pred_fallthru
          _
      $region12: #{_lambda_.1} parent=5 // pred_fallthru
        _
      %p272 = scmp.lt.s32.totalorder %s21, 2
      // Predicated region
      $region37: #{_lambda_.1} parent=5 // pred_check
        %p273 = pneg %p272
      $region38: #{_lambda_.1} parent=5 // pred_check_branch
        %275 = sbr.rel (%p273) target = $region40
      $region39: #{_lambda_.1} parent=5 // pred_region
        // Predicated region
        $region41: #{_lambda_.1} parent=39 // pred_check
          %p276 = pneg %p41
        $region42: #{_lambda_.1} parent=39 // pred_check_branch
          %278 = sbr.rel (%p276) target = $region44
        $region43: #{_lambda_.1} parent=39 // pred_region
          %s279 = sand.u32 %s31, 1
          %s280 = scalar_lea.sflag [#allocation3], %s279
          %s281 = sand.u32 %s31, 1
          %s282 = smul.addr %s281, 128
          %s283 = scalar_lea.vmem [#allocation2], %s282
          %s284 = smul.u32 16, %s21
          %s286 = ssub.s32 2048, 2048
          %287 = vsyncadd %s280, %s286
          %s288 = smul.addr %s284, 128
          %s289 = scalar_lea.hbm %s0, %s288
          %s290 = sshll.u32 %s283, 4
          %s291 = int_to_ptr.vmem [resolvable:$true] %s290
          %296 = dma.hbm_to_vmem [thread:$0]  %s289, 2048, %s291, %s280, 128, 128, 8
        $region44: #{_lambda_.1} parent=39 // pred_fallthru
          _
      $region40: #{_lambda_.1} parent=5 // pred_fallthru
        _
      %p297 = scmp.le.s32.totalorder 1, %s21
      %p298 = scmp.lt.s32.totalorder %s21, 3
      %p299 = pnand %p297, %p298
      %p300 = pneg %p299
      // Predicated region
      $region45: #{_lambda_.1} parent=5 // pred_check
        _
      $region46: #{_lambda_.1} parent=5 // pred_check_branch
        %302 = sbr.rel (%p299) target = $region48
      $region47: #{_lambda_.1} parent=5 // pred_region
        %s303 = ssub.s32 %s21, 1
        %s304 = sand.u32 %s34, 1
        %s305 = scalar_lea.sflag [#allocation3], %s304
        %s306 = sand.u32 %s34, 1
        %s307 = smul.addr %s306, 128
        %s308 = scalar_lea.vmem [#allocation2], %s307
        // Predicated region
        $region49: #{_lambda_.1} parent=47 // pred_check
          %p309 = pneg %p47
        $region50: #{_lambda_.1} parent=47 // pred_check_branch
          %311 = sbr.rel (%p309) target = $region52
        $region51: #{_lambda_.1} parent=47 // pred_region
          %312 = dma.done %s305, 2048
        $region52: #{_lambda_.1} parent=47 // pred_fallthru
          _
        // Predicated region
        $region53: #{_lambda_.1} parent=47 // pred_check
          %p313 = pneg %p68
        $region54: #{_lambda_.1} parent=47 // pred_check_branch
          %315 = sbr.rel (%p313) target = $region56
        $region55: #{_lambda_.1} parent=47 // pred_region
          %316 = dma.done [#allocation6], 2048
        $region56: #{_lambda_.1} parent=47 // pred_fallthru
          _
        // Predicated region
        $region57: #{_lambda_.1} parent=47 // pred_check
          %p317 = pneg %p89
        $region58: #{_lambda_.1} parent=47 // pred_check_branch
          %319 = sbr.rel (%p317) target = $region60
        $region59: #{_lambda_.1} parent=47 // pred_region
          %320 = dma.done [#allocation6], 2048
        $region60: #{_lambda_.1} parent=47 // pred_fallthru
          _
        // Predicated region
        $region61: #{_lambda_.1} parent=47 // pred_check
          %p321 = pneg %p110
        $region62: #{_lambda_.1} parent=47 // pred_check_branch
          %323 = sbr.rel (%p321) target = $region64
        $region63: #{_lambda_.1} parent=47 // pred_region
          %324 = dma.done [#allocation9], 5120
        $region64: #{_lambda_.1} parent=47 // pred_fallthru
          _
        // Predicated region
        $region65: #{_lambda_.1} parent=47 // pred_check
          %p325 = pneg %p152
        $region66: #{_lambda_.1} parent=47 // pred_check_branch
          %327 = sbr.rel (%p325) target = $region68
        $region67: #{_lambda_.1} parent=47 // pred_region
          %328 = dma.done [#allocation9], 5120
        $region68: #{_lambda_.1} parent=47 // pred_fallthru
          _
        %s329 = sand.u32 %s34, 1
        %s330 = scalar_lea.sflag [#allocation3], %s329
        %s331 = sand.u32 %s34, 1
        %s332 = smul.addr %s331, 128
        %s333 = scalar_lea.vmem [#allocation2], %s332
        %p334 = pneg %p47
        %p335 = pneg %p44
        %p336 = pneg %p68
        %p337 = pneg %p65
        %p338 = pneg %p89
        %p339 = pneg %p86
        %p340 = pneg %p110
        %p341 = pneg %p107
        %p342 = pneg %p131
        %p343 = pneg %p128
        %p344 = pneg %p152
        %p345 = pneg %p149
        %p346 = pneg %p173
        %p347 = pneg %p170
        %p348 = pneg %p199
        %p349 = pneg %p196
        %s350 = sand.u32 %s186, 1
        %s351 = scalar_lea.sflag [#allocation4], %s350
        %s352 = sand.u32 %s186, 1
        %s353 = smul.addr %s352, 128
        %s354 = scalar_lea.vmem [#allocation11], %s353
        %s355 = smul.u32 16, %s26
        %s356 = smul.u32 16, %s26
        %v357 = vld [vmem:[%s308] sm:$0xff]
        %v358 = vld [vmem:[%s308 + $0x8] sm:$0xff]
        %v359 = vld [vmem:[%s308 + $0x10] sm:$0xff]
        %v360 = vld [vmem:[%s308 + $0x18] sm:$0xff]
        %v361 = vld [vmem:[%s308 + $0x20] sm:$0xff]
        %v362 = vld [vmem:[%s308 + $0x28] sm:$0xff]
        %v363 = vld [vmem:[%s308 + $0x30] sm:$0xff]
        %v364 = vld [vmem:[%s308 + $0x38] sm:$0xff]
        %v365 = vld [vmem:[%s308 + $0x40] sm:$0xff]
        %v366 = vld [vmem:[%s308 + $0x48] sm:$0xff]
        %v367 = vld [vmem:[%s308 + $0x50] sm:$0xff]
        %v368 = vld [vmem:[%s308 + $0x58] sm:$0xff]
        %v369 = vld [vmem:[%s308 + $0x60] sm:$0xff]
        %v370 = vld [vmem:[%s308 + $0x68] sm:$0xff]
        %v371 = vld [vmem:[%s308 + $0x70] sm:$0xff]
        %v372 = vld [vmem:[%s308 + $0x78] sm:$0xff]
        %v373 = vld [vmem:[#allocation5] sm:$0xff]
        %v374 = vld [vmem:[#allocation5 + $0x8] sm:$0xff]
        %v375 = vld [vmem:[#allocation5 + $0x10] sm:$0xff]
        %v376 = vld [vmem:[#allocation5 + $0x18] sm:$0xff]
        %v377 = vld [vmem:[#allocation5 + $0x20] sm:$0xff]
        %v378 = vld [vmem:[#allocation5 + $0x28] sm:$0xff]
        %v379 = vld [vmem:[#allocation5 + $0x30] sm:$0xff]
        %v380 = vld [vmem:[#allocation5 + $0x38] sm:$0xff]
        %v381 = vld [vmem:[#allocation5 + $0x40] sm:$0xff]
        %v382 = vld [vmem:[#allocation5 + $0x48] sm:$0xff]
        %v383 = vld [vmem:[#allocation5 + $0x50] sm:$0xff]
        %v384 = vld [vmem:[#allocation5 + $0x58] sm:$0xff]
        %v385 = vld [vmem:[#allocation5 + $0x60] sm:$0xff]
        %v386 = vld [vmem:[#allocation5 + $0x68] sm:$0xff]
        %v387 = vld [vmem:[#allocation5 + $0x70] sm:$0xff]
        %v388 = vld [vmem:[#allocation5 + $0x78] sm:$0xff]
        %v389 = vld [vmem:[%s4] sm:$0xff]
        %v390 = vld [vmem:[#allocation8] sm:$0xff]
        %v391 = vld [vmem:[#allocation8 + $0x8] sm:$0xff]
        %v392 = vld [vmem:[#allocation8 + $0x10] sm:$0xff]
        %v393 = vld [vmem:[#allocation8 + $0x18] sm:$0xff]
        %v394 = vld [vmem:[#allocation8 + $0x20] sm:$0xff]
        %v395 = vld [vmem:[#allocation8 + $0x28] sm:$0xff]
        %v396 = vld [vmem:[#allocation8 + $0x30] sm:$0xff]
        %v397 = vld [vmem:[#allocation8 + $0x38] sm:$0xff]
        %v398 = vld [vmem:[#allocation8 + $0x40] sm:$0xff]
        %v399 = vld [vmem:[#allocation8 + $0x50] sm:$0xff]
        %v400 = vld [vmem:[#allocation8 + $0x60] sm:$0xff]
        %v401 = vld [vmem:[#allocation8 + $0x70] sm:$0xff]
        %v402 = vld [vmem:[#allocation8 + $0x80] sm:$0xff]
        %v403 = vld [vmem:[#allocation8 + $0x90] sm:$0xff]
        %v404 = vld [vmem:[#allocation8 + $0xa0] sm:$0xff]
        %v405 = vld [vmem:[#allocation8 + $0xb0] sm:$0xff]
        %v406 = vld [vmem:[#allocation8 + $0xc0] sm:$0xff]
        %v407 = vld [vmem:[#allocation8 + $0xd0] sm:$0xff]
        %v408 = vld [vmem:[#allocation8 + $0xe0] sm:$0xff]
        %v409 = vld [vmem:[#allocation8 + $0xf0] sm:$0xff]
        %v410 = vld [vmem:[#allocation8 + $0x100] sm:$0xff]
        %v411 = vld [vmem:[#allocation8 + $0x110] sm:$0xff]
        %v412 = vld [vmem:[#allocation8 + $0x120] sm:$0xff]
        %v413 = vld [vmem:[#allocation8 + $0x130] sm:$0xff]
        %vm414 = vcmask 261120
        %v415 = vsel %vm414, %v357, 0.0
        %416 = vadd.xlane.f32.xlu0 %v415
        %v417 = vpop.xlane.xlu0 %416
        %v418 = vsel %vm414, %v358, 0.0
        %419 = vadd.xlane.f32.xlu0 %v418
        %v420 = vpop.xlane.xlu0 %419
        %v421 = vsel %vm414, %v359, 0.0
        %422 = vadd.xlane.f32.xlu0 %v421
        %v423 = vpop.xlane.xlu0 %422
        %v424 = vsel %vm414, %v360, 0.0
        %425 = vadd.xlane.f32.xlu0 %v424
        %v426 = vpop.xlane.xlu0 %425
        %v427 = vsel %vm414, %v361, 0.0
        %428 = vadd.xlane.f32.xlu0 %v427
        %v429 = vpop.xlane.xlu0 %428
        %v430 = vsel %vm414, %v362, 0.0
        %431 = vadd.xlane.f32.xlu0 %v430
        %v432 = vpop.xlane.xlu0 %431
        %v433 = vsel %vm414, %v363, 0.0
        %434 = vadd.xlane.f32.xlu0 %v433
        %v435 = vpop.xlane.xlu0 %434
        %v436 = vsel %vm414, %v364, 0.0
        %437 = vadd.xlane.f32.xlu0 %v436
        %v438 = vpop.xlane.xlu0 %437
        %v439 = vsel %vm414, %v365, 0.0
        %440 = vadd.xlane.f32.xlu0 %v439
        %v441 = vpop.xlane.xlu0 %440
        %v442 = vsel %vm414, %v366, 0.0
        %443 = vadd.xlane.f32.xlu0 %v442
        %v444 = vpop.xlane.xlu0 %443
        %v445 = vsel %vm414, %v367, 0.0
        %446 = vadd.xlane.f32.xlu0 %v445
        %v447 = vpop.xlane.xlu0 %446
        %v448 = vsel %vm414, %v368, 0.0
        %449 = vadd.xlane.f32.xlu0 %v448
        %v450 = vpop.xlane.xlu0 %449
        %v451 = vsel %vm414, %v369, 0.0
        %452 = vadd.xlane.f32.xlu0 %v451
        %v453 = vpop.xlane.xlu0 %452
        %v454 = vsel %vm414, %v370, 0.0
        %455 = vadd.xlane.f32.xlu0 %v454
        %v456 = vpop.xlane.xlu0 %455
        %v457 = vsel %vm414, %v371, 0.0
        %458 = vadd.xlane.f32.xlu0 %v457
        %v459 = vpop.xlane.xlu0 %458
        %v460 = vsel %vm414, %v372, 0.0
        %461 = vadd.xlane.f32.xlu0 %v460
        %v462 = vpop.xlane.xlu0 %461
        %v463 = vrcp.pop 32.0
        %v464 = vmul.f32 %v417, %v463
        %v465 = vmul.f32 %v420, %v463
        %v466 = vmul.f32 %v423, %v463
        %v467 = vmul.f32 %v426, %v463
        %v468 = vmul.f32 %v429, %v463
        %v469 = vmul.f32 %v432, %v463
        %v470 = vmul.f32 %v435, %v463
        %v471 = vmul.f32 %v438, %v463
        %v472 = vmul.f32 %v441, %v463
        %v473 = vmul.f32 %v444, %v463
        %v474 = vmul.f32 %v447, %v463
        %v475 = vmul.f32 %v450, %v463
        %v476 = vmul.f32 %v453, %v463
        %v477 = vmul.f32 %v456, %v463
        %v478 = vmul.f32 %v459, %v463
        %v479 = vmul.f32 %v462, %v463
        %v480 = vsub.f32 %v357, %v464
        %v481 = vsub.f32 %v358, %v465
        %v482 = vsub.f32 %v359, %v466
        %v483 = vsub.f32 %v360, %v467
        %v484 = vsub.f32 %v361, %v468
        %v485 = vsub.f32 %v362, %v469
        %v486 = vsub.f32 %v363, %v470
        %v487 = vsub.f32 %v364, %v471
        %v488 = vsub.f32 %v365, %v472
        %v489 = vsub.f32 %v366, %v473
        %v490 = vsub.f32 %v367, %v474
        %v491 = vsub.f32 %v368, %v475
        %v492 = vsub.f32 %v369, %v476
        %v493 = vsub.f32 %v370, %v477
        %v494 = vsub.f32 %v371, %v478
        %v495 = vsub.f32 %v372, %v479
        %v496 = vmul.f32 %v480, %v480
        %v497 = vmul.f32 %v481, %v481
        %v498 = vmul.f32 %v482, %v482
        %v499 = vmul.f32 %v483, %v483
        %v500 = vmul.f32 %v484, %v484
        %v501 = vmul.f32 %v485, %v485
        %v502 = vmul.f32 %v486, %v486
        %v503 = vmul.f32 %v487, %v487
        %v504 = vmul.f32 %v488, %v488
        %v505 = vmul.f32 %v489, %v489
        %v506 = vmul.f32 %v490, %v490
        %v507 = vmul.f32 %v491, %v491
        %v508 = vmul.f32 %v492, %v492
        %v509 = vmul.f32 %v493, %v493
        %v510 = vmul.f32 %v494, %v494
        %v511 = vmul.f32 %v495, %v495
        %v512 = vsel %vm414, %v496, 0.0
        %513 = vadd.xlane.f32.xlu0 %v512
        %v514 = vpop.xlane.xlu0 %513
        %v515 = vsel %vm414, %v497, 0.0
        %516 = vadd.xlane.f32.xlu0 %v515
        %v517 = vpop.xlane.xlu0 %516
        %v518 = vsel %vm414, %v498, 0.0
        %519 = vadd.xlane.f32.xlu0 %v518
        %v520 = vpop.xlane.xlu0 %519
        %v521 = vsel %vm414, %v499, 0.0
        %522 = vadd.xlane.f32.xlu0 %v521
        %v523 = vpop.xlane.xlu0 %522
        %v524 = vsel %vm414, %v500, 0.0
        %525 = vadd.xlane.f32.xlu0 %v524
        %v526 = vpop.xlane.xlu0 %525
        %v527 = vsel %vm414, %v501, 0.0
        %528 = vadd.xlane.f32.xlu0 %v527
        %v529 = vpop.xlane.xlu0 %528
        %v530 = vsel %vm414, %v502, 0.0
        %531 = vadd.xlane.f32.xlu0 %v530
        %v532 = vpop.xlane.xlu0 %531
        %v533 = vsel %vm414, %v503, 0.0
        %534 = vadd.xlane.f32.xlu0 %v533
        %v535 = vpop.xlane.xlu0 %534
        %v536 = vsel %vm414, %v504, 0.0
        %537 = vadd.xlane.f32.xlu0 %v536
        %v538 = vpop.xlane.xlu0 %537
        %v539 = vsel %vm414, %v505, 0.0
        %540 = vadd.xlane.f32.xlu0 %v539
        %v541 = vpop.xlane.xlu0 %540
        %v542 = vsel %vm414, %v506, 0.0
        %543 = vadd.xlane.f32.xlu0 %v542
        %v544 = vpop.xlane.xlu0 %543
        %v545 = vsel %vm414, %v507, 0.0
        %546 = vadd.xlane.f32.xlu0 %v545
        %v547 = vpop.xlane.xlu0 %546
        %v548 = vsel %vm414, %v508, 0.0
        %549 = vadd.xlane.f32.xlu0 %v548
        %v550 = vpop.xlane.xlu0 %549
        %v551 = vsel %vm414, %v509, 0.0
        %552 = vadd.xlane.f32.xlu0 %v551
        %v553 = vpop.xlane.xlu0 %552
        %v554 = vsel %vm414, %v510, 0.0
        %555 = vadd.xlane.f32.xlu0 %v554
        %v556 = vpop.xlane.xlu0 %555
        %v557 = vsel %vm414, %v511, 0.0
        %558 = vadd.xlane.f32.xlu0 %v557
        %v559 = vpop.xlane.xlu0 %558
        %v560 = vmul.f32 %v514, %v463
        %v561 = vmul.f32 %v517, %v463
        %v562 = vmul.f32 %v520, %v463
        %v563 = vmul.f32 %v523, %v463
        %v564 = vmul.f32 %v526, %v463
        %v565 = vmul.f32 %v529, %v463
        %v566 = vmul.f32 %v532, %v463
        %v567 = vmul.f32 %v535, %v463
        %v568 = vmul.f32 %v538, %v463
        %v569 = vmul.f32 %v541, %v463
        %v570 = vmul.f32 %v544, %v463
        %v571 = vmul.f32 %v547, %v463
        %v572 = vmul.f32 %v550, %v463
        %v573 = vmul.f32 %v553, %v463
        %v574 = vmul.f32 %v556, %v463
        %v575 = vmul.f32 %v559, %v463
        %v576 = vadd.f32 %v560, 1e-05
        %v577 = vadd.f32 %v561, 1e-05
        %v578 = vadd.f32 %v562, 1e-05
        %v579 = vadd.f32 %v563, 1e-05
        %v580 = vadd.f32 %v564, 1e-05
        %v581 = vadd.f32 %v565, 1e-05
        %v582 = vadd.f32 %v566, 1e-05
        %v583 = vadd.f32 %v567, 1e-05
        %v584 = vadd.f32 %v568, 1e-05
        %v585 = vadd.f32 %v569, 1e-05
        %v586 = vadd.f32 %v570, 1e-05
        %v587 = vadd.f32 %v571, 1e-05
        %v588 = vadd.f32 %v572, 1e-05
        %v589 = vadd.f32 %v573, 1e-05
        %v590 = vadd.f32 %v574, 1e-05
        %v591 = vadd.f32 %v575, 1e-05
        %v592 = vrsqrt.pop %v576
        %v593 = vrsqrt.pop %v577
        %v594 = vrsqrt.pop %v578
        %v595 = vrsqrt.pop %v579
        %v596 = vrsqrt.pop %v580
        %v597 = vrsqrt.pop %v581
        %v598 = vrsqrt.pop %v582
        %v599 = vrsqrt.pop %v583
        %v600 = vrsqrt.pop %v584
        %v601 = vrsqrt.pop %v585
        %v602 = vrsqrt.pop %v586
        %v603 = vrsqrt.pop %v587
        %v604 = vrsqrt.pop %v588
        %v605 = vrsqrt.pop %v589
        %v606 = vrsqrt.pop %v590
        %v607 = vrsqrt.pop %v591
        %v608 = vmul.f32 %v480, %v592
        %v609 = vmul.f32 %v481, %v593
        %v610 = vmul.f32 %v482, %v594
        %v611 = vmul.f32 %v483, %v595
        %v612 = vmul.f32 %v484, %v596
        %v613 = vmul.f32 %v485, %v597
        %v614 = vmul.f32 %v486, %v598
        %v615 = vmul.f32 %v487, %v599
        %v616 = vmul.f32 %v488, %v600
        %v617 = vmul.f32 %v489, %v601
        %v618 = vmul.f32 %v490, %v602
        %v619 = vmul.f32 %v491, %v603
        %v620 = vmul.f32 %v492, %v604
        %v621 = vmul.f32 %v493, %v605
        %v622 = vmul.f32 %v494, %v606
        %v623 = vmul.f32 %v495, %v607
        %v624 = vlaneseq
        %v625 = vshrl.u32 %v624, 7
        %v626 = vsub.s32 0, %v625
        %v627 = vrot.slane %v389, %v626
        %v628 = vmul.f32 %v608, %v627
        %v629 = vmul.f32 %v609, %v627
        %v630 = vmul.f32 %v610, %v627
        %v631 = vmul.f32 %v611, %v627
        %v632 = vmul.f32 %v612, %v627
        %v633 = vmul.f32 %v613, %v627
        %v634 = vmul.f32 %v614, %v627
        %v635 = vmul.f32 %v615, %v627
        %v636 = vmul.f32 %v616, %v627
        %v637 = vmul.f32 %v617, %v627
        %v638 = vmul.f32 %v618, %v627
        %v639 = vmul.f32 %v619, %v627
        %v640 = vmul.f32 %v620, %v627
        %v641 = vmul.f32 %v621, %v627
        %v642 = vmul.f32 %v622, %v627
        %v643 = vmul.f32 %v623, %v627
        %v644 = vlaneseq
        %v645 = vshrl.u32 %v644, 7
        %v646 = vsub.s32 1, %v645
        %v647 = vrot.slane %v389, %v646
        %v648 = vadd.f32 %v628, %v647
        %v649 = vadd.f32 %v629, %v647
        %v650 = vadd.f32 %v630, %v647
        %v651 = vadd.f32 %v631, %v647
        %v652 = vadd.f32 %v632, %v647
        %v653 = vadd.f32 %v633, %v647
        %v654 = vadd.f32 %v634, %v647
        %v655 = vadd.f32 %v635, %v647
        %v656 = vadd.f32 %v636, %v647
        %v657 = vadd.f32 %v637, %v647
        %v658 = vadd.f32 %v638, %v647
        %v659 = vadd.f32 %v639, %v647
        %v660 = vadd.f32 %v640, %v647
        %v661 = vadd.f32 %v641, %v647
        %v662 = vadd.f32 %v642, %v647
        %v663 = vadd.f32 %v643, %v647
        %v664 = vlaneseq
        %v665 = vshrl.u32 %v664, 7
        %v666 = vsub.s32 2, %v665
        %v667 = vrot.slane %v389, %v666
        %v669 = vsel %vm414, %v648, 0
        %v672 = vsel %vm414, %v649, 0
        %v675 = vsel %vm414, %v650, 0
        %v678 = vsel %vm414, %v651, 0
        %v681 = vsel %vm414, %v652, 0
        %v684 = vsel %vm414, %v653, 0
        %v687 = vsel %vm414, %v654, 0
        %v690 = vsel %vm414, %v655, 0
        %v693 = vsel %vm414, %v656, 0
        %v696 = vsel %vm414, %v657, 0
        %v699 = vsel %vm414, %v658, 0
        %v702 = vsel %vm414, %v659, 0
        %v705 = vsel %vm414, %v660, 0
        %v708 = vsel %vm414, %v661, 0
        %v711 = vsel %vm414, %v662, 0
        %v714 = vsel %vm414, %v663, 0
        %716 = vmatprep.subr.mxu0 0.0
        %717 = vmatpush1.msra.mxu0 0.0
        %718 = vmatprep.subr.mxu0 0.0
        %719 = vmatpush1.msra.mxu0 0.0
        %720 = vmatprep.subr.mxu0 0.0
        %721 = vmatpush1.msra.mxu0 0.0
        %722 = vmatprep.subr.mxu0 0.0
        %723 = vmatpush1.msra.mxu0 0.0
        %724 = vmatprep.subr.mxu0 0.0
        %725 = vmatpush1.msra.mxu0 0.0
        %726 = vmatprep.subr.mxu0 0.0
        %727 = vmatpush1.msra.mxu0 0.0
        %728 = vmatprep.subr.mxu0 0.0
        %729 = vmatpush1.msra.mxu0 0.0
        %730 = vmatprep.subr.mxu0 0.0
        %731 = vmatpush1.msra.mxu0 0.0
        %732 = vmatprep.subr.mxu0 0.0
        %733 = vmatpush1.msra.mxu0 0.0
        %734 = vmatprep.subr.mxu0 0.0
        %735 = vmatpush1.msra.mxu0 0.0
        %736 = vmatprep.subr.mxu0 0.0
        %737 = vmatpush1.msra.mxu0 0.0
        %738 = vmatprep.subr.mxu0 0.0
        %739 = vmatpush1.msra.mxu0 0.0
        %740 = vmatprep.subr.mxu0 0.0
        %741 = vmatpush1.msra.mxu0 %v396
        %742 = vmatprep.subr.mxu0 0.0
        %743 = vmatpush1.msra.mxu0 %v394
        %744 = vmatprep.subr.mxu0 0.0
        %745 = vmatpush1.msra.mxu0 %v392
        %746 = vmatprep.subr.mxu0 0.0
        %747 = vmatpush1.msra.mxu0 %v390
        %748 = vmatprep.subr.mxu0 0.0
        %749 = vmatpush2.msra.mxu0 0.0
        %750 = vmatprep.subr.mxu0 0.0
        %751 = vmatpush2.msra.mxu0 0.0
        %752 = vmatprep.subr.mxu0 0.0
        %753 = vmatpush2.msra.mxu0 0.0
        %754 = vmatprep.subr.mxu0 0.0
        %755 = vmatpush2.msra.mxu0 0.0
        %756 = vmatprep.subr.mxu0 0.0
        %757 = vmatpush2.msra.mxu0 0.0
        %758 = vmatprep.subr.mxu0 0.0
        %759 = vmatpush2.msra.mxu0 0.0
        %760 = vmatprep.subr.mxu0 0.0
        %761 = vmatpush2.msra.mxu0 0.0
        %762 = vmatprep.subr.mxu0 0.0
        %763 = vmatpush2.msra.mxu0 0.0
        %764 = vmatprep.subr.mxu0 0.0
        %765 = vmatpush2.msra.mxu0 0.0
        %766 = vmatprep.subr.mxu0 0.0
        %767 = vmatpush2.msra.mxu0 0.0
        %768 = vmatprep.subr.mxu0 0.0
        %769 = vmatpush2.msra.mxu0 0.0
        %770 = vmatprep.subr.mxu0 0.0
        %771 = vmatpush2.msra.mxu0 0.0
        %772 = vmatprep.subr.mxu0 0.0
        %773 = vmatpush2.msra.mxu0 0.0
        %774 = vmatprep.subr.mxu0 0.0
        %775 = vmatpush2.msra.mxu0 0.0
        %776 = vmatprep.subr.mxu0 0.0
        %777 = vmatpush2.msra.mxu0 0.0
        %778 = vmatprep.subr.mxu0 0.0
        %779 = vmatpush2.msra.mxu0 0.0
        %780 = vmatprep.mubr.f32.mxu0 0.0
        %781 = vmatmul.mubr.f32.gmra.mxu0 %v669
        %v782 = vpop.f32.mrf.mxu0
        %v783 = vadd.f32 %v667, %v782
        %v784 = vpop.f32.mrf.mxu0
        %785 = vmatprep.mubr.f32.mxu0 0.0
        %786 = vmatmul.mubr.f32.gmra.mxu0 %v672
        %v787 = vpop.f32.mrf.mxu0
        %v788 = vadd.f32 %v667, %v787
        %v789 = vpop.f32.mrf.mxu0
        %790 = vmatprep.mubr.f32.mxu0 0.0
        %791 = vmatmul.mubr.f32.gmra.mxu0 %v675
        %v792 = vpop.f32.mrf.mxu0
        %v793 = vadd.f32 %v667, %v792
        %v794 = vpop.f32.mrf.mxu0
        %795 = vmatprep.mubr.f32.mxu0 0.0
        %796 = vmatmul.mubr.f32.gmra.mxu0 %v678
        %v797 = vpop.f32.mrf.mxu0
        %v798 = vadd.f32 %v667, %v797
        %v799 = vpop.f32.mrf.mxu0
        %800 = vmatprep.mubr.f32.mxu0 0.0
        %801 = vmatmul.mubr.f32.gmra.mxu0 %v681
        %v802 = vpop.f32.mrf.mxu0
        %v803 = vadd.f32 %v667, %v802
        %v804 = vpop.f32.mrf.mxu0
        %805 = vmatprep.mubr.f32.mxu0 0.0
        %806 = vmatmul.mubr.f32.gmra.mxu0 %v684
        %v807 = vpop.f32.mrf.mxu0
        %v808 = vadd.f32 %v667, %v807
        %v809 = vpop.f32.mrf.mxu0
        %810 = vmatprep.mubr.f32.mxu0 0.0
        %811 = vmatmul.mubr.f32.gmra.mxu0 %v687
        %v812 = vpop.f32.mrf.mxu0
        %v813 = vadd.f32 %v667, %v812
        %v814 = vpop.f32.mrf.mxu0
        %815 = vmatprep.mubr.f32.mxu0 0.0
        %816 = vmatmul.mubr.f32.gmra.mxu0 %v690
        %v817 = vpop.f32.mrf.mxu0
        %v818 = vadd.f32 %v667, %v817
        %v819 = vpop.f32.mrf.mxu0
        %820 = vmatprep.mubr.f32.mxu0 0.0
        %821 = vmatmul.mubr.f32.gmra.mxu0 %v693
        %v822 = vpop.f32.mrf.mxu0
        %v823 = vadd.f32 %v667, %v822
        %v824 = vpop.f32.mrf.mxu0
        %825 = vmatprep.mubr.f32.mxu0 0.0
        %826 = vmatmul.mubr.f32.gmra.mxu0 %v696
        %v827 = vpop.f32.mrf.mxu0
        %v828 = vadd.f32 %v667, %v827
        %v829 = vpop.f32.mrf.mxu0
        %830 = vmatprep.mubr.f32.mxu0 0.0
        %831 = vmatmul.mubr.f32.gmra.mxu0 %v699
        %v832 = vpop.f32.mrf.mxu0
        %v833 = vadd.f32 %v667, %v832
        %v834 = vpop.f32.mrf.mxu0
        %835 = vmatprep.mubr.f32.mxu0 0.0
        %836 = vmatmul.mubr.f32.gmra.mxu0 %v702
        %v837 = vpop.f32.mrf.mxu0
        %v838 = vadd.f32 %v667, %v837
        %v839 = vpop.f32.mrf.mxu0
        %840 = vmatprep.mubr.f32.mxu0 0.0
        %841 = vmatmul.mubr.f32.gmra.mxu0 %v705
        %v842 = vpop.f32.mrf.mxu0
        %v843 = vadd.f32 %v667, %v842
        %v844 = vpop.f32.mrf.mxu0
        %845 = vmatprep.mubr.f32.mxu0 0.0
        %846 = vmatmul.mubr.f32.gmra.mxu0 %v708
        %v847 = vpop.f32.mrf.mxu0
        %v848 = vadd.f32 %v667, %v847
        %v849 = vpop.f32.mrf.mxu0
        %850 = vmatprep.mubr.f32.mxu0 0.0
        %851 = vmatmul.mubr.f32.gmra.mxu0 %v711
        %v852 = vpop.f32.mrf.mxu0
        %v853 = vadd.f32 %v667, %v852
        %v854 = vpop.f32.mrf.mxu0
        %855 = vmatprep.mubr.f32.mxu0 0.0
        %856 = vmatmul.mubr.f32.gmra.mxu0 %v714
        %v857 = vpop.f32.mrf.mxu0
        %v858 = vadd.f32 %v667, %v857
        %v859 = vpop.f32.mrf.mxu0
        %860 = vdwg.mxu0
        %877 = vrot.lane.b32.xlu0 %v783, 96
        %v878 = vpop.permute.xlu0 %877
        %879 = vrot.lane.b32.xlu0 %v788, 96
        %v880 = vpop.permute.xlu0 %879
        %881 = vrot.lane.b32.xlu0 %v793, 96
        %v882 = vpop.permute.xlu0 %881
        %883 = vrot.lane.b32.xlu0 %v798, 96
        %v884 = vpop.permute.xlu0 %883
        %885 = vrot.lane.b32.xlu0 %v803, 96
        %v886 = vpop.permute.xlu0 %885
        %887 = vrot.lane.b32.xlu0 %v808, 96
        %v888 = vpop.permute.xlu0 %887
        %889 = vrot.lane.b32.xlu0 %v813, 96
        %v890 = vpop.permute.xlu0 %889
        %891 = vrot.lane.b32.xlu0 %v818, 96
        %v892 = vpop.permute.xlu0 %891
        %893 = vrot.lane.b32.xlu0 %v823, 96
        %v894 = vpop.permute.xlu0 %893
        %895 = vrot.lane.b32.xlu0 %v828, 96
        %v896 = vpop.permute.xlu0 %895
        %897 = vrot.lane.b32.xlu0 %v833, 96
        %v898 = vpop.permute.xlu0 %897
        %899 = vrot.lane.b32.xlu0 %v838, 96
        %v900 = vpop.permute.xlu0 %899
        %901 = vrot.lane.b32.xlu0 %v843, 96
        %v902 = vpop.permute.xlu0 %901
        %903 = vrot.lane.b32.xlu0 %v848, 96
        %v904 = vpop.permute.xlu0 %903
        %905 = vrot.lane.b32.xlu0 %v853, 96
        %v906 = vpop.permute.xlu0 %905
        %907 = vrot.lane.b32.xlu0 %v858, 96
        %v908 = vpop.permute.xlu0 %907
        %vm909 = vcmask 64512
        %v910 = vsel %vm909, %v783, 0
        %v912 = vsel %vm909, %v788, 0
        %v914 = vsel %vm909, %v793, 0
        %v916 = vsel %vm909, %v798, 0
        %v918 = vsel %vm909, %v803, 0
        %v920 = vsel %vm909, %v808, 0
        %v922 = vsel %vm909, %v813, 0
        %v924 = vsel %vm909, %v818, 0
        %v926 = vsel %vm909, %v823, 0
        %v928 = vsel %vm909, %v828, 0
        %v930 = vsel %vm909, %v833, 0
        %v932 = vsel %vm909, %v838, 0
        %v934 = vsel %vm909, %v843, 0
        %v936 = vsel %vm909, %v848, 0
        %v938 = vsel %vm909, %v853, 0
        %v940 = vsel %vm909, %v858, 0
        %v942 = vsel %vm909, %v878, 0
        %v944 = vsel %vm909, %v880, 0
        %v946 = vsel %vm909, %v882, 0
        %v948 = vsel %vm909, %v884, 0
        %v950 = vsel %vm909, %v886, 0
        %v952 = vsel %vm909, %v888, 0
        %v954 = vsel %vm909, %v890, 0
        %v956 = vsel %vm909, %v892, 0
        %v958 = vsel %vm909, %v894, 0
        %v960 = vsel %vm909, %v896, 0
        %v962 = vsel %vm909, %v898, 0
        %v964 = vsel %vm909, %v900, 0
        %v966 = vsel %vm909, %v902, 0
        %v968 = vsel %vm909, %v904, 0
        %v970 = vsel %vm909, %v906, 0
        %v972 = vsel %vm909, %v908, 0
        %974 = vmatprep.subr.mxu0 0.0
        %975 = vmatpush1.xpose.msra.mxu0 %v972
        %976 = vmatprep.subr.mxu0 0.0
        %977 = vmatpush1.xpose.msra.mxu0 %v970
        %978 = vmatprep.subr.mxu0 0.0
        %979 = vmatpush1.xpose.msra.mxu0 %v968
        %980 = vmatprep.subr.mxu0 0.0
        %981 = vmatpush1.xpose.msra.mxu0 %v966
        %982 = vmatprep.subr.mxu0 0.0
        %983 = vmatpush1.xpose.msra.mxu0 %v964
        %984 = vmatprep.subr.mxu0 0.0
        %985 = vmatpush1.xpose.msra.mxu0 %v962
        %986 = vmatprep.subr.mxu0 0.0
        %987 = vmatpush1.xpose.msra.mxu0 %v960
        %988 = vmatprep.subr.mxu0 0.0
        %989 = vmatpush1.xpose.msra.mxu0 %v958
        %990 = vmatprep.subr.mxu0 0.0
        %991 = vmatpush1.xpose.msra.mxu0 %v956
        %992 = vmatprep.subr.mxu0 0.0
        %993 = vmatpush1.xpose.msra.mxu0 %v954
        %994 = vmatprep.subr.mxu0 0.0
        %995 = vmatpush1.xpose.msra.mxu0 %v952
        %996 = vmatprep.subr.mxu0 0.0
        %997 = vmatpush1.xpose.msra.mxu0 %v950
        %998 = vmatprep.subr.mxu0 0.0
        %999 = vmatpush1.xpose.msra.mxu0 %v948
        %1000 = vmatprep.subr.mxu0 0.0
        %1001 = vmatpush1.xpose.msra.mxu0 %v946
        %1002 = vmatprep.subr.mxu0 0.0
        %1003 = vmatpush1.xpose.msra.mxu0 %v944
        %1004 = vmatprep.subr.mxu0 0.0
        %1005 = vmatpush1.xpose.msra.mxu0 %v942
        %1006 = vmatprep.subr.mxu0 0.0
        %1007 = vmatpush2.xpose.msra.mxu0 0.0
        %1008 = vmatprep.subr.mxu0 0.0
        %1009 = vmatpush2.xpose.msra.mxu0 0.0
        %1010 = vmatprep.subr.mxu0 0.0
        %1011 = vmatpush2.xpose.msra.mxu0 0.0
        %1012 = vmatprep.subr.mxu0 0.0
        %1013 = vmatpush2.xpose.msra.mxu0 0.0
        %1014 = vmatprep.subr.mxu0 0.0
        %1015 = vmatpush2.xpose.msra.mxu0 0.0
        %1016 = vmatprep.subr.mxu0 0.0
        %1017 = vmatpush2.xpose.msra.mxu0 0.0
        %1018 = vmatprep.subr.mxu0 0.0
        %1019 = vmatpush2.xpose.msra.mxu0 0.0
        %1020 = vmatprep.subr.mxu0 0.0
        %1021 = vmatpush2.xpose.msra.mxu0 0.0
        %1022 = vmatprep.subr.mxu0 0.0
        %1023 = vmatpush2.xpose.msra.mxu0 0.0
        %1024 = vmatprep.subr.mxu0 0.0
        %1025 = vmatpush2.xpose.msra.mxu0 0.0
        %1026 = vmatprep.subr.mxu0 0.0
        %1027 = vmatpush2.xpose.msra.mxu0 0.0
        %1028 = vmatprep.subr.mxu0 0.0
        %1029 = vmatpush2.xpose.msra.mxu0 0.0
        %1030 = vmatprep.subr.mxu0 0.0
        %1031 = vmatpush2.xpose.msra.mxu0 0.0
        %1032 = vmatprep.subr.mxu0 0.0
        %1033 = vmatpush2.xpose.msra.mxu0 0.0
        %1034 = vmatprep.subr.mxu0 0.0
        %1035 = vmatpush2.xpose.msra.mxu0 0.0
        %1036 = vmatprep.subr.mxu0 0.0
        %1037 = vmatpush2.xpose.msra.mxu0 0.0
        %1038 = vmatprep.mubr.f32.mxu0 0.0
        %1039 = vmatmul.mubr.f32.gmra.mxu0 %v910
        %v1040 = vpop.f32.mrf.mxu0
        %v1041 = vadd.f32 0.0, %v1040
        %v1042 = vpop.f32.mrf.mxu0
        %1043 = vmatprep.mubr.f32.mxu0 0.0
        %1044 = vmatmul.mubr.f32.gmra.mxu0 %v912
        %v1045 = vpop.f32.mrf.mxu0
        %v1046 = vadd.f32 0.0, %v1045
        %v1047 = vpop.f32.mrf.mxu0
        %1048 = vmatprep.mubr.f32.mxu0 0.0
        %1049 = vmatmul.mubr.f32.gmra.mxu0 %v914
        %v1050 = vpop.f32.mrf.mxu0
        %v1051 = vadd.f32 0.0, %v1050
        %v1052 = vpop.f32.mrf.mxu0
        %1053 = vmatprep.mubr.f32.mxu0 0.0
        %1054 = vmatmul.mubr.f32.gmra.mxu0 %v916
        %v1055 = vpop.f32.mrf.mxu0
        %v1056 = vadd.f32 0.0, %v1055
        %v1057 = vpop.f32.mrf.mxu0
        %1058 = vmatprep.mubr.f32.mxu0 0.0
        %1059 = vmatmul.mubr.f32.gmra.mxu0 %v918
        %v1060 = vpop.f32.mrf.mxu0
        %v1061 = vadd.f32 0.0, %v1060
        %v1062 = vpop.f32.mrf.mxu0
        %1063 = vmatprep.mubr.f32.mxu0 0.0
        %1064 = vmatmul.mubr.f32.gmra.mxu0 %v920
        %v1065 = vpop.f32.mrf.mxu0
        %v1066 = vadd.f32 0.0, %v1065
        %v1067 = vpop.f32.mrf.mxu0
        %1068 = vmatprep.mubr.f32.mxu0 0.0
        %1069 = vmatmul.mubr.f32.gmra.mxu0 %v922
        %v1070 = vpop.f32.mrf.mxu0
        %v1071 = vadd.f32 0.0, %v1070
        %v1072 = vpop.f32.mrf.mxu0
        %1073 = vmatprep.mubr.f32.mxu0 0.0
        %1074 = vmatmul.mubr.f32.gmra.mxu0 %v924
        %v1075 = vpop.f32.mrf.mxu0
        %v1076 = vadd.f32 0.0, %v1075
        %v1077 = vpop.f32.mrf.mxu0
        %1078 = vmatprep.mubr.f32.mxu0 0.0
        %1079 = vmatmul.mubr.f32.gmra.mxu0 %v926
        %v1080 = vpop.f32.mrf.mxu0
        %v1081 = vadd.f32 0.0, %v1080
        %v1082 = vpop.f32.mrf.mxu0
        %1083 = vmatprep.mubr.f32.mxu0 0.0
        %1084 = vmatmul.mubr.f32.gmra.mxu0 %v928
        %v1085 = vpop.f32.mrf.mxu0
        %v1086 = vadd.f32 0.0, %v1085
        %v1087 = vpop.f32.mrf.mxu0
        %1088 = vmatprep.mubr.f32.mxu0 0.0
        %1089 = vmatmul.mubr.f32.gmra.mxu0 %v930
        %v1090 = vpop.f32.mrf.mxu0
        %v1091 = vadd.f32 0.0, %v1090
        %v1092 = vpop.f32.mrf.mxu0
        %1093 = vmatprep.mubr.f32.mxu0 0.0
        %1094 = vmatmul.mubr.f32.gmra.mxu0 %v932
        %v1095 = vpop.f32.mrf.mxu0
        %v1096 = vadd.f32 0.0, %v1095
        %v1097 = vpop.f32.mrf.mxu0
        %1098 = vmatprep.mubr.f32.mxu0 0.0
        %1099 = vmatmul.mubr.f32.gmra.mxu0 %v934
        %v1100 = vpop.f32.mrf.mxu0
        %v1101 = vadd.f32 0.0, %v1100
        %v1102 = vpop.f32.mrf.mxu0
        %1103 = vmatprep.mubr.f32.mxu0 0.0
        %1104 = vmatmul.mubr.f32.gmra.mxu0 %v936
        %v1105 = vpop.f32.mrf.mxu0
        %v1106 = vadd.f32 0.0, %v1105
        %v1107 = vpop.f32.mrf.mxu0
        %1108 = vmatprep.mubr.f32.mxu0 0.0
        %1109 = vmatmul.mubr.f32.gmra.mxu0 %v938
        %v1110 = vpop.f32.mrf.mxu0
        %v1111 = vadd.f32 0.0, %v1110
        %v1112 = vpop.f32.mrf.mxu0
        %1113 = vmatprep.mubr.f32.mxu0 0.0
        %1114 = vmatmul.mubr.f32.gmra.mxu0 %v940
        %v1115 = vpop.f32.mrf.mxu0
        %v1116 = vadd.f32 0.0, %v1115
        %v1117 = vpop.f32.mrf.mxu0
        %1118 = vdwg.mxu0
        %v1119 = vmul.f32 %v1041, 0.35355338
        %v1120 = vmul.f32 %v1046, 0.35355338
        %v1121 = vmul.f32 %v1051, 0.35355338
        %v1122 = vmul.f32 %v1056, 0.35355338
        %v1123 = vmul.f32 %v1061, 0.35355338
        %v1124 = vmul.f32 %v1066, 0.35355338
        %v1125 = vmul.f32 %v1071, 0.35355338
        %v1126 = vmul.f32 %v1076, 0.35355338
        %v1127 = vmul.f32 %v1081, 0.35355338
        %v1128 = vmul.f32 %v1086, 0.35355338
        %v1129 = vmul.f32 %v1091, 0.35355338
        %v1130 = vmul.f32 %v1096, 0.35355338
        %v1131 = vmul.f32 %v1101, 0.35355338
        %v1132 = vmul.f32 %v1106, 0.35355338
        %v1133 = vmul.f32 %v1111, 0.35355338
        %v1134 = vmul.f32 %v1116, 0.35355338
        %v1135 = vadd.f32 %v1119, %v373
        %v1136 = vadd.f32 %v1120, %v374
        %v1137 = vadd.f32 %v1121, %v375
        %v1138 = vadd.f32 %v1122, %v376
        %v1139 = vadd.f32 %v1123, %v377
        %v1140 = vadd.f32 %v1124, %v378
        %v1141 = vadd.f32 %v1125, %v379
        %v1142 = vadd.f32 %v1126, %v380
        %v1143 = vadd.f32 %v1127, %v381
        %v1144 = vadd.f32 %v1128, %v382
        %v1145 = vadd.f32 %v1129, %v383
        %v1146 = vadd.f32 %v1130, %v384
        %v1147 = vadd.f32 %v1131, %v385
        %v1148 = vadd.f32 %v1132, %v386
        %v1149 = vadd.f32 %v1133, %v387
        %v1150 = vadd.f32 %v1134, %v388
        %1151 = vmax.xlane.f32.xlu0 %v1135
        %v1152 = vpop.xlane.xlu0 %1151
        %1153 = vmax.xlane.f32.xlu0 %v1136
        %v1154 = vpop.xlane.xlu0 %1153
        %1155 = vmax.xlane.f32.xlu0 %v1137
        %v1156 = vpop.xlane.xlu0 %1155
        %1157 = vmax.xlane.f32.xlu0 %v1138
        %v1158 = vpop.xlane.xlu0 %1157
        %1159 = vmax.xlane.f32.xlu0 %v1139
        %v1160 = vpop.xlane.xlu0 %1159
        %1161 = vmax.xlane.f32.xlu0 %v1140
        %v1162 = vpop.xlane.xlu0 %1161
        %1163 = vmax.xlane.f32.xlu0 %v1141
        %v1164 = vpop.xlane.xlu0 %1163
        %1165 = vmax.xlane.f32.xlu0 %v1142
        %v1166 = vpop.xlane.xlu0 %1165
        %1167 = vmax.xlane.f32.xlu0 %v1143
        %v1168 = vpop.xlane.xlu0 %1167
        %1169 = vmax.xlane.f32.xlu0 %v1144
        %v1170 = vpop.xlane.xlu0 %1169
        %1171 = vmax.xlane.f32.xlu0 %v1145
        %v1172 = vpop.xlane.xlu0 %1171
        %1173 = vmax.xlane.f32.xlu0 %v1146
        %v1174 = vpop.xlane.xlu0 %1173
        %1175 = vmax.xlane.f32.xlu0 %v1147
        %v1176 = vpop.xlane.xlu0 %1175
        %1177 = vmax.xlane.f32.xlu0 %v1148
        %v1178 = vpop.xlane.xlu0 %1177
        %1179 = vmax.xlane.f32.xlu0 %v1149
        %v1180 = vpop.xlane.xlu0 %1179
        %1181 = vmax.xlane.f32.xlu0 %v1150
        %v1182 = vpop.xlane.xlu0 %1181
        %v1183 = vsub.f32 %v1135, %v1152
        %v1184 = vsub.f32 %v1136, %v1154
        %v1185 = vsub.f32 %v1137, %v1156
        %v1186 = vsub.f32 %v1138, %v1158
        %v1187 = vsub.f32 %v1139, %v1160
        %v1188 = vsub.f32 %v1140, %v1162
        %v1189 = vsub.f32 %v1141, %v1164
        %v1190 = vsub.f32 %v1142, %v1166
        %v1191 = vsub.f32 %v1143, %v1168
        %v1192 = vsub.f32 %v1144, %v1170
        %v1193 = vsub.f32 %v1145, %v1172
        %v1194 = vsub.f32 %v1146, %v1174
        %v1195 = vsub.f32 %v1147, %v1176
        %v1196 = vsub.f32 %v1148, %v1178
        %v1197 = vsub.f32 %v1149, %v1180
        %v1198 = vsub.f32 %v1150, %v1182
        %v1199 = vmul.f32 %v1183, 1.442695
        %v1200 = vpow.pop %v1199
        %v1201 = vmul.f32 %v1184, 1.442695
        %v1202 = vpow.pop %v1201
        %v1203 = vmul.f32 %v1185, 1.442695
        %v1204 = vpow.pop %v1203
        %v1205 = vmul.f32 %v1186, 1.442695
        %v1206 = vpow.pop %v1205
        %v1207 = vmul.f32 %v1187, 1.442695
        %v1208 = vpow.pop %v1207
        %v1209 = vmul.f32 %v1188, 1.442695
        %v1210 = vpow.pop %v1209
        %v1211 = vmul.f32 %v1189, 1.442695
        %v1212 = vpow.pop %v1211
        %v1213 = vmul.f32 %v1190, 1.442695
        %v1214 = vpow.pop %v1213
        %v1215 = vmul.f32 %v1191, 1.442695
        %v1216 = vpow.pop %v1215
        %v1217 = vmul.f32 %v1192, 1.442695
        %v1218 = vpow.pop %v1217
        %v1219 = vmul.f32 %v1193, 1.442695
        %v1220 = vpow.pop %v1219
        %v1221 = vmul.f32 %v1194, 1.442695
        %v1222 = vpow.pop %v1221
        %v1223 = vmul.f32 %v1195, 1.442695
        %v1224 = vpow.pop %v1223
        %v1225 = vmul.f32 %v1196, 1.442695
        %v1226 = vpow.pop %v1225
        %v1227 = vmul.f32 %v1197, 1.442695
        %v1228 = vpow.pop %v1227
        %v1229 = vmul.f32 %v1198, 1.442695
        %v1230 = vpow.pop %v1229
        %1231 = vadd.xlane.f32.xlu0 %v1200
        %v1232 = vpop.xlane.xlu0 %1231
        %1233 = vadd.xlane.f32.xlu0 %v1202
        %v1234 = vpop.xlane.xlu0 %1233
        %1235 = vadd.xlane.f32.xlu0 %v1204
        %v1236 = vpop.xlane.xlu0 %1235
        %1237 = vadd.xlane.f32.xlu0 %v1206
        %v1238 = vpop.xlane.xlu0 %1237
        %1239 = vadd.xlane.f32.xlu0 %v1208
        %v1240 = vpop.xlane.xlu0 %1239
        %1241 = vadd.xlane.f32.xlu0 %v1210
        %v1242 = vpop.xlane.xlu0 %1241
        %1243 = vadd.xlane.f32.xlu0 %v1212
        %v1244 = vpop.xlane.xlu0 %1243
        %1245 = vadd.xlane.f32.xlu0 %v1214
        %v1246 = vpop.xlane.xlu0 %1245
        %1247 = vadd.xlane.f32.xlu0 %v1216
        %v1248 = vpop.xlane.xlu0 %1247
        %1249 = vadd.xlane.f32.xlu0 %v1218
        %v1250 = vpop.xlane.xlu0 %1249
        %1251 = vadd.xlane.f32.xlu0 %v1220
        %v1252 = vpop.xlane.xlu0 %1251
        %1253 = vadd.xlane.f32.xlu0 %v1222
        %v1254 = vpop.xlane.xlu0 %1253
        %1255 = vadd.xlane.f32.xlu0 %v1224
        %v1256 = vpop.xlane.xlu0 %1255
        %1257 = vadd.xlane.f32.xlu0 %v1226
        %v1258 = vpop.xlane.xlu0 %1257
        %1259 = vadd.xlane.f32.xlu0 %v1228
        %v1260 = vpop.xlane.xlu0 %1259
        %1261 = vadd.xlane.f32.xlu0 %v1230
        %v1262 = vpop.xlane.xlu0 %1261
        %v1263 = vrcp.pop %v1232
        %v1264 = vrcp.pop %v1234
        %v1265 = vrcp.pop %v1236
        %v1266 = vrcp.pop %v1238
        %v1267 = vrcp.pop %v1240
        %v1268 = vrcp.pop %v1242
        %v1269 = vrcp.pop %v1244
        %v1270 = vrcp.pop %v1246
        %v1271 = vrcp.pop %v1248
        %v1272 = vrcp.pop %v1250
        %v1273 = vrcp.pop %v1252
        %v1274 = vrcp.pop %v1254
        %v1275 = vrcp.pop %v1256
        %v1276 = vrcp.pop %v1258
        %v1277 = vrcp.pop %v1260
        %v1278 = vrcp.pop %v1262
        %v1279 = vmul.f32 %v1200, %v1263
        %v1280 = vmul.f32 %v1202, %v1264
        %v1281 = vmul.f32 %v1204, %v1265
        %v1282 = vmul.f32 %v1206, %v1266
        %v1283 = vmul.f32 %v1208, %v1267
        %v1284 = vmul.f32 %v1210, %v1268
        %v1285 = vmul.f32 %v1212, %v1269
        %v1286 = vmul.f32 %v1214, %v1270
        %v1287 = vmul.f32 %v1216, %v1271
        %v1288 = vmul.f32 %v1218, %v1272
        %v1289 = vmul.f32 %v1220, %v1273
        %v1290 = vmul.f32 %v1222, %v1274
        %v1291 = vmul.f32 %v1224, %v1275
        %v1292 = vmul.f32 %v1226, %v1276
        %v1293 = vmul.f32 %v1228, %v1277
        %v1294 = vmul.f32 %v1230, %v1278
        %1295 = vrot.lane.b32.xlu0 %v783, 64
        %v1296 = vpop.permute.xlu0 %1295
        %1297 = vrot.lane.b32.xlu0 %v788, 64
        %v1298 = vpop.permute.xlu0 %1297
        %1299 = vrot.lane.b32.xlu0 %v793, 64
        %v1300 = vpop.permute.xlu0 %1299
        %1301 = vrot.lane.b32.xlu0 %v798, 64
        %v1302 = vpop.permute.xlu0 %1301
        %1303 = vrot.lane.b32.xlu0 %v803, 64
        %v1304 = vpop.permute.xlu0 %1303
        %1305 = vrot.lane.b32.xlu0 %v808, 64
        %v1306 = vpop.permute.xlu0 %1305
        %1307 = vrot.lane.b32.xlu0 %v813, 64
        %v1308 = vpop.permute.xlu0 %1307
        %1309 = vrot.lane.b32.xlu0 %v818, 64
        %v1310 = vpop.permute.xlu0 %1309
        %1311 = vrot.lane.b32.xlu0 %v823, 64
        %v1312 = vpop.permute.xlu0 %1311
        %1313 = vrot.lane.b32.xlu0 %v828, 64
        %v1314 = vpop.permute.xlu0 %1313
        %1315 = vrot.lane.b32.xlu0 %v833, 64
        %v1316 = vpop.permute.xlu0 %1315
        %1317 = vrot.lane.b32.xlu0 %v838, 64
        %v1318 = vpop.permute.xlu0 %1317
        %1319 = vrot.lane.b32.xlu0 %v843, 64
        %v1320 = vpop.permute.xlu0 %1319
        %1321 = vrot.lane.b32.xlu0 %v848, 64
        %v1322 = vpop.permute.xlu0 %1321
        %1323 = vrot.lane.b32.xlu0 %v853, 64
        %v1324 = vpop.permute.xlu0 %1323
        %1325 = vrot.lane.b32.xlu0 %v858, 64
        %v1326 = vpop.permute.xlu0 %1325
        %1343 = vmatprep.subr.mxu0 0.0
        %1344 = vmatpush1.msra.mxu0 %v1326
        %1345 = vmatprep.subr.mxu0 0.0
        %1346 = vmatpush1.msra.mxu0 %v1324
        %1347 = vmatprep.subr.mxu0 0.0
        %1348 = vmatpush1.msra.mxu0 %v1322
        %1349 = vmatprep.subr.mxu0 0.0
        %1350 = vmatpush1.msra.mxu0 %v1320
        %1351 = vmatprep.subr.mxu0 0.0
        %1352 = vmatpush1.msra.mxu0 %v1318
        %1353 = vmatprep.subr.mxu0 0.0
        %1354 = vmatpush1.msra.mxu0 %v1316
        %1355 = vmatprep.subr.mxu0 0.0
        %1356 = vmatpush1.msra.mxu0 %v1314
        %1357 = vmatprep.subr.mxu0 0.0
        %1358 = vmatpush1.msra.mxu0 %v1312
        %1359 = vmatprep.subr.mxu0 0.0
        %1360 = vmatpush1.msra.mxu0 %v1310
        %1361 = vmatprep.subr.mxu0 0.0
        %1362 = vmatpush1.msra.mxu0 %v1308
        %1363 = vmatprep.subr.mxu0 0.0
        %1364 = vmatpush1.msra.mxu0 %v1306
        %1365 = vmatprep.subr.mxu0 0.0
        %1366 = vmatpush1.msra.mxu0 %v1304
        %1367 = vmatprep.subr.mxu0 0.0
        %1368 = vmatpush1.msra.mxu0 %v1302
        %1369 = vmatprep.subr.mxu0 0.0
        %1370 = vmatpush1.msra.mxu0 %v1300
        %1371 = vmatprep.subr.mxu0 0.0
        %1372 = vmatpush1.msra.mxu0 %v1298
        %1373 = vmatprep.subr.mxu0 0.0
        %1374 = vmatpush1.msra.mxu0 %v1296
        %1375 = vmatprep.subr.mxu0 0.0
        %1376 = vmatpush2.msra.mxu0 0.0
        %1377 = vmatprep.subr.mxu0 0.0
        %1378 = vmatpush2.msra.mxu0 0.0
        %1379 = vmatprep.subr.mxu0 0.0
        %1380 = vmatpush2.msra.mxu0 0.0
        %1381 = vmatprep.subr.mxu0 0.0
        %1382 = vmatpush2.msra.mxu0 0.0
        %1383 = vmatprep.subr.mxu0 0.0
        %1384 = vmatpush2.msra.mxu0 0.0
        %1385 = vmatprep.subr.mxu0 0.0
        %1386 = vmatpush2.msra.mxu0 0.0
        %1387 = vmatprep.subr.mxu0 0.0
        %1388 = vmatpush2.msra.mxu0 0.0
        %1389 = vmatprep.subr.mxu0 0.0
        %1390 = vmatpush2.msra.mxu0 0.0
        %1391 = vmatprep.subr.mxu0 0.0
        %1392 = vmatpush2.msra.mxu0 0.0
        %1393 = vmatprep.subr.mxu0 0.0
        %1394 = vmatpush2.msra.mxu0 0.0
        %1395 = vmatprep.subr.mxu0 0.0
        %1396 = vmatpush2.msra.mxu0 0.0
        %1397 = vmatprep.subr.mxu0 0.0
        %1398 = vmatpush2.msra.mxu0 0.0
        %1399 = vmatprep.subr.mxu0 0.0
        %1400 = vmatpush2.msra.mxu0 0.0
        %1401 = vmatprep.subr.mxu0 0.0
        %1402 = vmatpush2.msra.mxu0 0.0
        %1403 = vmatprep.subr.mxu0 0.0
        %1404 = vmatpush2.msra.mxu0 0.0
        %1405 = vmatprep.subr.mxu0 0.0
        %1406 = vmatpush2.msra.mxu0 0.0
        %1407 = vmatprep.mubr.f32.mxu0 0.0
        %1408 = vmatmul.mubr.f32.gmra.mxu0 %v1279
        %v1409 = vpop.f32.mrf.mxu0
        %v1410 = vadd.f32 0.0, %v1409
        %v1411 = vpop.f32.mrf.mxu0
        %1412 = vmatprep.mubr.f32.mxu0 0.0
        %1413 = vmatmul.mubr.f32.gmra.mxu0 %v1280
        %v1414 = vpop.f32.mrf.mxu0
        %v1415 = vadd.f32 0.0, %v1414
        %v1416 = vpop.f32.mrf.mxu0
        %1417 = vmatprep.mubr.f32.mxu0 0.0
        %1418 = vmatmul.mubr.f32.gmra.mxu0 %v1281
        %v1419 = vpop.f32.mrf.mxu0
        %v1420 = vadd.f32 0.0, %v1419
        %v1421 = vpop.f32.mrf.mxu0
        %1422 = vmatprep.mubr.f32.mxu0 0.0
        %1423 = vmatmul.mubr.f32.gmra.mxu0 %v1282
        %v1424 = vpop.f32.mrf.mxu0
        %v1425 = vadd.f32 0.0, %v1424
        %v1426 = vpop.f32.mrf.mxu0
        %1427 = vmatprep.mubr.f32.mxu0 0.0
        %1428 = vmatmul.mubr.f32.gmra.mxu0 %v1283
        %v1429 = vpop.f32.mrf.mxu0
        %v1430 = vadd.f32 0.0, %v1429
        %v1431 = vpop.f32.mrf.mxu0
        %1432 = vmatprep.mubr.f32.mxu0 0.0
        %1433 = vmatmul.mubr.f32.gmra.mxu0 %v1284
        %v1434 = vpop.f32.mrf.mxu0
        %v1435 = vadd.f32 0.0, %v1434
        %v1436 = vpop.f32.mrf.mxu0
        %1437 = vmatprep.mubr.f32.mxu0 0.0
        %1438 = vmatmul.mubr.f32.gmra.mxu0 %v1285
        %v1439 = vpop.f32.mrf.mxu0
        %v1440 = vadd.f32 0.0, %v1439
        %v1441 = vpop.f32.mrf.mxu0
        %1442 = vmatprep.mubr.f32.mxu0 0.0
        %1443 = vmatmul.mubr.f32.gmra.mxu0 %v1286
        %v1444 = vpop.f32.mrf.mxu0
        %v1445 = vadd.f32 0.0, %v1444
        %v1446 = vpop.f32.mrf.mxu0
        %1447 = vmatprep.mubr.f32.mxu0 0.0
        %1448 = vmatmul.mubr.f32.gmra.mxu0 %v1287
        %v1449 = vpop.f32.mrf.mxu0
        %v1450 = vadd.f32 0.0, %v1449
        %v1451 = vpop.f32.mrf.mxu0
        %1452 = vmatprep.mubr.f32.mxu0 0.0
        %1453 = vmatmul.mubr.f32.gmra.mxu0 %v1288
        %v1454 = vpop.f32.mrf.mxu0
        %v1455 = vadd.f32 0.0, %v1454
        %v1456 = vpop.f32.mrf.mxu0
        %1457 = vmatprep.mubr.f32.mxu0 0.0
        %1458 = vmatmul.mubr.f32.gmra.mxu0 %v1289
        %v1459 = vpop.f32.mrf.mxu0
        %v1460 = vadd.f32 0.0, %v1459
        %v1461 = vpop.f32.mrf.mxu0
        %1462 = vmatprep.mubr.f32.mxu0 0.0
        %1463 = vmatmul.mubr.f32.gmra.mxu0 %v1290
        %v1464 = vpop.f32.mrf.mxu0
        %v1465 = vadd.f32 0.0, %v1464
        %v1466 = vpop.f32.mrf.mxu0
        %1467 = vmatprep.mubr.f32.mxu0 0.0
        %1468 = vmatmul.mubr.f32.gmra.mxu0 %v1291
        %v1469 = vpop.f32.mrf.mxu0
        %v1470 = vadd.f32 0.0, %v1469
        %v1471 = vpop.f32.mrf.mxu0
        %1472 = vmatprep.mubr.f32.mxu0 0.0
        %1473 = vmatmul.mubr.f32.gmra.mxu0 %v1292
        %v1474 = vpop.f32.mrf.mxu0
        %v1475 = vadd.f32 0.0, %v1474
        %v1476 = vpop.f32.mrf.mxu0
        %1477 = vmatprep.mubr.f32.mxu0 0.0
        %1478 = vmatmul.mubr.f32.gmra.mxu0 %v1293
        %v1479 = vpop.f32.mrf.mxu0
        %v1480 = vadd.f32 0.0, %v1479
        %v1481 = vpop.f32.mrf.mxu0
        %1482 = vmatprep.mubr.f32.mxu0 0.0
        %1483 = vmatmul.mubr.f32.gmra.mxu0 %v1294
        %v1484 = vpop.f32.mrf.mxu0
        %v1485 = vadd.f32 0.0, %v1484
        %v1486 = vpop.f32.mrf.mxu0
        %1487 = vdwg.mxu0
        %1488 = vrot.lane.b32.xlu0 %v783, 120
        %v1489 = vpop.permute.xlu0 %1488
        %1490 = vrot.lane.b32.xlu0 %v788, 120
        %v1491 = vpop.permute.xlu0 %1490
        %1492 = vrot.lane.b32.xlu0 %v793, 120
        %v1493 = vpop.permute.xlu0 %1492
        %1494 = vrot.lane.b32.xlu0 %v798, 120
        %v1495 = vpop.permute.xlu0 %1494
        %1496 = vrot.lane.b32.xlu0 %v803, 120
        %v1497 = vpop.permute.xlu0 %1496
        %1498 = vrot.lane.b32.xlu0 %v808, 120
        %v1499 = vpop.permute.xlu0 %1498
        %1500 = vrot.lane.b32.xlu0 %v813, 120
        %v1501 = vpop.permute.xlu0 %1500
        %1502 = vrot.lane.b32.xlu0 %v818, 120
        %v1503 = vpop.permute.xlu0 %1502
        %1504 = vrot.lane.b32.xlu0 %v823, 120
        %v1505 = vpop.permute.xlu0 %1504
        %1506 = vrot.lane.b32.xlu0 %v828, 120
        %v1507 = vpop.permute.xlu0 %1506
        %1508 = vrot.lane.b32.xlu0 %v833, 120
        %v1509 = vpop.permute.xlu0 %1508
        %1510 = vrot.lane.b32.xlu0 %v838, 120
        %v1511 = vpop.permute.xlu0 %1510
        %1512 = vrot.lane.b32.xlu0 %v843, 120
        %v1513 = vpop.permute.xlu0 %1512
        %1514 = vrot.lane.b32.xlu0 %v848, 120
        %v1515 = vpop.permute.xlu0 %1514
        %1516 = vrot.lane.b32.xlu0 %v853, 120
        %v1517 = vpop.permute.xlu0 %1516
        %1518 = vrot.lane.b32.xlu0 %v858, 120
        %v1519 = vpop.permute.xlu0 %1518
        %1520 = vrot.lane.b32.xlu0 %v783, 88
        %v1521 = vpop.permute.xlu0 %1520
        %1522 = vrot.lane.b32.xlu0 %v788, 88
        %v1523 = vpop.permute.xlu0 %1522
        %1524 = vrot.lane.b32.xlu0 %v793, 88
        %v1525 = vpop.permute.xlu0 %1524
        %1526 = vrot.lane.b32.xlu0 %v798, 88
        %v1527 = vpop.permute.xlu0 %1526
        %1528 = vrot.lane.b32.xlu0 %v803, 88
        %v1529 = vpop.permute.xlu0 %1528
        %1530 = vrot.lane.b32.xlu0 %v808, 88
        %v1531 = vpop.permute.xlu0 %1530
        %1532 = vrot.lane.b32.xlu0 %v813, 88
        %v1533 = vpop.permute.xlu0 %1532
        %1534 = vrot.lane.b32.xlu0 %v818, 88
        %v1535 = vpop.permute.xlu0 %1534
        %1536 = vrot.lane.b32.xlu0 %v823, 88
        %v1537 = vpop.permute.xlu0 %1536
        %1538 = vrot.lane.b32.xlu0 %v828, 88
        %v1539 = vpop.permute.xlu0 %1538
        %1540 = vrot.lane.b32.xlu0 %v833, 88
        %v1541 = vpop.permute.xlu0 %1540
        %1542 = vrot.lane.b32.xlu0 %v838, 88
        %v1543 = vpop.permute.xlu0 %1542
        %1544 = vrot.lane.b32.xlu0 %v843, 88
        %v1545 = vpop.permute.xlu0 %1544
        %1546 = vrot.lane.b32.xlu0 %v848, 88
        %v1547 = vpop.permute.xlu0 %1546
        %1548 = vrot.lane.b32.xlu0 %v853, 88
        %v1549 = vpop.permute.xlu0 %1548
        %1550 = vrot.lane.b32.xlu0 %v858, 88
        %v1551 = vpop.permute.xlu0 %1550
        %v1552 = vsel %vm909, %v1489, 0
        %v1554 = vsel %vm909, %v1491, 0
        %v1556 = vsel %vm909, %v1493, 0
        %v1558 = vsel %vm909, %v1495, 0
        %v1560 = vsel %vm909, %v1497, 0
        %v1562 = vsel %vm909, %v1499, 0
        %v1564 = vsel %vm909, %v1501, 0
        %v1566 = vsel %vm909, %v1503, 0
        %v1568 = vsel %vm909, %v1505, 0
        %v1570 = vsel %vm909, %v1507, 0
        %v1572 = vsel %vm909, %v1509, 0
        %v1574 = vsel %vm909, %v1511, 0
        %v1576 = vsel %vm909, %v1513, 0
        %v1578 = vsel %vm909, %v1515, 0
        %v1580 = vsel %vm909, %v1517, 0
        %v1582 = vsel %vm909, %v1519, 0
        %v1584 = vsel %vm909, %v1521, 0
        %v1586 = vsel %vm909, %v1523, 0
        %v1588 = vsel %vm909, %v1525, 0
        %v1590 = vsel %vm909, %v1527, 0
        %v1592 = vsel %vm909, %v1529, 0
        %v1594 = vsel %vm909, %v1531, 0
        %v1596 = vsel %vm909, %v1533, 0
        %v1598 = vsel %vm909, %v1535, 0
        %v1600 = vsel %vm909, %v1537, 0
        %v1602 = vsel %vm909, %v1539, 0
        %v1604 = vsel %vm909, %v1541, 0
        %v1606 = vsel %vm909, %v1543, 0
        %v1608 = vsel %vm909, %v1545, 0
        %v1610 = vsel %vm909, %v1547, 0
        %v1612 = vsel %vm909, %v1549, 0
        %v1614 = vsel %vm909, %v1551, 0
        %1616 = vmatprep.subr.mxu0 0.0
        %1617 = vmatpush1.xpose.msra.mxu0 %v1614
        %1618 = vmatprep.subr.mxu0 0.0
        %1619 = vmatpush1.xpose.msra.mxu0 %v1612
        %1620 = vmatprep.subr.mxu0 0.0
        %1621 = vmatpush1.xpose.msra.mxu0 %v1610
        %1622 = vmatprep.subr.mxu0 0.0
        %1623 = vmatpush1.xpose.msra.mxu0 %v1608
        %1624 = vmatprep.subr.mxu0 0.0
        %1625 = vmatpush1.xpose.msra.mxu0 %v1606
        %1626 = vmatprep.subr.mxu0 0.0
        %1627 = vmatpush1.xpose.msra.mxu0 %v1604
        %1628 = vmatprep.subr.mxu0 0.0
        %1629 = vmatpush1.xpose.msra.mxu0 %v1602
        %1630 = vmatprep.subr.mxu0 0.0
        %1631 = vmatpush1.xpose.msra.mxu0 %v1600
        %1632 = vmatprep.subr.mxu0 0.0
        %1633 = vmatpush1.xpose.msra.mxu0 %v1598
        %1634 = vmatprep.subr.mxu0 0.0
        %1635 = vmatpush1.xpose.msra.mxu0 %v1596
        %1636 = vmatprep.subr.mxu0 0.0
        %1637 = vmatpush1.xpose.msra.mxu0 %v1594
        %1638 = vmatprep.subr.mxu0 0.0
        %1639 = vmatpush1.xpose.msra.mxu0 %v1592
        %1640 = vmatprep.subr.mxu0 0.0
        %1641 = vmatpush1.xpose.msra.mxu0 %v1590
        %1642 = vmatprep.subr.mxu0 0.0
        %1643 = vmatpush1.xpose.msra.mxu0 %v1588
        %1644 = vmatprep.subr.mxu0 0.0
        %1645 = vmatpush1.xpose.msra.mxu0 %v1586
        %1646 = vmatprep.subr.mxu0 0.0
        %1647 = vmatpush1.xpose.msra.mxu0 %v1584
        %1648 = vmatprep.subr.mxu0 0.0
        %1649 = vmatpush2.xpose.msra.mxu0 0.0
        %1650 = vmatprep.subr.mxu0 0.0
        %1651 = vmatpush2.xpose.msra.mxu0 0.0
        %1652 = vmatprep.subr.mxu0 0.0
        %1653 = vmatpush2.xpose.msra.mxu0 0.0
        %1654 = vmatprep.subr.mxu0 0.0
        %1655 = vmatpush2.xpose.msra.mxu0 0.0
        %1656 = vmatprep.subr.mxu0 0.0
        %1657 = vmatpush2.xpose.msra.mxu0 0.0
        %1658 = vmatprep.subr.mxu0 0.0
        %1659 = vmatpush2.xpose.msra.mxu0 0.0
        %1660 = vmatprep.subr.mxu0 0.0
        %1661 = vmatpush2.xpose.msra.mxu0 0.0
        %1662 = vmatprep.subr.mxu0 0.0
        %1663 = vmatpush2.xpose.msra.mxu0 0.0
        %1664 = vmatprep.subr.mxu0 0.0
        %1665 = vmatpush2.xpose.msra.mxu0 0.0
        %1666 = vmatprep.subr.mxu0 0.0
        %1667 = vmatpush2.xpose.msra.mxu0 0.0
        %1668 = vmatprep.subr.mxu0 0.0
        %1669 = vmatpush2.xpose.msra.mxu0 0.0
        %1670 = vmatprep.subr.mxu0 0.0
        %1671 = vmatpush2.xpose.msra.mxu0 0.0
        %1672 = vmatprep.subr.mxu0 0.0
        %1673 = vmatpush2.xpose.msra.mxu0 0.0
        %1674 = vmatprep.subr.mxu0 0.0
        %1675 = vmatpush2.xpose.msra.mxu0 0.0
        %1676 = vmatprep.subr.mxu0 0.0
        %1677 = vmatpush2.xpose.msra.mxu0 0.0
        %1678 = vmatprep.subr.mxu0 0.0
        %1679 = vmatpush2.xpose.msra.mxu0 0.0
        %1680 = vmatprep.mubr.f32.mxu0 0.0
        %1681 = vmatmul.mubr.f32.gmra.mxu0 %v1552
        %v1682 = vpop.f32.mrf.mxu0
        %v1683 = vadd.f32 0.0, %v1682
        %v1684 = vpop.f32.mrf.mxu0
        %1685 = vmatprep.mubr.f32.mxu0 0.0
        %1686 = vmatmul.mubr.f32.gmra.mxu0 %v1554
        %v1687 = vpop.f32.mrf.mxu0
        %v1688 = vadd.f32 0.0, %v1687
        %v1689 = vpop.f32.mrf.mxu0
        %1690 = vmatprep.mubr.f32.mxu0 0.0
        %1691 = vmatmul.mubr.f32.gmra.mxu0 %v1556
        %v1692 = vpop.f32.mrf.mxu0
        %v1693 = vadd.f32 0.0, %v1692
        %v1694 = vpop.f32.mrf.mxu0
        %1695 = vmatprep.mubr.f32.mxu0 0.0
        %1696 = vmatmul.mubr.f32.gmra.mxu0 %v1558
        %v1697 = vpop.f32.mrf.mxu0
        %v1698 = vadd.f32 0.0, %v1697
        %v1699 = vpop.f32.mrf.mxu0
        %1700 = vmatprep.mubr.f32.mxu0 0.0
        %1701 = vmatmul.mubr.f32.gmra.mxu0 %v1560
        %v1702 = vpop.f32.mrf.mxu0
        %v1703 = vadd.f32 0.0, %v1702
        %v1704 = vpop.f32.mrf.mxu0
        %1705 = vmatprep.mubr.f32.mxu0 0.0
        %1706 = vmatmul.mubr.f32.gmra.mxu0 %v1562
        %v1707 = vpop.f32.mrf.mxu0
        %v1708 = vadd.f32 0.0, %v1707
        %v1709 = vpop.f32.mrf.mxu0
        %1710 = vmatprep.mubr.f32.mxu0 0.0
        %1711 = vmatmul.mubr.f32.gmra.mxu0 %v1564
        %v1712 = vpop.f32.mrf.mxu0
        %v1713 = vadd.f32 0.0, %v1712
        %v1714 = vpop.f32.mrf.mxu0
        %1715 = vmatprep.mubr.f32.mxu0 0.0
        %1716 = vmatmul.mubr.f32.gmra.mxu0 %v1566
        %v1717 = vpop.f32.mrf.mxu0
        %v1718 = vadd.f32 0.0, %v1717
        %v1719 = vpop.f32.mrf.mxu0
        %1720 = vmatprep.mubr.f32.mxu0 0.0
        %1721 = vmatmul.mubr.f32.gmra.mxu0 %v1568
        %v1722 = vpop.f32.mrf.mxu0
        %v1723 = vadd.f32 0.0, %v1722
        %v1724 = vpop.f32.mrf.mxu0
        %1725 = vmatprep.mubr.f32.mxu0 0.0
        %1726 = vmatmul.mubr.f32.gmra.mxu0 %v1570
        %v1727 = vpop.f32.mrf.mxu0
        %v1728 = vadd.f32 0.0, %v1727
        %v1729 = vpop.f32.mrf.mxu0
        %1730 = vmatprep.mubr.f32.mxu0 0.0
        %1731 = vmatmul.mubr.f32.gmra.mxu0 %v1572
        %v1732 = vpop.f32.mrf.mxu0
        %v1733 = vadd.f32 0.0, %v1732
        %v1734 = vpop.f32.mrf.mxu0
        %1735 = vmatprep.mubr.f32.mxu0 0.0
        %1736 = vmatmul.mubr.f32.gmra.mxu0 %v1574
        %v1737 = vpop.f32.mrf.mxu0
        %v1738 = vadd.f32 0.0, %v1737
        %v1739 = vpop.f32.mrf.mxu0
        %1740 = vmatprep.mubr.f32.mxu0 0.0
        %1741 = vmatmul.mubr.f32.gmra.mxu0 %v1576
        %v1742 = vpop.f32.mrf.mxu0
        %v1743 = vadd.f32 0.0, %v1742
        %v1744 = vpop.f32.mrf.mxu0
        %1745 = vmatprep.mubr.f32.mxu0 0.0
        %1746 = vmatmul.mubr.f32.gmra.mxu0 %v1578
        %v1747 = vpop.f32.mrf.mxu0
        %v1748 = vadd.f32 0.0, %v1747
        %v1749 = vpop.f32.mrf.mxu0
        %1750 = vmatprep.mubr.f32.mxu0 0.0
        %1751 = vmatmul.mubr.f32.gmra.mxu0 %v1580
        %v1752 = vpop.f32.mrf.mxu0
        %v1753 = vadd.f32 0.0, %v1752
        %v1754 = vpop.f32.mrf.mxu0
        %1755 = vmatprep.mubr.f32.mxu0 0.0
        %1756 = vmatmul.mubr.f32.gmra.mxu0 %v1582
        %v1757 = vpop.f32.mrf.mxu0
        %v1758 = vadd.f32 0.0, %v1757
        %v1759 = vpop.f32.mrf.mxu0
        %1760 = vdwg.mxu0
        %v1761 = vmul.f32 %v1683, 0.35355338
        %v1762 = vmul.f32 %v1688, 0.35355338
        %v1763 = vmul.f32 %v1693, 0.35355338
        %v1764 = vmul.f32 %v1698, 0.35355338
        %v1765 = vmul.f32 %v1703, 0.35355338
        %v1766 = vmul.f32 %v1708, 0.35355338
        %v1767 = vmul.f32 %v1713, 0.35355338
        %v1768 = vmul.f32 %v1718, 0.35355338
        %v1769 = vmul.f32 %v1723, 0.35355338
        %v1770 = vmul.f32 %v1728, 0.35355338
        %v1771 = vmul.f32 %v1733, 0.35355338
        %v1772 = vmul.f32 %v1738, 0.35355338
        %v1773 = vmul.f32 %v1743, 0.35355338
        %v1774 = vmul.f32 %v1748, 0.35355338
        %v1775 = vmul.f32 %v1753, 0.35355338
        %v1776 = vmul.f32 %v1758, 0.35355338
        %v1777 = vadd.f32 %v1761, %v373
        %v1778 = vadd.f32 %v1762, %v374
        %v1779 = vadd.f32 %v1763, %v375
        %v1780 = vadd.f32 %v1764, %v376
        %v1781 = vadd.f32 %v1765, %v377
        %v1782 = vadd.f32 %v1766, %v378
        %v1783 = vadd.f32 %v1767, %v379
        %v1784 = vadd.f32 %v1768, %v380
        %v1785 = vadd.f32 %v1769, %v381
        %v1786 = vadd.f32 %v1770, %v382
        %v1787 = vadd.f32 %v1771, %v383
        %v1788 = vadd.f32 %v1772, %v384
        %v1789 = vadd.f32 %v1773, %v385
        %v1790 = vadd.f32 %v1774, %v386
        %v1791 = vadd.f32 %v1775, %v387
        %v1792 = vadd.f32 %v1776, %v388
        %1793 = vmax.xlane.f32.xlu0 %v1777
        %v1794 = vpop.xlane.xlu0 %1793
        %1795 = vmax.xlane.f32.xlu0 %v1778
        %v1796 = vpop.xlane.xlu0 %1795
        %1797 = vmax.xlane.f32.xlu0 %v1779
        %v1798 = vpop.xlane.xlu0 %1797
        %1799 = vmax.xlane.f32.xlu0 %v1780
        %v1800 = vpop.xlane.xlu0 %1799
        %1801 = vmax.xlane.f32.xlu0 %v1781
        %v1802 = vpop.xlane.xlu0 %1801
        %1803 = vmax.xlane.f32.xlu0 %v1782
        %v1804 = vpop.xlane.xlu0 %1803
        %1805 = vmax.xlane.f32.xlu0 %v1783
        %v1806 = vpop.xlane.xlu0 %1805
        %1807 = vmax.xlane.f32.xlu0 %v1784
        %v1808 = vpop.xlane.xlu0 %1807
        %1809 = vmax.xlane.f32.xlu0 %v1785
        %v1810 = vpop.xlane.xlu0 %1809
        %1811 = vmax.xlane.f32.xlu0 %v1786
        %v1812 = vpop.xlane.xlu0 %1811
        %1813 = vmax.xlane.f32.xlu0 %v1787
        %v1814 = vpop.xlane.xlu0 %1813
        %1815 = vmax.xlane.f32.xlu0 %v1788
        %v1816 = vpop.xlane.xlu0 %1815
        %1817 = vmax.xlane.f32.xlu0 %v1789
        %v1818 = vpop.xlane.xlu0 %1817
        %1819 = vmax.xlane.f32.xlu0 %v1790
        %v1820 = vpop.xlane.xlu0 %1819
        %1821 = vmax.xlane.f32.xlu0 %v1791
        %v1822 = vpop.xlane.xlu0 %1821
        %1823 = vmax.xlane.f32.xlu0 %v1792
        %v1824 = vpop.xlane.xlu0 %1823
        %v1825 = vsub.f32 %v1777, %v1794
        %v1826 = vsub.f32 %v1778, %v1796
        %v1827 = vsub.f32 %v1779, %v1798
        %v1828 = vsub.f32 %v1780, %v1800
        %v1829 = vsub.f32 %v1781, %v1802
        %v1830 = vsub.f32 %v1782, %v1804
        %v1831 = vsub.f32 %v1783, %v1806
        %v1832 = vsub.f32 %v1784, %v1808
        %v1833 = vsub.f32 %v1785, %v1810
        %v1834 = vsub.f32 %v1786, %v1812
        %v1835 = vsub.f32 %v1787, %v1814
        %v1836 = vsub.f32 %v1788, %v1816
        %v1837 = vsub.f32 %v1789, %v1818
        %v1838 = vsub.f32 %v1790, %v1820
        %v1839 = vsub.f32 %v1791, %v1822
        %v1840 = vsub.f32 %v1792, %v1824
        %v1841 = vmul.f32 %v1825, 1.442695
        %v1842 = vpow.pop %v1841
        %v1843 = vmul.f32 %v1826, 1.442695
        %v1844 = vpow.pop %v1843
        %v1845 = vmul.f32 %v1827, 1.442695
        %v1846 = vpow.pop %v1845
        %v1847 = vmul.f32 %v1828, 1.442695
        %v1848 = vpow.pop %v1847
        %v1849 = vmul.f32 %v1829, 1.442695
        %v1850 = vpow.pop %v1849
        %v1851 = vmul.f32 %v1830, 1.442695
        %v1852 = vpow.pop %v1851
        %v1853 = vmul.f32 %v1831, 1.442695
        %v1854 = vpow.pop %v1853
        %v1855 = vmul.f32 %v1832, 1.442695
        %v1856 = vpow.pop %v1855
        %v1857 = vmul.f32 %v1833, 1.442695
        %v1858 = vpow.pop %v1857
        %v1859 = vmul.f32 %v1834, 1.442695
        %v1860 = vpow.pop %v1859
        %v1861 = vmul.f32 %v1835, 1.442695
        %v1862 = vpow.pop %v1861
        %v1863 = vmul.f32 %v1836, 1.442695
        %v1864 = vpow.pop %v1863
        %v1865 = vmul.f32 %v1837, 1.442695
        %v1866 = vpow.pop %v1865
        %v1867 = vmul.f32 %v1838, 1.442695
        %v1868 = vpow.pop %v1867
        %v1869 = vmul.f32 %v1839, 1.442695
        %v1870 = vpow.pop %v1869
        %v1871 = vmul.f32 %v1840, 1.442695
        %v1872 = vpow.pop %v1871
        %1873 = vadd.xlane.f32.xlu0 %v1842
        %v1874 = vpop.xlane.xlu0 %1873
        %1875 = vadd.xlane.f32.xlu0 %v1844
        %v1876 = vpop.xlane.xlu0 %1875
        %1877 = vadd.xlane.f32.xlu0 %v1846
        %v1878 = vpop.xlane.xlu0 %1877
        %1879 = vadd.xlane.f32.xlu0 %v1848
        %v1880 = vpop.xlane.xlu0 %1879
        %1881 = vadd.xlane.f32.xlu0 %v1850
        %v1882 = vpop.xlane.xlu0 %1881
        %1883 = vadd.xlane.f32.xlu0 %v1852
        %v1884 = vpop.xlane.xlu0 %1883
        %1885 = vadd.xlane.f32.xlu0 %v1854
        %v1886 = vpop.xlane.xlu0 %1885
        %1887 = vadd.xlane.f32.xlu0 %v1856
        %v1888 = vpop.xlane.xlu0 %1887
        %1889 = vadd.xlane.f32.xlu0 %v1858
        %v1890 = vpop.xlane.xlu0 %1889
        %1891 = vadd.xlane.f32.xlu0 %v1860
        %v1892 = vpop.xlane.xlu0 %1891
        %1893 = vadd.xlane.f32.xlu0 %v1862
        %v1894 = vpop.xlane.xlu0 %1893
        %1895 = vadd.xlane.f32.xlu0 %v1864
        %v1896 = vpop.xlane.xlu0 %1895
        %1897 = vadd.xlane.f32.xlu0 %v1866
        %v1898 = vpop.xlane.xlu0 %1897
        %1899 = vadd.xlane.f32.xlu0 %v1868
        %v1900 = vpop.xlane.xlu0 %1899
        %1901 = vadd.xlane.f32.xlu0 %v1870
        %v1902 = vpop.xlane.xlu0 %1901
        %1903 = vadd.xlane.f32.xlu0 %v1872
        %v1904 = vpop.xlane.xlu0 %1903
        %v1905 = vrcp.pop %v1874
        %v1906 = vrcp.pop %v1876
        %v1907 = vrcp.pop %v1878
        %v1908 = vrcp.pop %v1880
        %v1909 = vrcp.pop %v1882
        %v1910 = vrcp.pop %v1884
        %v1911 = vrcp.pop %v1886
        %v1912 = vrcp.pop %v1888
        %v1913 = vrcp.pop %v1890
        %v1914 = vrcp.pop %v1892
        %v1915 = vrcp.pop %v1894
        %v1916 = vrcp.pop %v1896
        %v1917 = vrcp.pop %v1898
        %v1918 = vrcp.pop %v1900
        %v1919 = vrcp.pop %v1902
        %v1920 = vrcp.pop %v1904
        %v1921 = vmul.f32 %v1842, %v1905
        %v1922 = vmul.f32 %v1844, %v1906
        %v1923 = vmul.f32 %v1846, %v1907
        %v1924 = vmul.f32 %v1848, %v1908
        %v1925 = vmul.f32 %v1850, %v1909
        %v1926 = vmul.f32 %v1852, %v1910
        %v1927 = vmul.f32 %v1854, %v1911
        %v1928 = vmul.f32 %v1856, %v1912
        %v1929 = vmul.f32 %v1858, %v1913
        %v1930 = vmul.f32 %v1860, %v1914
        %v1931 = vmul.f32 %v1862, %v1915
        %v1932 = vmul.f32 %v1864, %v1916
        %v1933 = vmul.f32 %v1866, %v1917
        %v1934 = vmul.f32 %v1868, %v1918
        %v1935 = vmul.f32 %v1870, %v1919
        %v1936 = vmul.f32 %v1872, %v1920
        %1937 = vrot.lane.b32.xlu0 %v783, 56
        %v1938 = vpop.permute.xlu0 %1937
        %1939 = vrot.lane.b32.xlu0 %v788, 56
        %v1940 = vpop.permute.xlu0 %1939
        %1941 = vrot.lane.b32.xlu0 %v793, 56
        %v1942 = vpop.permute.xlu0 %1941
        %1943 = vrot.lane.b32.xlu0 %v798, 56
        %v1944 = vpop.permute.xlu0 %1943
        %1945 = vrot.lane.b32.xlu0 %v803, 56
        %v1946 = vpop.permute.xlu0 %1945
        %1947 = vrot.lane.b32.xlu0 %v808, 56
        %v1948 = vpop.permute.xlu0 %1947
        %1949 = vrot.lane.b32.xlu0 %v813, 56
        %v1950 = vpop.permute.xlu0 %1949
        %1951 = vrot.lane.b32.xlu0 %v818, 56
        %v1952 = vpop.permute.xlu0 %1951
        %1953 = vrot.lane.b32.xlu0 %v823, 56
        %v1954 = vpop.permute.xlu0 %1953
        %1955 = vrot.lane.b32.xlu0 %v828, 56
        %v1956 = vpop.permute.xlu0 %1955
        %1957 = vrot.lane.b32.xlu0 %v833, 56
        %v1958 = vpop.permute.xlu0 %1957
        %1959 = vrot.lane.b32.xlu0 %v838, 56
        %v1960 = vpop.permute.xlu0 %1959
        %1961 = vrot.lane.b32.xlu0 %v843, 56
        %v1962 = vpop.permute.xlu0 %1961
        %1963 = vrot.lane.b32.xlu0 %v848, 56
        %v1964 = vpop.permute.xlu0 %1963
        %1965 = vrot.lane.b32.xlu0 %v853, 56
        %v1966 = vpop.permute.xlu0 %1965
        %1967 = vrot.lane.b32.xlu0 %v858, 56
        %v1968 = vpop.permute.xlu0 %1967
        %1985 = vmatprep.subr.mxu0 0.0
        %1986 = vmatpush1.msra.mxu0 %v1968
        %1987 = vmatprep.subr.mxu0 0.0
        %1988 = vmatpush1.msra.mxu0 %v1966
        %1989 = vmatprep.subr.mxu0 0.0
        %1990 = vmatpush1.msra.mxu0 %v1964
        %1991 = vmatprep.subr.mxu0 0.0
        %1992 = vmatpush1.msra.mxu0 %v1962
        %1993 = vmatprep.subr.mxu0 0.0
        %1994 = vmatpush1.msra.mxu0 %v1960
        %1995 = vmatprep.subr.mxu0 0.0
        %1996 = vmatpush1.msra.mxu0 %v1958
        %1997 = vmatprep.subr.mxu0 0.0
        %1998 = vmatpush1.msra.mxu0 %v1956
        %1999 = vmatprep.subr.mxu0 0.0
        %2000 = vmatpush1.msra.mxu0 %v1954
        %2001 = vmatprep.subr.mxu0 0.0
        %2002 = vmatpush1.msra.mxu0 %v1952
        %2003 = vmatprep.subr.mxu0 0.0
        %2004 = vmatpush1.msra.mxu0 %v1950
        %2005 = vmatprep.subr.mxu0 0.0
        %2006 = vmatpush1.msra.mxu0 %v1948
        %2007 = vmatprep.subr.mxu0 0.0
        %2008 = vmatpush1.msra.mxu0 %v1946
        %2009 = vmatprep.subr.mxu0 0.0
        %2010 = vmatpush1.msra.mxu0 %v1944
        %2011 = vmatprep.subr.mxu0 0.0
        %2012 = vmatpush1.msra.mxu0 %v1942
        %2013 = vmatprep.subr.mxu0 0.0
        %2014 = vmatpush1.msra.mxu0 %v1940
        %2015 = vmatprep.subr.mxu0 0.0
        %2016 = vmatpush1.msra.mxu0 %v1938
        %2017 = vmatprep.subr.mxu0 0.0
        %2018 = vmatpush2.msra.mxu0 0.0
        %2019 = vmatprep.subr.mxu0 0.0
        %2020 = vmatpush2.msra.mxu0 0.0
        %2021 = vmatprep.subr.mxu0 0.0
        %2022 = vmatpush2.msra.mxu0 0.0
        %2023 = vmatprep.subr.mxu0 0.0
        %2024 = vmatpush2.msra.mxu0 0.0
        %2025 = vmatprep.subr.mxu0 0.0
        %2026 = vmatpush2.msra.mxu0 0.0
        %2027 = vmatprep.subr.mxu0 0.0
        %2028 = vmatpush2.msra.mxu0 0.0
        %2029 = vmatprep.subr.mxu0 0.0
        %2030 = vmatpush2.msra.mxu0 0.0
        %2031 = vmatprep.subr.mxu0 0.0
        %2032 = vmatpush2.msra.mxu0 0.0
        %2033 = vmatprep.subr.mxu0 0.0
        %2034 = vmatpush2.msra.mxu0 0.0
        %2035 = vmatprep.subr.mxu0 0.0
        %2036 = vmatpush2.msra.mxu0 0.0
        %2037 = vmatprep.subr.mxu0 0.0
        %2038 = vmatpush2.msra.mxu0 0.0
        %2039 = vmatprep.subr.mxu0 0.0
        %2040 = vmatpush2.msra.mxu0 0.0
        %2041 = vmatprep.subr.mxu0 0.0
        %2042 = vmatpush2.msra.mxu0 0.0
        %2043 = vmatprep.subr.mxu0 0.0
        %2044 = vmatpush2.msra.mxu0 0.0
        %2045 = vmatprep.subr.mxu0 0.0
        %2046 = vmatpush2.msra.mxu0 0.0
        %2047 = vmatprep.subr.mxu0 0.0
        %2048 = vmatpush2.msra.mxu0 0.0
        %2049 = vmatprep.mubr.f32.mxu0 0.0
        %2050 = vmatmul.mubr.f32.gmra.mxu0 %v1921
        %v2051 = vpop.f32.mrf.mxu0
        %v2052 = vadd.f32 0.0, %v2051
        %v2053 = vpop.f32.mrf.mxu0
        %2054 = vmatprep.mubr.f32.mxu0 0.0
        %2055 = vmatmul.mubr.f32.gmra.mxu0 %v1922
        %v2056 = vpop.f32.mrf.mxu0
        %v2057 = vadd.f32 0.0, %v2056
        %v2058 = vpop.f32.mrf.mxu0
        %2059 = vmatprep.mubr.f32.mxu0 0.0
        %2060 = vmatmul.mubr.f32.gmra.mxu0 %v1923
        %v2061 = vpop.f32.mrf.mxu0
        %v2062 = vadd.f32 0.0, %v2061
        %v2063 = vpop.f32.mrf.mxu0
        %2064 = vmatprep.mubr.f32.mxu0 0.0
        %2065 = vmatmul.mubr.f32.gmra.mxu0 %v1924
        %v2066 = vpop.f32.mrf.mxu0
        %v2067 = vadd.f32 0.0, %v2066
        %v2068 = vpop.f32.mrf.mxu0
        %2069 = vmatprep.mubr.f32.mxu0 0.0
        %2070 = vmatmul.mubr.f32.gmra.mxu0 %v1925
        %v2071 = vpop.f32.mrf.mxu0
        %v2072 = vadd.f32 0.0, %v2071
        %v2073 = vpop.f32.mrf.mxu0
        %2074 = vmatprep.mubr.f32.mxu0 0.0
        %2075 = vmatmul.mubr.f32.gmra.mxu0 %v1926
        %v2076 = vpop.f32.mrf.mxu0
        %v2077 = vadd.f32 0.0, %v2076
        %v2078 = vpop.f32.mrf.mxu0
        %2079 = vmatprep.mubr.f32.mxu0 0.0
        %2080 = vmatmul.mubr.f32.gmra.mxu0 %v1927
        %v2081 = vpop.f32.mrf.mxu0
        %v2082 = vadd.f32 0.0, %v2081
        %v2083 = vpop.f32.mrf.mxu0
        %2084 = vmatprep.mubr.f32.mxu0 0.0
        %2085 = vmatmul.mubr.f32.gmra.mxu0 %v1928
        %v2086 = vpop.f32.mrf.mxu0
        %v2087 = vadd.f32 0.0, %v2086
        %v2088 = vpop.f32.mrf.mxu0
        %2089 = vmatprep.mubr.f32.mxu0 0.0
        %2090 = vmatmul.mubr.f32.gmra.mxu0 %v1929
        %v2091 = vpop.f32.mrf.mxu0
        %v2092 = vadd.f32 0.0, %v2091
        %v2093 = vpop.f32.mrf.mxu0
        %2094 = vmatprep.mubr.f32.mxu0 0.0
        %2095 = vmatmul.mubr.f32.gmra.mxu0 %v1930
        %v2096 = vpop.f32.mrf.mxu0
        %v2097 = vadd.f32 0.0, %v2096
        %v2098 = vpop.f32.mrf.mxu0
        %2099 = vmatprep.mubr.f32.mxu0 0.0
        %2100 = vmatmul.mubr.f32.gmra.mxu0 %v1931
        %v2101 = vpop.f32.mrf.mxu0
        %v2102 = vadd.f32 0.0, %v2101
        %v2103 = vpop.f32.mrf.mxu0
        %2104 = vmatprep.mubr.f32.mxu0 0.0
        %2105 = vmatmul.mubr.f32.gmra.mxu0 %v1932
        %v2106 = vpop.f32.mrf.mxu0
        %v2107 = vadd.f32 0.0, %v2106
        %v2108 = vpop.f32.mrf.mxu0
        %2109 = vmatprep.mubr.f32.mxu0 0.0
        %2110 = vmatmul.mubr.f32.gmra.mxu0 %v1933
        %v2111 = vpop.f32.mrf.mxu0
        %v2112 = vadd.f32 0.0, %v2111
        %v2113 = vpop.f32.mrf.mxu0
        %2114 = vmatprep.mubr.f32.mxu0 0.0
        %2115 = vmatmul.mubr.f32.gmra.mxu0 %v1934
        %v2116 = vpop.f32.mrf.mxu0
        %v2117 = vadd.f32 0.0, %v2116
        %v2118 = vpop.f32.mrf.mxu0
        %2119 = vmatprep.mubr.f32.mxu0 0.0
        %2120 = vmatmul.mubr.f32.gmra.mxu0 %v1935
        %v2121 = vpop.f32.mrf.mxu0
        %v2122 = vadd.f32 0.0, %v2121
        %v2123 = vpop.f32.mrf.mxu0
        %2124 = vmatprep.mubr.f32.mxu0 0.0
        %2125 = vmatmul.mubr.f32.gmra.mxu0 %v1936
        %v2126 = vpop.f32.mrf.mxu0
        %v2127 = vadd.f32 0.0, %v2126
        %v2128 = vpop.f32.mrf.mxu0
        %2129 = vdwg.mxu0
        %2130 = vrot.lane.b32.xlu0 %v783, 112
        %v2131 = vpop.permute.xlu0 %2130
        %2132 = vrot.lane.b32.xlu0 %v788, 112
        %v2133 = vpop.permute.xlu0 %2132
        %2134 = vrot.lane.b32.xlu0 %v793, 112
        %v2135 = vpop.permute.xlu0 %2134
        %2136 = vrot.lane.b32.xlu0 %v798, 112
        %v2137 = vpop.permute.xlu0 %2136
        %2138 = vrot.lane.b32.xlu0 %v803, 112
        %v2139 = vpop.permute.xlu0 %2138
        %2140 = vrot.lane.b32.xlu0 %v808, 112
        %v2141 = vpop.permute.xlu0 %2140
        %2142 = vrot.lane.b32.xlu0 %v813, 112
        %v2143 = vpop.permute.xlu0 %2142
        %2144 = vrot.lane.b32.xlu0 %v818, 112
        %v2145 = vpop.permute.xlu0 %2144
        %2146 = vrot.lane.b32.xlu0 %v823, 112
        %v2147 = vpop.permute.xlu0 %2146
        %2148 = vrot.lane.b32.xlu0 %v828, 112
        %v2149 = vpop.permute.xlu0 %2148
        %2150 = vrot.lane.b32.xlu0 %v833, 112
        %v2151 = vpop.permute.xlu0 %2150
        %2152 = vrot.lane.b32.xlu0 %v838, 112
        %v2153 = vpop.permute.xlu0 %2152
        %2154 = vrot.lane.b32.xlu0 %v843, 112
        %v2155 = vpop.permute.xlu0 %2154
        %2156 = vrot.lane.b32.xlu0 %v848, 112
        %v2157 = vpop.permute.xlu0 %2156
        %2158 = vrot.lane.b32.xlu0 %v853, 112
        %v2159 = vpop.permute.xlu0 %2158
        %2160 = vrot.lane.b32.xlu0 %v858, 112
        %v2161 = vpop.permute.xlu0 %2160
        %2162 = vrot.lane.b32.xlu0 %v783, 80
        %v2163 = vpop.permute.xlu0 %2162
        %2164 = vrot.lane.b32.xlu0 %v788, 80
        %v2165 = vpop.permute.xlu0 %2164
        %2166 = vrot.lane.b32.xlu0 %v793, 80
        %v2167 = vpop.permute.xlu0 %2166
        %2168 = vrot.lane.b32.xlu0 %v798, 80
        %v2169 = vpop.permute.xlu0 %2168
        %2170 = vrot.lane.b32.xlu0 %v803, 80
        %v2171 = vpop.permute.xlu0 %2170
        %2172 = vrot.lane.b32.xlu0 %v808, 80
        %v2173 = vpop.permute.xlu0 %2172
        %2174 = vrot.lane.b32.xlu0 %v813, 80
        %v2175 = vpop.permute.xlu0 %2174
        %2176 = vrot.lane.b32.xlu0 %v818, 80
        %v2177 = vpop.permute.xlu0 %2176
        %2178 = vrot.lane.b32.xlu0 %v823, 80
        %v2179 = vpop.permute.xlu0 %2178
        %2180 = vrot.lane.b32.xlu0 %v828, 80
        %v2181 = vpop.permute.xlu0 %2180
        %2182 = vrot.lane.b32.xlu0 %v833, 80
        %v2183 = vpop.permute.xlu0 %2182
        %2184 = vrot.lane.b32.xlu0 %v838, 80
        %v2185 = vpop.permute.xlu0 %2184
        %2186 = vrot.lane.b32.xlu0 %v843, 80
        %v2187 = vpop.permute.xlu0 %2186
        %2188 = vrot.lane.b32.xlu0 %v848, 80
        %v2189 = vpop.permute.xlu0 %2188
        %2190 = vrot.lane.b32.xlu0 %v853, 80
        %v2191 = vpop.permute.xlu0 %2190
        %2192 = vrot.lane.b32.xlu0 %v858, 80
        %v2193 = vpop.permute.xlu0 %2192
        %v2194 = vsel %vm909, %v2131, 0
        %v2196 = vsel %vm909, %v2133, 0
        %v2198 = vsel %vm909, %v2135, 0
        %v2200 = vsel %vm909, %v2137, 0
        %v2202 = vsel %vm909, %v2139, 0
        %v2204 = vsel %vm909, %v2141, 0
        %v2206 = vsel %vm909, %v2143, 0
        %v2208 = vsel %vm909, %v2145, 0
        %v2210 = vsel %vm909, %v2147, 0
        %v2212 = vsel %vm909, %v2149, 0
        %v2214 = vsel %vm909, %v2151, 0
        %v2216 = vsel %vm909, %v2153, 0
        %v2218 = vsel %vm909, %v2155, 0
        %v2220 = vsel %vm909, %v2157, 0
        %v2222 = vsel %vm909, %v2159, 0
        %v2224 = vsel %vm909, %v2161, 0
        %v2226 = vsel %vm909, %v2163, 0
        %v2228 = vsel %vm909, %v2165, 0
        %v2230 = vsel %vm909, %v2167, 0
        %v2232 = vsel %vm909, %v2169, 0
        %v2234 = vsel %vm909, %v2171, 0
        %v2236 = vsel %vm909, %v2173, 0
        %v2238 = vsel %vm909, %v2175, 0
        %v2240 = vsel %vm909, %v2177, 0
        %v2242 = vsel %vm909, %v2179, 0
        %v2244 = vsel %vm909, %v2181, 0
        %v2246 = vsel %vm909, %v2183, 0
        %v2248 = vsel %vm909, %v2185, 0
        %v2250 = vsel %vm909, %v2187, 0
        %v2252 = vsel %vm909, %v2189, 0
        %v2254 = vsel %vm909, %v2191, 0
        %v2256 = vsel %vm909, %v2193, 0
        %2258 = vmatprep.subr.mxu0 0.0
        %2259 = vmatpush1.xpose.msra.mxu0 %v2256
        %2260 = vmatprep.subr.mxu0 0.0
        %2261 = vmatpush1.xpose.msra.mxu0 %v2254
        %2262 = vmatprep.subr.mxu0 0.0
        %2263 = vmatpush1.xpose.msra.mxu0 %v2252
        %2264 = vmatprep.subr.mxu0 0.0
        %2265 = vmatpush1.xpose.msra.mxu0 %v2250
        %2266 = vmatprep.subr.mxu0 0.0
        %2267 = vmatpush1.xpose.msra.mxu0 %v2248
        %2268 = vmatprep.subr.mxu0 0.0
        %2269 = vmatpush1.xpose.msra.mxu0 %v2246
        %2270 = vmatprep.subr.mxu0 0.0
        %2271 = vmatpush1.xpose.msra.mxu0 %v2244
        %2272 = vmatprep.subr.mxu0 0.0
        %2273 = vmatpush1.xpose.msra.mxu0 %v2242
        %2274 = vmatprep.subr.mxu0 0.0
        %2275 = vmatpush1.xpose.msra.mxu0 %v2240
        %2276 = vmatprep.subr.mxu0 0.0
        %2277 = vmatpush1.xpose.msra.mxu0 %v2238
        %2278 = vmatprep.subr.mxu0 0.0
        %2279 = vmatpush1.xpose.msra.mxu0 %v2236
        %2280 = vmatprep.subr.mxu0 0.0
        %2281 = vmatpush1.xpose.msra.mxu0 %v2234
        %2282 = vmatprep.subr.mxu0 0.0
        %2283 = vmatpush1.xpose.msra.mxu0 %v2232
        %2284 = vmatprep.subr.mxu0 0.0
        %2285 = vmatpush1.xpose.msra.mxu0 %v2230
        %2286 = vmatprep.subr.mxu0 0.0
        %2287 = vmatpush1.xpose.msra.mxu0 %v2228
        %2288 = vmatprep.subr.mxu0 0.0
        %2289 = vmatpush1.xpose.msra.mxu0 %v2226
        %2290 = vmatprep.subr.mxu0 0.0
        %2291 = vmatpush2.xpose.msra.mxu0 0.0
        %2292 = vmatprep.subr.mxu0 0.0
        %2293 = vmatpush2.xpose.msra.mxu0 0.0
        %2294 = vmatprep.subr.mxu0 0.0
        %2295 = vmatpush2.xpose.msra.mxu0 0.0
        %2296 = vmatprep.subr.mxu0 0.0
        %2297 = vmatpush2.xpose.msra.mxu0 0.0
        %2298 = vmatprep.subr.mxu0 0.0
        %2299 = vmatpush2.xpose.msra.mxu0 0.0
        %2300 = vmatprep.subr.mxu0 0.0
        %2301 = vmatpush2.xpose.msra.mxu0 0.0
        %2302 = vmatprep.subr.mxu0 0.0
        %2303 = vmatpush2.xpose.msra.mxu0 0.0
        %2304 = vmatprep.subr.mxu0 0.0
        %2305 = vmatpush2.xpose.msra.mxu0 0.0
        %2306 = vmatprep.subr.mxu0 0.0
        %2307 = vmatpush2.xpose.msra.mxu0 0.0
        %2308 = vmatprep.subr.mxu0 0.0
        %2309 = vmatpush2.xpose.msra.mxu0 0.0
        %2310 = vmatprep.subr.mxu0 0.0
        %2311 = vmatpush2.xpose.msra.mxu0 0.0
        %2312 = vmatprep.subr.mxu0 0.0
        %2313 = vmatpush2.xpose.msra.mxu0 0.0
        %2314 = vmatprep.subr.mxu0 0.0
        %2315 = vmatpush2.xpose.msra.mxu0 0.0
        %2316 = vmatprep.subr.mxu0 0.0
        %2317 = vmatpush2.xpose.msra.mxu0 0.0
        %2318 = vmatprep.subr.mxu0 0.0
        %2319 = vmatpush2.xpose.msra.mxu0 0.0
        %2320 = vmatprep.subr.mxu0 0.0
        %2321 = vmatpush2.xpose.msra.mxu0 0.0
        %2322 = vmatprep.mubr.f32.mxu0 0.0
        %2323 = vmatmul.mubr.f32.gmra.mxu0 %v2194
        %v2324 = vpop.f32.mrf.mxu0
        %v2325 = vadd.f32 0.0, %v2324
        %v2326 = vpop.f32.mrf.mxu0
        %2327 = vmatprep.mubr.f32.mxu0 0.0
        %2328 = vmatmul.mubr.f32.gmra.mxu0 %v2196
        %v2329 = vpop.f32.mrf.mxu0
        %v2330 = vadd.f32 0.0, %v2329
        %v2331 = vpop.f32.mrf.mxu0
        %2332 = vmatprep.mubr.f32.mxu0 0.0
        %2333 = vmatmul.mubr.f32.gmra.mxu0 %v2198
        %v2334 = vpop.f32.mrf.mxu0
        %v2335 = vadd.f32 0.0, %v2334
        %v2336 = vpop.f32.mrf.mxu0
        %2337 = vmatprep.mubr.f32.mxu0 0.0
        %2338 = vmatmul.mubr.f32.gmra.mxu0 %v2200
        %v2339 = vpop.f32.mrf.mxu0
        %v2340 = vadd.f32 0.0, %v2339
        %v2341 = vpop.f32.mrf.mxu0
        %2342 = vmatprep.mubr.f32.mxu0 0.0
        %2343 = vmatmul.mubr.f32.gmra.mxu0 %v2202
        %v2344 = vpop.f32.mrf.mxu0
        %v2345 = vadd.f32 0.0, %v2344
        %v2346 = vpop.f32.mrf.mxu0
        %2347 = vmatprep.mubr.f32.mxu0 0.0
        %2348 = vmatmul.mubr.f32.gmra.mxu0 %v2204
        %v2349 = vpop.f32.mrf.mxu0
        %v2350 = vadd.f32 0.0, %v2349
        %v2351 = vpop.f32.mrf.mxu0
        %2352 = vmatprep.mubr.f32.mxu0 0.0
        %2353 = vmatmul.mubr.f32.gmra.mxu0 %v2206
        %v2354 = vpop.f32.mrf.mxu0
        %v2355 = vadd.f32 0.0, %v2354
        %v2356 = vpop.f32.mrf.mxu0
        %2357 = vmatprep.mubr.f32.mxu0 0.0
        %2358 = vmatmul.mubr.f32.gmra.mxu0 %v2208
        %v2359 = vpop.f32.mrf.mxu0
        %v2360 = vadd.f32 0.0, %v2359
        %v2361 = vpop.f32.mrf.mxu0
        %2362 = vmatprep.mubr.f32.mxu0 0.0
        %2363 = vmatmul.mubr.f32.gmra.mxu0 %v2210
        %v2364 = vpop.f32.mrf.mxu0
        %v2365 = vadd.f32 0.0, %v2364
        %v2366 = vpop.f32.mrf.mxu0
        %2367 = vmatprep.mubr.f32.mxu0 0.0
        %2368 = vmatmul.mubr.f32.gmra.mxu0 %v2212
        %v2369 = vpop.f32.mrf.mxu0
        %v2370 = vadd.f32 0.0, %v2369
        %v2371 = vpop.f32.mrf.mxu0
        %2372 = vmatprep.mubr.f32.mxu0 0.0
        %2373 = vmatmul.mubr.f32.gmra.mxu0 %v2214
        %v2374 = vpop.f32.mrf.mxu0
        %v2375 = vadd.f32 0.0, %v2374
        %v2376 = vpop.f32.mrf.mxu0
        %2377 = vmatprep.mubr.f32.mxu0 0.0
        %2378 = vmatmul.mubr.f32.gmra.mxu0 %v2216
        %v2379 = vpop.f32.mrf.mxu0
        %v2380 = vadd.f32 0.0, %v2379
        %v2381 = vpop.f32.mrf.mxu0
        %2382 = vmatprep.mubr.f32.mxu0 0.0
        %2383 = vmatmul.mubr.f32.gmra.mxu0 %v2218
        %v2384 = vpop.f32.mrf.mxu0
        %v2385 = vadd.f32 0.0, %v2384
        %v2386 = vpop.f32.mrf.mxu0
        %2387 = vmatprep.mubr.f32.mxu0 0.0
        %2388 = vmatmul.mubr.f32.gmra.mxu0 %v2220
        %v2389 = vpop.f32.mrf.mxu0
        %v2390 = vadd.f32 0.0, %v2389
        %v2391 = vpop.f32.mrf.mxu0
        %2392 = vmatprep.mubr.f32.mxu0 0.0
        %2393 = vmatmul.mubr.f32.gmra.mxu0 %v2222
        %v2394 = vpop.f32.mrf.mxu0
        %v2395 = vadd.f32 0.0, %v2394
        %v2396 = vpop.f32.mrf.mxu0
        %2397 = vmatprep.mubr.f32.mxu0 0.0
        %2398 = vmatmul.mubr.f32.gmra.mxu0 %v2224
        %v2399 = vpop.f32.mrf.mxu0
        %v2400 = vadd.f32 0.0, %v2399
        %v2401 = vpop.f32.mrf.mxu0
        %2402 = vdwg.mxu0
        %v2403 = vmul.f32 %v2325, 0.35355338
        %v2404 = vmul.f32 %v2330, 0.35355338
        %v2405 = vmul.f32 %v2335, 0.35355338
        %v2406 = vmul.f32 %v2340, 0.35355338
        %v2407 = vmul.f32 %v2345, 0.35355338
        %v2408 = vmul.f32 %v2350, 0.35355338
        %v2409 = vmul.f32 %v2355, 0.35355338
        %v2410 = vmul.f32 %v2360, 0.35355338
        %v2411 = vmul.f32 %v2365, 0.35355338
        %v2412 = vmul.f32 %v2370, 0.35355338
        %v2413 = vmul.f32 %v2375, 0.35355338
        %v2414 = vmul.f32 %v2380, 0.35355338
        %v2415 = vmul.f32 %v2385, 0.35355338
        %v2416 = vmul.f32 %v2390, 0.35355338
        %v2417 = vmul.f32 %v2395, 0.35355338
        %v2418 = vmul.f32 %v2400, 0.35355338
        %v2419 = vadd.f32 %v2403, %v373
        %v2420 = vadd.f32 %v2404, %v374
        %v2421 = vadd.f32 %v2405, %v375
        %v2422 = vadd.f32 %v2406, %v376
        %v2423 = vadd.f32 %v2407, %v377
        %v2424 = vadd.f32 %v2408, %v378
        %v2425 = vadd.f32 %v2409, %v379
        %v2426 = vadd.f32 %v2410, %v380
        %v2427 = vadd.f32 %v2411, %v381
        %v2428 = vadd.f32 %v2412, %v382
        %v2429 = vadd.f32 %v2413, %v383
        %v2430 = vadd.f32 %v2414, %v384
        %v2431 = vadd.f32 %v2415, %v385
        %v2432 = vadd.f32 %v2416, %v386
        %v2433 = vadd.f32 %v2417, %v387
        %v2434 = vadd.f32 %v2418, %v388
        %2435 = vmax.xlane.f32.xlu0 %v2419
        %v2436 = vpop.xlane.xlu0 %2435
        %2437 = vmax.xlane.f32.xlu0 %v2420
        %v2438 = vpop.xlane.xlu0 %2437
        %2439 = vmax.xlane.f32.xlu0 %v2421
        %v2440 = vpop.xlane.xlu0 %2439
        %2441 = vmax.xlane.f32.xlu0 %v2422
        %v2442 = vpop.xlane.xlu0 %2441
        %2443 = vmax.xlane.f32.xlu0 %v2423
        %v2444 = vpop.xlane.xlu0 %2443
        %2445 = vmax.xlane.f32.xlu0 %v2424
        %v2446 = vpop.xlane.xlu0 %2445
        %2447 = vmax.xlane.f32.xlu0 %v2425
        %v2448 = vpop.xlane.xlu0 %2447
        %2449 = vmax.xlane.f32.xlu0 %v2426
        %v2450 = vpop.xlane.xlu0 %2449
        %2451 = vmax.xlane.f32.xlu0 %v2427
        %v2452 = vpop.xlane.xlu0 %2451
        %2453 = vmax.xlane.f32.xlu0 %v2428
        %v2454 = vpop.xlane.xlu0 %2453
        %2455 = vmax.xlane.f32.xlu0 %v2429
        %v2456 = vpop.xlane.xlu0 %2455
        %2457 = vmax.xlane.f32.xlu0 %v2430
        %v2458 = vpop.xlane.xlu0 %2457
        %2459 = vmax.xlane.f32.xlu0 %v2431
        %v2460 = vpop.xlane.xlu0 %2459
        %2461 = vmax.xlane.f32.xlu0 %v2432
        %v2462 = vpop.xlane.xlu0 %2461
        %2463 = vmax.xlane.f32.xlu0 %v2433
        %v2464 = vpop.xlane.xlu0 %2463
        %2465 = vmax.xlane.f32.xlu0 %v2434
        %v2466 = vpop.xlane.xlu0 %2465
        %v2467 = vsub.f32 %v2419, %v2436
        %v2468 = vsub.f32 %v2420, %v2438
        %v2469 = vsub.f32 %v2421, %v2440
        %v2470 = vsub.f32 %v2422, %v2442
        %v2471 = vsub.f32 %v2423, %v2444
        %v2472 = vsub.f32 %v2424, %v2446
        %v2473 = vsub.f32 %v2425, %v2448
        %v2474 = vsub.f32 %v2426, %v2450
        %v2475 = vsub.f32 %v2427, %v2452
        %v2476 = vsub.f32 %v2428, %v2454
        %v2477 = vsub.f32 %v2429, %v2456
        %v2478 = vsub.f32 %v2430, %v2458
        %v2479 = vsub.f32 %v2431, %v2460
        %v2480 = vsub.f32 %v2432, %v2462
        %v2481 = vsub.f32 %v2433, %v2464
        %v2482 = vsub.f32 %v2434, %v2466
        %v2483 = vmul.f32 %v2467, 1.442695
        %v2484 = vpow.pop %v2483
        %v2485 = vmul.f32 %v2468, 1.442695
        %v2486 = vpow.pop %v2485
        %v2487 = vmul.f32 %v2469, 1.442695
        %v2488 = vpow.pop %v2487
        %v2489 = vmul.f32 %v2470, 1.442695
        %v2490 = vpow.pop %v2489
        %v2491 = vmul.f32 %v2471, 1.442695
        %v2492 = vpow.pop %v2491
        %v2493 = vmul.f32 %v2472, 1.442695
        %v2494 = vpow.pop %v2493
        %v2495 = vmul.f32 %v2473, 1.442695
        %v2496 = vpow.pop %v2495
        %v2497 = vmul.f32 %v2474, 1.442695
        %v2498 = vpow.pop %v2497
        %v2499 = vmul.f32 %v2475, 1.442695
        %v2500 = vpow.pop %v2499
        %v2501 = vmul.f32 %v2476, 1.442695
        %v2502 = vpow.pop %v2501
        %v2503 = vmul.f32 %v2477, 1.442695
        %v2504 = vpow.pop %v2503
        %v2505 = vmul.f32 %v2478, 1.442695
        %v2506 = vpow.pop %v2505
        %v2507 = vmul.f32 %v2479, 1.442695
        %v2508 = vpow.pop %v2507
        %v2509 = vmul.f32 %v2480, 1.442695
        %v2510 = vpow.pop %v2509
        %v2511 = vmul.f32 %v2481, 1.442695
        %v2512 = vpow.pop %v2511
        %v2513 = vmul.f32 %v2482, 1.442695
        %v2514 = vpow.pop %v2513
        %2515 = vadd.xlane.f32.xlu0 %v2484
        %v2516 = vpop.xlane.xlu0 %2515
        %2517 = vadd.xlane.f32.xlu0 %v2486
        %v2518 = vpop.xlane.xlu0 %2517
        %2519 = vadd.xlane.f32.xlu0 %v2488
        %v2520 = vpop.xlane.xlu0 %2519
        %2521 = vadd.xlane.f32.xlu0 %v2490
        %v2522 = vpop.xlane.xlu0 %2521
        %2523 = vadd.xlane.f32.xlu0 %v2492
        %v2524 = vpop.xlane.xlu0 %2523
        %2525 = vadd.xlane.f32.xlu0 %v2494
        %v2526 = vpop.xlane.xlu0 %2525
        %2527 = vadd.xlane.f32.xlu0 %v2496
        %v2528 = vpop.xlane.xlu0 %2527
        %2529 = vadd.xlane.f32.xlu0 %v2498
        %v2530 = vpop.xlane.xlu0 %2529
        %2531 = vadd.xlane.f32.xlu0 %v2500
        %v2532 = vpop.xlane.xlu0 %2531
        %2533 = vadd.xlane.f32.xlu0 %v2502
        %v2534 = vpop.xlane.xlu0 %2533
        %2535 = vadd.xlane.f32.xlu0 %v2504
        %v2536 = vpop.xlane.xlu0 %2535
        %2537 = vadd.xlane.f32.xlu0 %v2506
        %v2538 = vpop.xlane.xlu0 %2537
        %2539 = vadd.xlane.f32.xlu0 %v2508
        %v2540 = vpop.xlane.xlu0 %2539
        %2541 = vadd.xlane.f32.xlu0 %v2510
        %v2542 = vpop.xlane.xlu0 %2541
        %2543 = vadd.xlane.f32.xlu0 %v2512
        %v2544 = vpop.xlane.xlu0 %2543
        %2545 = vadd.xlane.f32.xlu0 %v2514
        %v2546 = vpop.xlane.xlu0 %2545
        %v2547 = vrcp.pop %v2516
        %v2548 = vrcp.pop %v2518
        %v2549 = vrcp.pop %v2520
        %v2550 = vrcp.pop %v2522
        %v2551 = vrcp.pop %v2524
        %v2552 = vrcp.pop %v2526
        %v2553 = vrcp.pop %v2528
        %v2554 = vrcp.pop %v2530
        %v2555 = vrcp.pop %v2532
        %v2556 = vrcp.pop %v2534
        %v2557 = vrcp.pop %v2536
        %v2558 = vrcp.pop %v2538
        %v2559 = vrcp.pop %v2540
        %v2560 = vrcp.pop %v2542
        %v2561 = vrcp.pop %v2544
        %v2562 = vrcp.pop %v2546
        %v2563 = vmul.f32 %v2484, %v2547
        %v2564 = vmul.f32 %v2486, %v2548
        %v2565 = vmul.f32 %v2488, %v2549
        %v2566 = vmul.f32 %v2490, %v2550
        %v2567 = vmul.f32 %v2492, %v2551
        %v2568 = vmul.f32 %v2494, %v2552
        %v2569 = vmul.f32 %v2496, %v2553
        %v2570 = vmul.f32 %v2498, %v2554
        %v2571 = vmul.f32 %v2500, %v2555
        %v2572 = vmul.f32 %v2502, %v2556
        %v2573 = vmul.f32 %v2504, %v2557
        %v2574 = vmul.f32 %v2506, %v2558
        %v2575 = vmul.f32 %v2508, %v2559
        %v2576 = vmul.f32 %v2510, %v2560
        %v2577 = vmul.f32 %v2512, %v2561
        %v2578 = vmul.f32 %v2514, %v2562
        %2579 = vrot.lane.b32.xlu0 %v783, 48
        %v2580 = vpop.permute.xlu0 %2579
        %2581 = vrot.lane.b32.xlu0 %v788, 48
        %v2582 = vpop.permute.xlu0 %2581
        %2583 = vrot.lane.b32.xlu0 %v793, 48
        %v2584 = vpop.permute.xlu0 %2583
        %2585 = vrot.lane.b32.xlu0 %v798, 48
        %v2586 = vpop.permute.xlu0 %2585
        %2587 = vrot.lane.b32.xlu0 %v803, 48
        %v2588 = vpop.permute.xlu0 %2587
        %2589 = vrot.lane.b32.xlu0 %v808, 48
        %v2590 = vpop.permute.xlu0 %2589
        %2591 = vrot.lane.b32.xlu0 %v813, 48
        %v2592 = vpop.permute.xlu0 %2591
        %2593 = vrot.lane.b32.xlu0 %v818, 48
        %v2594 = vpop.permute.xlu0 %2593
        %2595 = vrot.lane.b32.xlu0 %v823, 48
        %v2596 = vpop.permute.xlu0 %2595
        %2597 = vrot.lane.b32.xlu0 %v828, 48
        %v2598 = vpop.permute.xlu0 %2597
        %2599 = vrot.lane.b32.xlu0 %v833, 48
        %v2600 = vpop.permute.xlu0 %2599
        %2601 = vrot.lane.b32.xlu0 %v838, 48
        %v2602 = vpop.permute.xlu0 %2601
        %2603 = vrot.lane.b32.xlu0 %v843, 48
        %v2604 = vpop.permute.xlu0 %2603
        %2605 = vrot.lane.b32.xlu0 %v848, 48
        %v2606 = vpop.permute.xlu0 %2605
        %2607 = vrot.lane.b32.xlu0 %v853, 48
        %v2608 = vpop.permute.xlu0 %2607
        %2609 = vrot.lane.b32.xlu0 %v858, 48
        %v2610 = vpop.permute.xlu0 %2609
        %2627 = vmatprep.subr.mxu0 0.0
        %2628 = vmatpush1.msra.mxu0 %v2610
        %2629 = vmatprep.subr.mxu0 0.0
        %2630 = vmatpush1.msra.mxu0 %v2608
        %2631 = vmatprep.subr.mxu0 0.0
        %2632 = vmatpush1.msra.mxu0 %v2606
        %2633 = vmatprep.subr.mxu0 0.0
        %2634 = vmatpush1.msra.mxu0 %v2604
        %2635 = vmatprep.subr.mxu0 0.0
        %2636 = vmatpush1.msra.mxu0 %v2602
        %2637 = vmatprep.subr.mxu0 0.0
        %2638 = vmatpush1.msra.mxu0 %v2600
        %2639 = vmatprep.subr.mxu0 0.0
        %2640 = vmatpush1.msra.mxu0 %v2598
        %2641 = vmatprep.subr.mxu0 0.0
        %2642 = vmatpush1.msra.mxu0 %v2596
        %2643 = vmatprep.subr.mxu0 0.0
        %2644 = vmatpush1.msra.mxu0 %v2594
        %2645 = vmatprep.subr.mxu0 0.0
        %2646 = vmatpush1.msra.mxu0 %v2592
        %2647 = vmatprep.subr.mxu0 0.0
        %2648 = vmatpush1.msra.mxu0 %v2590
        %2649 = vmatprep.subr.mxu0 0.0
        %2650 = vmatpush1.msra.mxu0 %v2588
        %2651 = vmatprep.subr.mxu0 0.0
        %2652 = vmatpush1.msra.mxu0 %v2586
        %2653 = vmatprep.subr.mxu0 0.0
        %2654 = vmatpush1.msra.mxu0 %v2584
        %2655 = vmatprep.subr.mxu0 0.0
        %2656 = vmatpush1.msra.mxu0 %v2582
        %2657 = vmatprep.subr.mxu0 0.0
        %2658 = vmatpush1.msra.mxu0 %v2580
        %2659 = vmatprep.subr.mxu0 0.0
        %2660 = vmatpush2.msra.mxu0 0.0
        %2661 = vmatprep.subr.mxu0 0.0
        %2662 = vmatpush2.msra.mxu0 0.0
        %2663 = vmatprep.subr.mxu0 0.0
        %2664 = vmatpush2.msra.mxu0 0.0
        %2665 = vmatprep.subr.mxu0 0.0
        %2666 = vmatpush2.msra.mxu0 0.0
        %2667 = vmatprep.subr.mxu0 0.0
        %2668 = vmatpush2.msra.mxu0 0.0
        %2669 = vmatprep.subr.mxu0 0.0
        %2670 = vmatpush2.msra.mxu0 0.0
        %2671 = vmatprep.subr.mxu0 0.0
        %2672 = vmatpush2.msra.mxu0 0.0
        %2673 = vmatprep.subr.mxu0 0.0
        %2674 = vmatpush2.msra.mxu0 0.0
        %2675 = vmatprep.subr.mxu0 0.0
        %2676 = vmatpush2.msra.mxu0 0.0
        %2677 = vmatprep.subr.mxu0 0.0
        %2678 = vmatpush2.msra.mxu0 0.0
        %2679 = vmatprep.subr.mxu0 0.0
        %2680 = vmatpush2.msra.mxu0 0.0
        %2681 = vmatprep.subr.mxu0 0.0
        %2682 = vmatpush2.msra.mxu0 0.0
        %2683 = vmatprep.subr.mxu0 0.0
        %2684 = vmatpush2.msra.mxu0 0.0
        %2685 = vmatprep.subr.mxu0 0.0
        %2686 = vmatpush2.msra.mxu0 0.0
        %2687 = vmatprep.subr.mxu0 0.0
        %2688 = vmatpush2.msra.mxu0 0.0
        %2689 = vmatprep.subr.mxu0 0.0
        %2690 = vmatpush2.msra.mxu0 0.0
        %2691 = vmatprep.mubr.f32.mxu0 0.0
        %2692 = vmatmul.mubr.f32.gmra.mxu0 %v2563
        %v2693 = vpop.f32.mrf.mxu0
        %v2694 = vadd.f32 0.0, %v2693
        %v2695 = vpop.f32.mrf.mxu0
        %2696 = vmatprep.mubr.f32.mxu0 0.0
        %2697 = vmatmul.mubr.f32.gmra.mxu0 %v2564
        %v2698 = vpop.f32.mrf.mxu0
        %v2699 = vadd.f32 0.0, %v2698
        %v2700 = vpop.f32.mrf.mxu0
        %2701 = vmatprep.mubr.f32.mxu0 0.0
        %2702 = vmatmul.mubr.f32.gmra.mxu0 %v2565
        %v2703 = vpop.f32.mrf.mxu0
        %v2704 = vadd.f32 0.0, %v2703
        %v2705 = vpop.f32.mrf.mxu0
        %2706 = vmatprep.mubr.f32.mxu0 0.0
        %2707 = vmatmul.mubr.f32.gmra.mxu0 %v2566
        %v2708 = vpop.f32.mrf.mxu0
        %v2709 = vadd.f32 0.0, %v2708
        %v2710 = vpop.f32.mrf.mxu0
        %2711 = vmatprep.mubr.f32.mxu0 0.0
        %2712 = vmatmul.mubr.f32.gmra.mxu0 %v2567
        %v2713 = vpop.f32.mrf.mxu0
        %v2714 = vadd.f32 0.0, %v2713
        %v2715 = vpop.f32.mrf.mxu0
        %2716 = vmatprep.mubr.f32.mxu0 0.0
        %2717 = vmatmul.mubr.f32.gmra.mxu0 %v2568
        %v2718 = vpop.f32.mrf.mxu0
        %v2719 = vadd.f32 0.0, %v2718
        %v2720 = vpop.f32.mrf.mxu0
        %2721 = vmatprep.mubr.f32.mxu0 0.0
        %2722 = vmatmul.mubr.f32.gmra.mxu0 %v2569
        %v2723 = vpop.f32.mrf.mxu0
        %v2724 = vadd.f32 0.0, %v2723
        %v2725 = vpop.f32.mrf.mxu0
        %2726 = vmatprep.mubr.f32.mxu0 0.0
        %2727 = vmatmul.mubr.f32.gmra.mxu0 %v2570
        %v2728 = vpop.f32.mrf.mxu0
        %v2729 = vadd.f32 0.0, %v2728
        %v2730 = vpop.f32.mrf.mxu0
        %2731 = vmatprep.mubr.f32.mxu0 0.0
        %2732 = vmatmul.mubr.f32.gmra.mxu0 %v2571
        %v2733 = vpop.f32.mrf.mxu0
        %v2734 = vadd.f32 0.0, %v2733
        %v2735 = vpop.f32.mrf.mxu0
        %2736 = vmatprep.mubr.f32.mxu0 0.0
        %2737 = vmatmul.mubr.f32.gmra.mxu0 %v2572
        %v2738 = vpop.f32.mrf.mxu0
        %v2739 = vadd.f32 0.0, %v2738
        %v2740 = vpop.f32.mrf.mxu0
        %2741 = vmatprep.mubr.f32.mxu0 0.0
        %2742 = vmatmul.mubr.f32.gmra.mxu0 %v2573
        %v2743 = vpop.f32.mrf.mxu0
        %v2744 = vadd.f32 0.0, %v2743
        %v2745 = vpop.f32.mrf.mxu0
        %2746 = vmatprep.mubr.f32.mxu0 0.0
        %2747 = vmatmul.mubr.f32.gmra.mxu0 %v2574
        %v2748 = vpop.f32.mrf.mxu0
        %v2749 = vadd.f32 0.0, %v2748
        %v2750 = vpop.f32.mrf.mxu0
        %2751 = vmatprep.mubr.f32.mxu0 0.0
        %2752 = vmatmul.mubr.f32.gmra.mxu0 %v2575
        %v2753 = vpop.f32.mrf.mxu0
        %v2754 = vadd.f32 0.0, %v2753
        %v2755 = vpop.f32.mrf.mxu0
        %2756 = vmatprep.mubr.f32.mxu0 0.0
        %2757 = vmatmul.mubr.f32.gmra.mxu0 %v2576
        %v2758 = vpop.f32.mrf.mxu0
        %v2759 = vadd.f32 0.0, %v2758
        %v2760 = vpop.f32.mrf.mxu0
        %2761 = vmatprep.mubr.f32.mxu0 0.0
        %2762 = vmatmul.mubr.f32.gmra.mxu0 %v2577
        %v2763 = vpop.f32.mrf.mxu0
        %v2764 = vadd.f32 0.0, %v2763
        %v2765 = vpop.f32.mrf.mxu0
        %2766 = vmatprep.mubr.f32.mxu0 0.0
        %2767 = vmatmul.mubr.f32.gmra.mxu0 %v2578
        %v2768 = vpop.f32.mrf.mxu0
        %v2769 = vadd.f32 0.0, %v2768
        %v2770 = vpop.f32.mrf.mxu0
        %2771 = vdwg.mxu0
        %2772 = vrot.lane.b32.xlu0 %v783, 104
        %v2773 = vpop.permute.xlu0 %2772
        %2774 = vrot.lane.b32.xlu0 %v788, 104
        %v2775 = vpop.permute.xlu0 %2774
        %2776 = vrot.lane.b32.xlu0 %v793, 104
        %v2777 = vpop.permute.xlu0 %2776
        %2778 = vrot.lane.b32.xlu0 %v798, 104
        %v2779 = vpop.permute.xlu0 %2778
        %2780 = vrot.lane.b32.xlu0 %v803, 104
        %v2781 = vpop.permute.xlu0 %2780
        %2782 = vrot.lane.b32.xlu0 %v808, 104
        %v2783 = vpop.permute.xlu0 %2782
        %2784 = vrot.lane.b32.xlu0 %v813, 104
        %v2785 = vpop.permute.xlu0 %2784
        %2786 = vrot.lane.b32.xlu0 %v818, 104
        %v2787 = vpop.permute.xlu0 %2786
        %2788 = vrot.lane.b32.xlu0 %v823, 104
        %v2789 = vpop.permute.xlu0 %2788
        %2790 = vrot.lane.b32.xlu0 %v828, 104
        %v2791 = vpop.permute.xlu0 %2790
        %2792 = vrot.lane.b32.xlu0 %v833, 104
        %v2793 = vpop.permute.xlu0 %2792
        %2794 = vrot.lane.b32.xlu0 %v838, 104
        %v2795 = vpop.permute.xlu0 %2794
        %2796 = vrot.lane.b32.xlu0 %v843, 104
        %v2797 = vpop.permute.xlu0 %2796
        %2798 = vrot.lane.b32.xlu0 %v848, 104
        %v2799 = vpop.permute.xlu0 %2798
        %2800 = vrot.lane.b32.xlu0 %v853, 104
        %v2801 = vpop.permute.xlu0 %2800
        %2802 = vrot.lane.b32.xlu0 %v858, 104
        %v2803 = vpop.permute.xlu0 %2802
        %2804 = vrot.lane.b32.xlu0 %v783, 72
        %v2805 = vpop.permute.xlu0 %2804
        %2806 = vrot.lane.b32.xlu0 %v788, 72
        %v2807 = vpop.permute.xlu0 %2806
        %2808 = vrot.lane.b32.xlu0 %v793, 72
        %v2809 = vpop.permute.xlu0 %2808
        %2810 = vrot.lane.b32.xlu0 %v798, 72
        %v2811 = vpop.permute.xlu0 %2810
        %2812 = vrot.lane.b32.xlu0 %v803, 72
        %v2813 = vpop.permute.xlu0 %2812
        %2814 = vrot.lane.b32.xlu0 %v808, 72
        %v2815 = vpop.permute.xlu0 %2814
        %2816 = vrot.lane.b32.xlu0 %v813, 72
        %v2817 = vpop.permute.xlu0 %2816
        %2818 = vrot.lane.b32.xlu0 %v818, 72
        %v2819 = vpop.permute.xlu0 %2818
        %2820 = vrot.lane.b32.xlu0 %v823, 72
        %v2821 = vpop.permute.xlu0 %2820
        %2822 = vrot.lane.b32.xlu0 %v828, 72
        %v2823 = vpop.permute.xlu0 %2822
        %2824 = vrot.lane.b32.xlu0 %v833, 72
        %v2825 = vpop.permute.xlu0 %2824
        %2826 = vrot.lane.b32.xlu0 %v838, 72
        %v2827 = vpop.permute.xlu0 %2826
        %2828 = vrot.lane.b32.xlu0 %v843, 72
        %v2829 = vpop.permute.xlu0 %2828
        %2830 = vrot.lane.b32.xlu0 %v848, 72
        %v2831 = vpop.permute.xlu0 %2830
        %2832 = vrot.lane.b32.xlu0 %v853, 72
        %v2833 = vpop.permute.xlu0 %2832
        %2834 = vrot.lane.b32.xlu0 %v858, 72
        %v2835 = vpop.permute.xlu0 %2834
        %v2836 = vsel %vm909, %v2773, 0
        %v2838 = vsel %vm909, %v2775, 0
        %v2840 = vsel %vm909, %v2777, 0
        %v2842 = vsel %vm909, %v2779, 0
        %v2844 = vsel %vm909, %v2781, 0
        %v2846 = vsel %vm909, %v2783, 0
        %v2848 = vsel %vm909, %v2785, 0
        %v2850 = vsel %vm909, %v2787, 0
        %v2852 = vsel %vm909, %v2789, 0
        %v2854 = vsel %vm909, %v2791, 0
        %v2856 = vsel %vm909, %v2793, 0
        %v2858 = vsel %vm909, %v2795, 0
        %v2860 = vsel %vm909, %v2797, 0
        %v2862 = vsel %vm909, %v2799, 0
        %v2864 = vsel %vm909, %v2801, 0
        %v2866 = vsel %vm909, %v2803, 0
        %v2868 = vsel %vm909, %v2805, 0
        %v2870 = vsel %vm909, %v2807, 0
        %v2872 = vsel %vm909, %v2809, 0
        %v2874 = vsel %vm909, %v2811, 0
        %v2876 = vsel %vm909, %v2813, 0
        %v2878 = vsel %vm909, %v2815, 0
        %v2880 = vsel %vm909, %v2817, 0
        %v2882 = vsel %vm909, %v2819, 0
        %v2884 = vsel %vm909, %v2821, 0
        %v2886 = vsel %vm909, %v2823, 0
        %v2888 = vsel %vm909, %v2825, 0
        %v2890 = vsel %vm909, %v2827, 0
        %v2892 = vsel %vm909, %v2829, 0
        %v2894 = vsel %vm909, %v2831, 0
        %v2896 = vsel %vm909, %v2833, 0
        %v2898 = vsel %vm909, %v2835, 0
        %2900 = vmatprep.subr.mxu0 0.0
        %2901 = vmatpush1.xpose.msra.mxu0 %v2898
        %2902 = vmatprep.subr.mxu0 0.0
        %2903 = vmatpush1.xpose.msra.mxu0 %v2896
        %2904 = vmatprep.subr.mxu0 0.0
        %2905 = vmatpush1.xpose.msra.mxu0 %v2894
        %2906 = vmatprep.subr.mxu0 0.0
        %2907 = vmatpush1.xpose.msra.mxu0 %v2892
        %2908 = vmatprep.subr.mxu0 0.0
        %2909 = vmatpush1.xpose.msra.mxu0 %v2890
        %2910 = vmatprep.subr.mxu0 0.0
        %2911 = vmatpush1.xpose.msra.mxu0 %v2888
        %2912 = vmatprep.subr.mxu0 0.0
        %2913 = vmatpush1.xpose.msra.mxu0 %v2886
        %2914 = vmatprep.subr.mxu0 0.0
        %2915 = vmatpush1.xpose.msra.mxu0 %v2884
        %2916 = vmatprep.subr.mxu0 0.0
        %2917 = vmatpush1.xpose.msra.mxu0 %v2882
        %2918 = vmatprep.subr.mxu0 0.0
        %2919 = vmatpush1.xpose.msra.mxu0 %v2880
        %2920 = vmatprep.subr.mxu0 0.0
        %2921 = vmatpush1.xpose.msra.mxu0 %v2878
        %2922 = vmatprep.subr.mxu0 0.0
        %2923 = vmatpush1.xpose.msra.mxu0 %v2876
        %2924 = vmatprep.subr.mxu0 0.0
        %2925 = vmatpush1.xpose.msra.mxu0 %v2874
        %2926 = vmatprep.subr.mxu0 0.0
        %2927 = vmatpush1.xpose.msra.mxu0 %v2872
        %2928 = vmatprep.subr.mxu0 0.0
        %2929 = vmatpush1.xpose.msra.mxu0 %v2870
        %2930 = vmatprep.subr.mxu0 0.0
        %2931 = vmatpush1.xpose.msra.mxu0 %v2868
        %2932 = vmatprep.subr.mxu0 0.0
        %2933 = vmatpush2.xpose.msra.mxu0 0.0
        %2934 = vmatprep.subr.mxu0 0.0
        %2935 = vmatpush2.xpose.msra.mxu0 0.0
        %2936 = vmatprep.subr.mxu0 0.0
        %2937 = vmatpush2.xpose.msra.mxu0 0.0
        %2938 = vmatprep.subr.mxu0 0.0
        %2939 = vmatpush2.xpose.msra.mxu0 0.0
        %2940 = vmatprep.subr.mxu0 0.0
        %2941 = vmatpush2.xpose.msra.mxu0 0.0
        %2942 = vmatprep.subr.mxu0 0.0
        %2943 = vmatpush2.xpose.msra.mxu0 0.0
        %2944 = vmatprep.subr.mxu0 0.0
        %2945 = vmatpush2.xpose.msra.mxu0 0.0
        %2946 = vmatprep.subr.mxu0 0.0
        %2947 = vmatpush2.xpose.msra.mxu0 0.0
        %2948 = vmatprep.subr.mxu0 0.0
        %2949 = vmatpush2.xpose.msra.mxu0 0.0
        %2950 = vmatprep.subr.mxu0 0.0
        %2951 = vmatpush2.xpose.msra.mxu0 0.0
        %2952 = vmatprep.subr.mxu0 0.0
        %2953 = vmatpush2.xpose.msra.mxu0 0.0
        %2954 = vmatprep.subr.mxu0 0.0
        %2955 = vmatpush2.xpose.msra.mxu0 0.0
        %2956 = vmatprep.subr.mxu0 0.0
        %2957 = vmatpush2.xpose.msra.mxu0 0.0
        %2958 = vmatprep.subr.mxu0 0.0
        %2959 = vmatpush2.xpose.msra.mxu0 0.0
        %2960 = vmatprep.subr.mxu0 0.0
        %2961 = vmatpush2.xpose.msra.mxu0 0.0
        %2962 = vmatprep.subr.mxu0 0.0
        %2963 = vmatpush2.xpose.msra.mxu0 0.0
        %2964 = vmatprep.mubr.f32.mxu0 0.0
        %2965 = vmatmul.mubr.f32.gmra.mxu0 %v2836
        %v2966 = vpop.f32.mrf.mxu0
        %v2967 = vadd.f32 0.0, %v2966
        %v2968 = vpop.f32.mrf.mxu0
        %2969 = vmatprep.mubr.f32.mxu0 0.0
        %2970 = vmatmul.mubr.f32.gmra.mxu0 %v2838
        %v2971 = vpop.f32.mrf.mxu0
        %v2972 = vadd.f32 0.0, %v2971
        %v2973 = vpop.f32.mrf.mxu0
        %2974 = vmatprep.mubr.f32.mxu0 0.0
        %2975 = vmatmul.mubr.f32.gmra.mxu0 %v2840
        %v2976 = vpop.f32.mrf.mxu0
        %v2977 = vadd.f32 0.0, %v2976
        %v2978 = vpop.f32.mrf.mxu0
        %2979 = vmatprep.mubr.f32.mxu0 0.0
        %2980 = vmatmul.mubr.f32.gmra.mxu0 %v2842
        %v2981 = vpop.f32.mrf.mxu0
        %v2982 = vadd.f32 0.0, %v2981
        %v2983 = vpop.f32.mrf.mxu0
        %2984 = vmatprep.mubr.f32.mxu0 0.0
        %2985 = vmatmul.mubr.f32.gmra.mxu0 %v2844
        %v2986 = vpop.f32.mrf.mxu0
        %v2987 = vadd.f32 0.0, %v2986
        %v2988 = vpop.f32.mrf.mxu0
        %2989 = vmatprep.mubr.f32.mxu0 0.0
        %2990 = vmatmul.mubr.f32.gmra.mxu0 %v2846
        %v2991 = vpop.f32.mrf.mxu0
        %v2992 = vadd.f32 0.0, %v2991
        %v2993 = vpop.f32.mrf.mxu0
        %2994 = vmatprep.mubr.f32.mxu0 0.0
        %2995 = vmatmul.mubr.f32.gmra.mxu0 %v2848
        %v2996 = vpop.f32.mrf.mxu0
        %v2997 = vadd.f32 0.0, %v2996
        %v2998 = vpop.f32.mrf.mxu0
        %2999 = vmatprep.mubr.f32.mxu0 0.0
        %3000 = vmatmul.mubr.f32.gmra.mxu0 %v2850
        %v3001 = vpop.f32.mrf.mxu0
        %v3002 = vadd.f32 0.0, %v3001
        %v3003 = vpop.f32.mrf.mxu0
        %3004 = vmatprep.mubr.f32.mxu0 0.0
        %3005 = vmatmul.mubr.f32.gmra.mxu0 %v2852
        %v3006 = vpop.f32.mrf.mxu0
        %v3007 = vadd.f32 0.0, %v3006
        %v3008 = vpop.f32.mrf.mxu0
        %3009 = vmatprep.mubr.f32.mxu0 0.0
        %3010 = vmatmul.mubr.f32.gmra.mxu0 %v2854
        %v3011 = vpop.f32.mrf.mxu0
        %v3012 = vadd.f32 0.0, %v3011
        %v3013 = vpop.f32.mrf.mxu0
        %3014 = vmatprep.mubr.f32.mxu0 0.0
        %3015 = vmatmul.mubr.f32.gmra.mxu0 %v2856
        %v3016 = vpop.f32.mrf.mxu0
        %v3017 = vadd.f32 0.0, %v3016
        %v3018 = vpop.f32.mrf.mxu0
        %3019 = vmatprep.mubr.f32.mxu0 0.0
        %3020 = vmatmul.mubr.f32.gmra.mxu0 %v2858
        %v3021 = vpop.f32.mrf.mxu0
        %v3022 = vadd.f32 0.0, %v3021
        %v3023 = vpop.f32.mrf.mxu0
        %3024 = vmatprep.mubr.f32.mxu0 0.0
        %3025 = vmatmul.mubr.f32.gmra.mxu0 %v2860
        %v3026 = vpop.f32.mrf.mxu0
        %v3027 = vadd.f32 0.0, %v3026
        %v3028 = vpop.f32.mrf.mxu0
        %3029 = vmatprep.mubr.f32.mxu0 0.0
        %3030 = vmatmul.mubr.f32.gmra.mxu0 %v2862
        %v3031 = vpop.f32.mrf.mxu0
        %v3032 = vadd.f32 0.0, %v3031
        %v3033 = vpop.f32.mrf.mxu0
        %3034 = vmatprep.mubr.f32.mxu0 0.0
        %3035 = vmatmul.mubr.f32.gmra.mxu0 %v2864
        %v3036 = vpop.f32.mrf.mxu0
        %v3037 = vadd.f32 0.0, %v3036
        %v3038 = vpop.f32.mrf.mxu0
        %3039 = vmatprep.mubr.f32.mxu0 0.0
        %3040 = vmatmul.mubr.f32.gmra.mxu0 %v2866
        %v3041 = vpop.f32.mrf.mxu0
        %v3042 = vadd.f32 0.0, %v3041
        %v3043 = vpop.f32.mrf.mxu0
        %3044 = vdwg.mxu0
        %v3045 = vmul.f32 %v2967, 0.35355338
        %v3046 = vmul.f32 %v2972, 0.35355338
        %v3047 = vmul.f32 %v2977, 0.35355338
        %v3048 = vmul.f32 %v2982, 0.35355338
        %v3049 = vmul.f32 %v2987, 0.35355338
        %v3050 = vmul.f32 %v2992, 0.35355338
        %v3051 = vmul.f32 %v2997, 0.35355338
        %v3052 = vmul.f32 %v3002, 0.35355338
        %v3053 = vmul.f32 %v3007, 0.35355338
        %v3054 = vmul.f32 %v3012, 0.35355338
        %v3055 = vmul.f32 %v3017, 0.35355338
        %v3056 = vmul.f32 %v3022, 0.35355338
        %v3057 = vmul.f32 %v3027, 0.35355338
        %v3058 = vmul.f32 %v3032, 0.35355338
        %v3059 = vmul.f32 %v3037, 0.35355338
        %v3060 = vmul.f32 %v3042, 0.35355338
        %v3061 = vadd.f32 %v3045, %v373
        %v3062 = vadd.f32 %v3046, %v374
        %v3063 = vadd.f32 %v3047, %v375
        %v3064 = vadd.f32 %v3048, %v376
        %v3065 = vadd.f32 %v3049, %v377
        %v3066 = vadd.f32 %v3050, %v378
        %v3067 = vadd.f32 %v3051, %v379
        %v3068 = vadd.f32 %v3052, %v380
        %v3069 = vadd.f32 %v3053, %v381
        %v3070 = vadd.f32 %v3054, %v382
        %v3071 = vadd.f32 %v3055, %v383
        %v3072 = vadd.f32 %v3056, %v384
        %v3073 = vadd.f32 %v3057, %v385
        %v3074 = vadd.f32 %v3058, %v386
        %v3075 = vadd.f32 %v3059, %v387
        %v3076 = vadd.f32 %v3060, %v388
        %3077 = vmax.xlane.f32.xlu0 %v3061
        %v3078 = vpop.xlane.xlu0 %3077
        %3079 = vmax.xlane.f32.xlu0 %v3062
        %v3080 = vpop.xlane.xlu0 %3079
        %3081 = vmax.xlane.f32.xlu0 %v3063
        %v3082 = vpop.xlane.xlu0 %3081
        %3083 = vmax.xlane.f32.xlu0 %v3064
        %v3084 = vpop.xlane.xlu0 %3083
        %3085 = vmax.xlane.f32.xlu0 %v3065
        %v3086 = vpop.xlane.xlu0 %3085
        %3087 = vmax.xlane.f32.xlu0 %v3066
        %v3088 = vpop.xlane.xlu0 %3087
        %3089 = vmax.xlane.f32.xlu0 %v3067
        %v3090 = vpop.xlane.xlu0 %3089
        %3091 = vmax.xlane.f32.xlu0 %v3068
        %v3092 = vpop.xlane.xlu0 %3091
        %3093 = vmax.xlane.f32.xlu0 %v3069
        %v3094 = vpop.xlane.xlu0 %3093
        %3095 = vmax.xlane.f32.xlu0 %v3070
        %v3096 = vpop.xlane.xlu0 %3095
        %3097 = vmax.xlane.f32.xlu0 %v3071
        %v3098 = vpop.xlane.xlu0 %3097
        %3099 = vmax.xlane.f32.xlu0 %v3072
        %v3100 = vpop.xlane.xlu0 %3099
        %3101 = vmax.xlane.f32.xlu0 %v3073
        %v3102 = vpop.xlane.xlu0 %3101
        %3103 = vmax.xlane.f32.xlu0 %v3074
        %v3104 = vpop.xlane.xlu0 %3103
        %3105 = vmax.xlane.f32.xlu0 %v3075
        %v3106 = vpop.xlane.xlu0 %3105
        %3107 = vmax.xlane.f32.xlu0 %v3076
        %v3108 = vpop.xlane.xlu0 %3107
        %v3109 = vsub.f32 %v3061, %v3078
        %v3110 = vsub.f32 %v3062, %v3080
        %v3111 = vsub.f32 %v3063, %v3082
        %v3112 = vsub.f32 %v3064, %v3084
        %v3113 = vsub.f32 %v3065, %v3086
        %v3114 = vsub.f32 %v3066, %v3088
        %v3115 = vsub.f32 %v3067, %v3090
        %v3116 = vsub.f32 %v3068, %v3092
        %v3117 = vsub.f32 %v3069, %v3094
        %v3118 = vsub.f32 %v3070, %v3096
        %v3119 = vsub.f32 %v3071, %v3098
        %v3120 = vsub.f32 %v3072, %v3100
        %v3121 = vsub.f32 %v3073, %v3102
        %v3122 = vsub.f32 %v3074, %v3104
        %v3123 = vsub.f32 %v3075, %v3106
        %v3124 = vsub.f32 %v3076, %v3108
        %v3125 = vmul.f32 %v3109, 1.442695
        %v3126 = vpow.pop %v3125
        %v3127 = vmul.f32 %v3110, 1.442695
        %v3128 = vpow.pop %v3127
        %v3129 = vmul.f32 %v3111, 1.442695
        %v3130 = vpow.pop %v3129
        %v3131 = vmul.f32 %v3112, 1.442695
        %v3132 = vpow.pop %v3131
        %v3133 = vmul.f32 %v3113, 1.442695
        %v3134 = vpow.pop %v3133
        %v3135 = vmul.f32 %v3114, 1.442695
        %v3136 = vpow.pop %v3135
        %v3137 = vmul.f32 %v3115, 1.442695
        %v3138 = vpow.pop %v3137
        %v3139 = vmul.f32 %v3116, 1.442695
        %v3140 = vpow.pop %v3139
        %v3141 = vmul.f32 %v3117, 1.442695
        %v3142 = vpow.pop %v3141
        %v3143 = vmul.f32 %v3118, 1.442695
        %v3144 = vpow.pop %v3143
        %v3145 = vmul.f32 %v3119, 1.442695
        %v3146 = vpow.pop %v3145
        %v3147 = vmul.f32 %v3120, 1.442695
        %v3148 = vpow.pop %v3147
        %v3149 = vmul.f32 %v3121, 1.442695
        %v3150 = vpow.pop %v3149
        %v3151 = vmul.f32 %v3122, 1.442695
        %v3152 = vpow.pop %v3151
        %v3153 = vmul.f32 %v3123, 1.442695
        %v3154 = vpow.pop %v3153
        %v3155 = vmul.f32 %v3124, 1.442695
        %v3156 = vpow.pop %v3155
        %3157 = vadd.xlane.f32.xlu0 %v3126
        %v3158 = vpop.xlane.xlu0 %3157
        %3159 = vadd.xlane.f32.xlu0 %v3128
        %v3160 = vpop.xlane.xlu0 %3159
        %3161 = vadd.xlane.f32.xlu0 %v3130
        %v3162 = vpop.xlane.xlu0 %3161
        %3163 = vadd.xlane.f32.xlu0 %v3132
        %v3164 = vpop.xlane.xlu0 %3163
        %3165 = vadd.xlane.f32.xlu0 %v3134
        %v3166 = vpop.xlane.xlu0 %3165
        %3167 = vadd.xlane.f32.xlu0 %v3136
        %v3168 = vpop.xlane.xlu0 %3167
        %3169 = vadd.xlane.f32.xlu0 %v3138
        %v3170 = vpop.xlane.xlu0 %3169
        %3171 = vadd.xlane.f32.xlu0 %v3140
        %v3172 = vpop.xlane.xlu0 %3171
        %3173 = vadd.xlane.f32.xlu0 %v3142
        %v3174 = vpop.xlane.xlu0 %3173
        %3175 = vadd.xlane.f32.xlu0 %v3144
        %v3176 = vpop.xlane.xlu0 %3175
        %3177 = vadd.xlane.f32.xlu0 %v3146
        %v3178 = vpop.xlane.xlu0 %3177
        %3179 = vadd.xlane.f32.xlu0 %v3148
        %v3180 = vpop.xlane.xlu0 %3179
        %3181 = vadd.xlane.f32.xlu0 %v3150
        %v3182 = vpop.xlane.xlu0 %3181
        %3183 = vadd.xlane.f32.xlu0 %v3152
        %v3184 = vpop.xlane.xlu0 %3183
        %3185 = vadd.xlane.f32.xlu0 %v3154
        %v3186 = vpop.xlane.xlu0 %3185
        %3187 = vadd.xlane.f32.xlu0 %v3156
        %v3188 = vpop.xlane.xlu0 %3187
        %v3189 = vrcp.pop %v3158
        %v3190 = vrcp.pop %v3160
        %v3191 = vrcp.pop %v3162
        %v3192 = vrcp.pop %v3164
        %v3193 = vrcp.pop %v3166
        %v3194 = vrcp.pop %v3168
        %v3195 = vrcp.pop %v3170
        %v3196 = vrcp.pop %v3172
        %v3197 = vrcp.pop %v3174
        %v3198 = vrcp.pop %v3176
        %v3199 = vrcp.pop %v3178
        %v3200 = vrcp.pop %v3180
        %v3201 = vrcp.pop %v3182
        %v3202 = vrcp.pop %v3184
        %v3203 = vrcp.pop %v3186
        %v3204 = vrcp.pop %v3188
        %v3205 = vmul.f32 %v3126, %v3189
        %v3206 = vmul.f32 %v3128, %v3190
        %v3207 = vmul.f32 %v3130, %v3191
        %v3208 = vmul.f32 %v3132, %v3192
        %v3209 = vmul.f32 %v3134, %v3193
        %v3210 = vmul.f32 %v3136, %v3194
        %v3211 = vmul.f32 %v3138, %v3195
        %v3212 = vmul.f32 %v3140, %v3196
        %v3213 = vmul.f32 %v3142, %v3197
        %v3214 = vmul.f32 %v3144, %v3198
        %v3215 = vmul.f32 %v3146, %v3199
        %v3216 = vmul.f32 %v3148, %v3200
        %v3217 = vmul.f32 %v3150, %v3201
        %v3218 = vmul.f32 %v3152, %v3202
        %v3219 = vmul.f32 %v3154, %v3203
        %v3220 = vmul.f32 %v3156, %v3204
        %3221 = vrot.lane.b32.xlu0 %v783, 40
        %v3222 = vpop.permute.xlu0 %3221
        %3223 = vrot.lane.b32.xlu0 %v788, 40
        %v3224 = vpop.permute.xlu0 %3223
        %3225 = vrot.lane.b32.xlu0 %v793, 40
        %v3226 = vpop.permute.xlu0 %3225
        %3227 = vrot.lane.b32.xlu0 %v798, 40
        %v3228 = vpop.permute.xlu0 %3227
        %3229 = vrot.lane.b32.xlu0 %v803, 40
        %v3230 = vpop.permute.xlu0 %3229
        %3231 = vrot.lane.b32.xlu0 %v808, 40
        %v3232 = vpop.permute.xlu0 %3231
        %3233 = vrot.lane.b32.xlu0 %v813, 40
        %v3234 = vpop.permute.xlu0 %3233
        %3235 = vrot.lane.b32.xlu0 %v818, 40
        %v3236 = vpop.permute.xlu0 %3235
        %3237 = vrot.lane.b32.xlu0 %v823, 40
        %v3238 = vpop.permute.xlu0 %3237
        %3239 = vrot.lane.b32.xlu0 %v828, 40
        %v3240 = vpop.permute.xlu0 %3239
        %3241 = vrot.lane.b32.xlu0 %v833, 40
        %v3242 = vpop.permute.xlu0 %3241
        %3243 = vrot.lane.b32.xlu0 %v838, 40
        %v3244 = vpop.permute.xlu0 %3243
        %3245 = vrot.lane.b32.xlu0 %v843, 40
        %v3246 = vpop.permute.xlu0 %3245
        %3247 = vrot.lane.b32.xlu0 %v848, 40
        %v3248 = vpop.permute.xlu0 %3247
        %3249 = vrot.lane.b32.xlu0 %v853, 40
        %v3250 = vpop.permute.xlu0 %3249
        %3251 = vrot.lane.b32.xlu0 %v858, 40
        %v3252 = vpop.permute.xlu0 %3251
        %3269 = vmatprep.subr.mxu0 0.0
        %3270 = vmatpush1.msra.mxu0 %v3252
        %3271 = vmatprep.subr.mxu0 0.0
        %3272 = vmatpush1.msra.mxu0 %v3250
        %3273 = vmatprep.subr.mxu0 0.0
        %3274 = vmatpush1.msra.mxu0 %v3248
        %3275 = vmatprep.subr.mxu0 0.0
        %3276 = vmatpush1.msra.mxu0 %v3246
        %3277 = vmatprep.subr.mxu0 0.0
        %3278 = vmatpush1.msra.mxu0 %v3244
        %3279 = vmatprep.subr.mxu0 0.0
        %3280 = vmatpush1.msra.mxu0 %v3242
        %3281 = vmatprep.subr.mxu0 0.0
        %3282 = vmatpush1.msra.mxu0 %v3240
        %3283 = vmatprep.subr.mxu0 0.0
        %3284 = vmatpush1.msra.mxu0 %v3238
        %3285 = vmatprep.subr.mxu0 0.0
        %3286 = vmatpush1.msra.mxu0 %v3236
        %3287 = vmatprep.subr.mxu0 0.0
        %3288 = vmatpush1.msra.mxu0 %v3234
        %3289 = vmatprep.subr.mxu0 0.0
        %3290 = vmatpush1.msra.mxu0 %v3232
        %3291 = vmatprep.subr.mxu0 0.0
        %3292 = vmatpush1.msra.mxu0 %v3230
        %3293 = vmatprep.subr.mxu0 0.0
        %3294 = vmatpush1.msra.mxu0 %v3228
        %3295 = vmatprep.subr.mxu0 0.0
        %3296 = vmatpush1.msra.mxu0 %v3226
        %3297 = vmatprep.subr.mxu0 0.0
        %3298 = vmatpush1.msra.mxu0 %v3224
        %3299 = vmatprep.subr.mxu0 0.0
        %3300 = vmatpush1.msra.mxu0 %v3222
        %3301 = vmatprep.subr.mxu0 0.0
        %3302 = vmatpush2.msra.mxu0 0.0
        %3303 = vmatprep.subr.mxu0 0.0
        %3304 = vmatpush2.msra.mxu0 0.0
        %3305 = vmatprep.subr.mxu0 0.0
        %3306 = vmatpush2.msra.mxu0 0.0
        %3307 = vmatprep.subr.mxu0 0.0
        %3308 = vmatpush2.msra.mxu0 0.0
        %3309 = vmatprep.subr.mxu0 0.0
        %3310 = vmatpush2.msra.mxu0 0.0
        %3311 = vmatprep.subr.mxu0 0.0
        %3312 = vmatpush2.msra.mxu0 0.0
        %3313 = vmatprep.subr.mxu0 0.0
        %3314 = vmatpush2.msra.mxu0 0.0
        %3315 = vmatprep.subr.mxu0 0.0
        %3316 = vmatpush2.msra.mxu0 0.0
        %3317 = vmatprep.subr.mxu0 0.0
        %3318 = vmatpush2.msra.mxu0 0.0
        %3319 = vmatprep.subr.mxu0 0.0
        %3320 = vmatpush2.msra.mxu0 0.0
        %3321 = vmatprep.subr.mxu0 0.0
        %3322 = vmatpush2.msra.mxu0 0.0
        %3323 = vmatprep.subr.mxu0 0.0
        %3324 = vmatpush2.msra.mxu0 0.0
        %3325 = vmatprep.subr.mxu0 0.0
        %3326 = vmatpush2.msra.mxu0 0.0
        %3327 = vmatprep.subr.mxu0 0.0
        %3328 = vmatpush2.msra.mxu0 0.0
        %3329 = vmatprep.subr.mxu0 0.0
        %3330 = vmatpush2.msra.mxu0 0.0
        %3331 = vmatprep.subr.mxu0 0.0
        %3332 = vmatpush2.msra.mxu0 0.0
        %3333 = vmatprep.mubr.f32.mxu0 0.0
        %3334 = vmatmul.mubr.f32.gmra.mxu0 %v3205
        %v3335 = vpop.f32.mrf.mxu0
        %v3336 = vadd.f32 0.0, %v3335
        %v3337 = vpop.f32.mrf.mxu0
        %3338 = vmatprep.mubr.f32.mxu0 0.0
        %3339 = vmatmul.mubr.f32.gmra.mxu0 %v3206
        %v3340 = vpop.f32.mrf.mxu0
        %v3341 = vadd.f32 0.0, %v3340
        %v3342 = vpop.f32.mrf.mxu0
        %3343 = vmatprep.mubr.f32.mxu0 0.0
        %3344 = vmatmul.mubr.f32.gmra.mxu0 %v3207
        %v3345 = vpop.f32.mrf.mxu0
        %v3346 = vadd.f32 0.0, %v3345
        %v3347 = vpop.f32.mrf.mxu0
        %3348 = vmatprep.mubr.f32.mxu0 0.0
        %3349 = vmatmul.mubr.f32.gmra.mxu0 %v3208
        %v3350 = vpop.f32.mrf.mxu0
        %v3351 = vadd.f32 0.0, %v3350
        %v3352 = vpop.f32.mrf.mxu0
        %3353 = vmatprep.mubr.f32.mxu0 0.0
        %3354 = vmatmul.mubr.f32.gmra.mxu0 %v3209
        %v3355 = vpop.f32.mrf.mxu0
        %v3356 = vadd.f32 0.0, %v3355
        %v3357 = vpop.f32.mrf.mxu0
        %3358 = vmatprep.mubr.f32.mxu0 0.0
        %3359 = vmatmul.mubr.f32.gmra.mxu0 %v3210
        %v3360 = vpop.f32.mrf.mxu0
        %v3361 = vadd.f32 0.0, %v3360
        %v3362 = vpop.f32.mrf.mxu0
        %3363 = vmatprep.mubr.f32.mxu0 0.0
        %3364 = vmatmul.mubr.f32.gmra.mxu0 %v3211
        %v3365 = vpop.f32.mrf.mxu0
        %v3366 = vadd.f32 0.0, %v3365
        %v3367 = vpop.f32.mrf.mxu0
        %3368 = vmatprep.mubr.f32.mxu0 0.0
        %3369 = vmatmul.mubr.f32.gmra.mxu0 %v3212
        %v3370 = vpop.f32.mrf.mxu0
        %v3371 = vadd.f32 0.0, %v3370
        %v3372 = vpop.f32.mrf.mxu0
        %3373 = vmatprep.mubr.f32.mxu0 0.0
        %3374 = vmatmul.mubr.f32.gmra.mxu0 %v3213
        %v3375 = vpop.f32.mrf.mxu0
        %v3376 = vadd.f32 0.0, %v3375
        %v3377 = vpop.f32.mrf.mxu0
        %3378 = vmatprep.mubr.f32.mxu0 0.0
        %3379 = vmatmul.mubr.f32.gmra.mxu0 %v3214
        %v3380 = vpop.f32.mrf.mxu0
        %v3381 = vadd.f32 0.0, %v3380
        %v3382 = vpop.f32.mrf.mxu0
        %3383 = vmatprep.mubr.f32.mxu0 0.0
        %3384 = vmatmul.mubr.f32.gmra.mxu0 %v3215
        %v3385 = vpop.f32.mrf.mxu0
        %v3386 = vadd.f32 0.0, %v3385
        %v3387 = vpop.f32.mrf.mxu0
        %3388 = vmatprep.mubr.f32.mxu0 0.0
        %3389 = vmatmul.mubr.f32.gmra.mxu0 %v3216
        %v3390 = vpop.f32.mrf.mxu0
        %v3391 = vadd.f32 0.0, %v3390
        %v3392 = vpop.f32.mrf.mxu0
        %3393 = vmatprep.mubr.f32.mxu0 0.0
        %3394 = vmatmul.mubr.f32.gmra.mxu0 %v3217
        %v3395 = vpop.f32.mrf.mxu0
        %v3396 = vadd.f32 0.0, %v3395
        %v3397 = vpop.f32.mrf.mxu0
        %3398 = vmatprep.mubr.f32.mxu0 0.0
        %3399 = vmatmul.mubr.f32.gmra.mxu0 %v3218
        %v3400 = vpop.f32.mrf.mxu0
        %v3401 = vadd.f32 0.0, %v3400
        %v3402 = vpop.f32.mrf.mxu0
        %3403 = vmatprep.mubr.f32.mxu0 0.0
        %3404 = vmatmul.mubr.f32.gmra.mxu0 %v3219
        %v3405 = vpop.f32.mrf.mxu0
        %v3406 = vadd.f32 0.0, %v3405
        %v3407 = vpop.f32.mrf.mxu0
        %3408 = vmatprep.mubr.f32.mxu0 0.0
        %3409 = vmatmul.mubr.f32.gmra.mxu0 %v3220
        %v3410 = vpop.f32.mrf.mxu0
        %v3411 = vadd.f32 0.0, %v3410
        %v3412 = vpop.f32.mrf.mxu0
        %3413 = vdwg.mxu0
        %3430 = vrot.lane.b32.xlu0 %v2052, 8
        %v3431 = vpop.permute.xlu0 %3430
        %3432 = vrot.lane.b32.xlu0 %v2057, 8
        %v3433 = vpop.permute.xlu0 %3432
        %3434 = vrot.lane.b32.xlu0 %v2062, 8
        %v3435 = vpop.permute.xlu0 %3434
        %3436 = vrot.lane.b32.xlu0 %v2067, 8
        %v3437 = vpop.permute.xlu0 %3436
        %3438 = vrot.lane.b32.xlu0 %v2072, 8
        %v3439 = vpop.permute.xlu0 %3438
        %3440 = vrot.lane.b32.xlu0 %v2077, 8
        %v3441 = vpop.permute.xlu0 %3440
        %3442 = vrot.lane.b32.xlu0 %v2082, 8
        %v3443 = vpop.permute.xlu0 %3442
        %3444 = vrot.lane.b32.xlu0 %v2087, 8
        %v3445 = vpop.permute.xlu0 %3444
        %3446 = vrot.lane.b32.xlu0 %v2092, 8
        %v3447 = vpop.permute.xlu0 %3446
        %3448 = vrot.lane.b32.xlu0 %v2097, 8
        %v3449 = vpop.permute.xlu0 %3448
        %3450 = vrot.lane.b32.xlu0 %v2102, 8
        %v3451 = vpop.permute.xlu0 %3450
        %3452 = vrot.lane.b32.xlu0 %v2107, 8
        %v3453 = vpop.permute.xlu0 %3452
        %3454 = vrot.lane.b32.xlu0 %v2112, 8
        %v3455 = vpop.permute.xlu0 %3454
        %3456 = vrot.lane.b32.xlu0 %v2117, 8
        %v3457 = vpop.permute.xlu0 %3456
        %3458 = vrot.lane.b32.xlu0 %v2122, 8
        %v3459 = vpop.permute.xlu0 %3458
        %3460 = vrot.lane.b32.xlu0 %v2127, 8
        %v3461 = vpop.permute.xlu0 %3460
        %3494 = vrot.lane.b32.xlu0 %v2694, 16
        %v3495 = vpop.permute.xlu0 %3494
        %3496 = vrot.lane.b32.xlu0 %v2699, 16
        %v3497 = vpop.permute.xlu0 %3496
        %3498 = vrot.lane.b32.xlu0 %v2704, 16
        %v3499 = vpop.permute.xlu0 %3498
        %3500 = vrot.lane.b32.xlu0 %v2709, 16
        %v3501 = vpop.permute.xlu0 %3500
        %3502 = vrot.lane.b32.xlu0 %v2714, 16
        %v3503 = vpop.permute.xlu0 %3502
        %3504 = vrot.lane.b32.xlu0 %v2719, 16
        %v3505 = vpop.permute.xlu0 %3504
        %3506 = vrot.lane.b32.xlu0 %v2724, 16
        %v3507 = vpop.permute.xlu0 %3506
        %3508 = vrot.lane.b32.xlu0 %v2729, 16
        %v3509 = vpop.permute.xlu0 %3508
        %3510 = vrot.lane.b32.xlu0 %v2734, 16
        %v3511 = vpop.permute.xlu0 %3510
        %3512 = vrot.lane.b32.xlu0 %v2739, 16
        %v3513 = vpop.permute.xlu0 %3512
        %3514 = vrot.lane.b32.xlu0 %v2744, 16
        %v3515 = vpop.permute.xlu0 %3514
        %3516 = vrot.lane.b32.xlu0 %v2749, 16
        %v3517 = vpop.permute.xlu0 %3516
        %3518 = vrot.lane.b32.xlu0 %v2754, 16
        %v3519 = vpop.permute.xlu0 %3518
        %3520 = vrot.lane.b32.xlu0 %v2759, 16
        %v3521 = vpop.permute.xlu0 %3520
        %3522 = vrot.lane.b32.xlu0 %v2764, 16
        %v3523 = vpop.permute.xlu0 %3522
        %3524 = vrot.lane.b32.xlu0 %v2769, 16
        %v3525 = vpop.permute.xlu0 %3524
        %3558 = vrot.lane.b32.xlu0 %v3336, 24
        %v3559 = vpop.permute.xlu0 %3558
        %3560 = vrot.lane.b32.xlu0 %v3341, 24
        %v3561 = vpop.permute.xlu0 %3560
        %3562 = vrot.lane.b32.xlu0 %v3346, 24
        %v3563 = vpop.permute.xlu0 %3562
        %3564 = vrot.lane.b32.xlu0 %v3351, 24
        %v3565 = vpop.permute.xlu0 %3564
        %3566 = vrot.lane.b32.xlu0 %v3356, 24
        %v3567 = vpop.permute.xlu0 %3566
        %3568 = vrot.lane.b32.xlu0 %v3361, 24
        %v3569 = vpop.permute.xlu0 %3568
        %3570 = vrot.lane.b32.xlu0 %v3366, 24
        %v3571 = vpop.permute.xlu0 %3570
        %3572 = vrot.lane.b32.xlu0 %v3371, 24
        %v3573 = vpop.permute.xlu0 %3572
        %3574 = vrot.lane.b32.xlu0 %v3376, 24
        %v3575 = vpop.permute.xlu0 %3574
        %3576 = vrot.lane.b32.xlu0 %v3381, 24
        %v3577 = vpop.permute.xlu0 %3576
        %3578 = vrot.lane.b32.xlu0 %v3386, 24
        %v3579 = vpop.permute.xlu0 %3578
        %3580 = vrot.lane.b32.xlu0 %v3391, 24
        %v3581 = vpop.permute.xlu0 %3580
        %3582 = vrot.lane.b32.xlu0 %v3396, 24
        %v3583 = vpop.permute.xlu0 %3582
        %3584 = vrot.lane.b32.xlu0 %v3401, 24
        %v3585 = vpop.permute.xlu0 %3584
        %3586 = vrot.lane.b32.xlu0 %v3406, 24
        %v3587 = vpop.permute.xlu0 %3586
        %3588 = vrot.lane.b32.xlu0 %v3411, 24
        %v3589 = vpop.permute.xlu0 %3588
        %v3606 = vsel %vm909, %v1410, %v3431
        %v3607 = vsel %vm909, %v1415, %v3433
        %v3608 = vsel %vm909, %v1420, %v3435
        %v3609 = vsel %vm909, %v1425, %v3437
        %v3610 = vsel %vm909, %v1430, %v3439
        %v3611 = vsel %vm909, %v1435, %v3441
        %v3612 = vsel %vm909, %v1440, %v3443
        %v3613 = vsel %vm909, %v1445, %v3445
        %v3614 = vsel %vm909, %v1450, %v3447
        %v3615 = vsel %vm909, %v1455, %v3449
        %v3616 = vsel %vm909, %v1460, %v3451
        %v3617 = vsel %vm909, %v1465, %v3453
        %v3618 = vsel %vm909, %v1470, %v3455
        %v3619 = vsel %vm909, %v1475, %v3457
        %v3620 = vsel %vm909, %v1480, %v3459
        %v3621 = vsel %vm909, %v1485, %v3461
        %vm3622 = vcmask 130048
        %v3623 = vsel %vm3622, %v3606, %v3495
        %v3624 = vsel %vm3622, %v3607, %v3497
        %v3625 = vsel %vm3622, %v3608, %v3499
        %v3626 = vsel %vm3622, %v3609, %v3501
        %v3627 = vsel %vm3622, %v3610, %v3503
        %v3628 = vsel %vm3622, %v3611, %v3505
        %v3629 = vsel %vm3622, %v3612, %v3507
        %v3630 = vsel %vm3622, %v3613, %v3509
        %v3631 = vsel %vm3622, %v3614, %v3511
        %v3632 = vsel %vm3622, %v3615, %v3513
        %v3633 = vsel %vm3622, %v3616, %v3515
        %v3634 = vsel %vm3622, %v3617, %v3517
        %v3635 = vsel %vm3622, %v3618, %v3519
        %v3636 = vsel %vm3622, %v3619, %v3521
        %v3637 = vsel %vm3622, %v3620, %v3523
        %v3638 = vsel %vm3622, %v3621, %v3525
        %vm3639 = vcmask 195584
        %v3640 = vsel %vm3639, %v3623, %v3559
        %v3641 = vsel %vm3639, %v3624, %v3561
        %v3642 = vsel %vm3639, %v3625, %v3563
        %v3643 = vsel %vm3639, %v3626, %v3565
        %v3644 = vsel %vm3639, %v3627, %v3567
        %v3645 = vsel %vm3639, %v3628, %v3569
        %v3646 = vsel %vm3639, %v3629, %v3571
        %v3647 = vsel %vm3639, %v3630, %v3573
        %v3648 = vsel %vm3639, %v3631, %v3575
        %v3649 = vsel %vm3639, %v3632, %v3577
        %v3650 = vsel %vm3639, %v3633, %v3579
        %v3651 = vsel %vm3639, %v3634, %v3581
        %v3652 = vsel %vm3639, %v3635, %v3583
        %v3653 = vsel %vm3639, %v3636, %v3585
        %v3654 = vsel %vm3639, %v3637, %v3587
        %v3655 = vsel %vm3639, %v3638, %v3589
        %3660 = vrot.lane.b32.xlu0 %v390, 32
        %v3661 = vpop.permute.xlu0 %3660
        %3662 = vrot.lane.b32.xlu0 %v392, 32
        %v3663 = vpop.permute.xlu0 %3662
        %3664 = vrot.lane.b32.xlu0 %v394, 32
        %v3665 = vpop.permute.xlu0 %3664
        %3666 = vrot.lane.b32.xlu0 %v396, 32
        %v3667 = vpop.permute.xlu0 %3666
        %v3673 = vsel %vm414, %v3640, 0
        %v3676 = vsel %vm414, %v3641, 0
        %v3679 = vsel %vm414, %v3642, 0
        %v3682 = vsel %vm414, %v3643, 0
        %v3685 = vsel %vm414, %v3644, 0
        %v3688 = vsel %vm414, %v3645, 0
        %v3691 = vsel %vm414, %v3646, 0
        %v3694 = vsel %vm414, %v3647, 0
        %v3697 = vsel %vm414, %v3648, 0
        %v3700 = vsel %vm414, %v3649, 0
        %v3703 = vsel %vm414, %v3650, 0
        %v3706 = vsel %vm414, %v3651, 0
        %v3709 = vsel %vm414, %v3652, 0
        %v3712 = vsel %vm414, %v3653, 0
        %v3715 = vsel %vm414, %v3654, 0
        %v3718 = vsel %vm414, %v3655, 0
        %3720 = vmatprep.subr.mxu0 0.0
        %3721 = vmatpush1.msra.mxu0 0.0
        %3722 = vmatprep.subr.mxu0 0.0
        %3723 = vmatpush1.msra.mxu0 0.0
        %3724 = vmatprep.subr.mxu0 0.0
        %3725 = vmatpush1.msra.mxu0 0.0
        %3726 = vmatprep.subr.mxu0 0.0
        %3727 = vmatpush1.msra.mxu0 0.0
        %3728 = vmatprep.subr.mxu0 0.0
        %3729 = vmatpush1.msra.mxu0 0.0
        %3730 = vmatprep.subr.mxu0 0.0
        %3731 = vmatpush1.msra.mxu0 0.0
        %3732 = vmatprep.subr.mxu0 0.0
        %3733 = vmatpush1.msra.mxu0 0.0
        %3734 = vmatprep.subr.mxu0 0.0
        %3735 = vmatpush1.msra.mxu0 0.0
        %3736 = vmatprep.subr.mxu0 0.0
        %3737 = vmatpush1.msra.mxu0 0.0
        %3738 = vmatprep.subr.mxu0 0.0
        %3739 = vmatpush1.msra.mxu0 0.0
        %3740 = vmatprep.subr.mxu0 0.0
        %3741 = vmatpush1.msra.mxu0 0.0
        %3742 = vmatprep.subr.mxu0 0.0
        %3743 = vmatpush1.msra.mxu0 0.0
        %3744 = vmatprep.subr.mxu0 0.0
        %3745 = vmatpush1.msra.mxu0 %v3667
        %3746 = vmatprep.subr.mxu0 0.0
        %3747 = vmatpush1.msra.mxu0 %v3665
        %3748 = vmatprep.subr.mxu0 0.0
        %3749 = vmatpush1.msra.mxu0 %v3663
        %3750 = vmatprep.subr.mxu0 0.0
        %3751 = vmatpush1.msra.mxu0 %v3661
        %3752 = vmatprep.subr.mxu0 0.0
        %3753 = vmatpush2.msra.mxu0 0.0
        %3754 = vmatprep.subr.mxu0 0.0
        %3755 = vmatpush2.msra.mxu0 0.0
        %3756 = vmatprep.subr.mxu0 0.0
        %3757 = vmatpush2.msra.mxu0 0.0
        %3758 = vmatprep.subr.mxu0 0.0
        %3759 = vmatpush2.msra.mxu0 0.0
        %3760 = vmatprep.subr.mxu0 0.0
        %3761 = vmatpush2.msra.mxu0 0.0
        %3762 = vmatprep.subr.mxu0 0.0
        %3763 = vmatpush2.msra.mxu0 0.0
        %3764 = vmatprep.subr.mxu0 0.0
        %3765 = vmatpush2.msra.mxu0 0.0
        %3766 = vmatprep.subr.mxu0 0.0
        %3767 = vmatpush2.msra.mxu0 0.0
        %3768 = vmatprep.subr.mxu0 0.0
        %3769 = vmatpush2.msra.mxu0 0.0
        %3770 = vmatprep.subr.mxu0 0.0
        %3771 = vmatpush2.msra.mxu0 0.0
        %3772 = vmatprep.subr.mxu0 0.0
        %3773 = vmatpush2.msra.mxu0 0.0
        %3774 = vmatprep.subr.mxu0 0.0
        %3775 = vmatpush2.msra.mxu0 0.0
        %3776 = vmatprep.subr.mxu0 0.0
        %3777 = vmatpush2.msra.mxu0 0.0
        %3778 = vmatprep.subr.mxu0 0.0
        %3779 = vmatpush2.msra.mxu0 0.0
        %3780 = vmatprep.subr.mxu0 0.0
        %3781 = vmatpush2.msra.mxu0 0.0
        %3782 = vmatprep.subr.mxu0 0.0
        %3783 = vmatpush2.msra.mxu0 0.0
        %3784 = vmatprep.mubr.f32.mxu0 0.0
        %3785 = vmatmul.mubr.f32.gmra.mxu0 %v3673
        %v3786 = vpop.f32.mrf.mxu0
        %v3787 = vadd.f32 0.0, %v3786
        %v3788 = vpop.f32.mrf.mxu0
        %3789 = vmatprep.mubr.f32.mxu0 0.0
        %3790 = vmatmul.mubr.f32.gmra.mxu0 %v3676
        %v3791 = vpop.f32.mrf.mxu0
        %v3792 = vadd.f32 0.0, %v3791
        %v3793 = vpop.f32.mrf.mxu0
        %3794 = vmatprep.mubr.f32.mxu0 0.0
        %3795 = vmatmul.mubr.f32.gmra.mxu0 %v3679
        %v3796 = vpop.f32.mrf.mxu0
        %v3797 = vadd.f32 0.0, %v3796
        %v3798 = vpop.f32.mrf.mxu0
        %3799 = vmatprep.mubr.f32.mxu0 0.0
        %3800 = vmatmul.mubr.f32.gmra.mxu0 %v3682
        %v3801 = vpop.f32.mrf.mxu0
        %v3802 = vadd.f32 0.0, %v3801
        %v3803 = vpop.f32.mrf.mxu0
        %3804 = vmatprep.mubr.f32.mxu0 0.0
        %3805 = vmatmul.mubr.f32.gmra.mxu0 %v3685
        %v3806 = vpop.f32.mrf.mxu0
        %v3807 = vadd.f32 0.0, %v3806
        %v3808 = vpop.f32.mrf.mxu0
        %3809 = vmatprep.mubr.f32.mxu0 0.0
        %3810 = vmatmul.mubr.f32.gmra.mxu0 %v3688
        %v3811 = vpop.f32.mrf.mxu0
        %v3812 = vadd.f32 0.0, %v3811
        %v3813 = vpop.f32.mrf.mxu0
        %3814 = vmatprep.mubr.f32.mxu0 0.0
        %3815 = vmatmul.mubr.f32.gmra.mxu0 %v3691
        %v3816 = vpop.f32.mrf.mxu0
        %v3817 = vadd.f32 0.0, %v3816
        %v3818 = vpop.f32.mrf.mxu0
        %3819 = vmatprep.mubr.f32.mxu0 0.0
        %3820 = vmatmul.mubr.f32.gmra.mxu0 %v3694
        %v3821 = vpop.f32.mrf.mxu0
        %v3822 = vadd.f32 0.0, %v3821
        %v3823 = vpop.f32.mrf.mxu0
        %3824 = vmatprep.mubr.f32.mxu0 0.0
        %3825 = vmatmul.mubr.f32.gmra.mxu0 %v3697
        %v3826 = vpop.f32.mrf.mxu0
        %v3827 = vadd.f32 0.0, %v3826
        %v3828 = vpop.f32.mrf.mxu0
        %3829 = vmatprep.mubr.f32.mxu0 0.0
        %3830 = vmatmul.mubr.f32.gmra.mxu0 %v3700
        %v3831 = vpop.f32.mrf.mxu0
        %v3832 = vadd.f32 0.0, %v3831
        %v3833 = vpop.f32.mrf.mxu0
        %3834 = vmatprep.mubr.f32.mxu0 0.0
        %3835 = vmatmul.mubr.f32.gmra.mxu0 %v3703
        %v3836 = vpop.f32.mrf.mxu0
        %v3837 = vadd.f32 0.0, %v3836
        %v3838 = vpop.f32.mrf.mxu0
        %3839 = vmatprep.mubr.f32.mxu0 0.0
        %3840 = vmatmul.mubr.f32.gmra.mxu0 %v3706
        %v3841 = vpop.f32.mrf.mxu0
        %v3842 = vadd.f32 0.0, %v3841
        %v3843 = vpop.f32.mrf.mxu0
        %3844 = vmatprep.mubr.f32.mxu0 0.0
        %3845 = vmatmul.mubr.f32.gmra.mxu0 %v3709
        %v3846 = vpop.f32.mrf.mxu0
        %v3847 = vadd.f32 0.0, %v3846
        %v3848 = vpop.f32.mrf.mxu0
        %3849 = vmatprep.mubr.f32.mxu0 0.0
        %3850 = vmatmul.mubr.f32.gmra.mxu0 %v3712
        %v3851 = vpop.f32.mrf.mxu0
        %v3852 = vadd.f32 0.0, %v3851
        %v3853 = vpop.f32.mrf.mxu0
        %3854 = vmatprep.mubr.f32.mxu0 0.0
        %3855 = vmatmul.mubr.f32.gmra.mxu0 %v3715
        %v3856 = vpop.f32.mrf.mxu0
        %v3857 = vadd.f32 0.0, %v3856
        %v3858 = vpop.f32.mrf.mxu0
        %3859 = vmatprep.mubr.f32.mxu0 0.0
        %3860 = vmatmul.mubr.f32.gmra.mxu0 %v3718
        %v3861 = vpop.f32.mrf.mxu0
        %v3862 = vadd.f32 0.0, %v3861
        %v3863 = vpop.f32.mrf.mxu0
        %3864 = vdwg.mxu0
        %v3865 = vadd.f32 %v357, %v3787
        %v3866 = vadd.f32 %v358, %v3792
        %v3867 = vadd.f32 %v359, %v3797
        %v3868 = vadd.f32 %v360, %v3802
        %v3869 = vadd.f32 %v361, %v3807
        %v3870 = vadd.f32 %v362, %v3812
        %v3871 = vadd.f32 %v363, %v3817
        %v3872 = vadd.f32 %v364, %v3822
        %v3873 = vadd.f32 %v365, %v3827
        %v3874 = vadd.f32 %v366, %v3832
        %v3875 = vadd.f32 %v367, %v3837
        %v3876 = vadd.f32 %v368, %v3842
        %v3877 = vadd.f32 %v369, %v3847
        %v3878 = vadd.f32 %v370, %v3852
        %v3879 = vadd.f32 %v371, %v3857
        %v3880 = vadd.f32 %v372, %v3862
        %v3881 = vlaneseq
        %v3882 = vshrl.u32 %v3881, 7
        %v3883 = vsub.s32 3, %v3882
        %v3884 = vrot.slane %v389, %v3883
        %v3885 = vadd.f32 %v3865, %v3884
        %v3886 = vadd.f32 %v3866, %v3884
        %v3887 = vadd.f32 %v3867, %v3884
        %v3888 = vadd.f32 %v3868, %v3884
        %v3889 = vadd.f32 %v3869, %v3884
        %v3890 = vadd.f32 %v3870, %v3884
        %v3891 = vadd.f32 %v3871, %v3884
        %v3892 = vadd.f32 %v3872, %v3884
        %v3893 = vadd.f32 %v3873, %v3884
        %v3894 = vadd.f32 %v3874, %v3884
        %v3895 = vadd.f32 %v3875, %v3884
        %v3896 = vadd.f32 %v3876, %v3884
        %v3897 = vadd.f32 %v3877, %v3884
        %v3898 = vadd.f32 %v3878, %v3884
        %v3899 = vadd.f32 %v3879, %v3884
        %v3900 = vadd.f32 %v3880, %v3884
        %v3901 = vsel %vm414, %v3885, 0.0
        %3902 = vadd.xlane.f32.xlu0 %v3901
        %v3903 = vpop.xlane.xlu0 %3902
        %v3904 = vsel %vm414, %v3886, 0.0
        %3905 = vadd.xlane.f32.xlu0 %v3904
        %v3906 = vpop.xlane.xlu0 %3905
        %v3907 = vsel %vm414, %v3887, 0.0
        %3908 = vadd.xlane.f32.xlu0 %v3907
        %v3909 = vpop.xlane.xlu0 %3908
        %v3910 = vsel %vm414, %v3888, 0.0
        %3911 = vadd.xlane.f32.xlu0 %v3910
        %v3912 = vpop.xlane.xlu0 %3911
        %v3913 = vsel %vm414, %v3889, 0.0
        %3914 = vadd.xlane.f32.xlu0 %v3913
        %v3915 = vpop.xlane.xlu0 %3914
        %v3916 = vsel %vm414, %v3890, 0.0
        %3917 = vadd.xlane.f32.xlu0 %v3916
        %v3918 = vpop.xlane.xlu0 %3917
        %v3919 = vsel %vm414, %v3891, 0.0
        %3920 = vadd.xlane.f32.xlu0 %v3919
        %v3921 = vpop.xlane.xlu0 %3920
        %v3922 = vsel %vm414, %v3892, 0.0
        %3923 = vadd.xlane.f32.xlu0 %v3922
        %v3924 = vpop.xlane.xlu0 %3923
        %v3925 = vsel %vm414, %v3893, 0.0
        %3926 = vadd.xlane.f32.xlu0 %v3925
        %v3927 = vpop.xlane.xlu0 %3926
        %v3928 = vsel %vm414, %v3894, 0.0
        %3929 = vadd.xlane.f32.xlu0 %v3928
        %v3930 = vpop.xlane.xlu0 %3929
        %v3931 = vsel %vm414, %v3895, 0.0
        %3932 = vadd.xlane.f32.xlu0 %v3931
        %v3933 = vpop.xlane.xlu0 %3932
        %v3934 = vsel %vm414, %v3896, 0.0
        %3935 = vadd.xlane.f32.xlu0 %v3934
        %v3936 = vpop.xlane.xlu0 %3935
        %v3937 = vsel %vm414, %v3897, 0.0
        %3938 = vadd.xlane.f32.xlu0 %v3937
        %v3939 = vpop.xlane.xlu0 %3938
        %v3940 = vsel %vm414, %v3898, 0.0
        %3941 = vadd.xlane.f32.xlu0 %v3940
        %v3942 = vpop.xlane.xlu0 %3941
        %v3943 = vsel %vm414, %v3899, 0.0
        %3944 = vadd.xlane.f32.xlu0 %v3943
        %v3945 = vpop.xlane.xlu0 %3944
        %v3946 = vsel %vm414, %v3900, 0.0
        %3947 = vadd.xlane.f32.xlu0 %v3946
        %v3948 = vpop.xlane.xlu0 %3947
        %v3949 = vmul.f32 %v3903, %v463
        %v3950 = vmul.f32 %v3906, %v463
        %v3951 = vmul.f32 %v3909, %v463
        %v3952 = vmul.f32 %v3912, %v463
        %v3953 = vmul.f32 %v3915, %v463
        %v3954 = vmul.f32 %v3918, %v463
        %v3955 = vmul.f32 %v3921, %v463
        %v3956 = vmul.f32 %v3924, %v463
        %v3957 = vmul.f32 %v3927, %v463
        %v3958 = vmul.f32 %v3930, %v463
        %v3959 = vmul.f32 %v3933, %v463
        %v3960 = vmul.f32 %v3936, %v463
        %v3961 = vmul.f32 %v3939, %v463
        %v3962 = vmul.f32 %v3942, %v463
        %v3963 = vmul.f32 %v3945, %v463
        %v3964 = vmul.f32 %v3948, %v463
        %v3965 = vsub.f32 %v3885, %v3949
        %v3966 = vsub.f32 %v3886, %v3950
        %v3967 = vsub.f32 %v3887, %v3951
        %v3968 = vsub.f32 %v3888, %v3952
        %v3969 = vsub.f32 %v3889, %v3953
        %v3970 = vsub.f32 %v3890, %v3954
        %v3971 = vsub.f32 %v3891, %v3955
        %v3972 = vsub.f32 %v3892, %v3956
        %v3973 = vsub.f32 %v3893, %v3957
        %v3974 = vsub.f32 %v3894, %v3958
        %v3975 = vsub.f32 %v3895, %v3959
        %v3976 = vsub.f32 %v3896, %v3960
        %v3977 = vsub.f32 %v3897, %v3961
        %v3978 = vsub.f32 %v3898, %v3962
        %v3979 = vsub.f32 %v3899, %v3963
        %v3980 = vsub.f32 %v3900, %v3964
        %v3981 = vmul.f32 %v3965, %v3965
        %v3982 = vmul.f32 %v3966, %v3966
        %v3983 = vmul.f32 %v3967, %v3967
        %v3984 = vmul.f32 %v3968, %v3968
        %v3985 = vmul.f32 %v3969, %v3969
        %v3986 = vmul.f32 %v3970, %v3970
        %v3987 = vmul.f32 %v3971, %v3971
        %v3988 = vmul.f32 %v3972, %v3972
        %v3989 = vmul.f32 %v3973, %v3973
        %v3990 = vmul.f32 %v3974, %v3974
        %v3991 = vmul.f32 %v3975, %v3975
        %v3992 = vmul.f32 %v3976, %v3976
        %v3993 = vmul.f32 %v3977, %v3977
        %v3994 = vmul.f32 %v3978, %v3978
        %v3995 = vmul.f32 %v3979, %v3979
        %v3996 = vmul.f32 %v3980, %v3980
        %v3997 = vsel %vm414, %v3981, 0.0
        %3998 = vadd.xlane.f32.xlu0 %v3997
        %v3999 = vpop.xlane.xlu0 %3998
        %v4000 = vsel %vm414, %v3982, 0.0
        %4001 = vadd.xlane.f32.xlu0 %v4000
        %v4002 = vpop.xlane.xlu0 %4001
        %v4003 = vsel %vm414, %v3983, 0.0
        %4004 = vadd.xlane.f32.xlu0 %v4003
        %v4005 = vpop.xlane.xlu0 %4004
        %v4006 = vsel %vm414, %v3984, 0.0
        %4007 = vadd.xlane.f32.xlu0 %v4006
        %v4008 = vpop.xlane.xlu0 %4007
        %v4009 = vsel %vm414, %v3985, 0.0
        %4010 = vadd.xlane.f32.xlu0 %v4009
        %v4011 = vpop.xlane.xlu0 %4010
        %v4012 = vsel %vm414, %v3986, 0.0
        %4013 = vadd.xlane.f32.xlu0 %v4012
        %v4014 = vpop.xlane.xlu0 %4013
        %v4015 = vsel %vm414, %v3987, 0.0
        %4016 = vadd.xlane.f32.xlu0 %v4015
        %v4017 = vpop.xlane.xlu0 %4016
        %v4018 = vsel %vm414, %v3988, 0.0
        %4019 = vadd.xlane.f32.xlu0 %v4018
        %v4020 = vpop.xlane.xlu0 %4019
        %v4021 = vsel %vm414, %v3989, 0.0
        %4022 = vadd.xlane.f32.xlu0 %v4021
        %v4023 = vpop.xlane.xlu0 %4022
        %v4024 = vsel %vm414, %v3990, 0.0
        %4025 = vadd.xlane.f32.xlu0 %v4024
        %v4026 = vpop.xlane.xlu0 %4025
        %v4027 = vsel %vm414, %v3991, 0.0
        %4028 = vadd.xlane.f32.xlu0 %v4027
        %v4029 = vpop.xlane.xlu0 %4028
        %v4030 = vsel %vm414, %v3992, 0.0
        %4031 = vadd.xlane.f32.xlu0 %v4030
        %v4032 = vpop.xlane.xlu0 %4031
        %v4033 = vsel %vm414, %v3993, 0.0
        %4034 = vadd.xlane.f32.xlu0 %v4033
        %v4035 = vpop.xlane.xlu0 %4034
        %v4036 = vsel %vm414, %v3994, 0.0
        %4037 = vadd.xlane.f32.xlu0 %v4036
        %v4038 = vpop.xlane.xlu0 %4037
        %v4039 = vsel %vm414, %v3995, 0.0
        %4040 = vadd.xlane.f32.xlu0 %v4039
        %v4041 = vpop.xlane.xlu0 %4040
        %v4042 = vsel %vm414, %v3996, 0.0
        %4043 = vadd.xlane.f32.xlu0 %v4042
        %v4044 = vpop.xlane.xlu0 %4043
        %v4045 = vmul.f32 %v3999, %v463
        %v4046 = vmul.f32 %v4002, %v463
        %v4047 = vmul.f32 %v4005, %v463
        %v4048 = vmul.f32 %v4008, %v463
        %v4049 = vmul.f32 %v4011, %v463
        %v4050 = vmul.f32 %v4014, %v463
        %v4051 = vmul.f32 %v4017, %v463
        %v4052 = vmul.f32 %v4020, %v463
        %v4053 = vmul.f32 %v4023, %v463
        %v4054 = vmul.f32 %v4026, %v463
        %v4055 = vmul.f32 %v4029, %v463
        %v4056 = vmul.f32 %v4032, %v463
        %v4057 = vmul.f32 %v4035, %v463
        %v4058 = vmul.f32 %v4038, %v463
        %v4059 = vmul.f32 %v4041, %v463
        %v4060 = vmul.f32 %v4044, %v463
        %v4061 = vadd.f32 %v4045, 1e-05
        %v4062 = vadd.f32 %v4046, 1e-05
        %v4063 = vadd.f32 %v4047, 1e-05
        %v4064 = vadd.f32 %v4048, 1e-05
        %v4065 = vadd.f32 %v4049, 1e-05
        %v4066 = vadd.f32 %v4050, 1e-05
        %v4067 = vadd.f32 %v4051, 1e-05
        %v4068 = vadd.f32 %v4052, 1e-05
        %v4069 = vadd.f32 %v4053, 1e-05
        %v4070 = vadd.f32 %v4054, 1e-05
        %v4071 = vadd.f32 %v4055, 1e-05
        %v4072 = vadd.f32 %v4056, 1e-05
        %v4073 = vadd.f32 %v4057, 1e-05
        %v4074 = vadd.f32 %v4058, 1e-05
        %v4075 = vadd.f32 %v4059, 1e-05
        %v4076 = vadd.f32 %v4060, 1e-05
        %v4077 = vrsqrt.pop %v4061
        %v4078 = vrsqrt.pop %v4062
        %v4079 = vrsqrt.pop %v4063
        %v4080 = vrsqrt.pop %v4064
        %v4081 = vrsqrt.pop %v4065
        %v4082 = vrsqrt.pop %v4066
        %v4083 = vrsqrt.pop %v4067
        %v4084 = vrsqrt.pop %v4068
        %v4085 = vrsqrt.pop %v4069
        %v4086 = vrsqrt.pop %v4070
        %v4087 = vrsqrt.pop %v4071
        %v4088 = vrsqrt.pop %v4072
        %v4089 = vrsqrt.pop %v4073
        %v4090 = vrsqrt.pop %v4074
        %v4091 = vrsqrt.pop %v4075
        %v4092 = vrsqrt.pop %v4076
        %v4093 = vmul.f32 %v3965, %v4077
        %v4094 = vmul.f32 %v3966, %v4078
        %v4095 = vmul.f32 %v3967, %v4079
        %v4096 = vmul.f32 %v3968, %v4080
        %v4097 = vmul.f32 %v3969, %v4081
        %v4098 = vmul.f32 %v3970, %v4082
        %v4099 = vmul.f32 %v3971, %v4083
        %v4100 = vmul.f32 %v3972, %v4084
        %v4101 = vmul.f32 %v3973, %v4085
        %v4102 = vmul.f32 %v3974, %v4086
        %v4103 = vmul.f32 %v3975, %v4087
        %v4104 = vmul.f32 %v3976, %v4088
        %v4105 = vmul.f32 %v3977, %v4089
        %v4106 = vmul.f32 %v3978, %v4090
        %v4107 = vmul.f32 %v3979, %v4091
        %v4108 = vmul.f32 %v3980, %v4092
        %v4109 = vlaneseq
        %v4110 = vshrl.u32 %v4109, 7
        %v4111 = vsub.s32 4, %v4110
        %v4112 = vrot.slane %v389, %v4111
        %v4113 = vmul.f32 %v4093, %v4112
        %v4114 = vmul.f32 %v4094, %v4112
        %v4115 = vmul.f32 %v4095, %v4112
        %v4116 = vmul.f32 %v4096, %v4112
        %v4117 = vmul.f32 %v4097, %v4112
        %v4118 = vmul.f32 %v4098, %v4112
        %v4119 = vmul.f32 %v4099, %v4112
        %v4120 = vmul.f32 %v4100, %v4112
        %v4121 = vmul.f32 %v4101, %v4112
        %v4122 = vmul.f32 %v4102, %v4112
        %v4123 = vmul.f32 %v4103, %v4112
        %v4124 = vmul.f32 %v4104, %v4112
        %v4125 = vmul.f32 %v4105, %v4112
        %v4126 = vmul.f32 %v4106, %v4112
        %v4127 = vmul.f32 %v4107, %v4112
        %v4128 = vmul.f32 %v4108, %v4112
        %v4129 = vlaneseq
        %v4130 = vshrl.u32 %v4129, 7
        %v4131 = vsub.s32 5, %v4130
        %v4132 = vrot.slane %v389, %v4131
        %v4133 = vadd.f32 %v4113, %v4132
        %v4134 = vadd.f32 %v4114, %v4132
        %v4135 = vadd.f32 %v4115, %v4132
        %v4136 = vadd.f32 %v4116, %v4132
        %v4137 = vadd.f32 %v4117, %v4132
        %v4138 = vadd.f32 %v4118, %v4132
        %v4139 = vadd.f32 %v4119, %v4132
        %v4140 = vadd.f32 %v4120, %v4132
        %v4141 = vadd.f32 %v4121, %v4132
        %v4142 = vadd.f32 %v4122, %v4132
        %v4143 = vadd.f32 %v4123, %v4132
        %v4144 = vadd.f32 %v4124, %v4132
        %v4145 = vadd.f32 %v4125, %v4132
        %v4146 = vadd.f32 %v4126, %v4132
        %v4147 = vadd.f32 %v4127, %v4132
        %v4148 = vadd.f32 %v4128, %v4132
        %v4149 = vlaneseq
        %v4150 = vshrl.u32 %v4149, 7
        %v4151 = vsub.s32 6, %v4150
        %v4152 = vrot.slane %v389, %v4151
        %v4154 = vsel %vm414, %v4133, 0
        %v4157 = vsel %vm414, %v4134, 0
        %v4160 = vsel %vm414, %v4135, 0
        %v4163 = vsel %vm414, %v4136, 0
        %v4166 = vsel %vm414, %v4137, 0
        %v4169 = vsel %vm414, %v4138, 0
        %v4172 = vsel %vm414, %v4139, 0
        %v4175 = vsel %vm414, %v4140, 0
        %v4178 = vsel %vm414, %v4141, 0
        %v4181 = vsel %vm414, %v4142, 0
        %v4184 = vsel %vm414, %v4143, 0
        %v4187 = vsel %vm414, %v4144, 0
        %v4190 = vsel %vm414, %v4145, 0
        %v4193 = vsel %vm414, %v4146, 0
        %v4196 = vsel %vm414, %v4147, 0
        %v4199 = vsel %vm414, %v4148, 0
        %4201 = vmatprep.subr.mxu0 0.0
        %4202 = vmatpush1.msra.mxu0 0.0
        %4203 = vmatprep.subr.mxu0 0.0
        %4204 = vmatpush1.msra.mxu0 0.0
        %4205 = vmatprep.subr.mxu0 0.0
        %4206 = vmatpush1.msra.mxu0 0.0
        %4207 = vmatprep.subr.mxu0 0.0
        %4208 = vmatpush1.msra.mxu0 0.0
        %4209 = vmatprep.subr.mxu0 0.0
        %4210 = vmatpush1.msra.mxu0 0.0
        %4211 = vmatprep.subr.mxu0 0.0
        %4212 = vmatpush1.msra.mxu0 0.0
        %4213 = vmatprep.subr.mxu0 0.0
        %4214 = vmatpush1.msra.mxu0 0.0
        %4215 = vmatprep.subr.mxu0 0.0
        %4216 = vmatpush1.msra.mxu0 0.0
        %4217 = vmatprep.subr.mxu0 0.0
        %4218 = vmatpush1.msra.mxu0 0.0
        %4219 = vmatprep.subr.mxu0 0.0
        %4220 = vmatpush1.msra.mxu0 0.0
        %4221 = vmatprep.subr.mxu0 0.0
        %4222 = vmatpush1.msra.mxu0 0.0
        %4223 = vmatprep.subr.mxu0 0.0
        %4224 = vmatpush1.msra.mxu0 0.0
        %4225 = vmatprep.subr.mxu0 0.0
        %4226 = vmatpush1.msra.mxu0 %v397
        %4227 = vmatprep.subr.mxu0 0.0
        %4228 = vmatpush1.msra.mxu0 %v395
        %4229 = vmatprep.subr.mxu0 0.0
        %4230 = vmatpush1.msra.mxu0 %v393
        %4231 = vmatprep.subr.mxu0 0.0
        %4232 = vmatpush1.msra.mxu0 %v391
        %4233 = vmatprep.subr.mxu0 0.0
        %4234 = vmatpush2.msra.mxu0 0.0
        %4235 = vmatprep.subr.mxu0 0.0
        %4236 = vmatpush2.msra.mxu0 0.0
        %4237 = vmatprep.subr.mxu0 0.0
        %4238 = vmatpush2.msra.mxu0 0.0
        %4239 = vmatprep.subr.mxu0 0.0
        %4240 = vmatpush2.msra.mxu0 0.0
        %4241 = vmatprep.subr.mxu0 0.0
        %4242 = vmatpush2.msra.mxu0 0.0
        %4243 = vmatprep.subr.mxu0 0.0
        %4244 = vmatpush2.msra.mxu0 0.0
        %4245 = vmatprep.subr.mxu0 0.0
        %4246 = vmatpush2.msra.mxu0 0.0
        %4247 = vmatprep.subr.mxu0 0.0
        %4248 = vmatpush2.msra.mxu0 0.0
        %4249 = vmatprep.subr.mxu0 0.0
        %4250 = vmatpush2.msra.mxu0 0.0
        %4251 = vmatprep.subr.mxu0 0.0
        %4252 = vmatpush2.msra.mxu0 0.0
        %4253 = vmatprep.subr.mxu0 0.0
        %4254 = vmatpush2.msra.mxu0 0.0
        %4255 = vmatprep.subr.mxu0 0.0
        %4256 = vmatpush2.msra.mxu0 0.0
        %4257 = vmatprep.subr.mxu0 0.0
        %4258 = vmatpush2.msra.mxu0 0.0
        %4259 = vmatprep.subr.mxu0 0.0
        %4260 = vmatpush2.msra.mxu0 0.0
        %4261 = vmatprep.subr.mxu0 0.0
        %4262 = vmatpush2.msra.mxu0 0.0
        %4263 = vmatprep.subr.mxu0 0.0
        %4264 = vmatpush2.msra.mxu0 0.0
        %4265 = vmatprep.mubr.f32.mxu0 0.0
        %4266 = vmatmul.mubr.f32.gmra.mxu0 %v4154
        %v4267 = vpop.f32.mrf.mxu0
        %v4268 = vadd.f32 %v4152, %v4267
        %v4269 = vpop.f32.mrf.mxu0
        %4270 = vmatprep.mubr.f32.mxu0 0.0
        %4271 = vmatmul.mubr.f32.gmra.mxu0 %v4157
        %v4272 = vpop.f32.mrf.mxu0
        %v4273 = vadd.f32 %v4152, %v4272
        %v4274 = vpop.f32.mrf.mxu0
        %4275 = vmatprep.mubr.f32.mxu0 0.0
        %4276 = vmatmul.mubr.f32.gmra.mxu0 %v4160
        %v4277 = vpop.f32.mrf.mxu0
        %v4278 = vadd.f32 %v4152, %v4277
        %v4279 = vpop.f32.mrf.mxu0
        %4280 = vmatprep.mubr.f32.mxu0 0.0
        %4281 = vmatmul.mubr.f32.gmra.mxu0 %v4163
        %v4282 = vpop.f32.mrf.mxu0
        %v4283 = vadd.f32 %v4152, %v4282
        %v4284 = vpop.f32.mrf.mxu0
        %4285 = vmatprep.mubr.f32.mxu0 0.0
        %4286 = vmatmul.mubr.f32.gmra.mxu0 %v4166
        %v4287 = vpop.f32.mrf.mxu0
        %v4288 = vadd.f32 %v4152, %v4287
        %v4289 = vpop.f32.mrf.mxu0
        %4290 = vmatprep.mubr.f32.mxu0 0.0
        %4291 = vmatmul.mubr.f32.gmra.mxu0 %v4169
        %v4292 = vpop.f32.mrf.mxu0
        %v4293 = vadd.f32 %v4152, %v4292
        %v4294 = vpop.f32.mrf.mxu0
        %4295 = vmatprep.mubr.f32.mxu0 0.0
        %4296 = vmatmul.mubr.f32.gmra.mxu0 %v4172
        %v4297 = vpop.f32.mrf.mxu0
        %v4298 = vadd.f32 %v4152, %v4297
        %v4299 = vpop.f32.mrf.mxu0
        %4300 = vmatprep.mubr.f32.mxu0 0.0
        %4301 = vmatmul.mubr.f32.gmra.mxu0 %v4175
        %v4302 = vpop.f32.mrf.mxu0
        %v4303 = vadd.f32 %v4152, %v4302
        %v4304 = vpop.f32.mrf.mxu0
        %4305 = vmatprep.mubr.f32.mxu0 0.0
        %4306 = vmatmul.mubr.f32.gmra.mxu0 %v4178
        %v4307 = vpop.f32.mrf.mxu0
        %v4308 = vadd.f32 %v4152, %v4307
        %v4309 = vpop.f32.mrf.mxu0
        %4310 = vmatprep.mubr.f32.mxu0 0.0
        %4311 = vmatmul.mubr.f32.gmra.mxu0 %v4181
        %v4312 = vpop.f32.mrf.mxu0
        %v4313 = vadd.f32 %v4152, %v4312
        %v4314 = vpop.f32.mrf.mxu0
        %4315 = vmatprep.mubr.f32.mxu0 0.0
        %4316 = vmatmul.mubr.f32.gmra.mxu0 %v4184
        %v4317 = vpop.f32.mrf.mxu0
        %v4318 = vadd.f32 %v4152, %v4317
        %v4319 = vpop.f32.mrf.mxu0
        %4320 = vmatprep.mubr.f32.mxu0 0.0
        %4321 = vmatmul.mubr.f32.gmra.mxu0 %v4187
        %v4322 = vpop.f32.mrf.mxu0
        %v4323 = vadd.f32 %v4152, %v4322
        %v4324 = vpop.f32.mrf.mxu0
        %4325 = vmatprep.mubr.f32.mxu0 0.0
        %4326 = vmatmul.mubr.f32.gmra.mxu0 %v4190
        %v4327 = vpop.f32.mrf.mxu0
        %v4328 = vadd.f32 %v4152, %v4327
        %v4329 = vpop.f32.mrf.mxu0
        %4330 = vmatprep.mubr.f32.mxu0 0.0
        %4331 = vmatmul.mubr.f32.gmra.mxu0 %v4193
        %v4332 = vpop.f32.mrf.mxu0
        %v4333 = vadd.f32 %v4152, %v4332
        %v4334 = vpop.f32.mrf.mxu0
        %4335 = vmatprep.mubr.f32.mxu0 0.0
        %4336 = vmatmul.mubr.f32.gmra.mxu0 %v4196
        %v4337 = vpop.f32.mrf.mxu0
        %v4338 = vadd.f32 %v4152, %v4337
        %v4339 = vpop.f32.mrf.mxu0
        %4340 = vmatprep.mubr.f32.mxu0 0.0
        %4341 = vmatmul.mubr.f32.gmra.mxu0 %v4199
        %v4342 = vpop.f32.mrf.mxu0
        %v4343 = vadd.f32 %v4152, %v4342
        %v4344 = vpop.f32.mrf.mxu0
        %4345 = vdwg.mxu0
        %v4346 = vmul.f32 %v4268, 0.5
        %v4347 = vmul.f32 %v4273, 0.5
        %v4348 = vmul.f32 %v4278, 0.5
        %v4349 = vmul.f32 %v4283, 0.5
        %v4350 = vmul.f32 %v4288, 0.5
        %v4351 = vmul.f32 %v4293, 0.5
        %v4352 = vmul.f32 %v4298, 0.5
        %v4353 = vmul.f32 %v4303, 0.5
        %v4354 = vmul.f32 %v4308, 0.5
        %v4355 = vmul.f32 %v4313, 0.5
        %v4356 = vmul.f32 %v4318, 0.5
        %v4357 = vmul.f32 %v4323, 0.5
        %v4358 = vmul.f32 %v4328, 0.5
        %v4359 = vmul.f32 %v4333, 0.5
        %v4360 = vmul.f32 %v4338, 0.5
        %v4361 = vmul.f32 %v4343, 0.5
        %v4362 = vmul.f32 %v4268, 0.044715
        %v4363 = vmul.f32 %v4273, 0.044715
        %v4364 = vmul.f32 %v4278, 0.044715
        %v4365 = vmul.f32 %v4283, 0.044715
        %v4366 = vmul.f32 %v4288, 0.044715
        %v4367 = vmul.f32 %v4293, 0.044715
        %v4368 = vmul.f32 %v4298, 0.044715
        %v4369 = vmul.f32 %v4303, 0.044715
        %v4370 = vmul.f32 %v4308, 0.044715
        %v4371 = vmul.f32 %v4313, 0.044715
        %v4372 = vmul.f32 %v4318, 0.044715
        %v4373 = vmul.f32 %v4323, 0.044715
        %v4374 = vmul.f32 %v4328, 0.044715
        %v4375 = vmul.f32 %v4333, 0.044715
        %v4376 = vmul.f32 %v4338, 0.044715
        %v4377 = vmul.f32 %v4343, 0.044715
        %v4378 = vmul.f32 %v4362, %v4268
        %v4379 = vmul.f32 %v4363, %v4273
        %v4380 = vmul.f32 %v4364, %v4278
        %v4381 = vmul.f32 %v4365, %v4283
        %v4382 = vmul.f32 %v4366, %v4288
        %v4383 = vmul.f32 %v4367, %v4293
        %v4384 = vmul.f32 %v4368, %v4298
        %v4385 = vmul.f32 %v4369, %v4303
        %v4386 = vmul.f32 %v4370, %v4308
        %v4387 = vmul.f32 %v4371, %v4313
        %v4388 = vmul.f32 %v4372, %v4318
        %v4389 = vmul.f32 %v4373, %v4323
        %v4390 = vmul.f32 %v4374, %v4328
        %v4391 = vmul.f32 %v4375, %v4333
        %v4392 = vmul.f32 %v4376, %v4338
        %v4393 = vmul.f32 %v4377, %v4343
        %v4394 = vmul.f32 %v4378, %v4268
        %v4395 = vmul.f32 %v4379, %v4273
        %v4396 = vmul.f32 %v4380, %v4278
        %v4397 = vmul.f32 %v4381, %v4283
        %v4398 = vmul.f32 %v4382, %v4288
        %v4399 = vmul.f32 %v4383, %v4293
        %v4400 = vmul.f32 %v4384, %v4298
        %v4401 = vmul.f32 %v4385, %v4303
        %v4402 = vmul.f32 %v4386, %v4308
        %v4403 = vmul.f32 %v4387, %v4313
        %v4404 = vmul.f32 %v4388, %v4318
        %v4405 = vmul.f32 %v4389, %v4323
        %v4406 = vmul.f32 %v4390, %v4328
        %v4407 = vmul.f32 %v4391, %v4333
        %v4408 = vmul.f32 %v4392, %v4338
        %v4409 = vmul.f32 %v4393, %v4343
        %v4410 = vadd.f32 %v4268, %v4394
        %v4411 = vadd.f32 %v4273, %v4395
        %v4412 = vadd.f32 %v4278, %v4396
        %v4413 = vadd.f32 %v4283, %v4397
        %v4414 = vadd.f32 %v4288, %v4398
        %v4415 = vadd.f32 %v4293, %v4399
        %v4416 = vadd.f32 %v4298, %v4400
        %v4417 = vadd.f32 %v4303, %v4401
        %v4418 = vadd.f32 %v4308, %v4402
        %v4419 = vadd.f32 %v4313, %v4403
        %v4420 = vadd.f32 %v4318, %v4404
        %v4421 = vadd.f32 %v4323, %v4405
        %v4422 = vadd.f32 %v4328, %v4406
        %v4423 = vadd.f32 %v4333, %v4407
        %v4424 = vadd.f32 %v4338, %v4408
        %v4425 = vadd.f32 %v4343, %v4409
        %v4426 = vmul.f32 %v4410, 0.7978846
        %v4427 = vmul.f32 %v4411, 0.7978846
        %v4428 = vmul.f32 %v4412, 0.7978846
        %v4429 = vmul.f32 %v4413, 0.7978846
        %v4430 = vmul.f32 %v4414, 0.7978846
        %v4431 = vmul.f32 %v4415, 0.7978846
        %v4432 = vmul.f32 %v4416, 0.7978846
        %v4433 = vmul.f32 %v4417, 0.7978846
        %v4434 = vmul.f32 %v4418, 0.7978846
        %v4435 = vmul.f32 %v4419, 0.7978846
        %v4436 = vmul.f32 %v4420, 0.7978846
        %v4437 = vmul.f32 %v4421, 0.7978846
        %v4438 = vmul.f32 %v4422, 0.7978846
        %v4439 = vmul.f32 %v4423, 0.7978846
        %v4440 = vmul.f32 %v4424, 0.7978846
        %v4441 = vmul.f32 %v4425, 0.7978846
        %v4442 = vtanh.pop %v4426
        %v4443 = vtanh.pop %v4427
        %v4444 = vtanh.pop %v4428
        %v4445 = vtanh.pop %v4429
        %v4446 = vtanh.pop %v4430
        %v4447 = vtanh.pop %v4431
        %v4448 = vtanh.pop %v4432
        %v4449 = vtanh.pop %v4433
        %v4450 = vtanh.pop %v4434
        %v4451 = vtanh.pop %v4435
        %v4452 = vtanh.pop %v4436
        %v4453 = vtanh.pop %v4437
        %v4454 = vtanh.pop %v4438
        %v4455 = vtanh.pop %v4439
        %v4456 = vtanh.pop %v4440
        %v4457 = vtanh.pop %v4441
        %v4458 = vadd.f32 %v4442, 1.0
        %v4459 = vadd.f32 %v4443, 1.0
        %v4460 = vadd.f32 %v4444, 1.0
        %v4461 = vadd.f32 %v4445, 1.0
        %v4462 = vadd.f32 %v4446, 1.0
        %v4463 = vadd.f32 %v4447, 1.0
        %v4464 = vadd.f32 %v4448, 1.0
        %v4465 = vadd.f32 %v4449, 1.0
        %v4466 = vadd.f32 %v4450, 1.0
        %v4467 = vadd.f32 %v4451, 1.0
        %v4468 = vadd.f32 %v4452, 1.0
        %v4469 = vadd.f32 %v4453, 1.0
        %v4470 = vadd.f32 %v4454, 1.0
        %v4471 = vadd.f32 %v4455, 1.0
        %v4472 = vadd.f32 %v4456, 1.0
        %v4473 = vadd.f32 %v4457, 1.0
        %v4474 = vmul.f32 %v4346, %v4458
        %v4475 = vmul.f32 %v4347, %v4459
        %v4476 = vmul.f32 %v4348, %v4460
        %v4477 = vmul.f32 %v4349, %v4461
        %v4478 = vmul.f32 %v4350, %v4462
        %v4479 = vmul.f32 %v4351, %v4463
        %v4480 = vmul.f32 %v4352, %v4464
        %v4481 = vmul.f32 %v4353, %v4465
        %v4482 = vmul.f32 %v4354, %v4466
        %v4483 = vmul.f32 %v4355, %v4467
        %v4484 = vmul.f32 %v4356, %v4468
        %v4485 = vmul.f32 %v4357, %v4469
        %v4486 = vmul.f32 %v4358, %v4470
        %v4487 = vmul.f32 %v4359, %v4471
        %v4488 = vmul.f32 %v4360, %v4472
        %v4489 = vmul.f32 %v4361, %v4473
        %4490 = vmatprep.subr.mxu0 0.0
        %4491 = vmatpush1.msra.mxu0 %v413
        %4492 = vmatprep.subr.mxu0 0.0
        %4493 = vmatpush1.msra.mxu0 %v412
        %4494 = vmatprep.subr.mxu0 0.0
        %4495 = vmatpush1.msra.mxu0 %v411
        %4496 = vmatprep.subr.mxu0 0.0
        %4497 = vmatpush1.msra.mxu0 %v410
        %4498 = vmatprep.subr.mxu0 0.0
        %4499 = vmatpush1.msra.mxu0 %v409
        %4500 = vmatprep.subr.mxu0 0.0
        %4501 = vmatpush1.msra.mxu0 %v408
        %4502 = vmatprep.subr.mxu0 0.0
        %4503 = vmatpush1.msra.mxu0 %v407
        %4504 = vmatprep.subr.mxu0 0.0
        %4505 = vmatpush1.msra.mxu0 %v406
        %4506 = vmatprep.subr.mxu0 0.0
        %4507 = vmatpush1.msra.mxu0 %v405
        %4508 = vmatprep.subr.mxu0 0.0
        %4509 = vmatpush1.msra.mxu0 %v404
        %4510 = vmatprep.subr.mxu0 0.0
        %4511 = vmatpush1.msra.mxu0 %v403
        %4512 = vmatprep.subr.mxu0 0.0
        %4513 = vmatpush1.msra.mxu0 %v402
        %4514 = vmatprep.subr.mxu0 0.0
        %4515 = vmatpush1.msra.mxu0 %v401
        %4516 = vmatprep.subr.mxu0 0.0
        %4517 = vmatpush1.msra.mxu0 %v400
        %4518 = vmatprep.subr.mxu0 0.0
        %4519 = vmatpush1.msra.mxu0 %v399
        %4520 = vmatprep.subr.mxu0 0.0
        %4521 = vmatpush1.msra.mxu0 %v398
        %4522 = vmatprep.subr.mxu0 0.0
        %4523 = vmatpush2.msra.mxu0 0.0
        %4524 = vmatprep.subr.mxu0 0.0
        %4525 = vmatpush2.msra.mxu0 0.0
        %4526 = vmatprep.subr.mxu0 0.0
        %4527 = vmatpush2.msra.mxu0 0.0
        %4528 = vmatprep.subr.mxu0 0.0
        %4529 = vmatpush2.msra.mxu0 0.0
        %4530 = vmatprep.subr.mxu0 0.0
        %4531 = vmatpush2.msra.mxu0 0.0
        %4532 = vmatprep.subr.mxu0 0.0
        %4533 = vmatpush2.msra.mxu0 0.0
        %4534 = vmatprep.subr.mxu0 0.0
        %4535 = vmatpush2.msra.mxu0 0.0
        %4536 = vmatprep.subr.mxu0 0.0
        %4537 = vmatpush2.msra.mxu0 0.0
        %4538 = vmatprep.subr.mxu0 0.0
        %4539 = vmatpush2.msra.mxu0 0.0
        %4540 = vmatprep.subr.mxu0 0.0
        %4541 = vmatpush2.msra.mxu0 0.0
        %4542 = vmatprep.subr.mxu0 0.0
        %4543 = vmatpush2.msra.mxu0 0.0
        %4544 = vmatprep.subr.mxu0 0.0
        %4545 = vmatpush2.msra.mxu0 0.0
        %4546 = vmatprep.subr.mxu0 0.0
        %4547 = vmatpush2.msra.mxu0 0.0
        %4548 = vmatprep.subr.mxu0 0.0
        %4549 = vmatpush2.msra.mxu0 0.0
        %4550 = vmatprep.subr.mxu0 0.0
        %4551 = vmatpush2.msra.mxu0 0.0
        %4552 = vmatprep.subr.mxu0 0.0
        %4553 = vmatpush2.msra.mxu0 0.0
        %4554 = vmatprep.mubr.f32.mxu0 0.0
        %4555 = vmatmul.mubr.f32.gmra.mxu0 %v4474
        %v4556 = vpop.f32.mrf.mxu0
        %v4557 = vadd.f32 0.0, %v4556
        %v4558 = vpop.f32.mrf.mxu0
        %4559 = vmatprep.mubr.f32.mxu0 0.0
        %4560 = vmatmul.mubr.f32.gmra.mxu0 %v4475
        %v4561 = vpop.f32.mrf.mxu0
        %v4562 = vadd.f32 0.0, %v4561
        %v4563 = vpop.f32.mrf.mxu0
        %4564 = vmatprep.mubr.f32.mxu0 0.0
        %4565 = vmatmul.mubr.f32.gmra.mxu0 %v4476
        %v4566 = vpop.f32.mrf.mxu0
        %v4567 = vadd.f32 0.0, %v4566
        %v4568 = vpop.f32.mrf.mxu0
        %4569 = vmatprep.mubr.f32.mxu0 0.0
        %4570 = vmatmul.mubr.f32.gmra.mxu0 %v4477
        %v4571 = vpop.f32.mrf.mxu0
        %v4572 = vadd.f32 0.0, %v4571
        %v4573 = vpop.f32.mrf.mxu0
        %4574 = vmatprep.mubr.f32.mxu0 0.0
        %4575 = vmatmul.mubr.f32.gmra.mxu0 %v4478
        %v4576 = vpop.f32.mrf.mxu0
        %v4577 = vadd.f32 0.0, %v4576
        %v4578 = vpop.f32.mrf.mxu0
        %4579 = vmatprep.mubr.f32.mxu0 0.0
        %4580 = vmatmul.mubr.f32.gmra.mxu0 %v4479
        %v4581 = vpop.f32.mrf.mxu0
        %v4582 = vadd.f32 0.0, %v4581
        %v4583 = vpop.f32.mrf.mxu0
        %4584 = vmatprep.mubr.f32.mxu0 0.0
        %4585 = vmatmul.mubr.f32.gmra.mxu0 %v4480
        %v4586 = vpop.f32.mrf.mxu0
        %v4587 = vadd.f32 0.0, %v4586
        %v4588 = vpop.f32.mrf.mxu0
        %4589 = vmatprep.mubr.f32.mxu0 0.0
        %4590 = vmatmul.mubr.f32.gmra.mxu0 %v4481
        %v4591 = vpop.f32.mrf.mxu0
        %v4592 = vadd.f32 0.0, %v4591
        %v4593 = vpop.f32.mrf.mxu0
        %4594 = vmatprep.mubr.f32.mxu0 0.0
        %4595 = vmatmul.mubr.f32.gmra.mxu0 %v4482
        %v4596 = vpop.f32.mrf.mxu0
        %v4597 = vadd.f32 0.0, %v4596
        %v4598 = vpop.f32.mrf.mxu0
        %4599 = vmatprep.mubr.f32.mxu0 0.0
        %4600 = vmatmul.mubr.f32.gmra.mxu0 %v4483
        %v4601 = vpop.f32.mrf.mxu0
        %v4602 = vadd.f32 0.0, %v4601
        %v4603 = vpop.f32.mrf.mxu0
        %4604 = vmatprep.mubr.f32.mxu0 0.0
        %4605 = vmatmul.mubr.f32.gmra.mxu0 %v4484
        %v4606 = vpop.f32.mrf.mxu0
        %v4607 = vadd.f32 0.0, %v4606
        %v4608 = vpop.f32.mrf.mxu0
        %4609 = vmatprep.mubr.f32.mxu0 0.0
        %4610 = vmatmul.mubr.f32.gmra.mxu0 %v4485
        %v4611 = vpop.f32.mrf.mxu0
        %v4612 = vadd.f32 0.0, %v4611
        %v4613 = vpop.f32.mrf.mxu0
        %4614 = vmatprep.mubr.f32.mxu0 0.0
        %4615 = vmatmul.mubr.f32.gmra.mxu0 %v4486
        %v4616 = vpop.f32.mrf.mxu0
        %v4617 = vadd.f32 0.0, %v4616
        %v4618 = vpop.f32.mrf.mxu0
        %4619 = vmatprep.mubr.f32.mxu0 0.0
        %4620 = vmatmul.mubr.f32.gmra.mxu0 %v4487
        %v4621 = vpop.f32.mrf.mxu0
        %v4622 = vadd.f32 0.0, %v4621
        %v4623 = vpop.f32.mrf.mxu0
        %4624 = vmatprep.mubr.f32.mxu0 0.0
        %4625 = vmatmul.mubr.f32.gmra.mxu0 %v4488
        %v4626 = vpop.f32.mrf.mxu0
        %v4627 = vadd.f32 0.0, %v4626
        %v4628 = vpop.f32.mrf.mxu0
        %4629 = vmatprep.mubr.f32.mxu0 0.0
        %4630 = vmatmul.mubr.f32.gmra.mxu0 %v4489
        %v4631 = vpop.f32.mrf.mxu0
        %v4632 = vadd.f32 0.0, %v4631
        %v4633 = vpop.f32.mrf.mxu0
        %4634 = vdwg.mxu0
        %v4635 = vadd.f32 %v3885, %v4557
        %v4636 = vadd.f32 %v3886, %v4562
        %v4637 = vadd.f32 %v3887, %v4567
        %v4638 = vadd.f32 %v3888, %v4572
        %v4639 = vadd.f32 %v3889, %v4577
        %v4640 = vadd.f32 %v3890, %v4582
        %v4641 = vadd.f32 %v3891, %v4587
        %v4642 = vadd.f32 %v3892, %v4592
        %v4643 = vadd.f32 %v3893, %v4597
        %v4644 = vadd.f32 %v3894, %v4602
        %v4645 = vadd.f32 %v3895, %v4607
        %v4646 = vadd.f32 %v3896, %v4612
        %v4647 = vadd.f32 %v3897, %v4617
        %v4648 = vadd.f32 %v3898, %v4622
        %v4649 = vadd.f32 %v3899, %v4627
        %v4650 = vadd.f32 %v3900, %v4632
        %v4651 = vlaneseq
        %v4652 = vshrl.u32 %v4651, 7
        %v4653 = vsub.s32 7, %v4652
        %v4654 = vrot.slane %v389, %v4653
        %v4655 = vadd.f32 %v4635, %v4654
        %v4656 = vadd.f32 %v4636, %v4654
        %v4657 = vadd.f32 %v4637, %v4654
        %v4658 = vadd.f32 %v4638, %v4654
        %v4659 = vadd.f32 %v4639, %v4654
        %v4660 = vadd.f32 %v4640, %v4654
        %v4661 = vadd.f32 %v4641, %v4654
        %v4662 = vadd.f32 %v4642, %v4654
        %v4663 = vadd.f32 %v4643, %v4654
        %v4664 = vadd.f32 %v4644, %v4654
        %v4665 = vadd.f32 %v4645, %v4654
        %v4666 = vadd.f32 %v4646, %v4654
        %v4667 = vadd.f32 %v4647, %v4654
        %v4668 = vadd.f32 %v4648, %v4654
        %v4669 = vadd.f32 %v4649, %v4654
        %v4670 = vadd.f32 %v4650, %v4654
        %v4671 = vld [vmem:[#allocation7] sm:$0xff]
        %v4672 = vld [vmem:[#allocation7 + $0x8] sm:$0xff]
        %v4673 = vld [vmem:[#allocation7 + $0x10] sm:$0xff]
        %v4674 = vld [vmem:[#allocation7 + $0x18] sm:$0xff]
        %v4675 = vld [vmem:[#allocation7 + $0x20] sm:$0xff]
        %v4676 = vld [vmem:[#allocation7 + $0x28] sm:$0xff]
        %v4677 = vld [vmem:[#allocation7 + $0x30] sm:$0xff]
        %v4678 = vld [vmem:[#allocation7 + $0x38] sm:$0xff]
        %v4679 = vld [vmem:[#allocation7 + $0x40] sm:$0xff]
        %v4680 = vld [vmem:[#allocation7 + $0x48] sm:$0xff]
        %v4681 = vld [vmem:[#allocation7 + $0x50] sm:$0xff]
        %v4682 = vld [vmem:[#allocation7 + $0x58] sm:$0xff]
        %v4683 = vld [vmem:[#allocation7 + $0x60] sm:$0xff]
        %v4684 = vld [vmem:[#allocation7 + $0x68] sm:$0xff]
        %v4685 = vld [vmem:[#allocation7 + $0x70] sm:$0xff]
        %v4686 = vld [vmem:[#allocation7 + $0x78] sm:$0xff]
        %v4687 = vld [vmem:[%s6] sm:$0xff]
        %v4688 = vld [vmem:[#allocation10] sm:$0xff]
        %v4689 = vld [vmem:[#allocation10 + $0x8] sm:$0xff]
        %v4690 = vld [vmem:[#allocation10 + $0x10] sm:$0xff]
        %v4691 = vld [vmem:[#allocation10 + $0x18] sm:$0xff]
        %v4692 = vld [vmem:[#allocation10 + $0x20] sm:$0xff]
        %v4693 = vld [vmem:[#allocation10 + $0x28] sm:$0xff]
        %v4694 = vld [vmem:[#allocation10 + $0x30] sm:$0xff]
        %v4695 = vld [vmem:[#allocation10 + $0x38] sm:$0xff]
        %v4696 = vld [vmem:[#allocation10 + $0x40] sm:$0xff]
        %v4697 = vld [vmem:[#allocation10 + $0x50] sm:$0xff]
        %v4698 = vld [vmem:[#allocation10 + $0x60] sm:$0xff]
        %v4699 = vld [vmem:[#allocation10 + $0x70] sm:$0xff]
        %v4700 = vld [vmem:[#allocation10 + $0x80] sm:$0xff]
        %v4701 = vld [vmem:[#allocation10 + $0x90] sm:$0xff]
        %v4702 = vld [vmem:[#allocation10 + $0xa0] sm:$0xff]
        %v4703 = vld [vmem:[#allocation10 + $0xb0] sm:$0xff]
        %v4704 = vld [vmem:[#allocation10 + $0xc0] sm:$0xff]
        %v4705 = vld [vmem:[#allocation10 + $0xd0] sm:$0xff]
        %v4706 = vld [vmem:[#allocation10 + $0xe0] sm:$0xff]
        %v4707 = vld [vmem:[#allocation10 + $0xf0] sm:$0xff]
        %v4708 = vld [vmem:[#allocation10 + $0x100] sm:$0xff]
        %v4709 = vld [vmem:[#allocation10 + $0x110] sm:$0xff]
        %v4710 = vld [vmem:[#allocation10 + $0x120] sm:$0xff]
        %v4711 = vld [vmem:[#allocation10 + $0x130] sm:$0xff]
        %v4712 = vsel %vm414, %v4655, 0.0
        %4713 = vadd.xlane.f32.xlu0 %v4712
        %v4714 = vpop.xlane.xlu0 %4713
        %v4715 = vsel %vm414, %v4656, 0.0
        %4716 = vadd.xlane.f32.xlu0 %v4715
        %v4717 = vpop.xlane.xlu0 %4716
        %v4718 = vsel %vm414, %v4657, 0.0
        %4719 = vadd.xlane.f32.xlu0 %v4718
        %v4720 = vpop.xlane.xlu0 %4719
        %v4721 = vsel %vm414, %v4658, 0.0
        %4722 = vadd.xlane.f32.xlu0 %v4721
        %v4723 = vpop.xlane.xlu0 %4722
        %v4724 = vsel %vm414, %v4659, 0.0
        %4725 = vadd.xlane.f32.xlu0 %v4724
        %v4726 = vpop.xlane.xlu0 %4725
        %v4727 = vsel %vm414, %v4660, 0.0
        %4728 = vadd.xlane.f32.xlu0 %v4727
        %v4729 = vpop.xlane.xlu0 %4728
        %v4730 = vsel %vm414, %v4661, 0.0
        %4731 = vadd.xlane.f32.xlu0 %v4730
        %v4732 = vpop.xlane.xlu0 %4731
        %v4733 = vsel %vm414, %v4662, 0.0
        %4734 = vadd.xlane.f32.xlu0 %v4733
        %v4735 = vpop.xlane.xlu0 %4734
        %v4736 = vsel %vm414, %v4663, 0.0
        %4737 = vadd.xlane.f32.xlu0 %v4736
        %v4738 = vpop.xlane.xlu0 %4737
        %v4739 = vsel %vm414, %v4664, 0.0
        %4740 = vadd.xlane.f32.xlu0 %v4739
        %v4741 = vpop.xlane.xlu0 %4740
        %v4742 = vsel %vm414, %v4665, 0.0
        %4743 = vadd.xlane.f32.xlu0 %v4742
        %v4744 = vpop.xlane.xlu0 %4743
        %v4745 = vsel %vm414, %v4666, 0.0
        %4746 = vadd.xlane.f32.xlu0 %v4745
        %v4747 = vpop.xlane.xlu0 %4746
        %v4748 = vsel %vm414, %v4667, 0.0
        %4749 = vadd.xlane.f32.xlu0 %v4748
        %v4750 = vpop.xlane.xlu0 %4749
        %v4751 = vsel %vm414, %v4668, 0.0
        %4752 = vadd.xlane.f32.xlu0 %v4751
        %v4753 = vpop.xlane.xlu0 %4752
        %v4754 = vsel %vm414, %v4669, 0.0
        %4755 = vadd.xlane.f32.xlu0 %v4754
        %v4756 = vpop.xlane.xlu0 %4755
        %v4757 = vsel %vm414, %v4670, 0.0
        %4758 = vadd.xlane.f32.xlu0 %v4757
        %v4759 = vpop.xlane.xlu0 %4758
        %v4760 = vmul.f32 %v4714, %v463
        %v4761 = vmul.f32 %v4717, %v463
        %v4762 = vmul.f32 %v4720, %v463
        %v4763 = vmul.f32 %v4723, %v463
        %v4764 = vmul.f32 %v4726, %v463
        %v4765 = vmul.f32 %v4729, %v463
        %v4766 = vmul.f32 %v4732, %v463
        %v4767 = vmul.f32 %v4735, %v463
        %v4768 = vmul.f32 %v4738, %v463
        %v4769 = vmul.f32 %v4741, %v463
        %v4770 = vmul.f32 %v4744, %v463
        %v4771 = vmul.f32 %v4747, %v463
        %v4772 = vmul.f32 %v4750, %v463
        %v4773 = vmul.f32 %v4753, %v463
        %v4774 = vmul.f32 %v4756, %v463
        %v4775 = vmul.f32 %v4759, %v463
        %v4776 = vsub.f32 %v4655, %v4760
        %v4777 = vsub.f32 %v4656, %v4761
        %v4778 = vsub.f32 %v4657, %v4762
        %v4779 = vsub.f32 %v4658, %v4763
        %v4780 = vsub.f32 %v4659, %v4764
        %v4781 = vsub.f32 %v4660, %v4765
        %v4782 = vsub.f32 %v4661, %v4766
        %v4783 = vsub.f32 %v4662, %v4767
        %v4784 = vsub.f32 %v4663, %v4768
        %v4785 = vsub.f32 %v4664, %v4769
        %v4786 = vsub.f32 %v4665, %v4770
        %v4787 = vsub.f32 %v4666, %v4771
        %v4788 = vsub.f32 %v4667, %v4772
        %v4789 = vsub.f32 %v4668, %v4773
        %v4790 = vsub.f32 %v4669, %v4774
        %v4791 = vsub.f32 %v4670, %v4775
        %v4792 = vmul.f32 %v4776, %v4776
        %v4793 = vmul.f32 %v4777, %v4777
        %v4794 = vmul.f32 %v4778, %v4778
        %v4795 = vmul.f32 %v4779, %v4779
        %v4796 = vmul.f32 %v4780, %v4780
        %v4797 = vmul.f32 %v4781, %v4781
        %v4798 = vmul.f32 %v4782, %v4782
        %v4799 = vmul.f32 %v4783, %v4783
        %v4800 = vmul.f32 %v4784, %v4784
        %v4801 = vmul.f32 %v4785, %v4785
        %v4802 = vmul.f32 %v4786, %v4786
        %v4803 = vmul.f32 %v4787, %v4787
        %v4804 = vmul.f32 %v4788, %v4788
        %v4805 = vmul.f32 %v4789, %v4789
        %v4806 = vmul.f32 %v4790, %v4790
        %v4807 = vmul.f32 %v4791, %v4791
        %v4808 = vsel %vm414, %v4792, 0.0
        %4809 = vadd.xlane.f32.xlu0 %v4808
        %v4810 = vpop.xlane.xlu0 %4809
        %v4811 = vsel %vm414, %v4793, 0.0
        %4812 = vadd.xlane.f32.xlu0 %v4811
        %v4813 = vpop.xlane.xlu0 %4812
        %v4814 = vsel %vm414, %v4794, 0.0
        %4815 = vadd.xlane.f32.xlu0 %v4814
        %v4816 = vpop.xlane.xlu0 %4815
        %v4817 = vsel %vm414, %v4795, 0.0
        %4818 = vadd.xlane.f32.xlu0 %v4817
        %v4819 = vpop.xlane.xlu0 %4818
        %v4820 = vsel %vm414, %v4796, 0.0
        %4821 = vadd.xlane.f32.xlu0 %v4820
        %v4822 = vpop.xlane.xlu0 %4821
        %v4823 = vsel %vm414, %v4797, 0.0
        %4824 = vadd.xlane.f32.xlu0 %v4823
        %v4825 = vpop.xlane.xlu0 %4824
        %v4826 = vsel %vm414, %v4798, 0.0
        %4827 = vadd.xlane.f32.xlu0 %v4826
        %v4828 = vpop.xlane.xlu0 %4827
        %v4829 = vsel %vm414, %v4799, 0.0
        %4830 = vadd.xlane.f32.xlu0 %v4829
        %v4831 = vpop.xlane.xlu0 %4830
        %v4832 = vsel %vm414, %v4800, 0.0
        %4833 = vadd.xlane.f32.xlu0 %v4832
        %v4834 = vpop.xlane.xlu0 %4833
        %v4835 = vsel %vm414, %v4801, 0.0
        %4836 = vadd.xlane.f32.xlu0 %v4835
        %v4837 = vpop.xlane.xlu0 %4836
        %v4838 = vsel %vm414, %v4802, 0.0
        %4839 = vadd.xlane.f32.xlu0 %v4838
        %v4840 = vpop.xlane.xlu0 %4839
        %v4841 = vsel %vm414, %v4803, 0.0
        %4842 = vadd.xlane.f32.xlu0 %v4841
        %v4843 = vpop.xlane.xlu0 %4842
        %v4844 = vsel %vm414, %v4804, 0.0
        %4845 = vadd.xlane.f32.xlu0 %v4844
        %v4846 = vpop.xlane.xlu0 %4845
        %v4847 = vsel %vm414, %v4805, 0.0
        %4848 = vadd.xlane.f32.xlu0 %v4847
        %v4849 = vpop.xlane.xlu0 %4848
        %v4850 = vsel %vm414, %v4806, 0.0
        %4851 = vadd.xlane.f32.xlu0 %v4850
        %v4852 = vpop.xlane.xlu0 %4851
        %v4853 = vsel %vm414, %v4807, 0.0
        %4854 = vadd.xlane.f32.xlu0 %v4853
        %v4855 = vpop.xlane.xlu0 %4854
        %v4856 = vmul.f32 %v4810, %v463
        %v4857 = vmul.f32 %v4813, %v463
        %v4858 = vmul.f32 %v4816, %v463
        %v4859 = vmul.f32 %v4819, %v463
        %v4860 = vmul.f32 %v4822, %v463
        %v4861 = vmul.f32 %v4825, %v463
        %v4862 = vmul.f32 %v4828, %v463
        %v4863 = vmul.f32 %v4831, %v463
        %v4864 = vmul.f32 %v4834, %v463
        %v4865 = vmul.f32 %v4837, %v463
        %v4866 = vmul.f32 %v4840, %v463
        %v4867 = vmul.f32 %v4843, %v463
        %v4868 = vmul.f32 %v4846, %v463
        %v4869 = vmul.f32 %v4849, %v463
        %v4870 = vmul.f32 %v4852, %v463
        %v4871 = vmul.f32 %v4855, %v463
        %v4872 = vadd.f32 %v4856, 1e-05
        %v4873 = vadd.f32 %v4857, 1e-05
        %v4874 = vadd.f32 %v4858, 1e-05
        %v4875 = vadd.f32 %v4859, 1e-05
        %v4876 = vadd.f32 %v4860, 1e-05
        %v4877 = vadd.f32 %v4861, 1e-05
        %v4878 = vadd.f32 %v4862, 1e-05
        %v4879 = vadd.f32 %v4863, 1e-05
        %v4880 = vadd.f32 %v4864, 1e-05
        %v4881 = vadd.f32 %v4865, 1e-05
        %v4882 = vadd.f32 %v4866, 1e-05
        %v4883 = vadd.f32 %v4867, 1e-05
        %v4884 = vadd.f32 %v4868, 1e-05
        %v4885 = vadd.f32 %v4869, 1e-05
        %v4886 = vadd.f32 %v4870, 1e-05
        %v4887 = vadd.f32 %v4871, 1e-05
        %v4888 = vrsqrt.pop %v4872
        %v4889 = vrsqrt.pop %v4873
        %v4890 = vrsqrt.pop %v4874
        %v4891 = vrsqrt.pop %v4875
        %v4892 = vrsqrt.pop %v4876
        %v4893 = vrsqrt.pop %v4877
        %v4894 = vrsqrt.pop %v4878
        %v4895 = vrsqrt.pop %v4879
        %v4896 = vrsqrt.pop %v4880
        %v4897 = vrsqrt.pop %v4881
        %v4898 = vrsqrt.pop %v4882
        %v4899 = vrsqrt.pop %v4883
        %v4900 = vrsqrt.pop %v4884
        %v4901 = vrsqrt.pop %v4885
        %v4902 = vrsqrt.pop %v4886
        %v4903 = vrsqrt.pop %v4887
        %v4904 = vmul.f32 %v4776, %v4888
        %v4905 = vmul.f32 %v4777, %v4889
        %v4906 = vmul.f32 %v4778, %v4890
        %v4907 = vmul.f32 %v4779, %v4891
        %v4908 = vmul.f32 %v4780, %v4892
        %v4909 = vmul.f32 %v4781, %v4893
        %v4910 = vmul.f32 %v4782, %v4894
        %v4911 = vmul.f32 %v4783, %v4895
        %v4912 = vmul.f32 %v4784, %v4896
        %v4913 = vmul.f32 %v4785, %v4897
        %v4914 = vmul.f32 %v4786, %v4898
        %v4915 = vmul.f32 %v4787, %v4899
        %v4916 = vmul.f32 %v4788, %v4900
        %v4917 = vmul.f32 %v4789, %v4901
        %v4918 = vmul.f32 %v4790, %v4902
        %v4919 = vmul.f32 %v4791, %v4903
        %v4920 = vlaneseq
        %v4921 = vshrl.u32 %v4920, 7
        %v4922 = vsub.s32 0, %v4921
        %v4923 = vrot.slane %v4687, %v4922
        %v4924 = vmul.f32 %v4904, %v4923
        %v4925 = vmul.f32 %v4905, %v4923
        %v4926 = vmul.f32 %v4906, %v4923
        %v4927 = vmul.f32 %v4907, %v4923
        %v4928 = vmul.f32 %v4908, %v4923
        %v4929 = vmul.f32 %v4909, %v4923
        %v4930 = vmul.f32 %v4910, %v4923
        %v4931 = vmul.f32 %v4911, %v4923
        %v4932 = vmul.f32 %v4912, %v4923
        %v4933 = vmul.f32 %v4913, %v4923
        %v4934 = vmul.f32 %v4914, %v4923
        %v4935 = vmul.f32 %v4915, %v4923
        %v4936 = vmul.f32 %v4916, %v4923
        %v4937 = vmul.f32 %v4917, %v4923
        %v4938 = vmul.f32 %v4918, %v4923
        %v4939 = vmul.f32 %v4919, %v4923
        %v4940 = vlaneseq
        %v4941 = vshrl.u32 %v4940, 7
        %v4942 = vsub.s32 1, %v4941
        %v4943 = vrot.slane %v4687, %v4942
        %v4944 = vadd.f32 %v4924, %v4943
        %v4945 = vadd.f32 %v4925, %v4943
        %v4946 = vadd.f32 %v4926, %v4943
        %v4947 = vadd.f32 %v4927, %v4943
        %v4948 = vadd.f32 %v4928, %v4943
        %v4949 = vadd.f32 %v4929, %v4943
        %v4950 = vadd.f32 %v4930, %v4943
        %v4951 = vadd.f32 %v4931, %v4943
        %v4952 = vadd.f32 %v4932, %v4943
        %v4953 = vadd.f32 %v4933, %v4943
        %v4954 = vadd.f32 %v4934, %v4943
        %v4955 = vadd.f32 %v4935, %v4943
        %v4956 = vadd.f32 %v4936, %v4943
        %v4957 = vadd.f32 %v4937, %v4943
        %v4958 = vadd.f32 %v4938, %v4943
        %v4959 = vadd.f32 %v4939, %v4943
        %v4960 = vlaneseq
        %v4961 = vshrl.u32 %v4960, 7
        %v4962 = vsub.s32 2, %v4961
        %v4963 = vrot.slane %v4687, %v4962
        %v4965 = vsel %vm414, %v4944, 0
        %v4968 = vsel %vm414, %v4945, 0
        %v4971 = vsel %vm414, %v4946, 0
        %v4974 = vsel %vm414, %v4947, 0
        %v4977 = vsel %vm414, %v4948, 0
        %v4980 = vsel %vm414, %v4949, 0
        %v4983 = vsel %vm414, %v4950, 0
        %v4986 = vsel %vm414, %v4951, 0
        %v4989 = vsel %vm414, %v4952, 0
        %v4992 = vsel %vm414, %v4953, 0
        %v4995 = vsel %vm414, %v4954, 0
        %v4998 = vsel %vm414, %v4955, 0
        %v5001 = vsel %vm414, %v4956, 0
        %v5004 = vsel %vm414, %v4957, 0
        %v5007 = vsel %vm414, %v4958, 0
        %v5010 = vsel %vm414, %v4959, 0
        %5012 = vmatprep.subr.mxu0 0.0
        %5013 = vmatpush1.msra.mxu0 0.0
        %5014 = vmatprep.subr.mxu0 0.0
        %5015 = vmatpush1.msra.mxu0 0.0
        %5016 = vmatprep.subr.mxu0 0.0
        %5017 = vmatpush1.msra.mxu0 0.0
        %5018 = vmatprep.subr.mxu0 0.0
        %5019 = vmatpush1.msra.mxu0 0.0
        %5020 = vmatprep.subr.mxu0 0.0
        %5021 = vmatpush1.msra.mxu0 0.0
        %5022 = vmatprep.subr.mxu0 0.0
        %5023 = vmatpush1.msra.mxu0 0.0
        %5024 = vmatprep.subr.mxu0 0.0
        %5025 = vmatpush1.msra.mxu0 0.0
        %5026 = vmatprep.subr.mxu0 0.0
        %5027 = vmatpush1.msra.mxu0 0.0
        %5028 = vmatprep.subr.mxu0 0.0
        %5029 = vmatpush1.msra.mxu0 0.0
        %5030 = vmatprep.subr.mxu0 0.0
        %5031 = vmatpush1.msra.mxu0 0.0
        %5032 = vmatprep.subr.mxu0 0.0
        %5033 = vmatpush1.msra.mxu0 0.0
        %5034 = vmatprep.subr.mxu0 0.0
        %5035 = vmatpush1.msra.mxu0 0.0
        %5036 = vmatprep.subr.mxu0 0.0
        %5037 = vmatpush1.msra.mxu0 %v4694
        %5038 = vmatprep.subr.mxu0 0.0
        %5039 = vmatpush1.msra.mxu0 %v4692
        %5040 = vmatprep.subr.mxu0 0.0
        %5041 = vmatpush1.msra.mxu0 %v4690
        %5042 = vmatprep.subr.mxu0 0.0
        %5043 = vmatpush1.msra.mxu0 %v4688
        %5044 = vmatprep.subr.mxu0 0.0
        %5045 = vmatpush2.msra.mxu0 0.0
        %5046 = vmatprep.subr.mxu0 0.0
        %5047 = vmatpush2.msra.mxu0 0.0
        %5048 = vmatprep.subr.mxu0 0.0
        %5049 = vmatpush2.msra.mxu0 0.0
        %5050 = vmatprep.subr.mxu0 0.0
        %5051 = vmatpush2.msra.mxu0 0.0
        %5052 = vmatprep.subr.mxu0 0.0
        %5053 = vmatpush2.msra.mxu0 0.0
        %5054 = vmatprep.subr.mxu0 0.0
        %5055 = vmatpush2.msra.mxu0 0.0
        %5056 = vmatprep.subr.mxu0 0.0
        %5057 = vmatpush2.msra.mxu0 0.0
        %5058 = vmatprep.subr.mxu0 0.0
        %5059 = vmatpush2.msra.mxu0 0.0
        %5060 = vmatprep.subr.mxu0 0.0
        %5061 = vmatpush2.msra.mxu0 0.0
        %5062 = vmatprep.subr.mxu0 0.0
        %5063 = vmatpush2.msra.mxu0 0.0
        %5064 = vmatprep.subr.mxu0 0.0
        %5065 = vmatpush2.msra.mxu0 0.0
        %5066 = vmatprep.subr.mxu0 0.0
        %5067 = vmatpush2.msra.mxu0 0.0
        %5068 = vmatprep.subr.mxu0 0.0
        %5069 = vmatpush2.msra.mxu0 0.0
        %5070 = vmatprep.subr.mxu0 0.0
        %5071 = vmatpush2.msra.mxu0 0.0
        %5072 = vmatprep.subr.mxu0 0.0
        %5073 = vmatpush2.msra.mxu0 0.0
        %5074 = vmatprep.subr.mxu0 0.0
        %5075 = vmatpush2.msra.mxu0 0.0
        %5076 = vmatprep.mubr.f32.mxu0 0.0
        %5077 = vmatmul.mubr.f32.gmra.mxu0 %v4965
        %v5078 = vpop.f32.mrf.mxu0
        %v5079 = vadd.f32 %v4963, %v5078
        %v5080 = vpop.f32.mrf.mxu0
        %5081 = vmatprep.mubr.f32.mxu0 0.0
        %5082 = vmatmul.mubr.f32.gmra.mxu0 %v4968
        %v5083 = vpop.f32.mrf.mxu0
        %v5084 = vadd.f32 %v4963, %v5083
        %v5085 = vpop.f32.mrf.mxu0
        %5086 = vmatprep.mubr.f32.mxu0 0.0
        %5087 = vmatmul.mubr.f32.gmra.mxu0 %v4971
        %v5088 = vpop.f32.mrf.mxu0
        %v5089 = vadd.f32 %v4963, %v5088
        %v5090 = vpop.f32.mrf.mxu0
        %5091 = vmatprep.mubr.f32.mxu0 0.0
        %5092 = vmatmul.mubr.f32.gmra.mxu0 %v4974
        %v5093 = vpop.f32.mrf.mxu0
        %v5094 = vadd.f32 %v4963, %v5093
        %v5095 = vpop.f32.mrf.mxu0
        %5096 = vmatprep.mubr.f32.mxu0 0.0
        %5097 = vmatmul.mubr.f32.gmra.mxu0 %v4977
        %v5098 = vpop.f32.mrf.mxu0
        %v5099 = vadd.f32 %v4963, %v5098
        %v5100 = vpop.f32.mrf.mxu0
        %5101 = vmatprep.mubr.f32.mxu0 0.0
        %5102 = vmatmul.mubr.f32.gmra.mxu0 %v4980
        %v5103 = vpop.f32.mrf.mxu0
        %v5104 = vadd.f32 %v4963, %v5103
        %v5105 = vpop.f32.mrf.mxu0
        %5106 = vmatprep.mubr.f32.mxu0 0.0
        %5107 = vmatmul.mubr.f32.gmra.mxu0 %v4983
        %v5108 = vpop.f32.mrf.mxu0
        %v5109 = vadd.f32 %v4963, %v5108
        %v5110 = vpop.f32.mrf.mxu0
        %5111 = vmatprep.mubr.f32.mxu0 0.0
        %5112 = vmatmul.mubr.f32.gmra.mxu0 %v4986
        %v5113 = vpop.f32.mrf.mxu0
        %v5114 = vadd.f32 %v4963, %v5113
        %v5115 = vpop.f32.mrf.mxu0
        %5116 = vmatprep.mubr.f32.mxu0 0.0
        %5117 = vmatmul.mubr.f32.gmra.mxu0 %v4989
        %v5118 = vpop.f32.mrf.mxu0
        %v5119 = vadd.f32 %v4963, %v5118
        %v5120 = vpop.f32.mrf.mxu0
        %5121 = vmatprep.mubr.f32.mxu0 0.0
        %5122 = vmatmul.mubr.f32.gmra.mxu0 %v4992
        %v5123 = vpop.f32.mrf.mxu0
        %v5124 = vadd.f32 %v4963, %v5123
        %v5125 = vpop.f32.mrf.mxu0
        %5126 = vmatprep.mubr.f32.mxu0 0.0
        %5127 = vmatmul.mubr.f32.gmra.mxu0 %v4995
        %v5128 = vpop.f32.mrf.mxu0
        %v5129 = vadd.f32 %v4963, %v5128
        %v5130 = vpop.f32.mrf.mxu0
        %5131 = vmatprep.mubr.f32.mxu0 0.0
        %5132 = vmatmul.mubr.f32.gmra.mxu0 %v4998
        %v5133 = vpop.f32.mrf.mxu0
        %v5134 = vadd.f32 %v4963, %v5133
        %v5135 = vpop.f32.mrf.mxu0
        %5136 = vmatprep.mubr.f32.mxu0 0.0
        %5137 = vmatmul.mubr.f32.gmra.mxu0 %v5001
        %v5138 = vpop.f32.mrf.mxu0
        %v5139 = vadd.f32 %v4963, %v5138
        %v5140 = vpop.f32.mrf.mxu0
        %5141 = vmatprep.mubr.f32.mxu0 0.0
        %5142 = vmatmul.mubr.f32.gmra.mxu0 %v5004
        %v5143 = vpop.f32.mrf.mxu0
        %v5144 = vadd.f32 %v4963, %v5143
        %v5145 = vpop.f32.mrf.mxu0
        %5146 = vmatprep.mubr.f32.mxu0 0.0
        %5147 = vmatmul.mubr.f32.gmra.mxu0 %v5007
        %v5148 = vpop.f32.mrf.mxu0
        %v5149 = vadd.f32 %v4963, %v5148
        %v5150 = vpop.f32.mrf.mxu0
        %5151 = vmatprep.mubr.f32.mxu0 0.0
        %5152 = vmatmul.mubr.f32.gmra.mxu0 %v5010
        %v5153 = vpop.f32.mrf.mxu0
        %v5154 = vadd.f32 %v4963, %v5153
        %v5155 = vpop.f32.mrf.mxu0
        %5156 = vdwg.mxu0
        %5173 = vrot.lane.b32.xlu0 %v5079, 96
        %v5174 = vpop.permute.xlu0 %5173
        %5175 = vrot.lane.b32.xlu0 %v5084, 96
        %v5176 = vpop.permute.xlu0 %5175
        %5177 = vrot.lane.b32.xlu0 %v5089, 96
        %v5178 = vpop.permute.xlu0 %5177
        %5179 = vrot.lane.b32.xlu0 %v5094, 96
        %v5180 = vpop.permute.xlu0 %5179
        %5181 = vrot.lane.b32.xlu0 %v5099, 96
        %v5182 = vpop.permute.xlu0 %5181
        %5183 = vrot.lane.b32.xlu0 %v5104, 96
        %v5184 = vpop.permute.xlu0 %5183
        %5185 = vrot.lane.b32.xlu0 %v5109, 96
        %v5186 = vpop.permute.xlu0 %5185
        %5187 = vrot.lane.b32.xlu0 %v5114, 96
        %v5188 = vpop.permute.xlu0 %5187
        %5189 = vrot.lane.b32.xlu0 %v5119, 96
        %v5190 = vpop.permute.xlu0 %5189
        %5191 = vrot.lane.b32.xlu0 %v5124, 96
        %v5192 = vpop.permute.xlu0 %5191
        %5193 = vrot.lane.b32.xlu0 %v5129, 96
        %v5194 = vpop.permute.xlu0 %5193
        %5195 = vrot.lane.b32.xlu0 %v5134, 96
        %v5196 = vpop.permute.xlu0 %5195
        %5197 = vrot.lane.b32.xlu0 %v5139, 96
        %v5198 = vpop.permute.xlu0 %5197
        %5199 = vrot.lane.b32.xlu0 %v5144, 96
        %v5200 = vpop.permute.xlu0 %5199
        %5201 = vrot.lane.b32.xlu0 %v5149, 96
        %v5202 = vpop.permute.xlu0 %5201
        %5203 = vrot.lane.b32.xlu0 %v5154, 96
        %v5204 = vpop.permute.xlu0 %5203
        %v5205 = vsel %vm909, %v5079, 0
        %v5207 = vsel %vm909, %v5084, 0
        %v5209 = vsel %vm909, %v5089, 0
        %v5211 = vsel %vm909, %v5094, 0
        %v5213 = vsel %vm909, %v5099, 0
        %v5215 = vsel %vm909, %v5104, 0
        %v5217 = vsel %vm909, %v5109, 0
        %v5219 = vsel %vm909, %v5114, 0
        %v5221 = vsel %vm909, %v5119, 0
        %v5223 = vsel %vm909, %v5124, 0
        %v5225 = vsel %vm909, %v5129, 0
        %v5227 = vsel %vm909, %v5134, 0
        %v5229 = vsel %vm909, %v5139, 0
        %v5231 = vsel %vm909, %v5144, 0
        %v5233 = vsel %vm909, %v5149, 0
        %v5235 = vsel %vm909, %v5154, 0
        %v5237 = vsel %vm909, %v5174, 0
        %v5239 = vsel %vm909, %v5176, 0
        %v5241 = vsel %vm909, %v5178, 0
        %v5243 = vsel %vm909, %v5180, 0
        %v5245 = vsel %vm909, %v5182, 0
        %v5247 = vsel %vm909, %v5184, 0
        %v5249 = vsel %vm909, %v5186, 0
        %v5251 = vsel %vm909, %v5188, 0
        %v5253 = vsel %vm909, %v5190, 0
        %v5255 = vsel %vm909, %v5192, 0
        %v5257 = vsel %vm909, %v5194, 0
        %v5259 = vsel %vm909, %v5196, 0
        %v5261 = vsel %vm909, %v5198, 0
        %v5263 = vsel %vm909, %v5200, 0
        %v5265 = vsel %vm909, %v5202, 0
        %v5267 = vsel %vm909, %v5204, 0
        %5269 = vmatprep.subr.mxu0 0.0
        %5270 = vmatpush1.xpose.msra.mxu0 %v5267
        %5271 = vmatprep.subr.mxu0 0.0
        %5272 = vmatpush1.xpose.msra.mxu0 %v5265
        %5273 = vmatprep.subr.mxu0 0.0
        %5274 = vmatpush1.xpose.msra.mxu0 %v5263
        %5275 = vmatprep.subr.mxu0 0.0
        %5276 = vmatpush1.xpose.msra.mxu0 %v5261
        %5277 = vmatprep.subr.mxu0 0.0
        %5278 = vmatpush1.xpose.msra.mxu0 %v5259
        %5279 = vmatprep.subr.mxu0 0.0
        %5280 = vmatpush1.xpose.msra.mxu0 %v5257
        %5281 = vmatprep.subr.mxu0 0.0
        %5282 = vmatpush1.xpose.msra.mxu0 %v5255
        %5283 = vmatprep.subr.mxu0 0.0
        %5284 = vmatpush1.xpose.msra.mxu0 %v5253
        %5285 = vmatprep.subr.mxu0 0.0
        %5286 = vmatpush1.xpose.msra.mxu0 %v5251
        %5287 = vmatprep.subr.mxu0 0.0
        %5288 = vmatpush1.xpose.msra.mxu0 %v5249
        %5289 = vmatprep.subr.mxu0 0.0
        %5290 = vmatpush1.xpose.msra.mxu0 %v5247
        %5291 = vmatprep.subr.mxu0 0.0
        %5292 = vmatpush1.xpose.msra.mxu0 %v5245
        %5293 = vmatprep.subr.mxu0 0.0
        %5294 = vmatpush1.xpose.msra.mxu0 %v5243
        %5295 = vmatprep.subr.mxu0 0.0
        %5296 = vmatpush1.xpose.msra.mxu0 %v5241
        %5297 = vmatprep.subr.mxu0 0.0
        %5298 = vmatpush1.xpose.msra.mxu0 %v5239
        %5299 = vmatprep.subr.mxu0 0.0
        %5300 = vmatpush1.xpose.msra.mxu0 %v5237
        %5301 = vmatprep.subr.mxu0 0.0
        %5302 = vmatpush2.xpose.msra.mxu0 0.0
        %5303 = vmatprep.subr.mxu0 0.0
        %5304 = vmatpush2.xpose.msra.mxu0 0.0
        %5305 = vmatprep.subr.mxu0 0.0
        %5306 = vmatpush2.xpose.msra.mxu0 0.0
        %5307 = vmatprep.subr.mxu0 0.0
        %5308 = vmatpush2.xpose.msra.mxu0 0.0
        %5309 = vmatprep.subr.mxu0 0.0
        %5310 = vmatpush2.xpose.msra.mxu0 0.0
        %5311 = vmatprep.subr.mxu0 0.0
        %5312 = vmatpush2.xpose.msra.mxu0 0.0
        %5313 = vmatprep.subr.mxu0 0.0
        %5314 = vmatpush2.xpose.msra.mxu0 0.0
        %5315 = vmatprep.subr.mxu0 0.0
        %5316 = vmatpush2.xpose.msra.mxu0 0.0
        %5317 = vmatprep.subr.mxu0 0.0
        %5318 = vmatpush2.xpose.msra.mxu0 0.0
        %5319 = vmatprep.subr.mxu0 0.0
        %5320 = vmatpush2.xpose.msra.mxu0 0.0
        %5321 = vmatprep.subr.mxu0 0.0
        %5322 = vmatpush2.xpose.msra.mxu0 0.0
        %5323 = vmatprep.subr.mxu0 0.0
        %5324 = vmatpush2.xpose.msra.mxu0 0.0
        %5325 = vmatprep.subr.mxu0 0.0
        %5326 = vmatpush2.xpose.msra.mxu0 0.0
        %5327 = vmatprep.subr.mxu0 0.0
        %5328 = vmatpush2.xpose.msra.mxu0 0.0
        %5329 = vmatprep.subr.mxu0 0.0
        %5330 = vmatpush2.xpose.msra.mxu0 0.0
        %5331 = vmatprep.subr.mxu0 0.0
        %5332 = vmatpush2.xpose.msra.mxu0 0.0
        %5333 = vmatprep.mubr.f32.mxu0 0.0
        %5334 = vmatmul.mubr.f32.gmra.mxu0 %v5205
        %v5335 = vpop.f32.mrf.mxu0
        %v5336 = vadd.f32 0.0, %v5335
        %v5337 = vpop.f32.mrf.mxu0
        %5338 = vmatprep.mubr.f32.mxu0 0.0
        %5339 = vmatmul.mubr.f32.gmra.mxu0 %v5207
        %v5340 = vpop.f32.mrf.mxu0
        %v5341 = vadd.f32 0.0, %v5340
        %v5342 = vpop.f32.mrf.mxu0
        %5343 = vmatprep.mubr.f32.mxu0 0.0
        %5344 = vmatmul.mubr.f32.gmra.mxu0 %v5209
        %v5345 = vpop.f32.mrf.mxu0
        %v5346 = vadd.f32 0.0, %v5345
        %v5347 = vpop.f32.mrf.mxu0
        %5348 = vmatprep.mubr.f32.mxu0 0.0
        %5349 = vmatmul.mubr.f32.gmra.mxu0 %v5211
        %v5350 = vpop.f32.mrf.mxu0
        %v5351 = vadd.f32 0.0, %v5350
        %v5352 = vpop.f32.mrf.mxu0
        %5353 = vmatprep.mubr.f32.mxu0 0.0
        %5354 = vmatmul.mubr.f32.gmra.mxu0 %v5213
        %v5355 = vpop.f32.mrf.mxu0
        %v5356 = vadd.f32 0.0, %v5355
        %v5357 = vpop.f32.mrf.mxu0
        %5358 = vmatprep.mubr.f32.mxu0 0.0
        %5359 = vmatmul.mubr.f32.gmra.mxu0 %v5215
        %v5360 = vpop.f32.mrf.mxu0
        %v5361 = vadd.f32 0.0, %v5360
        %v5362 = vpop.f32.mrf.mxu0
        %5363 = vmatprep.mubr.f32.mxu0 0.0
        %5364 = vmatmul.mubr.f32.gmra.mxu0 %v5217
        %v5365 = vpop.f32.mrf.mxu0
        %v5366 = vadd.f32 0.0, %v5365
        %v5367 = vpop.f32.mrf.mxu0
        %5368 = vmatprep.mubr.f32.mxu0 0.0
        %5369 = vmatmul.mubr.f32.gmra.mxu0 %v5219
        %v5370 = vpop.f32.mrf.mxu0
        %v5371 = vadd.f32 0.0, %v5370
        %v5372 = vpop.f32.mrf.mxu0
        %5373 = vmatprep.mubr.f32.mxu0 0.0
        %5374 = vmatmul.mubr.f32.gmra.mxu0 %v5221
        %v5375 = vpop.f32.mrf.mxu0
        %v5376 = vadd.f32 0.0, %v5375
        %v5377 = vpop.f32.mrf.mxu0
        %5378 = vmatprep.mubr.f32.mxu0 0.0
        %5379 = vmatmul.mubr.f32.gmra.mxu0 %v5223
        %v5380 = vpop.f32.mrf.mxu0
        %v5381 = vadd.f32 0.0, %v5380
        %v5382 = vpop.f32.mrf.mxu0
        %5383 = vmatprep.mubr.f32.mxu0 0.0
        %5384 = vmatmul.mubr.f32.gmra.mxu0 %v5225
        %v5385 = vpop.f32.mrf.mxu0
        %v5386 = vadd.f32 0.0, %v5385
        %v5387 = vpop.f32.mrf.mxu0
        %5388 = vmatprep.mubr.f32.mxu0 0.0
        %5389 = vmatmul.mubr.f32.gmra.mxu0 %v5227
        %v5390 = vpop.f32.mrf.mxu0
        %v5391 = vadd.f32 0.0, %v5390
        %v5392 = vpop.f32.mrf.mxu0
        %5393 = vmatprep.mubr.f32.mxu0 0.0
        %5394 = vmatmul.mubr.f32.gmra.mxu0 %v5229
        %v5395 = vpop.f32.mrf.mxu0
        %v5396 = vadd.f32 0.0, %v5395
        %v5397 = vpop.f32.mrf.mxu0
        %5398 = vmatprep.mubr.f32.mxu0 0.0
        %5399 = vmatmul.mubr.f32.gmra.mxu0 %v5231
        %v5400 = vpop.f32.mrf.mxu0
        %v5401 = vadd.f32 0.0, %v5400
        %v5402 = vpop.f32.mrf.mxu0
        %5403 = vmatprep.mubr.f32.mxu0 0.0
        %5404 = vmatmul.mubr.f32.gmra.mxu0 %v5233
        %v5405 = vpop.f32.mrf.mxu0
        %v5406 = vadd.f32 0.0, %v5405
        %v5407 = vpop.f32.mrf.mxu0
        %5408 = vmatprep.mubr.f32.mxu0 0.0
        %5409 = vmatmul.mubr.f32.gmra.mxu0 %v5235
        %v5410 = vpop.f32.mrf.mxu0
        %v5411 = vadd.f32 0.0, %v5410
        %v5412 = vpop.f32.mrf.mxu0
        %5413 = vdwg.mxu0
        %v5414 = vmul.f32 %v5336, 0.35355338
        %v5415 = vmul.f32 %v5341, 0.35355338
        %v5416 = vmul.f32 %v5346, 0.35355338
        %v5417 = vmul.f32 %v5351, 0.35355338
        %v5418 = vmul.f32 %v5356, 0.35355338
        %v5419 = vmul.f32 %v5361, 0.35355338
        %v5420 = vmul.f32 %v5366, 0.35355338
        %v5421 = vmul.f32 %v5371, 0.35355338
        %v5422 = vmul.f32 %v5376, 0.35355338
        %v5423 = vmul.f32 %v5381, 0.35355338
        %v5424 = vmul.f32 %v5386, 0.35355338
        %v5425 = vmul.f32 %v5391, 0.35355338
        %v5426 = vmul.f32 %v5396, 0.35355338
        %v5427 = vmul.f32 %v5401, 0.35355338
        %v5428 = vmul.f32 %v5406, 0.35355338
        %v5429 = vmul.f32 %v5411, 0.35355338
        %v5430 = vadd.f32 %v5414, %v4671
        %v5431 = vadd.f32 %v5415, %v4672
        %v5432 = vadd.f32 %v5416, %v4673
        %v5433 = vadd.f32 %v5417, %v4674
        %v5434 = vadd.f32 %v5418, %v4675
        %v5435 = vadd.f32 %v5419, %v4676
        %v5436 = vadd.f32 %v5420, %v4677
        %v5437 = vadd.f32 %v5421, %v4678
        %v5438 = vadd.f32 %v5422, %v4679
        %v5439 = vadd.f32 %v5423, %v4680
        %v5440 = vadd.f32 %v5424, %v4681
        %v5441 = vadd.f32 %v5425, %v4682
        %v5442 = vadd.f32 %v5426, %v4683
        %v5443 = vadd.f32 %v5427, %v4684
        %v5444 = vadd.f32 %v5428, %v4685
        %v5445 = vadd.f32 %v5429, %v4686
        %5446 = vmax.xlane.f32.xlu0 %v5430
        %v5447 = vpop.xlane.xlu0 %5446
        %5448 = vmax.xlane.f32.xlu0 %v5431
        %v5449 = vpop.xlane.xlu0 %5448
        %5450 = vmax.xlane.f32.xlu0 %v5432
        %v5451 = vpop.xlane.xlu0 %5450
        %5452 = vmax.xlane.f32.xlu0 %v5433
        %v5453 = vpop.xlane.xlu0 %5452
        %5454 = vmax.xlane.f32.xlu0 %v5434
        %v5455 = vpop.xlane.xlu0 %5454
        %5456 = vmax.xlane.f32.xlu0 %v5435
        %v5457 = vpop.xlane.xlu0 %5456
        %5458 = vmax.xlane.f32.xlu0 %v5436
        %v5459 = vpop.xlane.xlu0 %5458
        %5460 = vmax.xlane.f32.xlu0 %v5437
        %v5461 = vpop.xlane.xlu0 %5460
        %5462 = vmax.xlane.f32.xlu0 %v5438
        %v5463 = vpop.xlane.xlu0 %5462
        %5464 = vmax.xlane.f32.xlu0 %v5439
        %v5465 = vpop.xlane.xlu0 %5464
        %5466 = vmax.xlane.f32.xlu0 %v5440
        %v5467 = vpop.xlane.xlu0 %5466
        %5468 = vmax.xlane.f32.xlu0 %v5441
        %v5469 = vpop.xlane.xlu0 %5468
        %5470 = vmax.xlane.f32.xlu0 %v5442
        %v5471 = vpop.xlane.xlu0 %5470
        %5472 = vmax.xlane.f32.xlu0 %v5443
        %v5473 = vpop.xlane.xlu0 %5472
        %5474 = vmax.xlane.f32.xlu0 %v5444
        %v5475 = vpop.xlane.xlu0 %5474
        %5476 = vmax.xlane.f32.xlu0 %v5445
        %v5477 = vpop.xlane.xlu0 %5476
        %v5478 = vsub.f32 %v5430, %v5447
        %v5479 = vsub.f32 %v5431, %v5449
        %v5480 = vsub.f32 %v5432, %v5451
        %v5481 = vsub.f32 %v5433, %v5453
        %v5482 = vsub.f32 %v5434, %v5455
        %v5483 = vsub.f32 %v5435, %v5457
        %v5484 = vsub.f32 %v5436, %v5459
        %v5485 = vsub.f32 %v5437, %v5461
        %v5486 = vsub.f32 %v5438, %v5463
        %v5487 = vsub.f32 %v5439, %v5465
        %v5488 = vsub.f32 %v5440, %v5467
        %v5489 = vsub.f32 %v5441, %v5469
        %v5490 = vsub.f32 %v5442, %v5471
        %v5491 = vsub.f32 %v5443, %v5473
        %v5492 = vsub.f32 %v5444, %v5475
        %v5493 = vsub.f32 %v5445, %v5477
        %v5494 = vmul.f32 %v5478, 1.442695
        %v5495 = vpow.pop %v5494
        %v5496 = vmul.f32 %v5479, 1.442695
        %v5497 = vpow.pop %v5496
        %v5498 = vmul.f32 %v5480, 1.442695
        %v5499 = vpow.pop %v5498
        %v5500 = vmul.f32 %v5481, 1.442695
        %v5501 = vpow.pop %v5500
        %v5502 = vmul.f32 %v5482, 1.442695
        %v5503 = vpow.pop %v5502
        %v5504 = vmul.f32 %v5483, 1.442695
        %v5505 = vpow.pop %v5504
        %v5506 = vmul.f32 %v5484, 1.442695
        %v5507 = vpow.pop %v5506
        %v5508 = vmul.f32 %v5485, 1.442695
        %v5509 = vpow.pop %v5508
        %v5510 = vmul.f32 %v5486, 1.442695
        %v5511 = vpow.pop %v5510
        %v5512 = vmul.f32 %v5487, 1.442695
        %v5513 = vpow.pop %v5512
        %v5514 = vmul.f32 %v5488, 1.442695
        %v5515 = vpow.pop %v5514
        %v5516 = vmul.f32 %v5489, 1.442695
        %v5517 = vpow.pop %v5516
        %v5518 = vmul.f32 %v5490, 1.442695
        %v5519 = vpow.pop %v5518
        %v5520 = vmul.f32 %v5491, 1.442695
        %v5521 = vpow.pop %v5520
        %v5522 = vmul.f32 %v5492, 1.442695
        %v5523 = vpow.pop %v5522
        %v5524 = vmul.f32 %v5493, 1.442695
        %v5525 = vpow.pop %v5524
        %5526 = vadd.xlane.f32.xlu0 %v5495
        %v5527 = vpop.xlane.xlu0 %5526
        %5528 = vadd.xlane.f32.xlu0 %v5497
        %v5529 = vpop.xlane.xlu0 %5528
        %5530 = vadd.xlane.f32.xlu0 %v5499
        %v5531 = vpop.xlane.xlu0 %5530
        %5532 = vadd.xlane.f32.xlu0 %v5501
        %v5533 = vpop.xlane.xlu0 %5532
        %5534 = vadd.xlane.f32.xlu0 %v5503
        %v5535 = vpop.xlane.xlu0 %5534
        %5536 = vadd.xlane.f32.xlu0 %v5505
        %v5537 = vpop.xlane.xlu0 %5536
        %5538 = vadd.xlane.f32.xlu0 %v5507
        %v5539 = vpop.xlane.xlu0 %5538
        %5540 = vadd.xlane.f32.xlu0 %v5509
        %v5541 = vpop.xlane.xlu0 %5540
        %5542 = vadd.xlane.f32.xlu0 %v5511
        %v5543 = vpop.xlane.xlu0 %5542
        %5544 = vadd.xlane.f32.xlu0 %v5513
        %v5545 = vpop.xlane.xlu0 %5544
        %5546 = vadd.xlane.f32.xlu0 %v5515
        %v5547 = vpop.xlane.xlu0 %5546
        %5548 = vadd.xlane.f32.xlu0 %v5517
        %v5549 = vpop.xlane.xlu0 %5548
        %5550 = vadd.xlane.f32.xlu0 %v5519
        %v5551 = vpop.xlane.xlu0 %5550
        %5552 = vadd.xlane.f32.xlu0 %v5521
        %v5553 = vpop.xlane.xlu0 %5552
        %5554 = vadd.xlane.f32.xlu0 %v5523
        %v5555 = vpop.xlane.xlu0 %5554
        %5556 = vadd.xlane.f32.xlu0 %v5525
        %v5557 = vpop.xlane.xlu0 %5556
        %v5558 = vrcp.pop %v5527
        %v5559 = vrcp.pop %v5529
        %v5560 = vrcp.pop %v5531
        %v5561 = vrcp.pop %v5533
        %v5562 = vrcp.pop %v5535
        %v5563 = vrcp.pop %v5537
        %v5564 = vrcp.pop %v5539
        %v5565 = vrcp.pop %v5541
        %v5566 = vrcp.pop %v5543
        %v5567 = vrcp.pop %v5545
        %v5568 = vrcp.pop %v5547
        %v5569 = vrcp.pop %v5549
        %v5570 = vrcp.pop %v5551
        %v5571 = vrcp.pop %v5553
        %v5572 = vrcp.pop %v5555
        %v5573 = vrcp.pop %v5557
        %v5574 = vmul.f32 %v5495, %v5558
        %v5575 = vmul.f32 %v5497, %v5559
        %v5576 = vmul.f32 %v5499, %v5560
        %v5577 = vmul.f32 %v5501, %v5561
        %v5578 = vmul.f32 %v5503, %v5562
        %v5579 = vmul.f32 %v5505, %v5563
        %v5580 = vmul.f32 %v5507, %v5564
        %v5581 = vmul.f32 %v5509, %v5565
        %v5582 = vmul.f32 %v5511, %v5566
        %v5583 = vmul.f32 %v5513, %v5567
        %v5584 = vmul.f32 %v5515, %v5568
        %v5585 = vmul.f32 %v5517, %v5569
        %v5586 = vmul.f32 %v5519, %v5570
        %v5587 = vmul.f32 %v5521, %v5571
        %v5588 = vmul.f32 %v5523, %v5572
        %v5589 = vmul.f32 %v5525, %v5573
        %5590 = vrot.lane.b32.xlu0 %v5079, 64
        %v5591 = vpop.permute.xlu0 %5590
        %5592 = vrot.lane.b32.xlu0 %v5084, 64
        %v5593 = vpop.permute.xlu0 %5592
        %5594 = vrot.lane.b32.xlu0 %v5089, 64
        %v5595 = vpop.permute.xlu0 %5594
        %5596 = vrot.lane.b32.xlu0 %v5094, 64
        %v5597 = vpop.permute.xlu0 %5596
        %5598 = vrot.lane.b32.xlu0 %v5099, 64
        %v5599 = vpop.permute.xlu0 %5598
        %5600 = vrot.lane.b32.xlu0 %v5104, 64
        %v5601 = vpop.permute.xlu0 %5600
        %5602 = vrot.lane.b32.xlu0 %v5109, 64
        %v5603 = vpop.permute.xlu0 %5602
        %5604 = vrot.lane.b32.xlu0 %v5114, 64
        %v5605 = vpop.permute.xlu0 %5604
        %5606 = vrot.lane.b32.xlu0 %v5119, 64
        %v5607 = vpop.permute.xlu0 %5606
        %5608 = vrot.lane.b32.xlu0 %v5124, 64
        %v5609 = vpop.permute.xlu0 %5608
        %5610 = vrot.lane.b32.xlu0 %v5129, 64
        %v5611 = vpop.permute.xlu0 %5610
        %5612 = vrot.lane.b32.xlu0 %v5134, 64
        %v5613 = vpop.permute.xlu0 %5612
        %5614 = vrot.lane.b32.xlu0 %v5139, 64
        %v5615 = vpop.permute.xlu0 %5614
        %5616 = vrot.lane.b32.xlu0 %v5144, 64
        %v5617 = vpop.permute.xlu0 %5616
        %5618 = vrot.lane.b32.xlu0 %v5149, 64
        %v5619 = vpop.permute.xlu0 %5618
        %5620 = vrot.lane.b32.xlu0 %v5154, 64
        %v5621 = vpop.permute.xlu0 %5620
        %5638 = vmatprep.subr.mxu0 0.0
        %5639 = vmatpush1.msra.mxu0 %v5621
        %5640 = vmatprep.subr.mxu0 0.0
        %5641 = vmatpush1.msra.mxu0 %v5619
        %5642 = vmatprep.subr.mxu0 0.0
        %5643 = vmatpush1.msra.mxu0 %v5617
        %5644 = vmatprep.subr.mxu0 0.0
        %5645 = vmatpush1.msra.mxu0 %v5615
        %5646 = vmatprep.subr.mxu0 0.0
        %5647 = vmatpush1.msra.mxu0 %v5613
        %5648 = vmatprep.subr.mxu0 0.0
        %5649 = vmatpush1.msra.mxu0 %v5611
        %5650 = vmatprep.subr.mxu0 0.0
        %5651 = vmatpush1.msra.mxu0 %v5609
        %5652 = vmatprep.subr.mxu0 0.0
        %5653 = vmatpush1.msra.mxu0 %v5607
        %5654 = vmatprep.subr.mxu0 0.0
        %5655 = vmatpush1.msra.mxu0 %v5605
        %5656 = vmatprep.subr.mxu0 0.0
        %5657 = vmatpush1.msra.mxu0 %v5603
        %5658 = vmatprep.subr.mxu0 0.0
        %5659 = vmatpush1.msra.mxu0 %v5601
        %5660 = vmatprep.subr.mxu0 0.0
        %5661 = vmatpush1.msra.mxu0 %v5599
        %5662 = vmatprep.subr.mxu0 0.0
        %5663 = vmatpush1.msra.mxu0 %v5597
        %5664 = vmatprep.subr.mxu0 0.0
        %5665 = vmatpush1.msra.mxu0 %v5595
        %5666 = vmatprep.subr.mxu0 0.0
        %5667 = vmatpush1.msra.mxu0 %v5593
        %5668 = vmatprep.subr.mxu0 0.0
        %5669 = vmatpush1.msra.mxu0 %v5591
        %5670 = vmatprep.subr.mxu0 0.0
        %5671 = vmatpush2.msra.mxu0 0.0
        %5672 = vmatprep.subr.mxu0 0.0
        %5673 = vmatpush2.msra.mxu0 0.0
        %5674 = vmatprep.subr.mxu0 0.0
        %5675 = vmatpush2.msra.mxu0 0.0
        %5676 = vmatprep.subr.mxu0 0.0
        %5677 = vmatpush2.msra.mxu0 0.0
        %5678 = vmatprep.subr.mxu0 0.0
        %5679 = vmatpush2.msra.mxu0 0.0
        %5680 = vmatprep.subr.mxu0 0.0
        %5681 = vmatpush2.msra.mxu0 0.0
        %5682 = vmatprep.subr.mxu0 0.0
        %5683 = vmatpush2.msra.mxu0 0.0
        %5684 = vmatprep.subr.mxu0 0.0
        %5685 = vmatpush2.msra.mxu0 0.0
        %5686 = vmatprep.subr.mxu0 0.0
        %5687 = vmatpush2.msra.mxu0 0.0
        %5688 = vmatprep.subr.mxu0 0.0
        %5689 = vmatpush2.msra.mxu0 0.0
        %5690 = vmatprep.subr.mxu0 0.0
        %5691 = vmatpush2.msra.mxu0 0.0
        %5692 = vmatprep.subr.mxu0 0.0
        %5693 = vmatpush2.msra.mxu0 0.0
        %5694 = vmatprep.subr.mxu0 0.0
        %5695 = vmatpush2.msra.mxu0 0.0
        %5696 = vmatprep.subr.mxu0 0.0
        %5697 = vmatpush2.msra.mxu0 0.0
        %5698 = vmatprep.subr.mxu0 0.0
        %5699 = vmatpush2.msra.mxu0 0.0
        %5700 = vmatprep.subr.mxu0 0.0
        %5701 = vmatpush2.msra.mxu0 0.0
        %5702 = vmatprep.mubr.f32.mxu0 0.0
        %5703 = vmatmul.mubr.f32.gmra.mxu0 %v5574
        %v5704 = vpop.f32.mrf.mxu0
        %v5705 = vadd.f32 0.0, %v5704
        %v5706 = vpop.f32.mrf.mxu0
        %5707 = vmatprep.mubr.f32.mxu0 0.0
        %5708 = vmatmul.mubr.f32.gmra.mxu0 %v5575
        %v5709 = vpop.f32.mrf.mxu0
        %v5710 = vadd.f32 0.0, %v5709
        %v5711 = vpop.f32.mrf.mxu0
        %5712 = vmatprep.mubr.f32.mxu0 0.0
        %5713 = vmatmul.mubr.f32.gmra.mxu0 %v5576
        %v5714 = vpop.f32.mrf.mxu0
        %v5715 = vadd.f32 0.0, %v5714
        %v5716 = vpop.f32.mrf.mxu0
        %5717 = vmatprep.mubr.f32.mxu0 0.0
        %5718 = vmatmul.mubr.f32.gmra.mxu0 %v5577
        %v5719 = vpop.f32.mrf.mxu0
        %v5720 = vadd.f32 0.0, %v5719
        %v5721 = vpop.f32.mrf.mxu0
        %5722 = vmatprep.mubr.f32.mxu0 0.0
        %5723 = vmatmul.mubr.f32.gmra.mxu0 %v5578
        %v5724 = vpop.f32.mrf.mxu0
        %v5725 = vadd.f32 0.0, %v5724
        %v5726 = vpop.f32.mrf.mxu0
        %5727 = vmatprep.mubr.f32.mxu0 0.0
        %5728 = vmatmul.mubr.f32.gmra.mxu0 %v5579
        %v5729 = vpop.f32.mrf.mxu0
        %v5730 = vadd.f32 0.0, %v5729
        %v5731 = vpop.f32.mrf.mxu0
        %5732 = vmatprep.mubr.f32.mxu0 0.0
        %5733 = vmatmul.mubr.f32.gmra.mxu0 %v5580
        %v5734 = vpop.f32.mrf.mxu0
        %v5735 = vadd.f32 0.0, %v5734
        %v5736 = vpop.f32.mrf.mxu0
        %5737 = vmatprep.mubr.f32.mxu0 0.0
        %5738 = vmatmul.mubr.f32.gmra.mxu0 %v5581
        %v5739 = vpop.f32.mrf.mxu0
        %v5740 = vadd.f32 0.0, %v5739
        %v5741 = vpop.f32.mrf.mxu0
        %5742 = vmatprep.mubr.f32.mxu0 0.0
        %5743 = vmatmul.mubr.f32.gmra.mxu0 %v5582
        %v5744 = vpop.f32.mrf.mxu0
        %v5745 = vadd.f32 0.0, %v5744
        %v5746 = vpop.f32.mrf.mxu0
        %5747 = vmatprep.mubr.f32.mxu0 0.0
        %5748 = vmatmul.mubr.f32.gmra.mxu0 %v5583
        %v5749 = vpop.f32.mrf.mxu0
        %v5750 = vadd.f32 0.0, %v5749
        %v5751 = vpop.f32.mrf.mxu0
        %5752 = vmatprep.mubr.f32.mxu0 0.0
        %5753 = vmatmul.mubr.f32.gmra.mxu0 %v5584
        %v5754 = vpop.f32.mrf.mxu0
        %v5755 = vadd.f32 0.0, %v5754
        %v5756 = vpop.f32.mrf.mxu0
        %5757 = vmatprep.mubr.f32.mxu0 0.0
        %5758 = vmatmul.mubr.f32.gmra.mxu0 %v5585
        %v5759 = vpop.f32.mrf.mxu0
        %v5760 = vadd.f32 0.0, %v5759
        %v5761 = vpop.f32.mrf.mxu0
        %5762 = vmatprep.mubr.f32.mxu0 0.0
        %5763 = vmatmul.mubr.f32.gmra.mxu0 %v5586
        %v5764 = vpop.f32.mrf.mxu0
        %v5765 = vadd.f32 0.0, %v5764
        %v5766 = vpop.f32.mrf.mxu0
        %5767 = vmatprep.mubr.f32.mxu0 0.0
        %5768 = vmatmul.mubr.f32.gmra.mxu0 %v5587
        %v5769 = vpop.f32.mrf.mxu0
        %v5770 = vadd.f32 0.0, %v5769
        %v5771 = vpop.f32.mrf.mxu0
        %5772 = vmatprep.mubr.f32.mxu0 0.0
        %5773 = vmatmul.mubr.f32.gmra.mxu0 %v5588
        %v5774 = vpop.f32.mrf.mxu0
        %v5775 = vadd.f32 0.0, %v5774
        %v5776 = vpop.f32.mrf.mxu0
        %5777 = vmatprep.mubr.f32.mxu0 0.0
        %5778 = vmatmul.mubr.f32.gmra.mxu0 %v5589
        %v5779 = vpop.f32.mrf.mxu0
        %v5780 = vadd.f32 0.0, %v5779
        %v5781 = vpop.f32.mrf.mxu0
        %5782 = vdwg.mxu0
        %5783 = vrot.lane.b32.xlu0 %v5079, 120
        %v5784 = vpop.permute.xlu0 %5783
        %5785 = vrot.lane.b32.xlu0 %v5084, 120
        %v5786 = vpop.permute.xlu0 %5785
        %5787 = vrot.lane.b32.xlu0 %v5089, 120
        %v5788 = vpop.permute.xlu0 %5787
        %5789 = vrot.lane.b32.xlu0 %v5094, 120
        %v5790 = vpop.permute.xlu0 %5789
        %5791 = vrot.lane.b32.xlu0 %v5099, 120
        %v5792 = vpop.permute.xlu0 %5791
        %5793 = vrot.lane.b32.xlu0 %v5104, 120
        %v5794 = vpop.permute.xlu0 %5793
        %5795 = vrot.lane.b32.xlu0 %v5109, 120
        %v5796 = vpop.permute.xlu0 %5795
        %5797 = vrot.lane.b32.xlu0 %v5114, 120
        %v5798 = vpop.permute.xlu0 %5797
        %5799 = vrot.lane.b32.xlu0 %v5119, 120
        %v5800 = vpop.permute.xlu0 %5799
        %5801 = vrot.lane.b32.xlu0 %v5124, 120
        %v5802 = vpop.permute.xlu0 %5801
        %5803 = vrot.lane.b32.xlu0 %v5129, 120
        %v5804 = vpop.permute.xlu0 %5803
        %5805 = vrot.lane.b32.xlu0 %v5134, 120
        %v5806 = vpop.permute.xlu0 %5805
        %5807 = vrot.lane.b32.xlu0 %v5139, 120
        %v5808 = vpop.permute.xlu0 %5807
        %5809 = vrot.lane.b32.xlu0 %v5144, 120
        %v5810 = vpop.permute.xlu0 %5809
        %5811 = vrot.lane.b32.xlu0 %v5149, 120
        %v5812 = vpop.permute.xlu0 %5811
        %5813 = vrot.lane.b32.xlu0 %v5154, 120
        %v5814 = vpop.permute.xlu0 %5813
        %5815 = vrot.lane.b32.xlu0 %v5079, 88
        %v5816 = vpop.permute.xlu0 %5815
        %5817 = vrot.lane.b32.xlu0 %v5084, 88
        %v5818 = vpop.permute.xlu0 %5817
        %5819 = vrot.lane.b32.xlu0 %v5089, 88
        %v5820 = vpop.permute.xlu0 %5819
        %5821 = vrot.lane.b32.xlu0 %v5094, 88
        %v5822 = vpop.permute.xlu0 %5821
        %5823 = vrot.lane.b32.xlu0 %v5099, 88
        %v5824 = vpop.permute.xlu0 %5823
        %5825 = vrot.lane.b32.xlu0 %v5104, 88
        %v5826 = vpop.permute.xlu0 %5825
        %5827 = vrot.lane.b32.xlu0 %v5109, 88
        %v5828 = vpop.permute.xlu0 %5827
        %5829 = vrot.lane.b32.xlu0 %v5114, 88
        %v5830 = vpop.permute.xlu0 %5829
        %5831 = vrot.lane.b32.xlu0 %v5119, 88
        %v5832 = vpop.permute.xlu0 %5831
        %5833 = vrot.lane.b32.xlu0 %v5124, 88
        %v5834 = vpop.permute.xlu0 %5833
        %5835 = vrot.lane.b32.xlu0 %v5129, 88
        %v5836 = vpop.permute.xlu0 %5835
        %5837 = vrot.lane.b32.xlu0 %v5134, 88
        %v5838 = vpop.permute.xlu0 %5837
        %5839 = vrot.lane.b32.xlu0 %v5139, 88
        %v5840 = vpop.permute.xlu0 %5839
        %5841 = vrot.lane.b32.xlu0 %v5144, 88
        %v5842 = vpop.permute.xlu0 %5841
        %5843 = vrot.lane.b32.xlu0 %v5149, 88
        %v5844 = vpop.permute.xlu0 %5843
        %5845 = vrot.lane.b32.xlu0 %v5154, 88
        %v5846 = vpop.permute.xlu0 %5845
        %v5847 = vsel %vm909, %v5784, 0
        %v5849 = vsel %vm909, %v5786, 0
        %v5851 = vsel %vm909, %v5788, 0
        %v5853 = vsel %vm909, %v5790, 0
        %v5855 = vsel %vm909, %v5792, 0
        %v5857 = vsel %vm909, %v5794, 0
        %v5859 = vsel %vm909, %v5796, 0
        %v5861 = vsel %vm909, %v5798, 0
        %v5863 = vsel %vm909, %v5800, 0
        %v5865 = vsel %vm909, %v5802, 0
        %v5867 = vsel %vm909, %v5804, 0
        %v5869 = vsel %vm909, %v5806, 0
        %v5871 = vsel %vm909, %v5808, 0
        %v5873 = vsel %vm909, %v5810, 0
        %v5875 = vsel %vm909, %v5812, 0
        %v5877 = vsel %vm909, %v5814, 0
        %v5879 = vsel %vm909, %v5816, 0
        %v5881 = vsel %vm909, %v5818, 0
        %v5883 = vsel %vm909, %v5820, 0
        %v5885 = vsel %vm909, %v5822, 0
        %v5887 = vsel %vm909, %v5824, 0
        %v5889 = vsel %vm909, %v5826, 0
        %v5891 = vsel %vm909, %v5828, 0
        %v5893 = vsel %vm909, %v5830, 0
        %v5895 = vsel %vm909, %v5832, 0
        %v5897 = vsel %vm909, %v5834, 0
        %v5899 = vsel %vm909, %v5836, 0
        %v5901 = vsel %vm909, %v5838, 0
        %v5903 = vsel %vm909, %v5840, 0
        %v5905 = vsel %vm909, %v5842, 0
        %v5907 = vsel %vm909, %v5844, 0
        %v5909 = vsel %vm909, %v5846, 0
        %5911 = vmatprep.subr.mxu0 0.0
        %5912 = vmatpush1.xpose.msra.mxu0 %v5909
        %5913 = vmatprep.subr.mxu0 0.0
        %5914 = vmatpush1.xpose.msra.mxu0 %v5907
        %5915 = vmatprep.subr.mxu0 0.0
        %5916 = vmatpush1.xpose.msra.mxu0 %v5905
        %5917 = vmatprep.subr.mxu0 0.0
        %5918 = vmatpush1.xpose.msra.mxu0 %v5903
        %5919 = vmatprep.subr.mxu0 0.0
        %5920 = vmatpush1.xpose.msra.mxu0 %v5901
        %5921 = vmatprep.subr.mxu0 0.0
        %5922 = vmatpush1.xpose.msra.mxu0 %v5899
        %5923 = vmatprep.subr.mxu0 0.0
        %5924 = vmatpush1.xpose.msra.mxu0 %v5897
        %5925 = vmatprep.subr.mxu0 0.0
        %5926 = vmatpush1.xpose.msra.mxu0 %v5895
        %5927 = vmatprep.subr.mxu0 0.0
        %5928 = vmatpush1.xpose.msra.mxu0 %v5893
        %5929 = vmatprep.subr.mxu0 0.0
        %5930 = vmatpush1.xpose.msra.mxu0 %v5891
        %5931 = vmatprep.subr.mxu0 0.0
        %5932 = vmatpush1.xpose.msra.mxu0 %v5889
        %5933 = vmatprep.subr.mxu0 0.0
        %5934 = vmatpush1.xpose.msra.mxu0 %v5887
        %5935 = vmatprep.subr.mxu0 0.0
        %5936 = vmatpush1.xpose.msra.mxu0 %v5885
        %5937 = vmatprep.subr.mxu0 0.0
        %5938 = vmatpush1.xpose.msra.mxu0 %v5883
        %5939 = vmatprep.subr.mxu0 0.0
        %5940 = vmatpush1.xpose.msra.mxu0 %v5881
        %5941 = vmatprep.subr.mxu0 0.0
        %5942 = vmatpush1.xpose.msra.mxu0 %v5879
        %5943 = vmatprep.subr.mxu0 0.0
        %5944 = vmatpush2.xpose.msra.mxu0 0.0
        %5945 = vmatprep.subr.mxu0 0.0
        %5946 = vmatpush2.xpose.msra.mxu0 0.0
        %5947 = vmatprep.subr.mxu0 0.0
        %5948 = vmatpush2.xpose.msra.mxu0 0.0
        %5949 = vmatprep.subr.mxu0 0.0
        %5950 = vmatpush2.xpose.msra.mxu0 0.0
        %5951 = vmatprep.subr.mxu0 0.0
        %5952 = vmatpush2.xpose.msra.mxu0 0.0
        %5953 = vmatprep.subr.mxu0 0.0
        %5954 = vmatpush2.xpose.msra.mxu0 0.0
        %5955 = vmatprep.subr.mxu0 0.0
        %5956 = vmatpush2.xpose.msra.mxu0 0.0
        %5957 = vmatprep.subr.mxu0 0.0
        %5958 = vmatpush2.xpose.msra.mxu0 0.0
        %5959 = vmatprep.subr.mxu0 0.0
        %5960 = vmatpush2.xpose.msra.mxu0 0.0
        %5961 = vmatprep.subr.mxu0 0.0
        %5962 = vmatpush2.xpose.msra.mxu0 0.0
        %5963 = vmatprep.subr.mxu0 0.0
        %5964 = vmatpush2.xpose.msra.mxu0 0.0
        %5965 = vmatprep.subr.mxu0 0.0
        %5966 = vmatpush2.xpose.msra.mxu0 0.0
        %5967 = vmatprep.subr.mxu0 0.0
        %5968 = vmatpush2.xpose.msra.mxu0 0.0
        %5969 = vmatprep.subr.mxu0 0.0
        %5970 = vmatpush2.xpose.msra.mxu0 0.0
        %5971 = vmatprep.subr.mxu0 0.0
        %5972 = vmatpush2.xpose.msra.mxu0 0.0
        %5973 = vmatprep.subr.mxu0 0.0
        %5974 = vmatpush2.xpose.msra.mxu0 0.0
        %5975 = vmatprep.mubr.f32.mxu0 0.0
        %5976 = vmatmul.mubr.f32.gmra.mxu0 %v5847
        %v5977 = vpop.f32.mrf.mxu0
        %v5978 = vadd.f32 0.0, %v5977
        %v5979 = vpop.f32.mrf.mxu0
        %5980 = vmatprep.mubr.f32.mxu0 0.0
        %5981 = vmatmul.mubr.f32.gmra.mxu0 %v5849
        %v5982 = vpop.f32.mrf.mxu0
        %v5983 = vadd.f32 0.0, %v5982
        %v5984 = vpop.f32.mrf.mxu0
        %5985 = vmatprep.mubr.f32.mxu0 0.0
        %5986 = vmatmul.mubr.f32.gmra.mxu0 %v5851
        %v5987 = vpop.f32.mrf.mxu0
        %v5988 = vadd.f32 0.0, %v5987
        %v5989 = vpop.f32.mrf.mxu0
        %5990 = vmatprep.mubr.f32.mxu0 0.0
        %5991 = vmatmul.mubr.f32.gmra.mxu0 %v5853
        %v5992 = vpop.f32.mrf.mxu0
        %v5993 = vadd.f32 0.0, %v5992
        %v5994 = vpop.f32.mrf.mxu0
        %5995 = vmatprep.mubr.f32.mxu0 0.0
        %5996 = vmatmul.mubr.f32.gmra.mxu0 %v5855
        %v5997 = vpop.f32.mrf.mxu0
        %v5998 = vadd.f32 0.0, %v5997
        %v5999 = vpop.f32.mrf.mxu0
        %6000 = vmatprep.mubr.f32.mxu0 0.0
        %6001 = vmatmul.mubr.f32.gmra.mxu0 %v5857
        %v6002 = vpop.f32.mrf.mxu0
        %v6003 = vadd.f32 0.0, %v6002
        %v6004 = vpop.f32.mrf.mxu0
        %6005 = vmatprep.mubr.f32.mxu0 0.0
        %6006 = vmatmul.mubr.f32.gmra.mxu0 %v5859
        %v6007 = vpop.f32.mrf.mxu0
        %v6008 = vadd.f32 0.0, %v6007
        %v6009 = vpop.f32.mrf.mxu0
        %6010 = vmatprep.mubr.f32.mxu0 0.0
        %6011 = vmatmul.mubr.f32.gmra.mxu0 %v5861
        %v6012 = vpop.f32.mrf.mxu0
        %v6013 = vadd.f32 0.0, %v6012
        %v6014 = vpop.f32.mrf.mxu0
        %6015 = vmatprep.mubr.f32.mxu0 0.0
        %6016 = vmatmul.mubr.f32.gmra.mxu0 %v5863
        %v6017 = vpop.f32.mrf.mxu0
        %v6018 = vadd.f32 0.0, %v6017
        %v6019 = vpop.f32.mrf.mxu0
        %6020 = vmatprep.mubr.f32.mxu0 0.0
        %6021 = vmatmul.mubr.f32.gmra.mxu0 %v5865
        %v6022 = vpop.f32.mrf.mxu0
        %v6023 = vadd.f32 0.0, %v6022
        %v6024 = vpop.f32.mrf.mxu0
        %6025 = vmatprep.mubr.f32.mxu0 0.0
        %6026 = vmatmul.mubr.f32.gmra.mxu0 %v5867
        %v6027 = vpop.f32.mrf.mxu0
        %v6028 = vadd.f32 0.0, %v6027
        %v6029 = vpop.f32.mrf.mxu0
        %6030 = vmatprep.mubr.f32.mxu0 0.0
        %6031 = vmatmul.mubr.f32.gmra.mxu0 %v5869
        %v6032 = vpop.f32.mrf.mxu0
        %v6033 = vadd.f32 0.0, %v6032
        %v6034 = vpop.f32.mrf.mxu0
        %6035 = vmatprep.mubr.f32.mxu0 0.0
        %6036 = vmatmul.mubr.f32.gmra.mxu0 %v5871
        %v6037 = vpop.f32.mrf.mxu0
        %v6038 = vadd.f32 0.0, %v6037
        %v6039 = vpop.f32.mrf.mxu0
        %6040 = vmatprep.mubr.f32.mxu0 0.0
        %6041 = vmatmul.mubr.f32.gmra.mxu0 %v5873
        %v6042 = vpop.f32.mrf.mxu0
        %v6043 = vadd.f32 0.0, %v6042
        %v6044 = vpop.f32.mrf.mxu0
        %6045 = vmatprep.mubr.f32.mxu0 0.0
        %6046 = vmatmul.mubr.f32.gmra.mxu0 %v5875
        %v6047 = vpop.f32.mrf.mxu0
        %v6048 = vadd.f32 0.0, %v6047
        %v6049 = vpop.f32.mrf.mxu0
        %6050 = vmatprep.mubr.f32.mxu0 0.0
        %6051 = vmatmul.mubr.f32.gmra.mxu0 %v5877
        %v6052 = vpop.f32.mrf.mxu0
        %v6053 = vadd.f32 0.0, %v6052
        %v6054 = vpop.f32.mrf.mxu0
        %6055 = vdwg.mxu0
        %v6056 = vmul.f32 %v5978, 0.35355338
        %v6057 = vmul.f32 %v5983, 0.35355338
        %v6058 = vmul.f32 %v5988, 0.35355338
        %v6059 = vmul.f32 %v5993, 0.35355338
        %v6060 = vmul.f32 %v5998, 0.35355338
        %v6061 = vmul.f32 %v6003, 0.35355338
        %v6062 = vmul.f32 %v6008, 0.35355338
        %v6063 = vmul.f32 %v6013, 0.35355338
        %v6064 = vmul.f32 %v6018, 0.35355338
        %v6065 = vmul.f32 %v6023, 0.35355338
        %v6066 = vmul.f32 %v6028, 0.35355338
        %v6067 = vmul.f32 %v6033, 0.35355338
        %v6068 = vmul.f32 %v6038, 0.35355338
        %v6069 = vmul.f32 %v6043, 0.35355338
        %v6070 = vmul.f32 %v6048, 0.35355338
        %v6071 = vmul.f32 %v6053, 0.35355338
        %v6072 = vadd.f32 %v6056, %v4671
        %v6073 = vadd.f32 %v6057, %v4672
        %v6074 = vadd.f32 %v6058, %v4673
        %v6075 = vadd.f32 %v6059, %v4674
        %v6076 = vadd.f32 %v6060, %v4675
        %v6077 = vadd.f32 %v6061, %v4676
        %v6078 = vadd.f32 %v6062, %v4677
        %v6079 = vadd.f32 %v6063, %v4678
        %v6080 = vadd.f32 %v6064, %v4679
        %v6081 = vadd.f32 %v6065, %v4680
        %v6082 = vadd.f32 %v6066, %v4681
        %v6083 = vadd.f32 %v6067, %v4682
        %v6084 = vadd.f32 %v6068, %v4683
        %v6085 = vadd.f32 %v6069, %v4684
        %v6086 = vadd.f32 %v6070, %v4685
        %v6087 = vadd.f32 %v6071, %v4686
        %6088 = vmax.xlane.f32.xlu0 %v6072
        %v6089 = vpop.xlane.xlu0 %6088
        %6090 = vmax.xlane.f32.xlu0 %v6073
        %v6091 = vpop.xlane.xlu0 %6090
        %6092 = vmax.xlane.f32.xlu0 %v6074
        %v6093 = vpop.xlane.xlu0 %6092
        %6094 = vmax.xlane.f32.xlu0 %v6075
        %v6095 = vpop.xlane.xlu0 %6094
        %6096 = vmax.xlane.f32.xlu0 %v6076
        %v6097 = vpop.xlane.xlu0 %6096
        %6098 = vmax.xlane.f32.xlu0 %v6077
        %v6099 = vpop.xlane.xlu0 %6098
        %6100 = vmax.xlane.f32.xlu0 %v6078
        %v6101 = vpop.xlane.xlu0 %6100
        %6102 = vmax.xlane.f32.xlu0 %v6079
        %v6103 = vpop.xlane.xlu0 %6102
        %6104 = vmax.xlane.f32.xlu0 %v6080
        %v6105 = vpop.xlane.xlu0 %6104
        %6106 = vmax.xlane.f32.xlu0 %v6081
        %v6107 = vpop.xlane.xlu0 %6106
        %6108 = vmax.xlane.f32.xlu0 %v6082
        %v6109 = vpop.xlane.xlu0 %6108
        %6110 = vmax.xlane.f32.xlu0 %v6083
        %v6111 = vpop.xlane.xlu0 %6110
        %6112 = vmax.xlane.f32.xlu0 %v6084
        %v6113 = vpop.xlane.xlu0 %6112
        %6114 = vmax.xlane.f32.xlu0 %v6085
        %v6115 = vpop.xlane.xlu0 %6114
        %6116 = vmax.xlane.f32.xlu0 %v6086
        %v6117 = vpop.xlane.xlu0 %6116
        %6118 = vmax.xlane.f32.xlu0 %v6087
        %v6119 = vpop.xlane.xlu0 %6118
        %v6120 = vsub.f32 %v6072, %v6089
        %v6121 = vsub.f32 %v6073, %v6091
        %v6122 = vsub.f32 %v6074, %v6093
        %v6123 = vsub.f32 %v6075, %v6095
        %v6124 = vsub.f32 %v6076, %v6097
        %v6125 = vsub.f32 %v6077, %v6099
        %v6126 = vsub.f32 %v6078, %v6101
        %v6127 = vsub.f32 %v6079, %v6103
        %v6128 = vsub.f32 %v6080, %v6105
        %v6129 = vsub.f32 %v6081, %v6107
        %v6130 = vsub.f32 %v6082, %v6109
        %v6131 = vsub.f32 %v6083, %v6111
        %v6132 = vsub.f32 %v6084, %v6113
        %v6133 = vsub.f32 %v6085, %v6115
        %v6134 = vsub.f32 %v6086, %v6117
        %v6135 = vsub.f32 %v6087, %v6119
        %v6136 = vmul.f32 %v6120, 1.442695
        %v6137 = vpow.pop %v6136
        %v6138 = vmul.f32 %v6121, 1.442695
        %v6139 = vpow.pop %v6138
        %v6140 = vmul.f32 %v6122, 1.442695
        %v6141 = vpow.pop %v6140
        %v6142 = vmul.f32 %v6123, 1.442695
        %v6143 = vpow.pop %v6142
        %v6144 = vmul.f32 %v6124, 1.442695
        %v6145 = vpow.pop %v6144
        %v6146 = vmul.f32 %v6125, 1.442695
        %v6147 = vpow.pop %v6146
        %v6148 = vmul.f32 %v6126, 1.442695
        %v6149 = vpow.pop %v6148
        %v6150 = vmul.f32 %v6127, 1.442695
        %v6151 = vpow.pop %v6150
        %v6152 = vmul.f32 %v6128, 1.442695
        %v6153 = vpow.pop %v6152
        %v6154 = vmul.f32 %v6129, 1.442695
        %v6155 = vpow.pop %v6154
        %v6156 = vmul.f32 %v6130, 1.442695
        %v6157 = vpow.pop %v6156
        %v6158 = vmul.f32 %v6131, 1.442695
        %v6159 = vpow.pop %v6158
        %v6160 = vmul.f32 %v6132, 1.442695
        %v6161 = vpow.pop %v6160
        %v6162 = vmul.f32 %v6133, 1.442695
        %v6163 = vpow.pop %v6162
        %v6164 = vmul.f32 %v6134, 1.442695
        %v6165 = vpow.pop %v6164
        %v6166 = vmul.f32 %v6135, 1.442695
        %v6167 = vpow.pop %v6166
        %6168 = vadd.xlane.f32.xlu0 %v6137
        %v6169 = vpop.xlane.xlu0 %6168
        %6170 = vadd.xlane.f32.xlu0 %v6139
        %v6171 = vpop.xlane.xlu0 %6170
        %6172 = vadd.xlane.f32.xlu0 %v6141
        %v6173 = vpop.xlane.xlu0 %6172
        %6174 = vadd.xlane.f32.xlu0 %v6143
        %v6175 = vpop.xlane.xlu0 %6174
        %6176 = vadd.xlane.f32.xlu0 %v6145
        %v6177 = vpop.xlane.xlu0 %6176
        %6178 = vadd.xlane.f32.xlu0 %v6147
        %v6179 = vpop.xlane.xlu0 %6178
        %6180 = vadd.xlane.f32.xlu0 %v6149
        %v6181 = vpop.xlane.xlu0 %6180
        %6182 = vadd.xlane.f32.xlu0 %v6151
        %v6183 = vpop.xlane.xlu0 %6182
        %6184 = vadd.xlane.f32.xlu0 %v6153
        %v6185 = vpop.xlane.xlu0 %6184
        %6186 = vadd.xlane.f32.xlu0 %v6155
        %v6187 = vpop.xlane.xlu0 %6186
        %6188 = vadd.xlane.f32.xlu0 %v6157
        %v6189 = vpop.xlane.xlu0 %6188
        %6190 = vadd.xlane.f32.xlu0 %v6159
        %v6191 = vpop.xlane.xlu0 %6190
        %6192 = vadd.xlane.f32.xlu0 %v6161
        %v6193 = vpop.xlane.xlu0 %6192
        %6194 = vadd.xlane.f32.xlu0 %v6163
        %v6195 = vpop.xlane.xlu0 %6194
        %6196 = vadd.xlane.f32.xlu0 %v6165
        %v6197 = vpop.xlane.xlu0 %6196
        %6198 = vadd.xlane.f32.xlu0 %v6167
        %v6199 = vpop.xlane.xlu0 %6198
        %v6200 = vrcp.pop %v6169
        %v6201 = vrcp.pop %v6171
        %v6202 = vrcp.pop %v6173
        %v6203 = vrcp.pop %v6175
        %v6204 = vrcp.pop %v6177
        %v6205 = vrcp.pop %v6179
        %v6206 = vrcp.pop %v6181
        %v6207 = vrcp.pop %v6183
        %v6208 = vrcp.pop %v6185
        %v6209 = vrcp.pop %v6187
        %v6210 = vrcp.pop %v6189
        %v6211 = vrcp.pop %v6191
        %v6212 = vrcp.pop %v6193
        %v6213 = vrcp.pop %v6195
        %v6214 = vrcp.pop %v6197
        %v6215 = vrcp.pop %v6199
        %v6216 = vmul.f32 %v6137, %v6200
        %v6217 = vmul.f32 %v6139, %v6201
        %v6218 = vmul.f32 %v6141, %v6202
        %v6219 = vmul.f32 %v6143, %v6203
        %v6220 = vmul.f32 %v6145, %v6204
        %v6221 = vmul.f32 %v6147, %v6205
        %v6222 = vmul.f32 %v6149, %v6206
        %v6223 = vmul.f32 %v6151, %v6207
        %v6224 = vmul.f32 %v6153, %v6208
        %v6225 = vmul.f32 %v6155, %v6209
        %v6226 = vmul.f32 %v6157, %v6210
        %v6227 = vmul.f32 %v6159, %v6211
        %v6228 = vmul.f32 %v6161, %v6212
        %v6229 = vmul.f32 %v6163, %v6213
        %v6230 = vmul.f32 %v6165, %v6214
        %v6231 = vmul.f32 %v6167, %v6215
        %6232 = vrot.lane.b32.xlu0 %v5079, 56
        %v6233 = vpop.permute.xlu0 %6232
        %6234 = vrot.lane.b32.xlu0 %v5084, 56
        %v6235 = vpop.permute.xlu0 %6234
        %6236 = vrot.lane.b32.xlu0 %v5089, 56
        %v6237 = vpop.permute.xlu0 %6236
        %6238 = vrot.lane.b32.xlu0 %v5094, 56
        %v6239 = vpop.permute.xlu0 %6238
        %6240 = vrot.lane.b32.xlu0 %v5099, 56
        %v6241 = vpop.permute.xlu0 %6240
        %6242 = vrot.lane.b32.xlu0 %v5104, 56
        %v6243 = vpop.permute.xlu0 %6242
        %6244 = vrot.lane.b32.xlu0 %v5109, 56
        %v6245 = vpop.permute.xlu0 %6244
        %6246 = vrot.lane.b32.xlu0 %v5114, 56
        %v6247 = vpop.permute.xlu0 %6246
        %6248 = vrot.lane.b32.xlu0 %v5119, 56
        %v6249 = vpop.permute.xlu0 %6248
        %6250 = vrot.lane.b32.xlu0 %v5124, 56
        %v6251 = vpop.permute.xlu0 %6250
        %6252 = vrot.lane.b32.xlu0 %v5129, 56
        %v6253 = vpop.permute.xlu0 %6252
        %6254 = vrot.lane.b32.xlu0 %v5134, 56
        %v6255 = vpop.permute.xlu0 %6254
        %6256 = vrot.lane.b32.xlu0 %v5139, 56
        %v6257 = vpop.permute.xlu0 %6256
        %6258 = vrot.lane.b32.xlu0 %v5144, 56
        %v6259 = vpop.permute.xlu0 %6258
        %6260 = vrot.lane.b32.xlu0 %v5149, 56
        %v6261 = vpop.permute.xlu0 %6260
        %6262 = vrot.lane.b32.xlu0 %v5154, 56
        %v6263 = vpop.permute.xlu0 %6262
        %6280 = vmatprep.subr.mxu0 0.0
        %6281 = vmatpush1.msra.mxu0 %v6263
        %6282 = vmatprep.subr.mxu0 0.0
        %6283 = vmatpush1.msra.mxu0 %v6261
        %6284 = vmatprep.subr.mxu0 0.0
        %6285 = vmatpush1.msra.mxu0 %v6259
        %6286 = vmatprep.subr.mxu0 0.0
        %6287 = vmatpush1.msra.mxu0 %v6257
        %6288 = vmatprep.subr.mxu0 0.0
        %6289 = vmatpush1.msra.mxu0 %v6255
        %6290 = vmatprep.subr.mxu0 0.0
        %6291 = vmatpush1.msra.mxu0 %v6253
        %6292 = vmatprep.subr.mxu0 0.0
        %6293 = vmatpush1.msra.mxu0 %v6251
        %6294 = vmatprep.subr.mxu0 0.0
        %6295 = vmatpush1.msra.mxu0 %v6249
        %6296 = vmatprep.subr.mxu0 0.0
        %6297 = vmatpush1.msra.mxu0 %v6247
        %6298 = vmatprep.subr.mxu0 0.0
        %6299 = vmatpush1.msra.mxu0 %v6245
        %6300 = vmatprep.subr.mxu0 0.0
        %6301 = vmatpush1.msra.mxu0 %v6243
        %6302 = vmatprep.subr.mxu0 0.0
        %6303 = vmatpush1.msra.mxu0 %v6241
        %6304 = vmatprep.subr.mxu0 0.0
        %6305 = vmatpush1.msra.mxu0 %v6239
        %6306 = vmatprep.subr.mxu0 0.0
        %6307 = vmatpush1.msra.mxu0 %v6237
        %6308 = vmatprep.subr.mxu0 0.0
        %6309 = vmatpush1.msra.mxu0 %v6235
        %6310 = vmatprep.subr.mxu0 0.0
        %6311 = vmatpush1.msra.mxu0 %v6233
        %6312 = vmatprep.subr.mxu0 0.0
        %6313 = vmatpush2.msra.mxu0 0.0
        %6314 = vmatprep.subr.mxu0 0.0
        %6315 = vmatpush2.msra.mxu0 0.0
        %6316 = vmatprep.subr.mxu0 0.0
        %6317 = vmatpush2.msra.mxu0 0.0
        %6318 = vmatprep.subr.mxu0 0.0
        %6319 = vmatpush2.msra.mxu0 0.0
        %6320 = vmatprep.subr.mxu0 0.0
        %6321 = vmatpush2.msra.mxu0 0.0
        %6322 = vmatprep.subr.mxu0 0.0
        %6323 = vmatpush2.msra.mxu0 0.0
        %6324 = vmatprep.subr.mxu0 0.0
        %6325 = vmatpush2.msra.mxu0 0.0
        %6326 = vmatprep.subr.mxu0 0.0
        %6327 = vmatpush2.msra.mxu0 0.0
        %6328 = vmatprep.subr.mxu0 0.0
        %6329 = vmatpush2.msra.mxu0 0.0
        %6330 = vmatprep.subr.mxu0 0.0
        %6331 = vmatpush2.msra.mxu0 0.0
        %6332 = vmatprep.subr.mxu0 0.0
        %6333 = vmatpush2.msra.mxu0 0.0
        %6334 = vmatprep.subr.mxu0 0.0
        %6335 = vmatpush2.msra.mxu0 0.0
        %6336 = vmatprep.subr.mxu0 0.0
        %6337 = vmatpush2.msra.mxu0 0.0
        %6338 = vmatprep.subr.mxu0 0.0
        %6339 = vmatpush2.msra.mxu0 0.0
        %6340 = vmatprep.subr.mxu0 0.0
        %6341 = vmatpush2.msra.mxu0 0.0
        %6342 = vmatprep.subr.mxu0 0.0
        %6343 = vmatpush2.msra.mxu0 0.0
        %6344 = vmatprep.mubr.f32.mxu0 0.0
        %6345 = vmatmul.mubr.f32.gmra.mxu0 %v6216
        %v6346 = vpop.f32.mrf.mxu0
        %v6347 = vadd.f32 0.0, %v6346
        %v6348 = vpop.f32.mrf.mxu0
        %6349 = vmatprep.mubr.f32.mxu0 0.0
        %6350 = vmatmul.mubr.f32.gmra.mxu0 %v6217
        %v6351 = vpop.f32.mrf.mxu0
        %v6352 = vadd.f32 0.0, %v6351
        %v6353 = vpop.f32.mrf.mxu0
        %6354 = vmatprep.mubr.f32.mxu0 0.0
        %6355 = vmatmul.mubr.f32.gmra.mxu0 %v6218
        %v6356 = vpop.f32.mrf.mxu0
        %v6357 = vadd.f32 0.0, %v6356
        %v6358 = vpop.f32.mrf.mxu0
        %6359 = vmatprep.mubr.f32.mxu0 0.0
        %6360 = vmatmul.mubr.f32.gmra.mxu0 %v6219
        %v6361 = vpop.f32.mrf.mxu0
        %v6362 = vadd.f32 0.0, %v6361
        %v6363 = vpop.f32.mrf.mxu0
        %6364 = vmatprep.mubr.f32.mxu0 0.0
        %6365 = vmatmul.mubr.f32.gmra.mxu0 %v6220
        %v6366 = vpop.f32.mrf.mxu0
        %v6367 = vadd.f32 0.0, %v6366
        %v6368 = vpop.f32.mrf.mxu0
        %6369 = vmatprep.mubr.f32.mxu0 0.0
        %6370 = vmatmul.mubr.f32.gmra.mxu0 %v6221
        %v6371 = vpop.f32.mrf.mxu0
        %v6372 = vadd.f32 0.0, %v6371
        %v6373 = vpop.f32.mrf.mxu0
        %6374 = vmatprep.mubr.f32.mxu0 0.0
        %6375 = vmatmul.mubr.f32.gmra.mxu0 %v6222
        %v6376 = vpop.f32.mrf.mxu0
        %v6377 = vadd.f32 0.0, %v6376
        %v6378 = vpop.f32.mrf.mxu0
        %6379 = vmatprep.mubr.f32.mxu0 0.0
        %6380 = vmatmul.mubr.f32.gmra.mxu0 %v6223
        %v6381 = vpop.f32.mrf.mxu0
        %v6382 = vadd.f32 0.0, %v6381
        %v6383 = vpop.f32.mrf.mxu0
        %6384 = vmatprep.mubr.f32.mxu0 0.0
        %6385 = vmatmul.mubr.f32.gmra.mxu0 %v6224
        %v6386 = vpop.f32.mrf.mxu0
        %v6387 = vadd.f32 0.0, %v6386
        %v6388 = vpop.f32.mrf.mxu0
        %6389 = vmatprep.mubr.f32.mxu0 0.0
        %6390 = vmatmul.mubr.f32.gmra.mxu0 %v6225
        %v6391 = vpop.f32.mrf.mxu0
        %v6392 = vadd.f32 0.0, %v6391
        %v6393 = vpop.f32.mrf.mxu0
        %6394 = vmatprep.mubr.f32.mxu0 0.0
        %6395 = vmatmul.mubr.f32.gmra.mxu0 %v6226
        %v6396 = vpop.f32.mrf.mxu0
        %v6397 = vadd.f32 0.0, %v6396
        %v6398 = vpop.f32.mrf.mxu0
        %6399 = vmatprep.mubr.f32.mxu0 0.0
        %6400 = vmatmul.mubr.f32.gmra.mxu0 %v6227
        %v6401 = vpop.f32.mrf.mxu0
        %v6402 = vadd.f32 0.0, %v6401
        %v6403 = vpop.f32.mrf.mxu0
        %6404 = vmatprep.mubr.f32.mxu0 0.0
        %6405 = vmatmul.mubr.f32.gmra.mxu0 %v6228
        %v6406 = vpop.f32.mrf.mxu0
        %v6407 = vadd.f32 0.0, %v6406
        %v6408 = vpop.f32.mrf.mxu0
        %6409 = vmatprep.mubr.f32.mxu0 0.0
        %6410 = vmatmul.mubr.f32.gmra.mxu0 %v6229
        %v6411 = vpop.f32.mrf.mxu0
        %v6412 = vadd.f32 0.0, %v6411
        %v6413 = vpop.f32.mrf.mxu0
        %6414 = vmatprep.mubr.f32.mxu0 0.0
        %6415 = vmatmul.mubr.f32.gmra.mxu0 %v6230
        %v6416 = vpop.f32.mrf.mxu0
        %v6417 = vadd.f32 0.0, %v6416
        %v6418 = vpop.f32.mrf.mxu0
        %6419 = vmatprep.mubr.f32.mxu0 0.0
        %6420 = vmatmul.mubr.f32.gmra.mxu0 %v6231
        %v6421 = vpop.f32.mrf.mxu0
        %v6422 = vadd.f32 0.0, %v6421
        %v6423 = vpop.f32.mrf.mxu0
        %6424 = vdwg.mxu0
        %6425 = vrot.lane.b32.xlu0 %v5079, 112
        %v6426 = vpop.permute.xlu0 %6425
        %6427 = vrot.lane.b32.xlu0 %v5084, 112
        %v6428 = vpop.permute.xlu0 %6427
        %6429 = vrot.lane.b32.xlu0 %v5089, 112
        %v6430 = vpop.permute.xlu0 %6429
        %6431 = vrot.lane.b32.xlu0 %v5094, 112
        %v6432 = vpop.permute.xlu0 %6431
        %6433 = vrot.lane.b32.xlu0 %v5099, 112
        %v6434 = vpop.permute.xlu0 %6433
        %6435 = vrot.lane.b32.xlu0 %v5104, 112
        %v6436 = vpop.permute.xlu0 %6435
        %6437 = vrot.lane.b32.xlu0 %v5109, 112
        %v6438 = vpop.permute.xlu0 %6437
        %6439 = vrot.lane.b32.xlu0 %v5114, 112
        %v6440 = vpop.permute.xlu0 %6439
        %6441 = vrot.lane.b32.xlu0 %v5119, 112
        %v6442 = vpop.permute.xlu0 %6441
        %6443 = vrot.lane.b32.xlu0 %v5124, 112
        %v6444 = vpop.permute.xlu0 %6443
        %6445 = vrot.lane.b32.xlu0 %v5129, 112
        %v6446 = vpop.permute.xlu0 %6445
        %6447 = vrot.lane.b32.xlu0 %v5134, 112
        %v6448 = vpop.permute.xlu0 %6447
        %6449 = vrot.lane.b32.xlu0 %v5139, 112
        %v6450 = vpop.permute.xlu0 %6449
        %6451 = vrot.lane.b32.xlu0 %v5144, 112
        %v6452 = vpop.permute.xlu0 %6451
        %6453 = vrot.lane.b32.xlu0 %v5149, 112
        %v6454 = vpop.permute.xlu0 %6453
        %6455 = vrot.lane.b32.xlu0 %v5154, 112
        %v6456 = vpop.permute.xlu0 %6455
        %6457 = vrot.lane.b32.xlu0 %v5079, 80
        %v6458 = vpop.permute.xlu0 %6457
        %6459 = vrot.lane.b32.xlu0 %v5084, 80
        %v6460 = vpop.permute.xlu0 %6459
        %6461 = vrot.lane.b32.xlu0 %v5089, 80
        %v6462 = vpop.permute.xlu0 %6461
        %6463 = vrot.lane.b32.xlu0 %v5094, 80
        %v6464 = vpop.permute.xlu0 %6463
        %6465 = vrot.lane.b32.xlu0 %v5099, 80
        %v6466 = vpop.permute.xlu0 %6465
        %6467 = vrot.lane.b32.xlu0 %v5104, 80
        %v6468 = vpop.permute.xlu0 %6467
        %6469 = vrot.lane.b32.xlu0 %v5109, 80
        %v6470 = vpop.permute.xlu0 %6469
        %6471 = vrot.lane.b32.xlu0 %v5114, 80
        %v6472 = vpop.permute.xlu0 %6471
        %6473 = vrot.lane.b32.xlu0 %v5119, 80
        %v6474 = vpop.permute.xlu0 %6473
        %6475 = vrot.lane.b32.xlu0 %v5124, 80
        %v6476 = vpop.permute.xlu0 %6475
        %6477 = vrot.lane.b32.xlu0 %v5129, 80
        %v6478 = vpop.permute.xlu0 %6477
        %6479 = vrot.lane.b32.xlu0 %v5134, 80
        %v6480 = vpop.permute.xlu0 %6479
        %6481 = vrot.lane.b32.xlu0 %v5139, 80
        %v6482 = vpop.permute.xlu0 %6481
        %6483 = vrot.lane.b32.xlu0 %v5144, 80
        %v6484 = vpop.permute.xlu0 %6483
        %6485 = vrot.lane.b32.xlu0 %v5149, 80
        %v6486 = vpop.permute.xlu0 %6485
        %6487 = vrot.lane.b32.xlu0 %v5154, 80
        %v6488 = vpop.permute.xlu0 %6487
        %v6489 = vsel %vm909, %v6426, 0
        %v6491 = vsel %vm909, %v6428, 0
        %v6493 = vsel %vm909, %v6430, 0
        %v6495 = vsel %vm909, %v6432, 0
        %v6497 = vsel %vm909, %v6434, 0
        %v6499 = vsel %vm909, %v6436, 0
        %v6501 = vsel %vm909, %v6438, 0
        %v6503 = vsel %vm909, %v6440, 0
        %v6505 = vsel %vm909, %v6442, 0
        %v6507 = vsel %vm909, %v6444, 0
        %v6509 = vsel %vm909, %v6446, 0
        %v6511 = vsel %vm909, %v6448, 0
        %v6513 = vsel %vm909, %v6450, 0
        %v6515 = vsel %vm909, %v6452, 0
        %v6517 = vsel %vm909, %v6454, 0
        %v6519 = vsel %vm909, %v6456, 0
        %v6521 = vsel %vm909, %v6458, 0
        %v6523 = vsel %vm909, %v6460, 0
        %v6525 = vsel %vm909, %v6462, 0
        %v6527 = vsel %vm909, %v6464, 0
        %v6529 = vsel %vm909, %v6466, 0
        %v6531 = vsel %vm909, %v6468, 0
        %v6533 = vsel %vm909, %v6470, 0
        %v6535 = vsel %vm909, %v6472, 0
        %v6537 = vsel %vm909, %v6474, 0
        %v6539 = vsel %vm909, %v6476, 0
        %v6541 = vsel %vm909, %v6478, 0
        %v6543 = vsel %vm909, %v6480, 0
        %v6545 = vsel %vm909, %v6482, 0
        %v6547 = vsel %vm909, %v6484, 0
        %v6549 = vsel %vm909, %v6486, 0
        %v6551 = vsel %vm909, %v6488, 0
        %6553 = vmatprep.subr.mxu0 0.0
        %6554 = vmatpush1.xpose.msra.mxu0 %v6551
        %6555 = vmatprep.subr.mxu0 0.0
        %6556 = vmatpush1.xpose.msra.mxu0 %v6549
        %6557 = vmatprep.subr.mxu0 0.0
        %6558 = vmatpush1.xpose.msra.mxu0 %v6547
        %6559 = vmatprep.subr.mxu0 0.0
        %6560 = vmatpush1.xpose.msra.mxu0 %v6545
        %6561 = vmatprep.subr.mxu0 0.0
        %6562 = vmatpush1.xpose.msra.mxu0 %v6543
        %6563 = vmatprep.subr.mxu0 0.0
        %6564 = vmatpush1.xpose.msra.mxu0 %v6541
        %6565 = vmatprep.subr.mxu0 0.0
        %6566 = vmatpush1.xpose.msra.mxu0 %v6539
        %6567 = vmatprep.subr.mxu0 0.0
        %6568 = vmatpush1.xpose.msra.mxu0 %v6537
        %6569 = vmatprep.subr.mxu0 0.0
        %6570 = vmatpush1.xpose.msra.mxu0 %v6535
        %6571 = vmatprep.subr.mxu0 0.0
        %6572 = vmatpush1.xpose.msra.mxu0 %v6533
        %6573 = vmatprep.subr.mxu0 0.0
        %6574 = vmatpush1.xpose.msra.mxu0 %v6531
        %6575 = vmatprep.subr.mxu0 0.0
        %6576 = vmatpush1.xpose.msra.mxu0 %v6529
        %6577 = vmatprep.subr.mxu0 0.0
        %6578 = vmatpush1.xpose.msra.mxu0 %v6527
        %6579 = vmatprep.subr.mxu0 0.0
        %6580 = vmatpush1.xpose.msra.mxu0 %v6525
        %6581 = vmatprep.subr.mxu0 0.0
        %6582 = vmatpush1.xpose.msra.mxu0 %v6523
        %6583 = vmatprep.subr.mxu0 0.0
        %6584 = vmatpush1.xpose.msra.mxu0 %v6521
        %6585 = vmatprep.subr.mxu0 0.0
        %6586 = vmatpush2.xpose.msra.mxu0 0.0
        %6587 = vmatprep.subr.mxu0 0.0
        %6588 = vmatpush2.xpose.msra.mxu0 0.0
        %6589 = vmatprep.subr.mxu0 0.0
        %6590 = vmatpush2.xpose.msra.mxu0 0.0
        %6591 = vmatprep.subr.mxu0 0.0
        %6592 = vmatpush2.xpose.msra.mxu0 0.0
        %6593 = vmatprep.subr.mxu0 0.0
        %6594 = vmatpush2.xpose.msra.mxu0 0.0
        %6595 = vmatprep.subr.mxu0 0.0
        %6596 = vmatpush2.xpose.msra.mxu0 0.0
        %6597 = vmatprep.subr.mxu0 0.0
        %6598 = vmatpush2.xpose.msra.mxu0 0.0
        %6599 = vmatprep.subr.mxu0 0.0
        %6600 = vmatpush2.xpose.msra.mxu0 0.0
        %6601 = vmatprep.subr.mxu0 0.0
        %6602 = vmatpush2.xpose.msra.mxu0 0.0
        %6603 = vmatprep.subr.mxu0 0.0
        %6604 = vmatpush2.xpose.msra.mxu0 0.0
        %6605 = vmatprep.subr.mxu0 0.0
        %6606 = vmatpush2.xpose.msra.mxu0 0.0
        %6607 = vmatprep.subr.mxu0 0.0
        %6608 = vmatpush2.xpose.msra.mxu0 0.0
        %6609 = vmatprep.subr.mxu0 0.0
        %6610 = vmatpush2.xpose.msra.mxu0 0.0
        %6611 = vmatprep.subr.mxu0 0.0
        %6612 = vmatpush2.xpose.msra.mxu0 0.0
        %6613 = vmatprep.subr.mxu0 0.0
        %6614 = vmatpush2.xpose.msra.mxu0 0.0
        %6615 = vmatprep.subr.mxu0 0.0
        %6616 = vmatpush2.xpose.msra.mxu0 0.0
        %6617 = vmatprep.mubr.f32.mxu0 0.0
        %6618 = vmatmul.mubr.f32.gmra.mxu0 %v6489
        %v6619 = vpop.f32.mrf.mxu0
        %v6620 = vadd.f32 0.0, %v6619
        %v6621 = vpop.f32.mrf.mxu0
        %6622 = vmatprep.mubr.f32.mxu0 0.0
        %6623 = vmatmul.mubr.f32.gmra.mxu0 %v6491
        %v6624 = vpop.f32.mrf.mxu0
        %v6625 = vadd.f32 0.0, %v6624
        %v6626 = vpop.f32.mrf.mxu0
        %6627 = vmatprep.mubr.f32.mxu0 0.0
        %6628 = vmatmul.mubr.f32.gmra.mxu0 %v6493
        %v6629 = vpop.f32.mrf.mxu0
        %v6630 = vadd.f32 0.0, %v6629
        %v6631 = vpop.f32.mrf.mxu0
        %6632 = vmatprep.mubr.f32.mxu0 0.0
        %6633 = vmatmul.mubr.f32.gmra.mxu0 %v6495
        %v6634 = vpop.f32.mrf.mxu0
        %v6635 = vadd.f32 0.0, %v6634
        %v6636 = vpop.f32.mrf.mxu0
        %6637 = vmatprep.mubr.f32.mxu0 0.0
        %6638 = vmatmul.mubr.f32.gmra.mxu0 %v6497
        %v6639 = vpop.f32.mrf.mxu0
        %v6640 = vadd.f32 0.0, %v6639
        %v6641 = vpop.f32.mrf.mxu0
        %6642 = vmatprep.mubr.f32.mxu0 0.0
        %6643 = vmatmul.mubr.f32.gmra.mxu0 %v6499
        %v6644 = vpop.f32.mrf.mxu0
        %v6645 = vadd.f32 0.0, %v6644
        %v6646 = vpop.f32.mrf.mxu0
        %6647 = vmatprep.mubr.f32.mxu0 0.0
        %6648 = vmatmul.mubr.f32.gmra.mxu0 %v6501
        %v6649 = vpop.f32.mrf.mxu0
        %v6650 = vadd.f32 0.0, %v6649
        %v6651 = vpop.f32.mrf.mxu0
        %6652 = vmatprep.mubr.f32.mxu0 0.0
        %6653 = vmatmul.mubr.f32.gmra.mxu0 %v6503
        %v6654 = vpop.f32.mrf.mxu0
        %v6655 = vadd.f32 0.0, %v6654
        %v6656 = vpop.f32.mrf.mxu0
        %6657 = vmatprep.mubr.f32.mxu0 0.0
        %6658 = vmatmul.mubr.f32.gmra.mxu0 %v6505
        %v6659 = vpop.f32.mrf.mxu0
        %v6660 = vadd.f32 0.0, %v6659
        %v6661 = vpop.f32.mrf.mxu0
        %6662 = vmatprep.mubr.f32.mxu0 0.0
        %6663 = vmatmul.mubr.f32.gmra.mxu0 %v6507
        %v6664 = vpop.f32.mrf.mxu0
        %v6665 = vadd.f32 0.0, %v6664
        %v6666 = vpop.f32.mrf.mxu0
        %6667 = vmatprep.mubr.f32.mxu0 0.0
        %6668 = vmatmul.mubr.f32.gmra.mxu0 %v6509
        %v6669 = vpop.f32.mrf.mxu0
        %v6670 = vadd.f32 0.0, %v6669
        %v6671 = vpop.f32.mrf.mxu0
        %6672 = vmatprep.mubr.f32.mxu0 0.0
        %6673 = vmatmul.mubr.f32.gmra.mxu0 %v6511
        %v6674 = vpop.f32.mrf.mxu0
        %v6675 = vadd.f32 0.0, %v6674
        %v6676 = vpop.f32.mrf.mxu0
        %6677 = vmatprep.mubr.f32.mxu0 0.0
        %6678 = vmatmul.mubr.f32.gmra.mxu0 %v6513
        %v6679 = vpop.f32.mrf.mxu0
        %v6680 = vadd.f32 0.0, %v6679
        %v6681 = vpop.f32.mrf.mxu0
        %6682 = vmatprep.mubr.f32.mxu0 0.0
        %6683 = vmatmul.mubr.f32.gmra.mxu0 %v6515
        %v6684 = vpop.f32.mrf.mxu0
        %v6685 = vadd.f32 0.0, %v6684
        %v6686 = vpop.f32.mrf.mxu0
        %6687 = vmatprep.mubr.f32.mxu0 0.0
        %6688 = vmatmul.mubr.f32.gmra.mxu0 %v6517
        %v6689 = vpop.f32.mrf.mxu0
        %v6690 = vadd.f32 0.0, %v6689
        %v6691 = vpop.f32.mrf.mxu0
        %6692 = vmatprep.mubr.f32.mxu0 0.0
        %6693 = vmatmul.mubr.f32.gmra.mxu0 %v6519
        %v6694 = vpop.f32.mrf.mxu0
        %v6695 = vadd.f32 0.0, %v6694
        %v6696 = vpop.f32.mrf.mxu0
        %6697 = vdwg.mxu0
        %v6698 = vmul.f32 %v6620, 0.35355338
        %v6699 = vmul.f32 %v6625, 0.35355338
        %v6700 = vmul.f32 %v6630, 0.35355338
        %v6701 = vmul.f32 %v6635, 0.35355338
        %v6702 = vmul.f32 %v6640, 0.35355338
        %v6703 = vmul.f32 %v6645, 0.35355338
        %v6704 = vmul.f32 %v6650, 0.35355338
        %v6705 = vmul.f32 %v6655, 0.35355338
        %v6706 = vmul.f32 %v6660, 0.35355338
        %v6707 = vmul.f32 %v6665, 0.35355338
        %v6708 = vmul.f32 %v6670, 0.35355338
        %v6709 = vmul.f32 %v6675, 0.35355338
        %v6710 = vmul.f32 %v6680, 0.35355338
        %v6711 = vmul.f32 %v6685, 0.35355338
        %v6712 = vmul.f32 %v6690, 0.35355338
        %v6713 = vmul.f32 %v6695, 0.35355338
        %v6714 = vadd.f32 %v6698, %v4671
        %v6715 = vadd.f32 %v6699, %v4672
        %v6716 = vadd.f32 %v6700, %v4673
        %v6717 = vadd.f32 %v6701, %v4674
        %v6718 = vadd.f32 %v6702, %v4675
        %v6719 = vadd.f32 %v6703, %v4676
        %v6720 = vadd.f32 %v6704, %v4677
        %v6721 = vadd.f32 %v6705, %v4678
        %v6722 = vadd.f32 %v6706, %v4679
        %v6723 = vadd.f32 %v6707, %v4680
        %v6724 = vadd.f32 %v6708, %v4681
        %v6725 = vadd.f32 %v6709, %v4682
        %v6726 = vadd.f32 %v6710, %v4683
        %v6727 = vadd.f32 %v6711, %v4684
        %v6728 = vadd.f32 %v6712, %v4685
        %v6729 = vadd.f32 %v6713, %v4686
        %6730 = vmax.xlane.f32.xlu0 %v6714
        %v6731 = vpop.xlane.xlu0 %6730
        %6732 = vmax.xlane.f32.xlu0 %v6715
        %v6733 = vpop.xlane.xlu0 %6732
        %6734 = vmax.xlane.f32.xlu0 %v6716
        %v6735 = vpop.xlane.xlu0 %6734
        %6736 = vmax.xlane.f32.xlu0 %v6717
        %v6737 = vpop.xlane.xlu0 %6736
        %6738 = vmax.xlane.f32.xlu0 %v6718
        %v6739 = vpop.xlane.xlu0 %6738
        %6740 = vmax.xlane.f32.xlu0 %v6719
        %v6741 = vpop.xlane.xlu0 %6740
        %6742 = vmax.xlane.f32.xlu0 %v6720
        %v6743 = vpop.xlane.xlu0 %6742
        %6744 = vmax.xlane.f32.xlu0 %v6721
        %v6745 = vpop.xlane.xlu0 %6744
        %6746 = vmax.xlane.f32.xlu0 %v6722
        %v6747 = vpop.xlane.xlu0 %6746
        %6748 = vmax.xlane.f32.xlu0 %v6723
        %v6749 = vpop.xlane.xlu0 %6748
        %6750 = vmax.xlane.f32.xlu0 %v6724
        %v6751 = vpop.xlane.xlu0 %6750
        %6752 = vmax.xlane.f32.xlu0 %v6725
        %v6753 = vpop.xlane.xlu0 %6752
        %6754 = vmax.xlane.f32.xlu0 %v6726
        %v6755 = vpop.xlane.xlu0 %6754
        %6756 = vmax.xlane.f32.xlu0 %v6727
        %v6757 = vpop.xlane.xlu0 %6756
        %6758 = vmax.xlane.f32.xlu0 %v6728
        %v6759 = vpop.xlane.xlu0 %6758
        %6760 = vmax.xlane.f32.xlu0 %v6729
        %v6761 = vpop.xlane.xlu0 %6760
        %v6762 = vsub.f32 %v6714, %v6731
        %v6763 = vsub.f32 %v6715, %v6733
        %v6764 = vsub.f32 %v6716, %v6735
        %v6765 = vsub.f32 %v6717, %v6737
        %v6766 = vsub.f32 %v6718, %v6739
        %v6767 = vsub.f32 %v6719, %v6741
        %v6768 = vsub.f32 %v6720, %v6743
        %v6769 = vsub.f32 %v6721, %v6745
        %v6770 = vsub.f32 %v6722, %v6747
        %v6771 = vsub.f32 %v6723, %v6749
        %v6772 = vsub.f32 %v6724, %v6751
        %v6773 = vsub.f32 %v6725, %v6753
        %v6774 = vsub.f32 %v6726, %v6755
        %v6775 = vsub.f32 %v6727, %v6757
        %v6776 = vsub.f32 %v6728, %v6759
        %v6777 = vsub.f32 %v6729, %v6761
        %v6778 = vmul.f32 %v6762, 1.442695
        %v6779 = vpow.pop %v6778
        %v6780 = vmul.f32 %v6763, 1.442695
        %v6781 = vpow.pop %v6780
        %v6782 = vmul.f32 %v6764, 1.442695
        %v6783 = vpow.pop %v6782
        %v6784 = vmul.f32 %v6765, 1.442695
        %v6785 = vpow.pop %v6784
        %v6786 = vmul.f32 %v6766, 1.442695
        %v6787 = vpow.pop %v6786
        %v6788 = vmul.f32 %v6767, 1.442695
        %v6789 = vpow.pop %v6788
        %v6790 = vmul.f32 %v6768, 1.442695
        %v6791 = vpow.pop %v6790
        %v6792 = vmul.f32 %v6769, 1.442695
        %v6793 = vpow.pop %v6792
        %v6794 = vmul.f32 %v6770, 1.442695
        %v6795 = vpow.pop %v6794
        %v6796 = vmul.f32 %v6771, 1.442695
        %v6797 = vpow.pop %v6796
        %v6798 = vmul.f32 %v6772, 1.442695
        %v6799 = vpow.pop %v6798
        %v6800 = vmul.f32 %v6773, 1.442695
        %v6801 = vpow.pop %v6800
        %v6802 = vmul.f32 %v6774, 1.442695
        %v6803 = vpow.pop %v6802
        %v6804 = vmul.f32 %v6775, 1.442695
        %v6805 = vpow.pop %v6804
        %v6806 = vmul.f32 %v6776, 1.442695
        %v6807 = vpow.pop %v6806
        %v6808 = vmul.f32 %v6777, 1.442695
        %v6809 = vpow.pop %v6808
        %6810 = vadd.xlane.f32.xlu0 %v6779
        %v6811 = vpop.xlane.xlu0 %6810
        %6812 = vadd.xlane.f32.xlu0 %v6781
        %v6813 = vpop.xlane.xlu0 %6812
        %6814 = vadd.xlane.f32.xlu0 %v6783
        %v6815 = vpop.xlane.xlu0 %6814
        %6816 = vadd.xlane.f32.xlu0 %v6785
        %v6817 = vpop.xlane.xlu0 %6816
        %6818 = vadd.xlane.f32.xlu0 %v6787
        %v6819 = vpop.xlane.xlu0 %6818
        %6820 = vadd.xlane.f32.xlu0 %v6789
        %v6821 = vpop.xlane.xlu0 %6820
        %6822 = vadd.xlane.f32.xlu0 %v6791
        %v6823 = vpop.xlane.xlu0 %6822
        %6824 = vadd.xlane.f32.xlu0 %v6793
        %v6825 = vpop.xlane.xlu0 %6824
        %6826 = vadd.xlane.f32.xlu0 %v6795
        %v6827 = vpop.xlane.xlu0 %6826
        %6828 = vadd.xlane.f32.xlu0 %v6797
        %v6829 = vpop.xlane.xlu0 %6828
        %6830 = vadd.xlane.f32.xlu0 %v6799
        %v6831 = vpop.xlane.xlu0 %6830
        %6832 = vadd.xlane.f32.xlu0 %v6801
        %v6833 = vpop.xlane.xlu0 %6832
        %6834 = vadd.xlane.f32.xlu0 %v6803
        %v6835 = vpop.xlane.xlu0 %6834
        %6836 = vadd.xlane.f32.xlu0 %v6805
        %v6837 = vpop.xlane.xlu0 %6836
        %6838 = vadd.xlane.f32.xlu0 %v6807
        %v6839 = vpop.xlane.xlu0 %6838
        %6840 = vadd.xlane.f32.xlu0 %v6809
        %v6841 = vpop.xlane.xlu0 %6840
        %v6842 = vrcp.pop %v6811
        %v6843 = vrcp.pop %v6813
        %v6844 = vrcp.pop %v6815
        %v6845 = vrcp.pop %v6817
        %v6846 = vrcp.pop %v6819
        %v6847 = vrcp.pop %v6821
        %v6848 = vrcp.pop %v6823
        %v6849 = vrcp.pop %v6825
        %v6850 = vrcp.pop %v6827
        %v6851 = vrcp.pop %v6829
        %v6852 = vrcp.pop %v6831
        %v6853 = vrcp.pop %v6833
        %v6854 = vrcp.pop %v6835
        %v6855 = vrcp.pop %v6837
        %v6856 = vrcp.pop %v6839
        %v6857 = vrcp.pop %v6841
        %v6858 = vmul.f32 %v6779, %v6842
        %v6859 = vmul.f32 %v6781, %v6843
        %v6860 = vmul.f32 %v6783, %v6844
        %v6861 = vmul.f32 %v6785, %v6845
        %v6862 = vmul.f32 %v6787, %v6846
        %v6863 = vmul.f32 %v6789, %v6847
        %v6864 = vmul.f32 %v6791, %v6848
        %v6865 = vmul.f32 %v6793, %v6849
        %v6866 = vmul.f32 %v6795, %v6850
        %v6867 = vmul.f32 %v6797, %v6851
        %v6868 = vmul.f32 %v6799, %v6852
        %v6869 = vmul.f32 %v6801, %v6853
        %v6870 = vmul.f32 %v6803, %v6854
        %v6871 = vmul.f32 %v6805, %v6855
        %v6872 = vmul.f32 %v6807, %v6856
        %v6873 = vmul.f32 %v6809, %v6857
        %6874 = vrot.lane.b32.xlu0 %v5079, 48
        %v6875 = vpop.permute.xlu0 %6874
        %6876 = vrot.lane.b32.xlu0 %v5084, 48
        %v6877 = vpop.permute.xlu0 %6876
        %6878 = vrot.lane.b32.xlu0 %v5089, 48
        %v6879 = vpop.permute.xlu0 %6878
        %6880 = vrot.lane.b32.xlu0 %v5094, 48
        %v6881 = vpop.permute.xlu0 %6880
        %6882 = vrot.lane.b32.xlu0 %v5099, 48
        %v6883 = vpop.permute.xlu0 %6882
        %6884 = vrot.lane.b32.xlu0 %v5104, 48
        %v6885 = vpop.permute.xlu0 %6884
        %6886 = vrot.lane.b32.xlu0 %v5109, 48
        %v6887 = vpop.permute.xlu0 %6886
        %6888 = vrot.lane.b32.xlu0 %v5114, 48
        %v6889 = vpop.permute.xlu0 %6888
        %6890 = vrot.lane.b32.xlu0 %v5119, 48
        %v6891 = vpop.permute.xlu0 %6890
        %6892 = vrot.lane.b32.xlu0 %v5124, 48
        %v6893 = vpop.permute.xlu0 %6892
        %6894 = vrot.lane.b32.xlu0 %v5129, 48
        %v6895 = vpop.permute.xlu0 %6894
        %6896 = vrot.lane.b32.xlu0 %v5134, 48
        %v6897 = vpop.permute.xlu0 %6896
        %6898 = vrot.lane.b32.xlu0 %v5139, 48
        %v6899 = vpop.permute.xlu0 %6898
        %6900 = vrot.lane.b32.xlu0 %v5144, 48
        %v6901 = vpop.permute.xlu0 %6900
        %6902 = vrot.lane.b32.xlu0 %v5149, 48
        %v6903 = vpop.permute.xlu0 %6902
        %6904 = vrot.lane.b32.xlu0 %v5154, 48
        %v6905 = vpop.permute.xlu0 %6904
        %6922 = vmatprep.subr.mxu0 0.0
        %6923 = vmatpush1.msra.mxu0 %v6905
        %6924 = vmatprep.subr.mxu0 0.0
        %6925 = vmatpush1.msra.mxu0 %v6903
        %6926 = vmatprep.subr.mxu0 0.0
        %6927 = vmatpush1.msra.mxu0 %v6901
        %6928 = vmatprep.subr.mxu0 0.0
        %6929 = vmatpush1.msra.mxu0 %v6899
        %6930 = vmatprep.subr.mxu0 0.0
        %6931 = vmatpush1.msra.mxu0 %v6897
        %6932 = vmatprep.subr.mxu0 0.0
        %6933 = vmatpush1.msra.mxu0 %v6895
        %6934 = vmatprep.subr.mxu0 0.0
        %6935 = vmatpush1.msra.mxu0 %v6893
        %6936 = vmatprep.subr.mxu0 0.0
        %6937 = vmatpush1.msra.mxu0 %v6891
        %6938 = vmatprep.subr.mxu0 0.0
        %6939 = vmatpush1.msra.mxu0 %v6889
        %6940 = vmatprep.subr.mxu0 0.0
        %6941 = vmatpush1.msra.mxu0 %v6887
        %6942 = vmatprep.subr.mxu0 0.0
        %6943 = vmatpush1.msra.mxu0 %v6885
        %6944 = vmatprep.subr.mxu0 0.0
        %6945 = vmatpush1.msra.mxu0 %v6883
        %6946 = vmatprep.subr.mxu0 0.0
        %6947 = vmatpush1.msra.mxu0 %v6881
        %6948 = vmatprep.subr.mxu0 0.0
        %6949 = vmatpush1.msra.mxu0 %v6879
        %6950 = vmatprep.subr.mxu0 0.0
        %6951 = vmatpush1.msra.mxu0 %v6877
        %6952 = vmatprep.subr.mxu0 0.0
        %6953 = vmatpush1.msra.mxu0 %v6875
        %6954 = vmatprep.subr.mxu0 0.0
        %6955 = vmatpush2.msra.mxu0 0.0
        %6956 = vmatprep.subr.mxu0 0.0
        %6957 = vmatpush2.msra.mxu0 0.0
        %6958 = vmatprep.subr.mxu0 0.0
        %6959 = vmatpush2.msra.mxu0 0.0
        %6960 = vmatprep.subr.mxu0 0.0
        %6961 = vmatpush2.msra.mxu0 0.0
        %6962 = vmatprep.subr.mxu0 0.0
        %6963 = vmatpush2.msra.mxu0 0.0
        %6964 = vmatprep.subr.mxu0 0.0
        %6965 = vmatpush2.msra.mxu0 0.0
        %6966 = vmatprep.subr.mxu0 0.0
        %6967 = vmatpush2.msra.mxu0 0.0
        %6968 = vmatprep.subr.mxu0 0.0
        %6969 = vmatpush2.msra.mxu0 0.0
        %6970 = vmatprep.subr.mxu0 0.0
        %6971 = vmatpush2.msra.mxu0 0.0
        %6972 = vmatprep.subr.mxu0 0.0
        %6973 = vmatpush2.msra.mxu0 0.0
        %6974 = vmatprep.subr.mxu0 0.0
        %6975 = vmatpush2.msra.mxu0 0.0
        %6976 = vmatprep.subr.mxu0 0.0
        %6977 = vmatpush2.msra.mxu0 0.0
        %6978 = vmatprep.subr.mxu0 0.0
        %6979 = vmatpush2.msra.mxu0 0.0
        %6980 = vmatprep.subr.mxu0 0.0
        %6981 = vmatpush2.msra.mxu0 0.0
        %6982 = vmatprep.subr.mxu0 0.0
        %6983 = vmatpush2.msra.mxu0 0.0
        %6984 = vmatprep.subr.mxu0 0.0
        %6985 = vmatpush2.msra.mxu0 0.0
        %6986 = vmatprep.mubr.f32.mxu0 0.0
        %6987 = vmatmul.mubr.f32.gmra.mxu0 %v6858
        %v6988 = vpop.f32.mrf.mxu0
        %v6989 = vadd.f32 0.0, %v6988
        %v6990 = vpop.f32.mrf.mxu0
        %6991 = vmatprep.mubr.f32.mxu0 0.0
        %6992 = vmatmul.mubr.f32.gmra.mxu0 %v6859
        %v6993 = vpop.f32.mrf.mxu0
        %v6994 = vadd.f32 0.0, %v6993
        %v6995 = vpop.f32.mrf.mxu0
        %6996 = vmatprep.mubr.f32.mxu0 0.0
        %6997 = vmatmul.mubr.f32.gmra.mxu0 %v6860
        %v6998 = vpop.f32.mrf.mxu0
        %v6999 = vadd.f32 0.0, %v6998
        %v7000 = vpop.f32.mrf.mxu0
        %7001 = vmatprep.mubr.f32.mxu0 0.0
        %7002 = vmatmul.mubr.f32.gmra.mxu0 %v6861
        %v7003 = vpop.f32.mrf.mxu0
        %v7004 = vadd.f32 0.0, %v7003
        %v7005 = vpop.f32.mrf.mxu0
        %7006 = vmatprep.mubr.f32.mxu0 0.0
        %7007 = vmatmul.mubr.f32.gmra.mxu0 %v6862
        %v7008 = vpop.f32.mrf.mxu0
        %v7009 = vadd.f32 0.0, %v7008
        %v7010 = vpop.f32.mrf.mxu0
        %7011 = vmatprep.mubr.f32.mxu0 0.0
        %7012 = vmatmul.mubr.f32.gmra.mxu0 %v6863
        %v7013 = vpop.f32.mrf.mxu0
        %v7014 = vadd.f32 0.0, %v7013
        %v7015 = vpop.f32.mrf.mxu0
        %7016 = vmatprep.mubr.f32.mxu0 0.0
        %7017 = vmatmul.mubr.f32.gmra.mxu0 %v6864
        %v7018 = vpop.f32.mrf.mxu0
        %v7019 = vadd.f32 0.0, %v7018
        %v7020 = vpop.f32.mrf.mxu0
        %7021 = vmatprep.mubr.f32.mxu0 0.0
        %7022 = vmatmul.mubr.f32.gmra.mxu0 %v6865
        %v7023 = vpop.f32.mrf.mxu0
        %v7024 = vadd.f32 0.0, %v7023
        %v7025 = vpop.f32.mrf.mxu0
        %7026 = vmatprep.mubr.f32.mxu0 0.0
        %7027 = vmatmul.mubr.f32.gmra.mxu0 %v6866
        %v7028 = vpop.f32.mrf.mxu0
        %v7029 = vadd.f32 0.0, %v7028
        %v7030 = vpop.f32.mrf.mxu0
        %7031 = vmatprep.mubr.f32.mxu0 0.0
        %7032 = vmatmul.mubr.f32.gmra.mxu0 %v6867
        %v7033 = vpop.f32.mrf.mxu0
        %v7034 = vadd.f32 0.0, %v7033
        %v7035 = vpop.f32.mrf.mxu0
        %7036 = vmatprep.mubr.f32.mxu0 0.0
        %7037 = vmatmul.mubr.f32.gmra.mxu0 %v6868
        %v7038 = vpop.f32.mrf.mxu0
        %v7039 = vadd.f32 0.0, %v7038
        %v7040 = vpop.f32.mrf.mxu0
        %7041 = vmatprep.mubr.f32.mxu0 0.0
        %7042 = vmatmul.mubr.f32.gmra.mxu0 %v6869
        %v7043 = vpop.f32.mrf.mxu0
        %v7044 = vadd.f32 0.0, %v7043
        %v7045 = vpop.f32.mrf.mxu0
        %7046 = vmatprep.mubr.f32.mxu0 0.0
        %7047 = vmatmul.mubr.f32.gmra.mxu0 %v6870
        %v7048 = vpop.f32.mrf.mxu0
        %v7049 = vadd.f32 0.0, %v7048
        %v7050 = vpop.f32.mrf.mxu0
        %7051 = vmatprep.mubr.f32.mxu0 0.0
        %7052 = vmatmul.mubr.f32.gmra.mxu0 %v6871
        %v7053 = vpop.f32.mrf.mxu0
        %v7054 = vadd.f32 0.0, %v7053
        %v7055 = vpop.f32.mrf.mxu0
        %7056 = vmatprep.mubr.f32.mxu0 0.0
        %7057 = vmatmul.mubr.f32.gmra.mxu0 %v6872
        %v7058 = vpop.f32.mrf.mxu0
        %v7059 = vadd.f32 0.0, %v7058
        %v7060 = vpop.f32.mrf.mxu0
        %7061 = vmatprep.mubr.f32.mxu0 0.0
        %7062 = vmatmul.mubr.f32.gmra.mxu0 %v6873
        %v7063 = vpop.f32.mrf.mxu0
        %v7064 = vadd.f32 0.0, %v7063
        %v7065 = vpop.f32.mrf.mxu0
        %7066 = vdwg.mxu0
        %7067 = vrot.lane.b32.xlu0 %v5079, 104
        %v7068 = vpop.permute.xlu0 %7067
        %7069 = vrot.lane.b32.xlu0 %v5084, 104
        %v7070 = vpop.permute.xlu0 %7069
        %7071 = vrot.lane.b32.xlu0 %v5089, 104
        %v7072 = vpop.permute.xlu0 %7071
        %7073 = vrot.lane.b32.xlu0 %v5094, 104
        %v7074 = vpop.permute.xlu0 %7073
        %7075 = vrot.lane.b32.xlu0 %v5099, 104
        %v7076 = vpop.permute.xlu0 %7075
        %7077 = vrot.lane.b32.xlu0 %v5104, 104
        %v7078 = vpop.permute.xlu0 %7077
        %7079 = vrot.lane.b32.xlu0 %v5109, 104
        %v7080 = vpop.permute.xlu0 %7079
        %7081 = vrot.lane.b32.xlu0 %v5114, 104
        %v7082 = vpop.permute.xlu0 %7081
        %7083 = vrot.lane.b32.xlu0 %v5119, 104
        %v7084 = vpop.permute.xlu0 %7083
        %7085 = vrot.lane.b32.xlu0 %v5124, 104
        %v7086 = vpop.permute.xlu0 %7085
        %7087 = vrot.lane.b32.xlu0 %v5129, 104
        %v7088 = vpop.permute.xlu0 %7087
        %7089 = vrot.lane.b32.xlu0 %v5134, 104
        %v7090 = vpop.permute.xlu0 %7089
        %7091 = vrot.lane.b32.xlu0 %v5139, 104
        %v7092 = vpop.permute.xlu0 %7091
        %7093 = vrot.lane.b32.xlu0 %v5144, 104
        %v7094 = vpop.permute.xlu0 %7093
        %7095 = vrot.lane.b32.xlu0 %v5149, 104
        %v7096 = vpop.permute.xlu0 %7095
        %7097 = vrot.lane.b32.xlu0 %v5154, 104
        %v7098 = vpop.permute.xlu0 %7097
        %7099 = vrot.lane.b32.xlu0 %v5079, 72
        %v7100 = vpop.permute.xlu0 %7099
        %7101 = vrot.lane.b32.xlu0 %v5084, 72
        %v7102 = vpop.permute.xlu0 %7101
        %7103 = vrot.lane.b32.xlu0 %v5089, 72
        %v7104 = vpop.permute.xlu0 %7103
        %7105 = vrot.lane.b32.xlu0 %v5094, 72
        %v7106 = vpop.permute.xlu0 %7105
        %7107 = vrot.lane.b32.xlu0 %v5099, 72
        %v7108 = vpop.permute.xlu0 %7107
        %7109 = vrot.lane.b32.xlu0 %v5104, 72
        %v7110 = vpop.permute.xlu0 %7109
        %7111 = vrot.lane.b32.xlu0 %v5109, 72
        %v7112 = vpop.permute.xlu0 %7111
        %7113 = vrot.lane.b32.xlu0 %v5114, 72
        %v7114 = vpop.permute.xlu0 %7113
        %7115 = vrot.lane.b32.xlu0 %v5119, 72
        %v7116 = vpop.permute.xlu0 %7115
        %7117 = vrot.lane.b32.xlu0 %v5124, 72
        %v7118 = vpop.permute.xlu0 %7117
        %7119 = vrot.lane.b32.xlu0 %v5129, 72
        %v7120 = vpop.permute.xlu0 %7119
        %7121 = vrot.lane.b32.xlu0 %v5134, 72
        %v7122 = vpop.permute.xlu0 %7121
        %7123 = vrot.lane.b32.xlu0 %v5139, 72
        %v7124 = vpop.permute.xlu0 %7123
        %7125 = vrot.lane.b32.xlu0 %v5144, 72
        %v7126 = vpop.permute.xlu0 %7125
        %7127 = vrot.lane.b32.xlu0 %v5149, 72
        %v7128 = vpop.permute.xlu0 %7127
        %7129 = vrot.lane.b32.xlu0 %v5154, 72
        %v7130 = vpop.permute.xlu0 %7129
        %v7131 = vsel %vm909, %v7068, 0
        %v7133 = vsel %vm909, %v7070, 0
        %v7135 = vsel %vm909, %v7072, 0
        %v7137 = vsel %vm909, %v7074, 0
        %v7139 = vsel %vm909, %v7076, 0
        %v7141 = vsel %vm909, %v7078, 0
        %v7143 = vsel %vm909, %v7080, 0
        %v7145 = vsel %vm909, %v7082, 0
        %v7147 = vsel %vm909, %v7084, 0
        %v7149 = vsel %vm909, %v7086, 0
        %v7151 = vsel %vm909, %v7088, 0
        %v7153 = vsel %vm909, %v7090, 0
        %v7155 = vsel %vm909, %v7092, 0
        %v7157 = vsel %vm909, %v7094, 0
        %v7159 = vsel %vm909, %v7096, 0
        %v7161 = vsel %vm909, %v7098, 0
        %v7163 = vsel %vm909, %v7100, 0
        %v7165 = vsel %vm909, %v7102, 0
        %v7167 = vsel %vm909, %v7104, 0
        %v7169 = vsel %vm909, %v7106, 0
        %v7171 = vsel %vm909, %v7108, 0
        %v7173 = vsel %vm909, %v7110, 0
        %v7175 = vsel %vm909, %v7112, 0
        %v7177 = vsel %vm909, %v7114, 0
        %v7179 = vsel %vm909, %v7116, 0
        %v7181 = vsel %vm909, %v7118, 0
        %v7183 = vsel %vm909, %v7120, 0
        %v7185 = vsel %vm909, %v7122, 0
        %v7187 = vsel %vm909, %v7124, 0
        %v7189 = vsel %vm909, %v7126, 0
        %v7191 = vsel %vm909, %v7128, 0
        %v7193 = vsel %vm909, %v7130, 0
        %7195 = vmatprep.subr.mxu0 0.0
        %7196 = vmatpush1.xpose.msra.mxu0 %v7193
        %7197 = vmatprep.subr.mxu0 0.0
        %7198 = vmatpush1.xpose.msra.mxu0 %v7191
        %7199 = vmatprep.subr.mxu0 0.0
        %7200 = vmatpush1.xpose.msra.mxu0 %v7189
        %7201 = vmatprep.subr.mxu0 0.0
        %7202 = vmatpush1.xpose.msra.mxu0 %v7187
        %7203 = vmatprep.subr.mxu0 0.0
        %7204 = vmatpush1.xpose.msra.mxu0 %v7185
        %7205 = vmatprep.subr.mxu0 0.0
        %7206 = vmatpush1.xpose.msra.mxu0 %v7183
        %7207 = vmatprep.subr.mxu0 0.0
        %7208 = vmatpush1.xpose.msra.mxu0 %v7181
        %7209 = vmatprep.subr.mxu0 0.0
        %7210 = vmatpush1.xpose.msra.mxu0 %v7179
        %7211 = vmatprep.subr.mxu0 0.0
        %7212 = vmatpush1.xpose.msra.mxu0 %v7177
        %7213 = vmatprep.subr.mxu0 0.0
        %7214 = vmatpush1.xpose.msra.mxu0 %v7175
        %7215 = vmatprep.subr.mxu0 0.0
        %7216 = vmatpush1.xpose.msra.mxu0 %v7173
        %7217 = vmatprep.subr.mxu0 0.0
        %7218 = vmatpush1.xpose.msra.mxu0 %v7171
        %7219 = vmatprep.subr.mxu0 0.0
        %7220 = vmatpush1.xpose.msra.mxu0 %v7169
        %7221 = vmatprep.subr.mxu0 0.0
        %7222 = vmatpush1.xpose.msra.mxu0 %v7167
        %7223 = vmatprep.subr.mxu0 0.0
        %7224 = vmatpush1.xpose.msra.mxu0 %v7165
        %7225 = vmatprep.subr.mxu0 0.0
        %7226 = vmatpush1.xpose.msra.mxu0 %v7163
        %7227 = vmatprep.subr.mxu0 0.0
        %7228 = vmatpush2.xpose.msra.mxu0 0.0
        %7229 = vmatprep.subr.mxu0 0.0
        %7230 = vmatpush2.xpose.msra.mxu0 0.0
        %7231 = vmatprep.subr.mxu0 0.0
        %7232 = vmatpush2.xpose.msra.mxu0 0.0
        %7233 = vmatprep.subr.mxu0 0.0
        %7234 = vmatpush2.xpose.msra.mxu0 0.0
        %7235 = vmatprep.subr.mxu0 0.0
        %7236 = vmatpush2.xpose.msra.mxu0 0.0
        %7237 = vmatprep.subr.mxu0 0.0
        %7238 = vmatpush2.xpose.msra.mxu0 0.0
        %7239 = vmatprep.subr.mxu0 0.0
        %7240 = vmatpush2.xpose.msra.mxu0 0.0
        %7241 = vmatprep.subr.mxu0 0.0
        %7242 = vmatpush2.xpose.msra.mxu0 0.0
        %7243 = vmatprep.subr.mxu0 0.0
        %7244 = vmatpush2.xpose.msra.mxu0 0.0
        %7245 = vmatprep.subr.mxu0 0.0
        %7246 = vmatpush2.xpose.msra.mxu0 0.0
        %7247 = vmatprep.subr.mxu0 0.0
        %7248 = vmatpush2.xpose.msra.mxu0 0.0
        %7249 = vmatprep.subr.mxu0 0.0
        %7250 = vmatpush2.xpose.msra.mxu0 0.0
        %7251 = vmatprep.subr.mxu0 0.0
        %7252 = vmatpush2.xpose.msra.mxu0 0.0
        %7253 = vmatprep.subr.mxu0 0.0
        %7254 = vmatpush2.xpose.msra.mxu0 0.0
        %7255 = vmatprep.subr.mxu0 0.0
        %7256 = vmatpush2.xpose.msra.mxu0 0.0
        %7257 = vmatprep.subr.mxu0 0.0
        %7258 = vmatpush2.xpose.msra.mxu0 0.0
        %7259 = vmatprep.mubr.f32.mxu0 0.0
        %7260 = vmatmul.mubr.f32.gmra.mxu0 %v7131
        %v7261 = vpop.f32.mrf.mxu0
        %v7262 = vadd.f32 0.0, %v7261
        %v7263 = vpop.f32.mrf.mxu0
        %7264 = vmatprep.mubr.f32.mxu0 0.0
        %7265 = vmatmul.mubr.f32.gmra.mxu0 %v7133
        %v7266 = vpop.f32.mrf.mxu0
        %v7267 = vadd.f32 0.0, %v7266
        %v7268 = vpop.f32.mrf.mxu0
        %7269 = vmatprep.mubr.f32.mxu0 0.0
        %7270 = vmatmul.mubr.f32.gmra.mxu0 %v7135
        %v7271 = vpop.f32.mrf.mxu0
        %v7272 = vadd.f32 0.0, %v7271
        %v7273 = vpop.f32.mrf.mxu0
        %7274 = vmatprep.mubr.f32.mxu0 0.0
        %7275 = vmatmul.mubr.f32.gmra.mxu0 %v7137
        %v7276 = vpop.f32.mrf.mxu0
        %v7277 = vadd.f32 0.0, %v7276
        %v7278 = vpop.f32.mrf.mxu0
        %7279 = vmatprep.mubr.f32.mxu0 0.0
        %7280 = vmatmul.mubr.f32.gmra.mxu0 %v7139
        %v7281 = vpop.f32.mrf.mxu0
        %v7282 = vadd.f32 0.0, %v7281
        %v7283 = vpop.f32.mrf.mxu0
        %7284 = vmatprep.mubr.f32.mxu0 0.0
        %7285 = vmatmul.mubr.f32.gmra.mxu0 %v7141
        %v7286 = vpop.f32.mrf.mxu0
        %v7287 = vadd.f32 0.0, %v7286
        %v7288 = vpop.f32.mrf.mxu0
        %7289 = vmatprep.mubr.f32.mxu0 0.0
        %7290 = vmatmul.mubr.f32.gmra.mxu0 %v7143
        %v7291 = vpop.f32.mrf.mxu0
        %v7292 = vadd.f32 0.0, %v7291
        %v7293 = vpop.f32.mrf.mxu0
        %7294 = vmatprep.mubr.f32.mxu0 0.0
        %7295 = vmatmul.mubr.f32.gmra.mxu0 %v7145
        %v7296 = vpop.f32.mrf.mxu0
        %v7297 = vadd.f32 0.0, %v7296
        %v7298 = vpop.f32.mrf.mxu0
        %7299 = vmatprep.mubr.f32.mxu0 0.0
        %7300 = vmatmul.mubr.f32.gmra.mxu0 %v7147
        %v7301 = vpop.f32.mrf.mxu0
        %v7302 = vadd.f32 0.0, %v7301
        %v7303 = vpop.f32.mrf.mxu0
        %7304 = vmatprep.mubr.f32.mxu0 0.0
        %7305 = vmatmul.mubr.f32.gmra.mxu0 %v7149
        %v7306 = vpop.f32.mrf.mxu0
        %v7307 = vadd.f32 0.0, %v7306
        %v7308 = vpop.f32.mrf.mxu0
        %7309 = vmatprep.mubr.f32.mxu0 0.0
        %7310 = vmatmul.mubr.f32.gmra.mxu0 %v7151
        %v7311 = vpop.f32.mrf.mxu0
        %v7312 = vadd.f32 0.0, %v7311
        %v7313 = vpop.f32.mrf.mxu0
        %7314 = vmatprep.mubr.f32.mxu0 0.0
        %7315 = vmatmul.mubr.f32.gmra.mxu0 %v7153
        %v7316 = vpop.f32.mrf.mxu0
        %v7317 = vadd.f32 0.0, %v7316
        %v7318 = vpop.f32.mrf.mxu0
        %7319 = vmatprep.mubr.f32.mxu0 0.0
        %7320 = vmatmul.mubr.f32.gmra.mxu0 %v7155
        %v7321 = vpop.f32.mrf.mxu0
        %v7322 = vadd.f32 0.0, %v7321
        %v7323 = vpop.f32.mrf.mxu0
        %7324 = vmatprep.mubr.f32.mxu0 0.0
        %7325 = vmatmul.mubr.f32.gmra.mxu0 %v7157
        %v7326 = vpop.f32.mrf.mxu0
        %v7327 = vadd.f32 0.0, %v7326
        %v7328 = vpop.f32.mrf.mxu0
        %7329 = vmatprep.mubr.f32.mxu0 0.0
        %7330 = vmatmul.mubr.f32.gmra.mxu0 %v7159
        %v7331 = vpop.f32.mrf.mxu0
        %v7332 = vadd.f32 0.0, %v7331
        %v7333 = vpop.f32.mrf.mxu0
        %7334 = vmatprep.mubr.f32.mxu0 0.0
        %7335 = vmatmul.mubr.f32.gmra.mxu0 %v7161
        %v7336 = vpop.f32.mrf.mxu0
        %v7337 = vadd.f32 0.0, %v7336
        %v7338 = vpop.f32.mrf.mxu0
        %7339 = vdwg.mxu0
        %v7340 = vmul.f32 %v7262, 0.35355338
        %v7341 = vmul.f32 %v7267, 0.35355338
        %v7342 = vmul.f32 %v7272, 0.35355338
        %v7343 = vmul.f32 %v7277, 0.35355338
        %v7344 = vmul.f32 %v7282, 0.35355338
        %v7345 = vmul.f32 %v7287, 0.35355338
        %v7346 = vmul.f32 %v7292, 0.35355338
        %v7347 = vmul.f32 %v7297, 0.35355338
        %v7348 = vmul.f32 %v7302, 0.35355338
        %v7349 = vmul.f32 %v7307, 0.35355338
        %v7350 = vmul.f32 %v7312, 0.35355338
        %v7351 = vmul.f32 %v7317, 0.35355338
        %v7352 = vmul.f32 %v7322, 0.35355338
        %v7353 = vmul.f32 %v7327, 0.35355338
        %v7354 = vmul.f32 %v7332, 0.35355338
        %v7355 = vmul.f32 %v7337, 0.35355338
        %v7356 = vadd.f32 %v7340, %v4671
        %v7357 = vadd.f32 %v7341, %v4672
        %v7358 = vadd.f32 %v7342, %v4673
        %v7359 = vadd.f32 %v7343, %v4674
        %v7360 = vadd.f32 %v7344, %v4675
        %v7361 = vadd.f32 %v7345, %v4676
        %v7362 = vadd.f32 %v7346, %v4677
        %v7363 = vadd.f32 %v7347, %v4678
        %v7364 = vadd.f32 %v7348, %v4679
        %v7365 = vadd.f32 %v7349, %v4680
        %v7366 = vadd.f32 %v7350, %v4681
        %v7367 = vadd.f32 %v7351, %v4682
        %v7368 = vadd.f32 %v7352, %v4683
        %v7369 = vadd.f32 %v7353, %v4684
        %v7370 = vadd.f32 %v7354, %v4685
        %v7371 = vadd.f32 %v7355, %v4686
        %7372 = vmax.xlane.f32.xlu0 %v7356
        %v7373 = vpop.xlane.xlu0 %7372
        %7374 = vmax.xlane.f32.xlu0 %v7357
        %v7375 = vpop.xlane.xlu0 %7374
        %7376 = vmax.xlane.f32.xlu0 %v7358
        %v7377 = vpop.xlane.xlu0 %7376
        %7378 = vmax.xlane.f32.xlu0 %v7359
        %v7379 = vpop.xlane.xlu0 %7378
        %7380 = vmax.xlane.f32.xlu0 %v7360
        %v7381 = vpop.xlane.xlu0 %7380
        %7382 = vmax.xlane.f32.xlu0 %v7361
        %v7383 = vpop.xlane.xlu0 %7382
        %7384 = vmax.xlane.f32.xlu0 %v7362
        %v7385 = vpop.xlane.xlu0 %7384
        %7386 = vmax.xlane.f32.xlu0 %v7363
        %v7387 = vpop.xlane.xlu0 %7386
        %7388 = vmax.xlane.f32.xlu0 %v7364
        %v7389 = vpop.xlane.xlu0 %7388
        %7390 = vmax.xlane.f32.xlu0 %v7365
        %v7391 = vpop.xlane.xlu0 %7390
        %7392 = vmax.xlane.f32.xlu0 %v7366
        %v7393 = vpop.xlane.xlu0 %7392
        %7394 = vmax.xlane.f32.xlu0 %v7367
        %v7395 = vpop.xlane.xlu0 %7394
        %7396 = vmax.xlane.f32.xlu0 %v7368
        %v7397 = vpop.xlane.xlu0 %7396
        %7398 = vmax.xlane.f32.xlu0 %v7369
        %v7399 = vpop.xlane.xlu0 %7398
        %7400 = vmax.xlane.f32.xlu0 %v7370
        %v7401 = vpop.xlane.xlu0 %7400
        %7402 = vmax.xlane.f32.xlu0 %v7371
        %v7403 = vpop.xlane.xlu0 %7402
        %v7404 = vsub.f32 %v7356, %v7373
        %v7405 = vsub.f32 %v7357, %v7375
        %v7406 = vsub.f32 %v7358, %v7377
        %v7407 = vsub.f32 %v7359, %v7379
        %v7408 = vsub.f32 %v7360, %v7381
        %v7409 = vsub.f32 %v7361, %v7383
        %v7410 = vsub.f32 %v7362, %v7385
        %v7411 = vsub.f32 %v7363, %v7387
        %v7412 = vsub.f32 %v7364, %v7389
        %v7413 = vsub.f32 %v7365, %v7391
        %v7414 = vsub.f32 %v7366, %v7393
        %v7415 = vsub.f32 %v7367, %v7395
        %v7416 = vsub.f32 %v7368, %v7397
        %v7417 = vsub.f32 %v7369, %v7399
        %v7418 = vsub.f32 %v7370, %v7401
        %v7419 = vsub.f32 %v7371, %v7403
        %v7420 = vmul.f32 %v7404, 1.442695
        %v7421 = vpow.pop %v7420
        %v7422 = vmul.f32 %v7405, 1.442695
        %v7423 = vpow.pop %v7422
        %v7424 = vmul.f32 %v7406, 1.442695
        %v7425 = vpow.pop %v7424
        %v7426 = vmul.f32 %v7407, 1.442695
        %v7427 = vpow.pop %v7426
        %v7428 = vmul.f32 %v7408, 1.442695
        %v7429 = vpow.pop %v7428
        %v7430 = vmul.f32 %v7409, 1.442695
        %v7431 = vpow.pop %v7430
        %v7432 = vmul.f32 %v7410, 1.442695
        %v7433 = vpow.pop %v7432
        %v7434 = vmul.f32 %v7411, 1.442695
        %v7435 = vpow.pop %v7434
        %v7436 = vmul.f32 %v7412, 1.442695
        %v7437 = vpow.pop %v7436
        %v7438 = vmul.f32 %v7413, 1.442695
        %v7439 = vpow.pop %v7438
        %v7440 = vmul.f32 %v7414, 1.442695
        %v7441 = vpow.pop %v7440
        %v7442 = vmul.f32 %v7415, 1.442695
        %v7443 = vpow.pop %v7442
        %v7444 = vmul.f32 %v7416, 1.442695
        %v7445 = vpow.pop %v7444
        %v7446 = vmul.f32 %v7417, 1.442695
        %v7447 = vpow.pop %v7446
        %v7448 = vmul.f32 %v7418, 1.442695
        %v7449 = vpow.pop %v7448
        %v7450 = vmul.f32 %v7419, 1.442695
        %v7451 = vpow.pop %v7450
        %7452 = vadd.xlane.f32.xlu0 %v7421
        %v7453 = vpop.xlane.xlu0 %7452
        %7454 = vadd.xlane.f32.xlu0 %v7423
        %v7455 = vpop.xlane.xlu0 %7454
        %7456 = vadd.xlane.f32.xlu0 %v7425
        %v7457 = vpop.xlane.xlu0 %7456
        %7458 = vadd.xlane.f32.xlu0 %v7427
        %v7459 = vpop.xlane.xlu0 %7458
        %7460 = vadd.xlane.f32.xlu0 %v7429
        %v7461 = vpop.xlane.xlu0 %7460
        %7462 = vadd.xlane.f32.xlu0 %v7431
        %v7463 = vpop.xlane.xlu0 %7462
        %7464 = vadd.xlane.f32.xlu0 %v7433
        %v7465 = vpop.xlane.xlu0 %7464
        %7466 = vadd.xlane.f32.xlu0 %v7435
        %v7467 = vpop.xlane.xlu0 %7466
        %7468 = vadd.xlane.f32.xlu0 %v7437
        %v7469 = vpop.xlane.xlu0 %7468
        %7470 = vadd.xlane.f32.xlu0 %v7439
        %v7471 = vpop.xlane.xlu0 %7470
        %7472 = vadd.xlane.f32.xlu0 %v7441
        %v7473 = vpop.xlane.xlu0 %7472
        %7474 = vadd.xlane.f32.xlu0 %v7443
        %v7475 = vpop.xlane.xlu0 %7474
        %7476 = vadd.xlane.f32.xlu0 %v7445
        %v7477 = vpop.xlane.xlu0 %7476
        %7478 = vadd.xlane.f32.xlu0 %v7447
        %v7479 = vpop.xlane.xlu0 %7478
        %7480 = vadd.xlane.f32.xlu0 %v7449
        %v7481 = vpop.xlane.xlu0 %7480
        %7482 = vadd.xlane.f32.xlu0 %v7451
        %v7483 = vpop.xlane.xlu0 %7482
        %v7484 = vrcp.pop %v7453
        %v7485 = vrcp.pop %v7455
        %v7486 = vrcp.pop %v7457
        %v7487 = vrcp.pop %v7459
        %v7488 = vrcp.pop %v7461
        %v7489 = vrcp.pop %v7463
        %v7490 = vrcp.pop %v7465
        %v7491 = vrcp.pop %v7467
        %v7492 = vrcp.pop %v7469
        %v7493 = vrcp.pop %v7471
        %v7494 = vrcp.pop %v7473
        %v7495 = vrcp.pop %v7475
        %v7496 = vrcp.pop %v7477
        %v7497 = vrcp.pop %v7479
        %v7498 = vrcp.pop %v7481
        %v7499 = vrcp.pop %v7483
        %v7500 = vmul.f32 %v7421, %v7484
        %v7501 = vmul.f32 %v7423, %v7485
        %v7502 = vmul.f32 %v7425, %v7486
        %v7503 = vmul.f32 %v7427, %v7487
        %v7504 = vmul.f32 %v7429, %v7488
        %v7505 = vmul.f32 %v7431, %v7489
        %v7506 = vmul.f32 %v7433, %v7490
        %v7507 = vmul.f32 %v7435, %v7491
        %v7508 = vmul.f32 %v7437, %v7492
        %v7509 = vmul.f32 %v7439, %v7493
        %v7510 = vmul.f32 %v7441, %v7494
        %v7511 = vmul.f32 %v7443, %v7495
        %v7512 = vmul.f32 %v7445, %v7496
        %v7513 = vmul.f32 %v7447, %v7497
        %v7514 = vmul.f32 %v7449, %v7498
        %v7515 = vmul.f32 %v7451, %v7499
        %7516 = vrot.lane.b32.xlu0 %v5079, 40
        %v7517 = vpop.permute.xlu0 %7516
        %7518 = vrot.lane.b32.xlu0 %v5084, 40
        %v7519 = vpop.permute.xlu0 %7518
        %7520 = vrot.lane.b32.xlu0 %v5089, 40
        %v7521 = vpop.permute.xlu0 %7520
        %7522 = vrot.lane.b32.xlu0 %v5094, 40
        %v7523 = vpop.permute.xlu0 %7522
        %7524 = vrot.lane.b32.xlu0 %v5099, 40
        %v7525 = vpop.permute.xlu0 %7524
        %7526 = vrot.lane.b32.xlu0 %v5104, 40
        %v7527 = vpop.permute.xlu0 %7526
        %7528 = vrot.lane.b32.xlu0 %v5109, 40
        %v7529 = vpop.permute.xlu0 %7528
        %7530 = vrot.lane.b32.xlu0 %v5114, 40
        %v7531 = vpop.permute.xlu0 %7530
        %7532 = vrot.lane.b32.xlu0 %v5119, 40
        %v7533 = vpop.permute.xlu0 %7532
        %7534 = vrot.lane.b32.xlu0 %v5124, 40
        %v7535 = vpop.permute.xlu0 %7534
        %7536 = vrot.lane.b32.xlu0 %v5129, 40
        %v7537 = vpop.permute.xlu0 %7536
        %7538 = vrot.lane.b32.xlu0 %v5134, 40
        %v7539 = vpop.permute.xlu0 %7538
        %7540 = vrot.lane.b32.xlu0 %v5139, 40
        %v7541 = vpop.permute.xlu0 %7540
        %7542 = vrot.lane.b32.xlu0 %v5144, 40
        %v7543 = vpop.permute.xlu0 %7542
        %7544 = vrot.lane.b32.xlu0 %v5149, 40
        %v7545 = vpop.permute.xlu0 %7544
        %7546 = vrot.lane.b32.xlu0 %v5154, 40
        %v7547 = vpop.permute.xlu0 %7546
        %7564 = vmatprep.subr.mxu0 0.0
        %7565 = vmatpush1.msra.mxu0 %v7547
        %7566 = vmatprep.subr.mxu0 0.0
        %7567 = vmatpush1.msra.mxu0 %v7545
        %7568 = vmatprep.subr.mxu0 0.0
        %7569 = vmatpush1.msra.mxu0 %v7543
        %7570 = vmatprep.subr.mxu0 0.0
        %7571 = vmatpush1.msra.mxu0 %v7541
        %7572 = vmatprep.subr.mxu0 0.0
        %7573 = vmatpush1.msra.mxu0 %v7539
        %7574 = vmatprep.subr.mxu0 0.0
        %7575 = vmatpush1.msra.mxu0 %v7537
        %7576 = vmatprep.subr.mxu0 0.0
        %7577 = vmatpush1.msra.mxu0 %v7535
        %7578 = vmatprep.subr.mxu0 0.0
        %7579 = vmatpush1.msra.mxu0 %v7533
        %7580 = vmatprep.subr.mxu0 0.0
        %7581 = vmatpush1.msra.mxu0 %v7531
        %7582 = vmatprep.subr.mxu0 0.0
        %7583 = vmatpush1.msra.mxu0 %v7529
        %7584 = vmatprep.subr.mxu0 0.0
        %7585 = vmatpush1.msra.mxu0 %v7527
        %7586 = vmatprep.subr.mxu0 0.0
        %7587 = vmatpush1.msra.mxu0 %v7525
        %7588 = vmatprep.subr.mxu0 0.0
        %7589 = vmatpush1.msra.mxu0 %v7523
        %7590 = vmatprep.subr.mxu0 0.0
        %7591 = vmatpush1.msra.mxu0 %v7521
        %7592 = vmatprep.subr.mxu0 0.0
        %7593 = vmatpush1.msra.mxu0 %v7519
        %7594 = vmatprep.subr.mxu0 0.0
        %7595 = vmatpush1.msra.mxu0 %v7517
        %7596 = vmatprep.subr.mxu0 0.0
        %7597 = vmatpush2.msra.mxu0 0.0
        %7598 = vmatprep.subr.mxu0 0.0
        %7599 = vmatpush2.msra.mxu0 0.0
        %7600 = vmatprep.subr.mxu0 0.0
        %7601 = vmatpush2.msra.mxu0 0.0
        %7602 = vmatprep.subr.mxu0 0.0
        %7603 = vmatpush2.msra.mxu0 0.0
        %7604 = vmatprep.subr.mxu0 0.0
        %7605 = vmatpush2.msra.mxu0 0.0
        %7606 = vmatprep.subr.mxu0 0.0
        %7607 = vmatpush2.msra.mxu0 0.0
        %7608 = vmatprep.subr.mxu0 0.0
        %7609 = vmatpush2.msra.mxu0 0.0
        %7610 = vmatprep.subr.mxu0 0.0
        %7611 = vmatpush2.msra.mxu0 0.0
        %7612 = vmatprep.subr.mxu0 0.0
        %7613 = vmatpush2.msra.mxu0 0.0
        %7614 = vmatprep.subr.mxu0 0.0
        %7615 = vmatpush2.msra.mxu0 0.0
        %7616 = vmatprep.subr.mxu0 0.0
        %7617 = vmatpush2.msra.mxu0 0.0
        %7618 = vmatprep.subr.mxu0 0.0
        %7619 = vmatpush2.msra.mxu0 0.0
        %7620 = vmatprep.subr.mxu0 0.0
        %7621 = vmatpush2.msra.mxu0 0.0
        %7622 = vmatprep.subr.mxu0 0.0
        %7623 = vmatpush2.msra.mxu0 0.0
        %7624 = vmatprep.subr.mxu0 0.0
        %7625 = vmatpush2.msra.mxu0 0.0
        %7626 = vmatprep.subr.mxu0 0.0
        %7627 = vmatpush2.msra.mxu0 0.0
        %7628 = vmatprep.mubr.f32.mxu0 0.0
        %7629 = vmatmul.mubr.f32.gmra.mxu0 %v7500
        %v7630 = vpop.f32.mrf.mxu0
        %v7631 = vadd.f32 0.0, %v7630
        %v7632 = vpop.f32.mrf.mxu0
        %7633 = vmatprep.mubr.f32.mxu0 0.0
        %7634 = vmatmul.mubr.f32.gmra.mxu0 %v7501
        %v7635 = vpop.f32.mrf.mxu0
        %v7636 = vadd.f32 0.0, %v7635
        %v7637 = vpop.f32.mrf.mxu0
        %7638 = vmatprep.mubr.f32.mxu0 0.0
        %7639 = vmatmul.mubr.f32.gmra.mxu0 %v7502
        %v7640 = vpop.f32.mrf.mxu0
        %v7641 = vadd.f32 0.0, %v7640
        %v7642 = vpop.f32.mrf.mxu0
        %7643 = vmatprep.mubr.f32.mxu0 0.0
        %7644 = vmatmul.mubr.f32.gmra.mxu0 %v7503
        %v7645 = vpop.f32.mrf.mxu0
        %v7646 = vadd.f32 0.0, %v7645
        %v7647 = vpop.f32.mrf.mxu0
        %7648 = vmatprep.mubr.f32.mxu0 0.0
        %7649 = vmatmul.mubr.f32.gmra.mxu0 %v7504
        %v7650 = vpop.f32.mrf.mxu0
        %v7651 = vadd.f32 0.0, %v7650
        %v7652 = vpop.f32.mrf.mxu0
        %7653 = vmatprep.mubr.f32.mxu0 0.0
        %7654 = vmatmul.mubr.f32.gmra.mxu0 %v7505
        %v7655 = vpop.f32.mrf.mxu0
        %v7656 = vadd.f32 0.0, %v7655
        %v7657 = vpop.f32.mrf.mxu0
        %7658 = vmatprep.mubr.f32.mxu0 0.0
        %7659 = vmatmul.mubr.f32.gmra.mxu0 %v7506
        %v7660 = vpop.f32.mrf.mxu0
        %v7661 = vadd.f32 0.0, %v7660
        %v7662 = vpop.f32.mrf.mxu0
        %7663 = vmatprep.mubr.f32.mxu0 0.0
        %7664 = vmatmul.mubr.f32.gmra.mxu0 %v7507
        %v7665 = vpop.f32.mrf.mxu0
        %v7666 = vadd.f32 0.0, %v7665
        %v7667 = vpop.f32.mrf.mxu0
        %7668 = vmatprep.mubr.f32.mxu0 0.0
        %7669 = vmatmul.mubr.f32.gmra.mxu0 %v7508
        %v7670 = vpop.f32.mrf.mxu0
        %v7671 = vadd.f32 0.0, %v7670
        %v7672 = vpop.f32.mrf.mxu0
        %7673 = vmatprep.mubr.f32.mxu0 0.0
        %7674 = vmatmul.mubr.f32.gmra.mxu0 %v7509
        %v7675 = vpop.f32.mrf.mxu0
        %v7676 = vadd.f32 0.0, %v7675
        %v7677 = vpop.f32.mrf.mxu0
        %7678 = vmatprep.mubr.f32.mxu0 0.0
        %7679 = vmatmul.mubr.f32.gmra.mxu0 %v7510
        %v7680 = vpop.f32.mrf.mxu0
        %v7681 = vadd.f32 0.0, %v7680
        %v7682 = vpop.f32.mrf.mxu0
        %7683 = vmatprep.mubr.f32.mxu0 0.0
        %7684 = vmatmul.mubr.f32.gmra.mxu0 %v7511
        %v7685 = vpop.f32.mrf.mxu0
        %v7686 = vadd.f32 0.0, %v7685
        %v7687 = vpop.f32.mrf.mxu0
        %7688 = vmatprep.mubr.f32.mxu0 0.0
        %7689 = vmatmul.mubr.f32.gmra.mxu0 %v7512
        %v7690 = vpop.f32.mrf.mxu0
        %v7691 = vadd.f32 0.0, %v7690
        %v7692 = vpop.f32.mrf.mxu0
        %7693 = vmatprep.mubr.f32.mxu0 0.0
        %7694 = vmatmul.mubr.f32.gmra.mxu0 %v7513
        %v7695 = vpop.f32.mrf.mxu0
        %v7696 = vadd.f32 0.0, %v7695
        %v7697 = vpop.f32.mrf.mxu0
        %7698 = vmatprep.mubr.f32.mxu0 0.0
        %7699 = vmatmul.mubr.f32.gmra.mxu0 %v7514
        %v7700 = vpop.f32.mrf.mxu0
        %v7701 = vadd.f32 0.0, %v7700
        %v7702 = vpop.f32.mrf.mxu0
        %7703 = vmatprep.mubr.f32.mxu0 0.0
        %7704 = vmatmul.mubr.f32.gmra.mxu0 %v7515
        %v7705 = vpop.f32.mrf.mxu0
        %v7706 = vadd.f32 0.0, %v7705
        %v7707 = vpop.f32.mrf.mxu0
        %7708 = vdwg.mxu0
        %7725 = vrot.lane.b32.xlu0 %v6347, 8
        %v7726 = vpop.permute.xlu0 %7725
        %7727 = vrot.lane.b32.xlu0 %v6352, 8
        %v7728 = vpop.permute.xlu0 %7727
        %7729 = vrot.lane.b32.xlu0 %v6357, 8
        %v7730 = vpop.permute.xlu0 %7729
        %7731 = vrot.lane.b32.xlu0 %v6362, 8
        %v7732 = vpop.permute.xlu0 %7731
        %7733 = vrot.lane.b32.xlu0 %v6367, 8
        %v7734 = vpop.permute.xlu0 %7733
        %7735 = vrot.lane.b32.xlu0 %v6372, 8
        %v7736 = vpop.permute.xlu0 %7735
        %7737 = vrot.lane.b32.xlu0 %v6377, 8
        %v7738 = vpop.permute.xlu0 %7737
        %7739 = vrot.lane.b32.xlu0 %v6382, 8
        %v7740 = vpop.permute.xlu0 %7739
        %7741 = vrot.lane.b32.xlu0 %v6387, 8
        %v7742 = vpop.permute.xlu0 %7741
        %7743 = vrot.lane.b32.xlu0 %v6392, 8
        %v7744 = vpop.permute.xlu0 %7743
        %7745 = vrot.lane.b32.xlu0 %v6397, 8
        %v7746 = vpop.permute.xlu0 %7745
        %7747 = vrot.lane.b32.xlu0 %v6402, 8
        %v7748 = vpop.permute.xlu0 %7747
        %7749 = vrot.lane.b32.xlu0 %v6407, 8
        %v7750 = vpop.permute.xlu0 %7749
        %7751 = vrot.lane.b32.xlu0 %v6412, 8
        %v7752 = vpop.permute.xlu0 %7751
        %7753 = vrot.lane.b32.xlu0 %v6417, 8
        %v7754 = vpop.permute.xlu0 %7753
        %7755 = vrot.lane.b32.xlu0 %v6422, 8
        %v7756 = vpop.permute.xlu0 %7755
        %7789 = vrot.lane.b32.xlu0 %v6989, 16
        %v7790 = vpop.permute.xlu0 %7789
        %7791 = vrot.lane.b32.xlu0 %v6994, 16
        %v7792 = vpop.permute.xlu0 %7791
        %7793 = vrot.lane.b32.xlu0 %v6999, 16
        %v7794 = vpop.permute.xlu0 %7793
        %7795 = vrot.lane.b32.xlu0 %v7004, 16
        %v7796 = vpop.permute.xlu0 %7795
        %7797 = vrot.lane.b32.xlu0 %v7009, 16
        %v7798 = vpop.permute.xlu0 %7797
        %7799 = vrot.lane.b32.xlu0 %v7014, 16
        %v7800 = vpop.permute.xlu0 %7799
        %7801 = vrot.lane.b32.xlu0 %v7019, 16
        %v7802 = vpop.permute.xlu0 %7801
        %7803 = vrot.lane.b32.xlu0 %v7024, 16
        %v7804 = vpop.permute.xlu0 %7803
        %7805 = vrot.lane.b32.xlu0 %v7029, 16
        %v7806 = vpop.permute.xlu0 %7805
        %7807 = vrot.lane.b32.xlu0 %v7034, 16
        %v7808 = vpop.permute.xlu0 %7807
        %7809 = vrot.lane.b32.xlu0 %v7039, 16
        %v7810 = vpop.permute.xlu0 %7809
        %7811 = vrot.lane.b32.xlu0 %v7044, 16
        %v7812 = vpop.permute.xlu0 %7811
        %7813 = vrot.lane.b32.xlu0 %v7049, 16
        %v7814 = vpop.permute.xlu0 %7813
        %7815 = vrot.lane.b32.xlu0 %v7054, 16
        %v7816 = vpop.permute.xlu0 %7815
        %7817 = vrot.lane.b32.xlu0 %v7059, 16
        %v7818 = vpop.permute.xlu0 %7817
        %7819 = vrot.lane.b32.xlu0 %v7064, 16
        %v7820 = vpop.permute.xlu0 %7819
        %7853 = vrot.lane.b32.xlu0 %v7631, 24
        %v7854 = vpop.permute.xlu0 %7853
        %7855 = vrot.lane.b32.xlu0 %v7636, 24
        %v7856 = vpop.permute.xlu0 %7855
        %7857 = vrot.lane.b32.xlu0 %v7641, 24
        %v7858 = vpop.permute.xlu0 %7857
        %7859 = vrot.lane.b32.xlu0 %v7646, 24
        %v7860 = vpop.permute.xlu0 %7859
        %7861 = vrot.lane.b32.xlu0 %v7651, 24
        %v7862 = vpop.permute.xlu0 %7861
        %7863 = vrot.lane.b32.xlu0 %v7656, 24
        %v7864 = vpop.permute.xlu0 %7863
        %7865 = vrot.lane.b32.xlu0 %v7661, 24
        %v7866 = vpop.permute.xlu0 %7865
        %7867 = vrot.lane.b32.xlu0 %v7666, 24
        %v7868 = vpop.permute.xlu0 %7867
        %7869 = vrot.lane.b32.xlu0 %v7671, 24
        %v7870 = vpop.permute.xlu0 %7869
        %7871 = vrot.lane.b32.xlu0 %v7676, 24
        %v7872 = vpop.permute.xlu0 %7871
        %7873 = vrot.lane.b32.xlu0 %v7681, 24
        %v7874 = vpop.permute.xlu0 %7873
        %7875 = vrot.lane.b32.xlu0 %v7686, 24
        %v7876 = vpop.permute.xlu0 %7875
        %7877 = vrot.lane.b32.xlu0 %v7691, 24
        %v7878 = vpop.permute.xlu0 %7877
        %7879 = vrot.lane.b32.xlu0 %v7696, 24
        %v7880 = vpop.permute.xlu0 %7879
        %7881 = vrot.lane.b32.xlu0 %v7701, 24
        %v7882 = vpop.permute.xlu0 %7881
        %7883 = vrot.lane.b32.xlu0 %v7706, 24
        %v7884 = vpop.permute.xlu0 %7883
        %v7901 = vsel %vm909, %v5705, %v7726
        %v7902 = vsel %vm909, %v5710, %v7728
        %v7903 = vsel %vm909, %v5715, %v7730
        %v7904 = vsel %vm909, %v5720, %v7732
        %v7905 = vsel %vm909, %v5725, %v7734
        %v7906 = vsel %vm909, %v5730, %v7736
        %v7907 = vsel %vm909, %v5735, %v7738
        %v7908 = vsel %vm909, %v5740, %v7740
        %v7909 = vsel %vm909, %v5745, %v7742
        %v7910 = vsel %vm909, %v5750, %v7744
        %v7911 = vsel %vm909, %v5755, %v7746
        %v7912 = vsel %vm909, %v5760, %v7748
        %v7913 = vsel %vm909, %v5765, %v7750
        %v7914 = vsel %vm909, %v5770, %v7752
        %v7915 = vsel %vm909, %v5775, %v7754
        %v7916 = vsel %vm909, %v5780, %v7756
        %v7917 = vsel %vm3622, %v7901, %v7790
        %v7918 = vsel %vm3622, %v7902, %v7792
        %v7919 = vsel %vm3622, %v7903, %v7794
        %v7920 = vsel %vm3622, %v7904, %v7796
        %v7921 = vsel %vm3622, %v7905, %v7798
        %v7922 = vsel %vm3622, %v7906, %v7800
        %v7923 = vsel %vm3622, %v7907, %v7802
        %v7924 = vsel %vm3622, %v7908, %v7804
        %v7925 = vsel %vm3622, %v7909, %v7806
        %v7926 = vsel %vm3622, %v7910, %v7808
        %v7927 = vsel %vm3622, %v7911, %v7810
        %v7928 = vsel %vm3622, %v7912, %v7812
        %v7929 = vsel %vm3622, %v7913, %v7814
        %v7930 = vsel %vm3622, %v7914, %v7816
        %v7931 = vsel %vm3622, %v7915, %v7818
        %v7932 = vsel %vm3622, %v7916, %v7820
        %v7933 = vsel %vm3639, %v7917, %v7854
        %v7934 = vsel %vm3639, %v7918, %v7856
        %v7935 = vsel %vm3639, %v7919, %v7858
        %v7936 = vsel %vm3639, %v7920, %v7860
        %v7937 = vsel %vm3639, %v7921, %v7862
        %v7938 = vsel %vm3639, %v7922, %v7864
        %v7939 = vsel %vm3639, %v7923, %v7866
        %v7940 = vsel %vm3639, %v7924, %v7868
        %v7941 = vsel %vm3639, %v7925, %v7870
        %v7942 = vsel %vm3639, %v7926, %v7872
        %v7943 = vsel %vm3639, %v7927, %v7874
        %v7944 = vsel %vm3639, %v7928, %v7876
        %v7945 = vsel %vm3639, %v7929, %v7878
        %v7946 = vsel %vm3639, %v7930, %v7880
        %v7947 = vsel %vm3639, %v7931, %v7882
        %v7948 = vsel %vm3639, %v7932, %v7884
        %7953 = vrot.lane.b32.xlu0 %v4688, 32
        %v7954 = vpop.permute.xlu0 %7953
        %7955 = vrot.lane.b32.xlu0 %v4690, 32
        %v7956 = vpop.permute.xlu0 %7955
        %7957 = vrot.lane.b32.xlu0 %v4692, 32
        %v7958 = vpop.permute.xlu0 %7957
        %7959 = vrot.lane.b32.xlu0 %v4694, 32
        %v7960 = vpop.permute.xlu0 %7959
        %v7966 = vsel %vm414, %v7933, 0
        %v7969 = vsel %vm414, %v7934, 0
        %v7972 = vsel %vm414, %v7935, 0
        %v7975 = vsel %vm414, %v7936, 0
        %v7978 = vsel %vm414, %v7937, 0
        %v7981 = vsel %vm414, %v7938, 0
        %v7984 = vsel %vm414, %v7939, 0
        %v7987 = vsel %vm414, %v7940, 0
        %v7990 = vsel %vm414, %v7941, 0
        %v7993 = vsel %vm414, %v7942, 0
        %v7996 = vsel %vm414, %v7943, 0
        %v7999 = vsel %vm414, %v7944, 0
        %v8002 = vsel %vm414, %v7945, 0
        %v8005 = vsel %vm414, %v7946, 0
        %v8008 = vsel %vm414, %v7947, 0
        %v8011 = vsel %vm414, %v7948, 0
        %8013 = vmatprep.subr.mxu0 0.0
        %8014 = vmatpush1.msra.mxu0 0.0
        %8015 = vmatprep.subr.mxu0 0.0
        %8016 = vmatpush1.msra.mxu0 0.0
        %8017 = vmatprep.subr.mxu0 0.0
        %8018 = vmatpush1.msra.mxu0 0.0
        %8019 = vmatprep.subr.mxu0 0.0
        %8020 = vmatpush1.msra.mxu0 0.0
        %8021 = vmatprep.subr.mxu0 0.0
        %8022 = vmatpush1.msra.mxu0 0.0
        %8023 = vmatprep.subr.mxu0 0.0
        %8024 = vmatpush1.msra.mxu0 0.0
        %8025 = vmatprep.subr.mxu0 0.0
        %8026 = vmatpush1.msra.mxu0 0.0
        %8027 = vmatprep.subr.mxu0 0.0
        %8028 = vmatpush1.msra.mxu0 0.0
        %8029 = vmatprep.subr.mxu0 0.0
        %8030 = vmatpush1.msra.mxu0 0.0
        %8031 = vmatprep.subr.mxu0 0.0
        %8032 = vmatpush1.msra.mxu0 0.0
        %8033 = vmatprep.subr.mxu0 0.0
        %8034 = vmatpush1.msra.mxu0 0.0
        %8035 = vmatprep.subr.mxu0 0.0
        %8036 = vmatpush1.msra.mxu0 0.0
        %8037 = vmatprep.subr.mxu0 0.0
        %8038 = vmatpush1.msra.mxu0 %v7960
        %8039 = vmatprep.subr.mxu0 0.0
        %8040 = vmatpush1.msra.mxu0 %v7958
        %8041 = vmatprep.subr.mxu0 0.0
        %8042 = vmatpush1.msra.mxu0 %v7956
        %8043 = vmatprep.subr.mxu0 0.0
        %8044 = vmatpush1.msra.mxu0 %v7954
        %8045 = vmatprep.subr.mxu0 0.0
        %8046 = vmatpush2.msra.mxu0 0.0
        %8047 = vmatprep.subr.mxu0 0.0
        %8048 = vmatpush2.msra.mxu0 0.0
        %8049 = vmatprep.subr.mxu0 0.0
        %8050 = vmatpush2.msra.mxu0 0.0
        %8051 = vmatprep.subr.mxu0 0.0
        %8052 = vmatpush2.msra.mxu0 0.0
        %8053 = vmatprep.subr.mxu0 0.0
        %8054 = vmatpush2.msra.mxu0 0.0
        %8055 = vmatprep.subr.mxu0 0.0
        %8056 = vmatpush2.msra.mxu0 0.0
        %8057 = vmatprep.subr.mxu0 0.0
        %8058 = vmatpush2.msra.mxu0 0.0
        %8059 = vmatprep.subr.mxu0 0.0
        %8060 = vmatpush2.msra.mxu0 0.0
        %8061 = vmatprep.subr.mxu0 0.0
        %8062 = vmatpush2.msra.mxu0 0.0
        %8063 = vmatprep.subr.mxu0 0.0
        %8064 = vmatpush2.msra.mxu0 0.0
        %8065 = vmatprep.subr.mxu0 0.0
        %8066 = vmatpush2.msra.mxu0 0.0
        %8067 = vmatprep.subr.mxu0 0.0
        %8068 = vmatpush2.msra.mxu0 0.0
        %8069 = vmatprep.subr.mxu0 0.0
        %8070 = vmatpush2.msra.mxu0 0.0
        %8071 = vmatprep.subr.mxu0 0.0
        %8072 = vmatpush2.msra.mxu0 0.0
        %8073 = vmatprep.subr.mxu0 0.0
        %8074 = vmatpush2.msra.mxu0 0.0
        %8075 = vmatprep.subr.mxu0 0.0
        %8076 = vmatpush2.msra.mxu0 0.0
        %8077 = vmatprep.mubr.f32.mxu0 0.0
        %8078 = vmatmul.mubr.f32.gmra.mxu0 %v7966
        %v8079 = vpop.f32.mrf.mxu0
        %v8080 = vadd.f32 0.0, %v8079
        %v8081 = vpop.f32.mrf.mxu0
        %8082 = vmatprep.mubr.f32.mxu0 0.0
        %8083 = vmatmul.mubr.f32.gmra.mxu0 %v7969
        %v8084 = vpop.f32.mrf.mxu0
        %v8085 = vadd.f32 0.0, %v8084
        %v8086 = vpop.f32.mrf.mxu0
        %8087 = vmatprep.mubr.f32.mxu0 0.0
        %8088 = vmatmul.mubr.f32.gmra.mxu0 %v7972
        %v8089 = vpop.f32.mrf.mxu0
        %v8090 = vadd.f32 0.0, %v8089
        %v8091 = vpop.f32.mrf.mxu0
        %8092 = vmatprep.mubr.f32.mxu0 0.0
        %8093 = vmatmul.mubr.f32.gmra.mxu0 %v7975
        %v8094 = vpop.f32.mrf.mxu0
        %v8095 = vadd.f32 0.0, %v8094
        %v8096 = vpop.f32.mrf.mxu0
        %8097 = vmatprep.mubr.f32.mxu0 0.0
        %8098 = vmatmul.mubr.f32.gmra.mxu0 %v7978
        %v8099 = vpop.f32.mrf.mxu0
        %v8100 = vadd.f32 0.0, %v8099
        %v8101 = vpop.f32.mrf.mxu0
        %8102 = vmatprep.mubr.f32.mxu0 0.0
        %8103 = vmatmul.mubr.f32.gmra.mxu0 %v7981
        %v8104 = vpop.f32.mrf.mxu0
        %v8105 = vadd.f32 0.0, %v8104
        %v8106 = vpop.f32.mrf.mxu0
        %8107 = vmatprep.mubr.f32.mxu0 0.0
        %8108 = vmatmul.mubr.f32.gmra.mxu0 %v7984
        %v8109 = vpop.f32.mrf.mxu0
        %v8110 = vadd.f32 0.0, %v8109
        %v8111 = vpop.f32.mrf.mxu0
        %8112 = vmatprep.mubr.f32.mxu0 0.0
        %8113 = vmatmul.mubr.f32.gmra.mxu0 %v7987
        %v8114 = vpop.f32.mrf.mxu0
        %v8115 = vadd.f32 0.0, %v8114
        %v8116 = vpop.f32.mrf.mxu0
        %8117 = vmatprep.mubr.f32.mxu0 0.0
        %8118 = vmatmul.mubr.f32.gmra.mxu0 %v7990
        %v8119 = vpop.f32.mrf.mxu0
        %v8120 = vadd.f32 0.0, %v8119
        %v8121 = vpop.f32.mrf.mxu0
        %8122 = vmatprep.mubr.f32.mxu0 0.0
        %8123 = vmatmul.mubr.f32.gmra.mxu0 %v7993
        %v8124 = vpop.f32.mrf.mxu0
        %v8125 = vadd.f32 0.0, %v8124
        %v8126 = vpop.f32.mrf.mxu0
        %8127 = vmatprep.mubr.f32.mxu0 0.0
        %8128 = vmatmul.mubr.f32.gmra.mxu0 %v7996
        %v8129 = vpop.f32.mrf.mxu0
        %v8130 = vadd.f32 0.0, %v8129
        %v8131 = vpop.f32.mrf.mxu0
        %8132 = vmatprep.mubr.f32.mxu0 0.0
        %8133 = vmatmul.mubr.f32.gmra.mxu0 %v7999
        %v8134 = vpop.f32.mrf.mxu0
        %v8135 = vadd.f32 0.0, %v8134
        %v8136 = vpop.f32.mrf.mxu0
        %8137 = vmatprep.mubr.f32.mxu0 0.0
        %8138 = vmatmul.mubr.f32.gmra.mxu0 %v8002
        %v8139 = vpop.f32.mrf.mxu0
        %v8140 = vadd.f32 0.0, %v8139
        %v8141 = vpop.f32.mrf.mxu0
        %8142 = vmatprep.mubr.f32.mxu0 0.0
        %8143 = vmatmul.mubr.f32.gmra.mxu0 %v8005
        %v8144 = vpop.f32.mrf.mxu0
        %v8145 = vadd.f32 0.0, %v8144
        %v8146 = vpop.f32.mrf.mxu0
        %8147 = vmatprep.mubr.f32.mxu0 0.0
        %8148 = vmatmul.mubr.f32.gmra.mxu0 %v8008
        %v8149 = vpop.f32.mrf.mxu0
        %v8150 = vadd.f32 0.0, %v8149
        %v8151 = vpop.f32.mrf.mxu0
        %8152 = vmatprep.mubr.f32.mxu0 0.0
        %8153 = vmatmul.mubr.f32.gmra.mxu0 %v8011
        %v8154 = vpop.f32.mrf.mxu0
        %v8155 = vadd.f32 0.0, %v8154
        %v8156 = vpop.f32.mrf.mxu0
        %8157 = vdwg.mxu0
        %v8158 = vadd.f32 %v4655, %v8080
        %v8159 = vadd.f32 %v4656, %v8085
        %v8160 = vadd.f32 %v4657, %v8090
        %v8161 = vadd.f32 %v4658, %v8095
        %v8162 = vadd.f32 %v4659, %v8100
        %v8163 = vadd.f32 %v4660, %v8105
        %v8164 = vadd.f32 %v4661, %v8110
        %v8165 = vadd.f32 %v4662, %v8115
        %v8166 = vadd.f32 %v4663, %v8120
        %v8167 = vadd.f32 %v4664, %v8125
        %v8168 = vadd.f32 %v4665, %v8130
        %v8169 = vadd.f32 %v4666, %v8135
        %v8170 = vadd.f32 %v4667, %v8140
        %v8171 = vadd.f32 %v4668, %v8145
        %v8172 = vadd.f32 %v4669, %v8150
        %v8173 = vadd.f32 %v4670, %v8155
        %v8174 = vlaneseq
        %v8175 = vshrl.u32 %v8174, 7
        %v8176 = vsub.s32 3, %v8175
        %v8177 = vrot.slane %v4687, %v8176
        %v8178 = vadd.f32 %v8158, %v8177
        %v8179 = vadd.f32 %v8159, %v8177
        %v8180 = vadd.f32 %v8160, %v8177
        %v8181 = vadd.f32 %v8161, %v8177
        %v8182 = vadd.f32 %v8162, %v8177
        %v8183 = vadd.f32 %v8163, %v8177
        %v8184 = vadd.f32 %v8164, %v8177
        %v8185 = vadd.f32 %v8165, %v8177
        %v8186 = vadd.f32 %v8166, %v8177
        %v8187 = vadd.f32 %v8167, %v8177
        %v8188 = vadd.f32 %v8168, %v8177
        %v8189 = vadd.f32 %v8169, %v8177
        %v8190 = vadd.f32 %v8170, %v8177
        %v8191 = vadd.f32 %v8171, %v8177
        %v8192 = vadd.f32 %v8172, %v8177
        %v8193 = vadd.f32 %v8173, %v8177
        %v8194 = vsel %vm414, %v8178, 0.0
        %8195 = vadd.xlane.f32.xlu0 %v8194
        %v8196 = vpop.xlane.xlu0 %8195
        %v8197 = vsel %vm414, %v8179, 0.0
        %8198 = vadd.xlane.f32.xlu0 %v8197
        %v8199 = vpop.xlane.xlu0 %8198
        %v8200 = vsel %vm414, %v8180, 0.0
        %8201 = vadd.xlane.f32.xlu0 %v8200
        %v8202 = vpop.xlane.xlu0 %8201
        %v8203 = vsel %vm414, %v8181, 0.0
        %8204 = vadd.xlane.f32.xlu0 %v8203
        %v8205 = vpop.xlane.xlu0 %8204
        %v8206 = vsel %vm414, %v8182, 0.0
        %8207 = vadd.xlane.f32.xlu0 %v8206
        %v8208 = vpop.xlane.xlu0 %8207
        %v8209 = vsel %vm414, %v8183, 0.0
        %8210 = vadd.xlane.f32.xlu0 %v8209
        %v8211 = vpop.xlane.xlu0 %8210
        %v8212 = vsel %vm414, %v8184, 0.0
        %8213 = vadd.xlane.f32.xlu0 %v8212
        %v8214 = vpop.xlane.xlu0 %8213
        %v8215 = vsel %vm414, %v8185, 0.0
        %8216 = vadd.xlane.f32.xlu0 %v8215
        %v8217 = vpop.xlane.xlu0 %8216
        %v8218 = vsel %vm414, %v8186, 0.0
        %8219 = vadd.xlane.f32.xlu0 %v8218
        %v8220 = vpop.xlane.xlu0 %8219
        %v8221 = vsel %vm414, %v8187, 0.0
        %8222 = vadd.xlane.f32.xlu0 %v8221
        %v8223 = vpop.xlane.xlu0 %8222
        %v8224 = vsel %vm414, %v8188, 0.0
        %8225 = vadd.xlane.f32.xlu0 %v8224
        %v8226 = vpop.xlane.xlu0 %8225
        %v8227 = vsel %vm414, %v8189, 0.0
        %8228 = vadd.xlane.f32.xlu0 %v8227
        %v8229 = vpop.xlane.xlu0 %8228
        %v8230 = vsel %vm414, %v8190, 0.0
        %8231 = vadd.xlane.f32.xlu0 %v8230
        %v8232 = vpop.xlane.xlu0 %8231
        %v8233 = vsel %vm414, %v8191, 0.0
        %8234 = vadd.xlane.f32.xlu0 %v8233
        %v8235 = vpop.xlane.xlu0 %8234
        %v8236 = vsel %vm414, %v8192, 0.0
        %8237 = vadd.xlane.f32.xlu0 %v8236
        %v8238 = vpop.xlane.xlu0 %8237
        %v8239 = vsel %vm414, %v8193, 0.0
        %8240 = vadd.xlane.f32.xlu0 %v8239
        %v8241 = vpop.xlane.xlu0 %8240
        %v8242 = vmul.f32 %v8196, %v463
        %v8243 = vmul.f32 %v8199, %v463
        %v8244 = vmul.f32 %v8202, %v463
        %v8245 = vmul.f32 %v8205, %v463
        %v8246 = vmul.f32 %v8208, %v463
        %v8247 = vmul.f32 %v8211, %v463
        %v8248 = vmul.f32 %v8214, %v463
        %v8249 = vmul.f32 %v8217, %v463
        %v8250 = vmul.f32 %v8220, %v463
        %v8251 = vmul.f32 %v8223, %v463
        %v8252 = vmul.f32 %v8226, %v463
        %v8253 = vmul.f32 %v8229, %v463
        %v8254 = vmul.f32 %v8232, %v463
        %v8255 = vmul.f32 %v8235, %v463
        %v8256 = vmul.f32 %v8238, %v463
        %v8257 = vmul.f32 %v8241, %v463
        %v8258 = vsub.f32 %v8178, %v8242
        %v8259 = vsub.f32 %v8179, %v8243
        %v8260 = vsub.f32 %v8180, %v8244
        %v8261 = vsub.f32 %v8181, %v8245
        %v8262 = vsub.f32 %v8182, %v8246
        %v8263 = vsub.f32 %v8183, %v8247
        %v8264 = vsub.f32 %v8184, %v8248
        %v8265 = vsub.f32 %v8185, %v8249
        %v8266 = vsub.f32 %v8186, %v8250
        %v8267 = vsub.f32 %v8187, %v8251
        %v8268 = vsub.f32 %v8188, %v8252
        %v8269 = vsub.f32 %v8189, %v8253
        %v8270 = vsub.f32 %v8190, %v8254
        %v8271 = vsub.f32 %v8191, %v8255
        %v8272 = vsub.f32 %v8192, %v8256
        %v8273 = vsub.f32 %v8193, %v8257
        %v8274 = vmul.f32 %v8258, %v8258
        %v8275 = vmul.f32 %v8259, %v8259
        %v8276 = vmul.f32 %v8260, %v8260
        %v8277 = vmul.f32 %v8261, %v8261
        %v8278 = vmul.f32 %v8262, %v8262
        %v8279 = vmul.f32 %v8263, %v8263
        %v8280 = vmul.f32 %v8264, %v8264
        %v8281 = vmul.f32 %v8265, %v8265
        %v8282 = vmul.f32 %v8266, %v8266
        %v8283 = vmul.f32 %v8267, %v8267
        %v8284 = vmul.f32 %v8268, %v8268
        %v8285 = vmul.f32 %v8269, %v8269
        %v8286 = vmul.f32 %v8270, %v8270
        %v8287 = vmul.f32 %v8271, %v8271
        %v8288 = vmul.f32 %v8272, %v8272
        %v8289 = vmul.f32 %v8273, %v8273
        %v8290 = vsel %vm414, %v8274, 0.0
        %8291 = vadd.xlane.f32.xlu0 %v8290
        %v8292 = vpop.xlane.xlu0 %8291
        %v8293 = vsel %vm414, %v8275, 0.0
        %8294 = vadd.xlane.f32.xlu0 %v8293
        %v8295 = vpop.xlane.xlu0 %8294
        %v8296 = vsel %vm414, %v8276, 0.0
        %8297 = vadd.xlane.f32.xlu0 %v8296
        %v8298 = vpop.xlane.xlu0 %8297
        %v8299 = vsel %vm414, %v8277, 0.0
        %8300 = vadd.xlane.f32.xlu0 %v8299
        %v8301 = vpop.xlane.xlu0 %8300
        %v8302 = vsel %vm414, %v8278, 0.0
        %8303 = vadd.xlane.f32.xlu0 %v8302
        %v8304 = vpop.xlane.xlu0 %8303
        %v8305 = vsel %vm414, %v8279, 0.0
        %8306 = vadd.xlane.f32.xlu0 %v8305
        %v8307 = vpop.xlane.xlu0 %8306
        %v8308 = vsel %vm414, %v8280, 0.0
        %8309 = vadd.xlane.f32.xlu0 %v8308
        %v8310 = vpop.xlane.xlu0 %8309
        %v8311 = vsel %vm414, %v8281, 0.0
        %8312 = vadd.xlane.f32.xlu0 %v8311
        %v8313 = vpop.xlane.xlu0 %8312
        %v8314 = vsel %vm414, %v8282, 0.0
        %8315 = vadd.xlane.f32.xlu0 %v8314
        %v8316 = vpop.xlane.xlu0 %8315
        %v8317 = vsel %vm414, %v8283, 0.0
        %8318 = vadd.xlane.f32.xlu0 %v8317
        %v8319 = vpop.xlane.xlu0 %8318
        %v8320 = vsel %vm414, %v8284, 0.0
        %8321 = vadd.xlane.f32.xlu0 %v8320
        %v8322 = vpop.xlane.xlu0 %8321
        %v8323 = vsel %vm414, %v8285, 0.0
        %8324 = vadd.xlane.f32.xlu0 %v8323
        %v8325 = vpop.xlane.xlu0 %8324
        %v8326 = vsel %vm414, %v8286, 0.0
        %8327 = vadd.xlane.f32.xlu0 %v8326
        %v8328 = vpop.xlane.xlu0 %8327
        %v8329 = vsel %vm414, %v8287, 0.0
        %8330 = vadd.xlane.f32.xlu0 %v8329
        %v8331 = vpop.xlane.xlu0 %8330
        %v8332 = vsel %vm414, %v8288, 0.0
        %8333 = vadd.xlane.f32.xlu0 %v8332
        %v8334 = vpop.xlane.xlu0 %8333
        %v8335 = vsel %vm414, %v8289, 0.0
        %8336 = vadd.xlane.f32.xlu0 %v8335
        %v8337 = vpop.xlane.xlu0 %8336
        %v8338 = vmul.f32 %v8292, %v463
        %v8339 = vmul.f32 %v8295, %v463
        %v8340 = vmul.f32 %v8298, %v463
        %v8341 = vmul.f32 %v8301, %v463
        %v8342 = vmul.f32 %v8304, %v463
        %v8343 = vmul.f32 %v8307, %v463
        %v8344 = vmul.f32 %v8310, %v463
        %v8345 = vmul.f32 %v8313, %v463
        %v8346 = vmul.f32 %v8316, %v463
        %v8347 = vmul.f32 %v8319, %v463
        %v8348 = vmul.f32 %v8322, %v463
        %v8349 = vmul.f32 %v8325, %v463
        %v8350 = vmul.f32 %v8328, %v463
        %v8351 = vmul.f32 %v8331, %v463
        %v8352 = vmul.f32 %v8334, %v463
        %v8353 = vmul.f32 %v8337, %v463
        %v8354 = vadd.f32 %v8338, 1e-05
        %v8355 = vadd.f32 %v8339, 1e-05
        %v8356 = vadd.f32 %v8340, 1e-05
        %v8357 = vadd.f32 %v8341, 1e-05
        %v8358 = vadd.f32 %v8342, 1e-05
        %v8359 = vadd.f32 %v8343, 1e-05
        %v8360 = vadd.f32 %v8344, 1e-05
        %v8361 = vadd.f32 %v8345, 1e-05
        %v8362 = vadd.f32 %v8346, 1e-05
        %v8363 = vadd.f32 %v8347, 1e-05
        %v8364 = vadd.f32 %v8348, 1e-05
        %v8365 = vadd.f32 %v8349, 1e-05
        %v8366 = vadd.f32 %v8350, 1e-05
        %v8367 = vadd.f32 %v8351, 1e-05
        %v8368 = vadd.f32 %v8352, 1e-05
        %v8369 = vadd.f32 %v8353, 1e-05
        %v8370 = vrsqrt.pop %v8354
        %v8371 = vrsqrt.pop %v8355
        %v8372 = vrsqrt.pop %v8356
        %v8373 = vrsqrt.pop %v8357
        %v8374 = vrsqrt.pop %v8358
        %v8375 = vrsqrt.pop %v8359
        %v8376 = vrsqrt.pop %v8360
        %v8377 = vrsqrt.pop %v8361
        %v8378 = vrsqrt.pop %v8362
        %v8379 = vrsqrt.pop %v8363
        %v8380 = vrsqrt.pop %v8364
        %v8381 = vrsqrt.pop %v8365
        %v8382 = vrsqrt.pop %v8366
        %v8383 = vrsqrt.pop %v8367
        %v8384 = vrsqrt.pop %v8368
        %v8385 = vrsqrt.pop %v8369
        %v8386 = vmul.f32 %v8258, %v8370
        %v8387 = vmul.f32 %v8259, %v8371
        %v8388 = vmul.f32 %v8260, %v8372
        %v8389 = vmul.f32 %v8261, %v8373
        %v8390 = vmul.f32 %v8262, %v8374
        %v8391 = vmul.f32 %v8263, %v8375
        %v8392 = vmul.f32 %v8264, %v8376
        %v8393 = vmul.f32 %v8265, %v8377
        %v8394 = vmul.f32 %v8266, %v8378
        %v8395 = vmul.f32 %v8267, %v8379
        %v8396 = vmul.f32 %v8268, %v8380
        %v8397 = vmul.f32 %v8269, %v8381
        %v8398 = vmul.f32 %v8270, %v8382
        %v8399 = vmul.f32 %v8271, %v8383
        %v8400 = vmul.f32 %v8272, %v8384
        %v8401 = vmul.f32 %v8273, %v8385
        %v8402 = vlaneseq
        %v8403 = vshrl.u32 %v8402, 7
        %v8404 = vsub.s32 4, %v8403
        %v8405 = vrot.slane %v4687, %v8404
        %v8406 = vmul.f32 %v8386, %v8405
        %v8407 = vmul.f32 %v8387, %v8405
        %v8408 = vmul.f32 %v8388, %v8405
        %v8409 = vmul.f32 %v8389, %v8405
        %v8410 = vmul.f32 %v8390, %v8405
        %v8411 = vmul.f32 %v8391, %v8405
        %v8412 = vmul.f32 %v8392, %v8405
        %v8413 = vmul.f32 %v8393, %v8405
        %v8414 = vmul.f32 %v8394, %v8405
        %v8415 = vmul.f32 %v8395, %v8405
        %v8416 = vmul.f32 %v8396, %v8405
        %v8417 = vmul.f32 %v8397, %v8405
        %v8418 = vmul.f32 %v8398, %v8405
        %v8419 = vmul.f32 %v8399, %v8405
        %v8420 = vmul.f32 %v8400, %v8405
        %v8421 = vmul.f32 %v8401, %v8405
        %v8422 = vlaneseq
        %v8423 = vshrl.u32 %v8422, 7
        %v8424 = vsub.s32 5, %v8423
        %v8425 = vrot.slane %v4687, %v8424
        %v8426 = vadd.f32 %v8406, %v8425
        %v8427 = vadd.f32 %v8407, %v8425
        %v8428 = vadd.f32 %v8408, %v8425
        %v8429 = vadd.f32 %v8409, %v8425
        %v8430 = vadd.f32 %v8410, %v8425
        %v8431 = vadd.f32 %v8411, %v8425
        %v8432 = vadd.f32 %v8412, %v8425
        %v8433 = vadd.f32 %v8413, %v8425
        %v8434 = vadd.f32 %v8414, %v8425
        %v8435 = vadd.f32 %v8415, %v8425
        %v8436 = vadd.f32 %v8416, %v8425
        %v8437 = vadd.f32 %v8417, %v8425
        %v8438 = vadd.f32 %v8418, %v8425
        %v8439 = vadd.f32 %v8419, %v8425
        %v8440 = vadd.f32 %v8420, %v8425
        %v8441 = vadd.f32 %v8421, %v8425
        %v8442 = vlaneseq
        %v8443 = vshrl.u32 %v8442, 7
        %v8444 = vsub.s32 6, %v8443
        %v8445 = vrot.slane %v4687, %v8444
        %v8447 = vsel %vm414, %v8426, 0
        %v8450 = vsel %vm414, %v8427, 0
        %v8453 = vsel %vm414, %v8428, 0
        %v8456 = vsel %vm414, %v8429, 0
        %v8459 = vsel %vm414, %v8430, 0
        %v8462 = vsel %vm414, %v8431, 0
        %v8465 = vsel %vm414, %v8432, 0
        %v8468 = vsel %vm414, %v8433, 0
        %v8471 = vsel %vm414, %v8434, 0
        %v8474 = vsel %vm414, %v8435, 0
        %v8477 = vsel %vm414, %v8436, 0
        %v8480 = vsel %vm414, %v8437, 0
        %v8483 = vsel %vm414, %v8438, 0
        %v8486 = vsel %vm414, %v8439, 0
        %v8489 = vsel %vm414, %v8440, 0
        %v8492 = vsel %vm414, %v8441, 0
        %8494 = vmatprep.subr.mxu0 0.0
        %8495 = vmatpush1.msra.mxu0 0.0
        %8496 = vmatprep.subr.mxu0 0.0
        %8497 = vmatpush1.msra.mxu0 0.0
        %8498 = vmatprep.subr.mxu0 0.0
        %8499 = vmatpush1.msra.mxu0 0.0
        %8500 = vmatprep.subr.mxu0 0.0
        %8501 = vmatpush1.msra.mxu0 0.0
        %8502 = vmatprep.subr.mxu0 0.0
        %8503 = vmatpush1.msra.mxu0 0.0
        %8504 = vmatprep.subr.mxu0 0.0
        %8505 = vmatpush1.msra.mxu0 0.0
        %8506 = vmatprep.subr.mxu0 0.0
        %8507 = vmatpush1.msra.mxu0 0.0
        %8508 = vmatprep.subr.mxu0 0.0
        %8509 = vmatpush1.msra.mxu0 0.0
        %8510 = vmatprep.subr.mxu0 0.0
        %8511 = vmatpush1.msra.mxu0 0.0
        %8512 = vmatprep.subr.mxu0 0.0
        %8513 = vmatpush1.msra.mxu0 0.0
        %8514 = vmatprep.subr.mxu0 0.0
        %8515 = vmatpush1.msra.mxu0 0.0
        %8516 = vmatprep.subr.mxu0 0.0
        %8517 = vmatpush1.msra.mxu0 0.0
        %8518 = vmatprep.subr.mxu0 0.0
        %8519 = vmatpush1.msra.mxu0 %v4695
        %8520 = vmatprep.subr.mxu0 0.0
        %8521 = vmatpush1.msra.mxu0 %v4693
        %8522 = vmatprep.subr.mxu0 0.0
        %8523 = vmatpush1.msra.mxu0 %v4691
        %8524 = vmatprep.subr.mxu0 0.0
        %8525 = vmatpush1.msra.mxu0 %v4689
        %8526 = vmatprep.subr.mxu0 0.0
        %8527 = vmatpush2.msra.mxu0 0.0
        %8528 = vmatprep.subr.mxu0 0.0
        %8529 = vmatpush2.msra.mxu0 0.0
        %8530 = vmatprep.subr.mxu0 0.0
        %8531 = vmatpush2.msra.mxu0 0.0
        %8532 = vmatprep.subr.mxu0 0.0
        %8533 = vmatpush2.msra.mxu0 0.0
        %8534 = vmatprep.subr.mxu0 0.0
        %8535 = vmatpush2.msra.mxu0 0.0
        %8536 = vmatprep.subr.mxu0 0.0
        %8537 = vmatpush2.msra.mxu0 0.0
        %8538 = vmatprep.subr.mxu0 0.0
        %8539 = vmatpush2.msra.mxu0 0.0
        %8540 = vmatprep.subr.mxu0 0.0
        %8541 = vmatpush2.msra.mxu0 0.0
        %8542 = vmatprep.subr.mxu0 0.0
        %8543 = vmatpush2.msra.mxu0 0.0
        %8544 = vmatprep.subr.mxu0 0.0
        %8545 = vmatpush2.msra.mxu0 0.0
        %8546 = vmatprep.subr.mxu0 0.0
        %8547 = vmatpush2.msra.mxu0 0.0
        %8548 = vmatprep.subr.mxu0 0.0
        %8549 = vmatpush2.msra.mxu0 0.0
        %8550 = vmatprep.subr.mxu0 0.0
        %8551 = vmatpush2.msra.mxu0 0.0
        %8552 = vmatprep.subr.mxu0 0.0
        %8553 = vmatpush2.msra.mxu0 0.0
        %8554 = vmatprep.subr.mxu0 0.0
        %8555 = vmatpush2.msra.mxu0 0.0
        %8556 = vmatprep.subr.mxu0 0.0
        %8557 = vmatpush2.msra.mxu0 0.0
        %8558 = vmatprep.mubr.f32.mxu0 0.0
        %8559 = vmatmul.mubr.f32.gmra.mxu0 %v8447
        %v8560 = vpop.f32.mrf.mxu0
        %v8561 = vadd.f32 %v8445, %v8560
        %v8562 = vpop.f32.mrf.mxu0
        %8563 = vmatprep.mubr.f32.mxu0 0.0
        %8564 = vmatmul.mubr.f32.gmra.mxu0 %v8450
        %v8565 = vpop.f32.mrf.mxu0
        %v8566 = vadd.f32 %v8445, %v8565
        %v8567 = vpop.f32.mrf.mxu0
        %8568 = vmatprep.mubr.f32.mxu0 0.0
        %8569 = vmatmul.mubr.f32.gmra.mxu0 %v8453
        %v8570 = vpop.f32.mrf.mxu0
        %v8571 = vadd.f32 %v8445, %v8570
        %v8572 = vpop.f32.mrf.mxu0
        %8573 = vmatprep.mubr.f32.mxu0 0.0
        %8574 = vmatmul.mubr.f32.gmra.mxu0 %v8456
        %v8575 = vpop.f32.mrf.mxu0
        %v8576 = vadd.f32 %v8445, %v8575
        %v8577 = vpop.f32.mrf.mxu0
        %8578 = vmatprep.mubr.f32.mxu0 0.0
        %8579 = vmatmul.mubr.f32.gmra.mxu0 %v8459
        %v8580 = vpop.f32.mrf.mxu0
        %v8581 = vadd.f32 %v8445, %v8580
        %v8582 = vpop.f32.mrf.mxu0
        %8583 = vmatprep.mubr.f32.mxu0 0.0
        %8584 = vmatmul.mubr.f32.gmra.mxu0 %v8462
        %v8585 = vpop.f32.mrf.mxu0
        %v8586 = vadd.f32 %v8445, %v8585
        %v8587 = vpop.f32.mrf.mxu0
        %8588 = vmatprep.mubr.f32.mxu0 0.0
        %8589 = vmatmul.mubr.f32.gmra.mxu0 %v8465
        %v8590 = vpop.f32.mrf.mxu0
        %v8591 = vadd.f32 %v8445, %v8590
        %v8592 = vpop.f32.mrf.mxu0
        %8593 = vmatprep.mubr.f32.mxu0 0.0
        %8594 = vmatmul.mubr.f32.gmra.mxu0 %v8468
        %v8595 = vpop.f32.mrf.mxu0
        %v8596 = vadd.f32 %v8445, %v8595
        %v8597 = vpop.f32.mrf.mxu0
        %8598 = vmatprep.mubr.f32.mxu0 0.0
        %8599 = vmatmul.mubr.f32.gmra.mxu0 %v8471
        %v8600 = vpop.f32.mrf.mxu0
        %v8601 = vadd.f32 %v8445, %v8600
        %v8602 = vpop.f32.mrf.mxu0
        %8603 = vmatprep.mubr.f32.mxu0 0.0
        %8604 = vmatmul.mubr.f32.gmra.mxu0 %v8474
        %v8605 = vpop.f32.mrf.mxu0
        %v8606 = vadd.f32 %v8445, %v8605
        %v8607 = vpop.f32.mrf.mxu0
        %8608 = vmatprep.mubr.f32.mxu0 0.0
        %8609 = vmatmul.mubr.f32.gmra.mxu0 %v8477
        %v8610 = vpop.f32.mrf.mxu0
        %v8611 = vadd.f32 %v8445, %v8610
        %v8612 = vpop.f32.mrf.mxu0
        %8613 = vmatprep.mubr.f32.mxu0 0.0
        %8614 = vmatmul.mubr.f32.gmra.mxu0 %v8480
        %v8615 = vpop.f32.mrf.mxu0
        %v8616 = vadd.f32 %v8445, %v8615
        %v8617 = vpop.f32.mrf.mxu0
        %8618 = vmatprep.mubr.f32.mxu0 0.0
        %8619 = vmatmul.mubr.f32.gmra.mxu0 %v8483
        %v8620 = vpop.f32.mrf.mxu0
        %v8621 = vadd.f32 %v8445, %v8620
        %v8622 = vpop.f32.mrf.mxu0
        %8623 = vmatprep.mubr.f32.mxu0 0.0
        %8624 = vmatmul.mubr.f32.gmra.mxu0 %v8486
        %v8625 = vpop.f32.mrf.mxu0
        %v8626 = vadd.f32 %v8445, %v8625
        %v8627 = vpop.f32.mrf.mxu0
        %8628 = vmatprep.mubr.f32.mxu0 0.0
        %8629 = vmatmul.mubr.f32.gmra.mxu0 %v8489
        %v8630 = vpop.f32.mrf.mxu0
        %v8631 = vadd.f32 %v8445, %v8630
        %v8632 = vpop.f32.mrf.mxu0
        %8633 = vmatprep.mubr.f32.mxu0 0.0
        %8634 = vmatmul.mubr.f32.gmra.mxu0 %v8492
        %v8635 = vpop.f32.mrf.mxu0
        %v8636 = vadd.f32 %v8445, %v8635
        %v8637 = vpop.f32.mrf.mxu0
        %8638 = vdwg.mxu0
        %v8639 = vmul.f32 %v8561, 0.5
        %v8640 = vmul.f32 %v8566, 0.5
        %v8641 = vmul.f32 %v8571, 0.5
        %v8642 = vmul.f32 %v8576, 0.5
        %v8643 = vmul.f32 %v8581, 0.5
        %v8644 = vmul.f32 %v8586, 0.5
        %v8645 = vmul.f32 %v8591, 0.5
        %v8646 = vmul.f32 %v8596, 0.5
        %v8647 = vmul.f32 %v8601, 0.5
        %v8648 = vmul.f32 %v8606, 0.5
        %v8649 = vmul.f32 %v8611, 0.5
        %v8650 = vmul.f32 %v8616, 0.5
        %v8651 = vmul.f32 %v8621, 0.5
        %v8652 = vmul.f32 %v8626, 0.5
        %v8653 = vmul.f32 %v8631, 0.5
        %v8654 = vmul.f32 %v8636, 0.5
        %v8655 = vmul.f32 %v8561, 0.044715
        %v8656 = vmul.f32 %v8566, 0.044715
        %v8657 = vmul.f32 %v8571, 0.044715
        %v8658 = vmul.f32 %v8576, 0.044715
        %v8659 = vmul.f32 %v8581, 0.044715
        %v8660 = vmul.f32 %v8586, 0.044715
        %v8661 = vmul.f32 %v8591, 0.044715
        %v8662 = vmul.f32 %v8596, 0.044715
        %v8663 = vmul.f32 %v8601, 0.044715
        %v8664 = vmul.f32 %v8606, 0.044715
        %v8665 = vmul.f32 %v8611, 0.044715
        %v8666 = vmul.f32 %v8616, 0.044715
        %v8667 = vmul.f32 %v8621, 0.044715
        %v8668 = vmul.f32 %v8626, 0.044715
        %v8669 = vmul.f32 %v8631, 0.044715
        %v8670 = vmul.f32 %v8636, 0.044715
        %v8671 = vmul.f32 %v8655, %v8561
        %v8672 = vmul.f32 %v8656, %v8566
        %v8673 = vmul.f32 %v8657, %v8571
        %v8674 = vmul.f32 %v8658, %v8576
        %v8675 = vmul.f32 %v8659, %v8581
        %v8676 = vmul.f32 %v8660, %v8586
        %v8677 = vmul.f32 %v8661, %v8591
        %v8678 = vmul.f32 %v8662, %v8596
        %v8679 = vmul.f32 %v8663, %v8601
        %v8680 = vmul.f32 %v8664, %v8606
        %v8681 = vmul.f32 %v8665, %v8611
        %v8682 = vmul.f32 %v8666, %v8616
        %v8683 = vmul.f32 %v8667, %v8621
        %v8684 = vmul.f32 %v8668, %v8626
        %v8685 = vmul.f32 %v8669, %v8631
        %v8686 = vmul.f32 %v8670, %v8636
        %v8687 = vmul.f32 %v8671, %v8561
        %v8688 = vmul.f32 %v8672, %v8566
        %v8689 = vmul.f32 %v8673, %v8571
        %v8690 = vmul.f32 %v8674, %v8576
        %v8691 = vmul.f32 %v8675, %v8581
        %v8692 = vmul.f32 %v8676, %v8586
        %v8693 = vmul.f32 %v8677, %v8591
        %v8694 = vmul.f32 %v8678, %v8596
        %v8695 = vmul.f32 %v8679, %v8601
        %v8696 = vmul.f32 %v8680, %v8606
        %v8697 = vmul.f32 %v8681, %v8611
        %v8698 = vmul.f32 %v8682, %v8616
        %v8699 = vmul.f32 %v8683, %v8621
        %v8700 = vmul.f32 %v8684, %v8626
        %v8701 = vmul.f32 %v8685, %v8631
        %v8702 = vmul.f32 %v8686, %v8636
        %v8703 = vadd.f32 %v8561, %v8687
        %v8704 = vadd.f32 %v8566, %v8688
        %v8705 = vadd.f32 %v8571, %v8689
        %v8706 = vadd.f32 %v8576, %v8690
        %v8707 = vadd.f32 %v8581, %v8691
        %v8708 = vadd.f32 %v8586, %v8692
        %v8709 = vadd.f32 %v8591, %v8693
        %v8710 = vadd.f32 %v8596, %v8694
        %v8711 = vadd.f32 %v8601, %v8695
        %v8712 = vadd.f32 %v8606, %v8696
        %v8713 = vadd.f32 %v8611, %v8697
        %v8714 = vadd.f32 %v8616, %v8698
        %v8715 = vadd.f32 %v8621, %v8699
        %v8716 = vadd.f32 %v8626, %v8700
        %v8717 = vadd.f32 %v8631, %v8701
        %v8718 = vadd.f32 %v8636, %v8702
        %v8719 = vmul.f32 %v8703, 0.7978846
        %v8720 = vmul.f32 %v8704, 0.7978846
        %v8721 = vmul.f32 %v8705, 0.7978846
        %v8722 = vmul.f32 %v8706, 0.7978846
        %v8723 = vmul.f32 %v8707, 0.7978846
        %v8724 = vmul.f32 %v8708, 0.7978846
        %v8725 = vmul.f32 %v8709, 0.7978846
        %v8726 = vmul.f32 %v8710, 0.7978846
        %v8727 = vmul.f32 %v8711, 0.7978846
        %v8728 = vmul.f32 %v8712, 0.7978846
        %v8729 = vmul.f32 %v8713, 0.7978846
        %v8730 = vmul.f32 %v8714, 0.7978846
        %v8731 = vmul.f32 %v8715, 0.7978846
        %v8732 = vmul.f32 %v8716, 0.7978846
        %v8733 = vmul.f32 %v8717, 0.7978846
        %v8734 = vmul.f32 %v8718, 0.7978846
        %v8735 = vtanh.pop %v8719
        %v8736 = vtanh.pop %v8720
        %v8737 = vtanh.pop %v8721
        %v8738 = vtanh.pop %v8722
        %v8739 = vtanh.pop %v8723
        %v8740 = vtanh.pop %v8724
        %v8741 = vtanh.pop %v8725
        %v8742 = vtanh.pop %v8726
        %v8743 = vtanh.pop %v8727
        %v8744 = vtanh.pop %v8728
        %v8745 = vtanh.pop %v8729
        %v8746 = vtanh.pop %v8730
        %v8747 = vtanh.pop %v8731
        %v8748 = vtanh.pop %v8732
        %v8749 = vtanh.pop %v8733
        %v8750 = vtanh.pop %v8734
        %v8751 = vadd.f32 %v8735, 1.0
        %v8752 = vadd.f32 %v8736, 1.0
        %v8753 = vadd.f32 %v8737, 1.0
        %v8754 = vadd.f32 %v8738, 1.0
        %v8755 = vadd.f32 %v8739, 1.0
        %v8756 = vadd.f32 %v8740, 1.0
        %v8757 = vadd.f32 %v8741, 1.0
        %v8758 = vadd.f32 %v8742, 1.0
        %v8759 = vadd.f32 %v8743, 1.0
        %v8760 = vadd.f32 %v8744, 1.0
        %v8761 = vadd.f32 %v8745, 1.0
        %v8762 = vadd.f32 %v8746, 1.0
        %v8763 = vadd.f32 %v8747, 1.0
        %v8764 = vadd.f32 %v8748, 1.0
        %v8765 = vadd.f32 %v8749, 1.0
        %v8766 = vadd.f32 %v8750, 1.0
        %v8767 = vmul.f32 %v8639, %v8751
        %v8768 = vmul.f32 %v8640, %v8752
        %v8769 = vmul.f32 %v8641, %v8753
        %v8770 = vmul.f32 %v8642, %v8754
        %v8771 = vmul.f32 %v8643, %v8755
        %v8772 = vmul.f32 %v8644, %v8756
        %v8773 = vmul.f32 %v8645, %v8757
        %v8774 = vmul.f32 %v8646, %v8758
        %v8775 = vmul.f32 %v8647, %v8759
        %v8776 = vmul.f32 %v8648, %v8760
        %v8777 = vmul.f32 %v8649, %v8761
        %v8778 = vmul.f32 %v8650, %v8762
        %v8779 = vmul.f32 %v8651, %v8763
        %v8780 = vmul.f32 %v8652, %v8764
        %v8781 = vmul.f32 %v8653, %v8765
        %v8782 = vmul.f32 %v8654, %v8766
        %8783 = vmatprep.subr.mxu0 0.0
        %8784 = vmatpush1.msra.mxu0 %v4711
        %8785 = vmatprep.subr.mxu0 0.0
        %8786 = vmatpush1.msra.mxu0 %v4710
        %8787 = vmatprep.subr.mxu0 0.0
        %8788 = vmatpush1.msra.mxu0 %v4709
        %8789 = vmatprep.subr.mxu0 0.0
        %8790 = vmatpush1.msra.mxu0 %v4708
        %8791 = vmatprep.subr.mxu0 0.0
        %8792 = vmatpush1.msra.mxu0 %v4707
        %8793 = vmatprep.subr.mxu0 0.0
        %8794 = vmatpush1.msra.mxu0 %v4706
        %8795 = vmatprep.subr.mxu0 0.0
        %8796 = vmatpush1.msra.mxu0 %v4705
        %8797 = vmatprep.subr.mxu0 0.0
        %8798 = vmatpush1.msra.mxu0 %v4704
        %8799 = vmatprep.subr.mxu0 0.0
        %8800 = vmatpush1.msra.mxu0 %v4703
        %8801 = vmatprep.subr.mxu0 0.0
        %8802 = vmatpush1.msra.mxu0 %v4702
        %8803 = vmatprep.subr.mxu0 0.0
        %8804 = vmatpush1.msra.mxu0 %v4701
        %8805 = vmatprep.subr.mxu0 0.0
        %8806 = vmatpush1.msra.mxu0 %v4700
        %8807 = vmatprep.subr.mxu0 0.0
        %8808 = vmatpush1.msra.mxu0 %v4699
        %8809 = vmatprep.subr.mxu0 0.0
        %8810 = vmatpush1.msra.mxu0 %v4698
        %8811 = vmatprep.subr.mxu0 0.0
        %8812 = vmatpush1.msra.mxu0 %v4697
        %8813 = vmatprep.subr.mxu0 0.0
        %8814 = vmatpush1.msra.mxu0 %v4696
        %8815 = vmatprep.subr.mxu0 0.0
        %8816 = vmatpush2.msra.mxu0 0.0
        %8817 = vmatprep.subr.mxu0 0.0
        %8818 = vmatpush2.msra.mxu0 0.0
        %8819 = vmatprep.subr.mxu0 0.0
        %8820 = vmatpush2.msra.mxu0 0.0
        %8821 = vmatprep.subr.mxu0 0.0
        %8822 = vmatpush2.msra.mxu0 0.0
        %8823 = vmatprep.subr.mxu0 0.0
        %8824 = vmatpush2.msra.mxu0 0.0
        %8825 = vmatprep.subr.mxu0 0.0
        %8826 = vmatpush2.msra.mxu0 0.0
        %8827 = vmatprep.subr.mxu0 0.0
        %8828 = vmatpush2.msra.mxu0 0.0
        %8829 = vmatprep.subr.mxu0 0.0
        %8830 = vmatpush2.msra.mxu0 0.0
        %8831 = vmatprep.subr.mxu0 0.0
        %8832 = vmatpush2.msra.mxu0 0.0
        %8833 = vmatprep.subr.mxu0 0.0
        %8834 = vmatpush2.msra.mxu0 0.0
        %8835 = vmatprep.subr.mxu0 0.0
        %8836 = vmatpush2.msra.mxu0 0.0
        %8837 = vmatprep.subr.mxu0 0.0
        %8838 = vmatpush2.msra.mxu0 0.0
        %8839 = vmatprep.subr.mxu0 0.0
        %8840 = vmatpush2.msra.mxu0 0.0
        %8841 = vmatprep.subr.mxu0 0.0
        %8842 = vmatpush2.msra.mxu0 0.0
        %8843 = vmatprep.subr.mxu0 0.0
        %8844 = vmatpush2.msra.mxu0 0.0
        %8845 = vmatprep.subr.mxu0 0.0
        %8846 = vmatpush2.msra.mxu0 0.0
        %8847 = vmatprep.mubr.f32.mxu0 0.0
        %8848 = vmatmul.mubr.f32.gmra.mxu0 %v8767
        %v8849 = vpop.f32.mrf.mxu0
        %v8850 = vadd.f32 0.0, %v8849
        %v8851 = vpop.f32.mrf.mxu0
        %8852 = vmatprep.mubr.f32.mxu0 0.0
        %8853 = vmatmul.mubr.f32.gmra.mxu0 %v8768
        %v8854 = vpop.f32.mrf.mxu0
        %v8855 = vadd.f32 0.0, %v8854
        %v8856 = vpop.f32.mrf.mxu0
        %8857 = vmatprep.mubr.f32.mxu0 0.0
        %8858 = vmatmul.mubr.f32.gmra.mxu0 %v8769
        %v8859 = vpop.f32.mrf.mxu0
        %v8860 = vadd.f32 0.0, %v8859
        %v8861 = vpop.f32.mrf.mxu0
        %8862 = vmatprep.mubr.f32.mxu0 0.0
        %8863 = vmatmul.mubr.f32.gmra.mxu0 %v8770
        %v8864 = vpop.f32.mrf.mxu0
        %v8865 = vadd.f32 0.0, %v8864
        %v8866 = vpop.f32.mrf.mxu0
        %8867 = vmatprep.mubr.f32.mxu0 0.0
        %8868 = vmatmul.mubr.f32.gmra.mxu0 %v8771
        %v8869 = vpop.f32.mrf.mxu0
        %v8870 = vadd.f32 0.0, %v8869
        %v8871 = vpop.f32.mrf.mxu0
        %8872 = vmatprep.mubr.f32.mxu0 0.0
        %8873 = vmatmul.mubr.f32.gmra.mxu0 %v8772
        %v8874 = vpop.f32.mrf.mxu0
        %v8875 = vadd.f32 0.0, %v8874
        %v8876 = vpop.f32.mrf.mxu0
        %8877 = vmatprep.mubr.f32.mxu0 0.0
        %8878 = vmatmul.mubr.f32.gmra.mxu0 %v8773
        %v8879 = vpop.f32.mrf.mxu0
        %v8880 = vadd.f32 0.0, %v8879
        %v8881 = vpop.f32.mrf.mxu0
        %8882 = vmatprep.mubr.f32.mxu0 0.0
        %8883 = vmatmul.mubr.f32.gmra.mxu0 %v8774
        %v8884 = vpop.f32.mrf.mxu0
        %v8885 = vadd.f32 0.0, %v8884
        %v8886 = vpop.f32.mrf.mxu0
        %8887 = vmatprep.mubr.f32.mxu0 0.0
        %8888 = vmatmul.mubr.f32.gmra.mxu0 %v8775
        %v8889 = vpop.f32.mrf.mxu0
        %v8890 = vadd.f32 0.0, %v8889
        %v8891 = vpop.f32.mrf.mxu0
        %8892 = vmatprep.mubr.f32.mxu0 0.0
        %8893 = vmatmul.mubr.f32.gmra.mxu0 %v8776
        %v8894 = vpop.f32.mrf.mxu0
        %v8895 = vadd.f32 0.0, %v8894
        %v8896 = vpop.f32.mrf.mxu0
        %8897 = vmatprep.mubr.f32.mxu0 0.0
        %8898 = vmatmul.mubr.f32.gmra.mxu0 %v8777
        %v8899 = vpop.f32.mrf.mxu0
        %v8900 = vadd.f32 0.0, %v8899
        %v8901 = vpop.f32.mrf.mxu0
        %8902 = vmatprep.mubr.f32.mxu0 0.0
        %8903 = vmatmul.mubr.f32.gmra.mxu0 %v8778
        %v8904 = vpop.f32.mrf.mxu0
        %v8905 = vadd.f32 0.0, %v8904
        %v8906 = vpop.f32.mrf.mxu0
        %8907 = vmatprep.mubr.f32.mxu0 0.0
        %8908 = vmatmul.mubr.f32.gmra.mxu0 %v8779
        %v8909 = vpop.f32.mrf.mxu0
        %v8910 = vadd.f32 0.0, %v8909
        %v8911 = vpop.f32.mrf.mxu0
        %8912 = vmatprep.mubr.f32.mxu0 0.0
        %8913 = vmatmul.mubr.f32.gmra.mxu0 %v8780
        %v8914 = vpop.f32.mrf.mxu0
        %v8915 = vadd.f32 0.0, %v8914
        %v8916 = vpop.f32.mrf.mxu0
        %8917 = vmatprep.mubr.f32.mxu0 0.0
        %8918 = vmatmul.mubr.f32.gmra.mxu0 %v8781
        %v8919 = vpop.f32.mrf.mxu0
        %v8920 = vadd.f32 0.0, %v8919
        %v8921 = vpop.f32.mrf.mxu0
        %8922 = vmatprep.mubr.f32.mxu0 0.0
        %8923 = vmatmul.mubr.f32.gmra.mxu0 %v8782
        %v8924 = vpop.f32.mrf.mxu0
        %v8925 = vadd.f32 0.0, %v8924
        %v8926 = vpop.f32.mrf.mxu0
        %8927 = vdwg.mxu0
        %v8928 = vadd.f32 %v8178, %v8850
        %v8929 = vadd.f32 %v8179, %v8855
        %v8930 = vadd.f32 %v8180, %v8860
        %v8931 = vadd.f32 %v8181, %v8865
        %v8932 = vadd.f32 %v8182, %v8870
        %v8933 = vadd.f32 %v8183, %v8875
        %v8934 = vadd.f32 %v8184, %v8880
        %v8935 = vadd.f32 %v8185, %v8885
        %v8936 = vadd.f32 %v8186, %v8890
        %v8937 = vadd.f32 %v8187, %v8895
        %v8938 = vadd.f32 %v8188, %v8900
        %v8939 = vadd.f32 %v8189, %v8905
        %v8940 = vadd.f32 %v8190, %v8910
        %v8941 = vadd.f32 %v8191, %v8915
        %v8942 = vadd.f32 %v8192, %v8920
        %v8943 = vadd.f32 %v8193, %v8925
        %v8944 = vlaneseq
        %v8945 = vshrl.u32 %v8944, 7
        %v8946 = vsub.s32 7, %v8945
        %v8947 = vrot.slane %v4687, %v8946
        %v8948 = vadd.f32 %v8928, %v8947
        %v8949 = vadd.f32 %v8929, %v8947
        %v8950 = vadd.f32 %v8930, %v8947
        %v8951 = vadd.f32 %v8931, %v8947
        %v8952 = vadd.f32 %v8932, %v8947
        %v8953 = vadd.f32 %v8933, %v8947
        %v8954 = vadd.f32 %v8934, %v8947
        %v8955 = vadd.f32 %v8935, %v8947
        %v8956 = vadd.f32 %v8936, %v8947
        %v8957 = vadd.f32 %v8937, %v8947
        %v8958 = vadd.f32 %v8938, %v8947
        %v8959 = vadd.f32 %v8939, %v8947
        %v8960 = vadd.f32 %v8940, %v8947
        %v8961 = vadd.f32 %v8941, %v8947
        %v8962 = vadd.f32 %v8942, %v8947
        %v8963 = vadd.f32 %v8943, %v8947
        %8964 = vst.msk [vmem:[%s354] sm:$0xff] %vm414, %v8948
        %8965 = vst.msk [vmem:[%s354 + $0x8] sm:$0xff] %vm414, %v8949
        %8966 = vst.msk [vmem:[%s354 + $0x10] sm:$0xff] %vm414, %v8950
        %8967 = vst.msk [vmem:[%s354 + $0x18] sm:$0xff] %vm414, %v8951
        %8968 = vst.msk [vmem:[%s354 + $0x20] sm:$0xff] %vm414, %v8952
        %8969 = vst.msk [vmem:[%s354 + $0x28] sm:$0xff] %vm414, %v8953
        %8970 = vst.msk [vmem:[%s354 + $0x30] sm:$0xff] %vm414, %v8954
        %8971 = vst.msk [vmem:[%s354 + $0x38] sm:$0xff] %vm414, %v8955
        %8972 = vst.msk [vmem:[%s354 + $0x40] sm:$0xff] %vm414, %v8956
        %8973 = vst.msk [vmem:[%s354 + $0x48] sm:$0xff] %vm414, %v8957
        %8974 = vst.msk [vmem:[%s354 + $0x50] sm:$0xff] %vm414, %v8958
        %8975 = vst.msk [vmem:[%s354 + $0x58] sm:$0xff] %vm414, %v8959
        %8976 = vst.msk [vmem:[%s354 + $0x60] sm:$0xff] %vm414, %v8960
        %8977 = vst.msk [vmem:[%s354 + $0x68] sm:$0xff] %vm414, %v8961
        %8978 = vst.msk [vmem:[%s354 + $0x70] sm:$0xff] %vm414, %v8962
        %8979 = vst.msk [vmem:[%s354 + $0x78] sm:$0xff] %vm414, %v8963
        %s8980 = sand.u32 %s186, 1
        %s8981 = scalar_lea.sflag [#allocation4], %s8980
        %s8982 = sand.u32 %s186, 1
        %s8983 = smul.addr %s8982, 128
        %s8984 = scalar_lea.vmem [#allocation11], %s8983
        // Predicated region
        $region69: #{_lambda_.1} parent=47 // pred_check
          %p8985 = pneg %p196
        $region70: #{_lambda_.1} parent=47 // pred_check_branch
          %8987 = sbr.rel (%p8985) target = $region72
        $region71: #{_lambda_.1} parent=47 // pred_region
          %s8988 = smul.u32 16, %s26
          %s8990 = ssub.s32 2048, 2048
          %8991 = vsyncadd %s8981, %s8990
          %s8992 = smul.addr %s8988, 128
          %s8993 = scalar_lea.hbm %s7, %s8992
          %s8994 = sshll.u32 %s8984, 4
          %s8995 = int_to_ptr.vmem [resolvable:$true] %s8994
          %9000 = dma.vmem_to_hbm [thread:$0]  %s8995, 2048, %s8993, %s8981, 128, 128, 8
        $region72: #{_lambda_.1} parent=47 // pred_fallthru
          _
      $region48: #{_lambda_.1} parent=5 // pred_fallthru
        _
      %p9001 = scmp.le.s32.totalorder 2, %s21
      // Predicated region
      $region73: #{_lambda_.1} parent=5 // pred_check
        %p9002 = pneg %p9001
      $region74: #{_lambda_.1} parent=5 // pred_check_branch
        %9004 = sbr.rel (%p9002) target = $region76
      $region75: #{_lambda_.1} parent=5 // pred_region
        %s9005 = ssub.s32 %s21, 2
        // Predicated region
        $region77: #{_lambda_.1} parent=75 // pred_check
          %p9006 = pneg %p202
        $region78: #{_lambda_.1} parent=75 // pred_check_branch
          %9008 = sbr.rel (%p9006) target = $region80
        $region79: #{_lambda_.1} parent=75 // pred_region
          %s9009 = sand.u32 %s187, 1
          %s9010 = scalar_lea.sflag [#allocation4], %s9009
          %s9011 = sand.u32 %s187, 1
          %s9012 = smul.addr %s9011, 128
          %s9013 = scalar_lea.vmem [#allocation11], %s9012
          %9014 = dma.done %s9010, 2048
        $region80: #{_lambda_.1} parent=75 // pred_fallthru
          _
      $region76: #{_lambda_.1} parent=5 // pred_fallthru
        _
    $region6: #{_lambda_.1} parent=1 // loop_footer
      %s25 = sadd.s32 1, %s21
    $region7: #{_lambda_.1} parent=1 // loop_footer_branch
      %20 = sbr.rel target = $region3
    $region8: #{_lambda_.1} parent=1 // loop_exit
      _
    %9015 = vsyncpa [#allocation3], 1
    %s9016 = scalar_lea.sflag [#allocation3], 1
    %9017 = vsyncpa %s9016, 1
    %9018 = vsyncpa [#allocation6], 1
    %9019 = vsyncpa [#allocation9], 1
    %9020 = vsyncpa [#allocation4], 1
    %s9021 = scalar_lea.sflag [#allocation4], 1
    %9022 = vsyncpa %s9021, 1

</llo_original>
